<compile_context>
chip_gen: v6e
topology: v6e:2x2x1
jax: 0.10.0
libtpu: 0.0.40
codegen_flags: <defaults>
</compile_context>

<pallas_src>
import functools

import numpy as np
import jax
import jax.numpy as jnp
from jax.experimental import pallas as pl
from jax.experimental.pallas import tpu as pltpu


# ---------------------------------------------------------------------------
# Kernel 1: conv1 as a single weight-stationary GEMM
# ---------------------------------------------------------------------------
def _conv_gemm_kernel(w_ref, p_ref, b_ref, o_ref):
    """out(OC, M) = relu(W(OC, KKC) @ patches(KKC, M) + b(OC, 1))."""
    acc = jnp.dot(w_ref[...], p_ref[...], preferred_element_type=jnp.float32)
    o_ref[...] = jnp.maximum(acc + b_ref[...], 0.0).astype(o_ref.dtype)


def conv_gemm_pallas(w, patches, b):
    """w: (OC, KKC), patches: (KKC, M), b: (OC, 1) -> (OC, M); all float32."""
    OC, KKC = w.shape
    M = patches.shape[1]
    cost = pl.CostEstimate(
        flops=2 * OC * KKC * M,
        transcendentals=0,
        bytes_accessed=4 * (OC * KKC + KKC * M + OC + OC * M))
    return pl.pallas_call(
        _conv_gemm_kernel,
        out_shape=jax.ShapeDtypeStruct((OC, M), jnp.float32),
        grid=(1,),
        in_specs=[
            pl.BlockSpec((OC, KKC), lambda i: (0, 0)),   # weight (stationary)
            pl.BlockSpec((KKC, M), lambda i: (0, 0)),    # patches, lane dim = M
            pl.BlockSpec((OC, 1), lambda i: (0, 0)),     # bias column
        ],
        out_specs=pl.BlockSpec((OC, M), lambda i: (0, 0)),
        compiler_params=pltpu.CompilerParams(
            dimension_semantics=("arbitrary",)),
        cost_estimate=cost,
    )(w, patches, b)


# ---------------------------------------------------------------------------
# Kernel 2: fused conv2 + conv3 (conv2 output stays in VMEM; conv3's stride-1
# im2col is expressed as 9 matmuls against constant 0/1 tap-selection matrices)
# ---------------------------------------------------------------------------
def _conv23_kernel(p2_ref, w2_ref, b2_ref, w3_ref, b3_ref, s3_ref, o_ref):
    y2 = jnp.dot(w2_ref[...], p2_ref[...], preferred_element_type=jnp.float32)
    y2 = jnp.maximum(y2 + b2_ref[...], 0.0)               # (64, B*81), VMEM only
    acc = jnp.zeros(o_ref.shape, jnp.float32)
    for t in range(9):                                    # static unroll: 3x3 taps
        # p3_t[c, (b,i,j)] = y2[c, (b, i+kh, j+kw)]  via 0/1 selection matmul
        p3_t = jnp.dot(y2, s3_ref[t], preferred_element_type=jnp.float32)
        acc = acc + jnp.dot(w3_ref[t], p3_t, preferred_element_type=jnp.float32)
    o_ref[...] = jnp.maximum(acc + b3_ref[...], 0.0).astype(o_ref.dtype)


def conv23_pallas(p2, w2, b2, w3taps, b3, s3):
    """p2: (512, M2) f32, w2: (64, 512), b2: (64,1), w3taps: (9,64,64),
    b3: (64,1), s3: (9, M2, M3) 0/1 f32 -> relu(conv3) as (64, M3)."""
    KKC2, M2 = p2.shape
    OC2 = w2.shape[0]
    T, OC3, _ = w3taps.shape
    M3 = s3.shape[2]
    flops = (2 * OC2 * KKC2 * M2
             + T * (2 * OC2 * M2 * M3 + 2 * OC3 * OC2 * M3))
    bytes_accessed = 4 * (KKC2 * M2 + OC2 * KKC2 + OC2 + T * OC3 * OC2 + OC3
                          + T * M2 * M3 + OC3 * M3)
    return pl.pallas_call(
        _conv23_kernel,
        out_shape=jax.ShapeDtypeStruct((OC3, M3), jnp.float32),
        grid=(1,),
        in_specs=[
            pl.BlockSpec((KKC2, M2), lambda i: (0, 0)),
            pl.BlockSpec((OC2, KKC2), lambda i: (0, 0)),
            pl.BlockSpec((OC2, 1), lambda i: (0, 0)),
            pl.BlockSpec((T, OC3, OC2), lambda i: (0, 0, 0)),
            pl.BlockSpec((OC3, 1), lambda i: (0, 0)),
            pl.BlockSpec((T, M2, M3), lambda i: (0, 0, 0)),
        ],
        out_specs=pl.BlockSpec((OC3, M3), lambda i: (0, 0)),
        compiler_params=pltpu.CompilerParams(
            dimension_semantics=("arbitrary",)),
        cost_estimate=pl.CostEstimate(flops=flops, transcendentals=0,
                                      bytes_accessed=bytes_accessed),
    )(p2, w2, b2, w3taps, b3, s3)


# ---------------------------------------------------------------------------
# Kernel 3: fused fc4 (ReLU) + fc5; bf16 weights, f32 accumulation
# ---------------------------------------------------------------------------
def _mlp_head_kernel(x_ref, w4_ref, b4_ref, w5_ref, b5_ref, o_ref):
    xb = x_ref[...].astype(jnp.bfloat16)
    h = jnp.dot(xb, w4_ref[...], preferred_element_type=jnp.float32)
    h = jnp.maximum(h + b4_ref[...], 0.0)                      # (B, 512) f32
    out = jnp.dot(h.astype(jnp.bfloat16), w5_ref[...],
                  preferred_element_type=jnp.float32)
    o_ref[...] = (out + b5_ref[...]).astype(o_ref.dtype)       # (B, Npad)


def mlp_head_pallas(x, w4t, b4, w5p, b5p):
    """x: (B, F) f32; w4t: (F, H) bf16; b4: (1, H) f32; w5p: (H, Np) bf16;
    b5p: (1, Np) f32.  bf16 halves the dominant w4 DMA; no vmem override
    needed (~6.7 MB total even with default double-buffering)."""
    B, F = x.shape
    H = w4t.shape[1]
    Np = w5p.shape[1]
    flops = 2 * B * F * H + 2 * B * H * Np
    bytes_accessed = 4 * B * F + 2 * F * H + 4 * H + 2 * H * Np + 4 * Np + 4 * B * Np
    return pl.pallas_call(
        _mlp_head_kernel,
        out_shape=jax.ShapeDtypeStruct((B, Np), jnp.float32),
        grid=(1,),
        in_specs=[
            pl.BlockSpec((B, F), lambda i: (0, 0)),
            pl.BlockSpec((F, H), lambda i: (0, 0)),
            pl.BlockSpec((1, H), lambda i: (0, 0)),
            pl.BlockSpec((H, Np), lambda i: (0, 0)),
            pl.BlockSpec((1, Np), lambda i: (0, 0)),
        ],
        out_specs=pl.BlockSpec((B, Np), lambda i: (0, 0)),
        compiler_params=pltpu.CompilerParams(
            dimension_semantics=("arbitrary",)),
        cost_estimate=pl.CostEstimate(flops=flops, transcendentals=0,
                                      bytes_accessed=bytes_accessed),
    )(x, w4t, b4, w5p, b5p)


# ---------------------------------------------------------------------------
# XLA glue: channel-major im2col (pure slicing + one concat; no transposes)
# ---------------------------------------------------------------------------
def _im2col_cm(y, k, stride):
    """y: (C, B, H, W) -> patches (K*K*C, B*OH*OW); row order (kh, kw, c)."""
    C, B, H, W = y.shape
    oh = (H - k) // stride + 1
    ow = (W - k) // stride + 1
    cols = []
    for kh in range(k):
        for kw in range(k):
            cols.append(y[:, :,
                          kh:kh + (oh - 1) * stride + 1:stride,
                          kw:kw + (ow - 1) * stride + 1:stride])  # (C,B,OH,OW)
    p = jnp.stack(cols, axis=0)                  # (K*K, C, B, OH, OW)
    return p.reshape(k * k * C, B * oh * ow), oh, ow


def _conv3_selection_matrices(batch):
    """0/1 matrices S[t] of shape (B*9*9, B*7*7); column (b,i,j) of S[kh*3+kw]
    selects row (b, i+kh, j+kw) -> in-kernel im2col for the stride-1 conv3."""
    s3 = np.zeros((9, batch * 81, batch * 49), np.float32)
    for kh in range(3):
        for kw in range(3):
            t = kh * 3 + kw
            for b in range(batch):
                for i in range(7):
                    for j in range(7):
                        src = (b * 9 + i + kh) * 9 + (j + kw)
                        dst = (b * 7 + i) * 7 + j
                        s3[t, src, dst] = 1.0
    return jnp.asarray(s3)


# ---------------------------------------------------------------------------
# Parameters (PyTorch layout) + one-time kernel-friendly re-layout
# ---------------------------------------------------------------------------
def init_params(in_channels, num_actions, key):
    ks = jax.random.split(key, 10)

    def u(k, shape, fan_in):
        bound = 1.0 / jnp.sqrt(fan_in)
        return jax.random.uniform(k, shape, jnp.float32, -bound, bound)

    p = {}
    p["w1"] = u(ks[0], (32, in_channels, 8, 8), in_channels * 64)
    p["b1"] = u(ks[1], (32,), in_channels * 64)
    p["w2"] = u(ks[2], (64, 32, 4, 4), 32 * 16)
    p["b2"] = u(ks[3], (64,), 32 * 16)
    p["w3"] = u(ks[4], (64, 64, 3, 3), 64 * 9)
    p["b3"] = u(ks[5], (64,), 64 * 9)
    p["w4"] = u(ks[6], (512, 7 * 7 * 64), 7 * 7 * 64)   # torch Linear: (out, in)
    p["b4"] = u(ks[7], (512,), 7 * 7 * 64)
    p["w5"] = u(ks[8], (num_actions, 512), 512)
    p["b5"] = u(ks[9], (num_actions,), 512)
    return p


def prepare_params(p, batch):
    """One-time (outside jit) re-layout of weights into GEMM-ready form."""
    def conv_w(w):  # (OC, C, KH, KW) -> (OC, KH*KW*C), columns ordered (kh,kw,c)
        OC = w.shape[0]
        return jnp.transpose(w, (0, 2, 3, 1)).reshape(OC, -1)

    num_actions, hidden = p["w5"].shape
    n_pad = max(128, ((num_actions + 127) // 128) * 128)
    w5p = jnp.zeros((hidden, n_pad), jnp.bfloat16).at[:, :num_actions].set(
        p["w5"].T.astype(jnp.bfloat16))
    b5p = jnp.zeros((1, n_pad), jnp.float32).at[0, :num_actions].set(p["b5"])
    return {
        "w1": conv_w(p["w1"]), "b1": p["b1"].reshape(-1, 1),
        "w2": conv_w(p["w2"]), "b2": p["b2"].reshape(-1, 1),
        # conv3 tap weights: w3t[kh*3+kw, oc, c] = w3[oc, c, kh, kw]
        "w3t": jnp.transpose(p["w3"], (2, 3, 0, 1)).reshape(9, 64, 64),
        "b3": p["b3"].reshape(-1, 1),
        "s3": _conv3_selection_matrices(batch),
        "w4t": p["w4"].T.astype(jnp.bfloat16),   # (3136, 512) bf16
        "b4": p["b4"].reshape(1, -1),
        "w5p": w5p, "b5p": b5p,
    }


# ---------------------------------------------------------------------------
# Forward pass (jitted); x follows the PyTorch NCHW convention
# ---------------------------------------------------------------------------
def network_forward(prep, x, *, num_actions):
    B = x.shape[0]
    y = jnp.transpose(x, (1, 0, 2, 3))                     # (C, B, H, W), once
    # conv1 (stride 4): XLA im2col + single-block GEMM kernel
    p1, oh, ow = _im2col_cm(y, 8, 4)
    y1 = conv_gemm_pallas(prep["w1"], p1, prep["b1"]).reshape(32, B, oh, ow)
    # conv2 (stride 2) + conv3 (stride 1) fused in one kernel
    p2, _, _ = _im2col_cm(y1, 4, 2)                        # (512, B*81)
    y3 = conv23_pallas(p2, prep["w2"], prep["b2"],
                       prep["w3t"], prep["b3"], prep["s3"])  # (64, B*49)
    # PyTorch x.reshape(B, -1) flattens NCHW as (c, h, w):
    flat = jnp.transpose(y3.reshape(64, B, 49), (1, 0, 2)).reshape(B, -1)
    # fused fc4+fc5 head (bf16 weights)
    out = mlp_head_pallas(flat, prep["w4t"], prep["b4"], prep["w5p"], prep["b5p"])
    return out[:, :num_actions]


# Pure-JAX reference (XLA conv, original PyTorch-layout f32 params).
def network_reference(params, x):
    def conv(x, w, b, s):
        y = jax.lax.conv_general_dilated(
            x, w, window_strides=(s, s), padding="VALID",
            dimension_numbers=("NCHW", "OIHW", "NCHW"))
        return jax.nn.relu(y + b.reshape(1, -1, 1, 1))

    B = x.shape[0]
    x = conv(x, params["w1"], params["b1"], 4)
    x = conv(x, params["w2"], params["b2"], 2)
    x = conv(x, params["w3"], params["b3"], 1)
    x = x.reshape(B, -1)
    x = jax.nn.relu(x @ params["w4"].T + params["b4"])
    return x @ params["w5"].T + params["b5"]


if __name__ == "__main__":
    in_channels, num_actions, batch = 4, 6, 2

    key = jax.random.PRNGKey(0)
    k_param, k_x = jax.random.split(key)
    params = init_params(in_channels, num_actions, k_param)
    prep = prepare_params(params, batch)   # one-time weight re-layout, outside jit
    # 84x84 input is required by the hard-coded 7*7*64 features of fc4.
    x = jax.random.uniform(k_x, (batch, in_channels, 84, 84), jnp.float32)

    fwd = jax.jit(functools.partial(network_forward, num_actions=num_actions))
    out = jax.block_until_ready(fwd(prep, x))

    ref = network_reference(params, x)
    assert out.shape == (batch, num_actions)
    assert jnp.allclose(out, ref, atol=1e-2, rtol=1e-2), \
        float(jnp.max(jnp.abs(out - ref)))

    print("KERNEL_OK")
</pallas_src>

<mosaic_0001>
module attributes {stable_mosaic.version = 11 : i64} {
  func.func @_conv_gemm_kernel(%arg0: i32, %arg1: memref<32x256xf32, #tpu.memory_space<vmem>>, %arg2: memref<256x800xf32, #tpu.memory_space<vmem>>, %arg3: memref<32x1xf32, #tpu.memory_space<vmem>>, %arg4: memref<32x800xf32, #tpu.memory_space<vmem>>) attributes {dimension_semantics = [#tpu.dimension_semantics<arbitrary>], iteration_bounds = array<i64: 1>, scalar_prefetch = 0 : i64, scratch_operands = 0 : i64, tpu.core_type = #tpu.core_type<tc>, window_params = [{pipeline_mode = #tpu.pipeline_mode<synchronous>, transform_indices = @transform_0, window_bounds = array<i64: 32, 256>}, {pipeline_mode = #tpu.pipeline_mode<synchronous>, transform_indices = @transform_1, window_bounds = array<i64: 256, 800>}, {pipeline_mode = #tpu.pipeline_mode<synchronous>, transform_indices = @transform_2, window_bounds = array<i64: 32, 1>}, {pipeline_mode = #tpu.pipeline_mode<synchronous>, transform_indices = @transform_3, window_bounds = array<i64: 32, 800>}]} {
    %c0 = arith.constant 0 : index
    %c0_0 = arith.constant 0 : index
    %0 = vector.load %arg1[%c0, %c0_0] : memref<32x256xf32, #tpu.memory_space<vmem>>, vector<32x256xf32>
    %c0_1 = arith.constant 0 : index
    %c0_2 = arith.constant 0 : index
    %1 = vector.load %arg2[%c0_1, %c0_2] : memref<256x800xf32, #tpu.memory_space<vmem>>, vector<256x800xf32>
    %cst = arith.constant dense<0.000000e+00> : vector<32x800xf32>
    %2 = tpu.matmul %0, %1, %cst {dimension_numbers = #tpu.dot_dimension_numbers<[1], [0], [0], [1], [0, 0, 1, 1], [], []>} : vector<32x256xf32>, vector<256x800xf32>, vector<32x800xf32> -> vector<32x800xf32>
    %c0_3 = arith.constant 0 : index
    %c0_4 = arith.constant 0 : index
    %3 = vector.load %arg3[%c0_3, %c0_4] : memref<32x1xf32, #tpu.memory_space<vmem>>, vector<32x1xf32>
    %4 = vector.broadcast %3 : vector<32x1xf32> to vector<32x800xf32>
    %5 = arith.addf %2, %4 : vector<32x800xf32>
    %cst_5 = arith.constant 0.000000e+00 : f32
    %6 = vector.broadcast %cst_5 : f32 to vector<32x800xf32>
    %7 = arith.maximumf %5, %6 : vector<32x800xf32>
    %c0_6 = arith.constant 0 : index
    %c0_7 = arith.constant 0 : index
    %8 = vector.load %arg4[%c0_6, %c0_7] : memref<32x800xf32, #tpu.memory_space<vmem>>, vector<32x800xf32>
    tpu.vector_store %arg4[%c0_6, %c0_7], %7 {strides = array<i32>} : memref<32x800xf32, #tpu.memory_space<vmem>>, vector<32x800xf32>,
    return
  }
  func.func @transform_0(%arg0: i32) -> (i32, i32) {
    %c0_i32 = arith.constant 0 : i32
    %c0_i32_0 = arith.constant 0 : i32
    %c0_i32_1 = arith.constant 0 : i32
    return %c0_i32, %c0_i32_0 : i32, i32
  }
  func.func @transform_1(%arg0: i32) -> (i32, i32) {
    %c0_i32 = arith.constant 0 : i32
    %c0_i32_0 = arith.constant 0 : i32
    %c0_i32_1 = arith.constant 0 : i32
    return %c0_i32, %c0_i32_0 : i32, i32
  }
  func.func @transform_2(%arg0: i32) -> (i32, i32) {
    %c0_i32 = arith.constant 0 : i32
    %c0_i32_0 = arith.constant 0 : i32
    %c0_i32_1 = arith.constant 0 : i32
    return %c0_i32, %c0_i32_0 : i32, i32
  }
  func.func @transform_3(%arg0: i32) -> (i32, i32) {
    %c0_i32 = arith.constant 0 : i32
    %c0_i32_0 = arith.constant 0 : i32
    %c0_i32_1 = arith.constant 0 : i32
    return %c0_i32, %c0_i32_0 : i32, i32
  }
}

module attributes {stable_mosaic.version = 11 : i64} {
  func.func @_conv23_kernel(%arg0: i32, %arg1: memref<512x162xf32, #tpu.memory_space<vmem>>, %arg2: memref<64x512xf32, #tpu.memory_space<vmem>>, %arg3: memref<64x1xf32, #tpu.memory_space<vmem>>, %arg4: memref<9x64x64xf32, #tpu.memory_space<vmem>>, %arg5: memref<64x1xf32, #tpu.memory_space<vmem>>, %arg6: memref<9x162x98xf32, #tpu.memory_space<vmem>>, %arg7: memref<64x98xf32, #tpu.memory_space<vmem>>) attributes {dimension_semantics = [#tpu.dimension_semantics<arbitrary>], iteration_bounds = array<i64: 1>, scalar_prefetch = 0 : i64, scratch_operands = 0 : i64, tpu.core_type = #tpu.core_type<tc>, window_params = [{pipeline_mode = #tpu.pipeline_mode<synchronous>, transform_indices = @transform_0, window_bounds = array<i64: 512, 162>}, {pipeline_mode = #tpu.pipeline_mode<synchronous>, transform_indices = @transform_1, window_bounds = array<i64: 64, 512>}, {pipeline_mode = #tpu.pipeline_mode<synchronous>, transform_indices = @transform_2, window_bounds = array<i64: 64, 1>}, {pipeline_mode = #tpu.pipeline_mode<synchronous>, transform_indices = @transform_3, window_bounds = array<i64: 9, 64, 64>}, {pipeline_mode = #tpu.pipeline_mode<synchronous>, transform_indices = @transform_4, window_bounds = array<i64: 64, 1>}, {pipeline_mode = #tpu.pipeline_mode<synchronous>, transform_indices = @transform_5, window_bounds = array<i64: 9, 162, 98>}, {pipeline_mode = #tpu.pipeline_mode<synchronous>, transform_indices = @transform_6, window_bounds = array<i64: 64, 98>}]} {
    %c0 = arith.constant 0 : index
    %c0_0 = arith.constant 0 : index
    %0 = vector.load %arg2[%c0, %c0_0] : memref<64x512xf32, #tpu.memory_space<vmem>>, vector<64x512xf32>
    %c0_1 = arith.constant 0 : index
    %c0_2 = arith.constant 0 : index
    %1 = vector.load %arg1[%c0_1, %c0_2] : memref<512x162xf32, #tpu.memory_space<vmem>>, vector<512x162xf32>
    %cst = arith.constant dense<0.000000e+00> : vector<64x162xf32>
    %2 = tpu.matmul %0, %1, %cst {dimension_numbers = #tpu.dot_dimension_numbers<[1], [0], [0], [1], [0, 0, 1, 1], [], []>} : vector<64x512xf32>, vector<512x162xf32>, vector<64x162xf32> -> vector<64x162xf32>
    %c0_3 = arith.constant 0 : index
    %c0_4 = arith.constant 0 : index
    %3 = vector.load %arg3[%c0_3, %c0_4] : memref<64x1xf32, #tpu.memory_space<vmem>>, vector<64x1xf32>
    %4 = vector.broadcast %3 : vector<64x1xf32> to vector<64x162xf32>
    %5 = arith.addf %2, %4 : vector<64x162xf32>
    %cst_5 = arith.constant 0.000000e+00 : f32
    %6 = vector.broadcast %cst_5 : f32 to vector<64x162xf32>
    %7 = arith.maximumf %5, %6 : vector<64x162xf32>
    %cst_6 = arith.constant 0.000000e+00 : f32
    %8 = vector.broadcast %cst_6 : f32 to vector<64x98xf32>
    %c0_7 = arith.constant 0 : index
    %c0_8 = arith.constant 0 : index
    %c0_9 = arith.constant 0 : index
    %9 = vector.load %arg6[%c0_7, %c0_8, %c0_9] : memref<9x162x98xf32, #tpu.memory_space<vmem>>, vector<1x162x98xf32>
    %10 = vector.shape_cast %9 : vector<1x162x98xf32> to vector<162x98xf32>
    %cst_10 = arith.constant dense<0.000000e+00> : vector<64x98xf32>
    %11 = tpu.matmul %7, %10, %cst_10 {dimension_numbers = #tpu.dot_dimension_numbers<[1], [0], [0], [1], [0, 0, 1, 1], [], []>} : vector<64x162xf32>, vector<162x98xf32>, vector<64x98xf32> -> vector<64x98xf32>
    %c0_11 = arith.constant 0 : index
    %c0_12 = arith.constant 0 : index
    %c0_13 = arith.constant 0 : index
    %12 = vector.load %arg4[%c0_11, %c0_12, %c0_13] : memref<9x64x64xf32, #tpu.memory_space<vmem>>, vector<1x64x64xf32>
    %13 = vector.shape_cast %12 : vector<1x64x64xf32> to vector<64x64xf32>
    %cst_14 = arith.constant dense<0.000000e+00> : vector<64x98xf32>
    %14 = tpu.matmul %13, %11, %cst_14 {dimension_numbers = #tpu.dot_dimension_numbers<[1], [0], [0], [1], [0, 0, 1, 1], [], []>} : vector<64x64xf32>, vector<64x98xf32>, vector<64x98xf32> -> vector<64x98xf32>
    %15 = arith.addf %8, %14 : vector<64x98xf32>
    %c1 = arith.constant 1 : index
    %c0_15 = arith.constant 0 : index
    %c0_16 = arith.constant 0 : index
    %16 = vector.load %arg6[%c1, %c0_15, %c0_16] : memref<9x162x98xf32, #tpu.memory_space<vmem>>, vector<1x162x98xf32>
    %17 = vector.shape_cast %16 : vector<1x162x98xf32> to vector<162x98xf32>
    %cst_17 = arith.constant dense<0.000000e+00> : vector<64x98xf32>
    %18 = tpu.matmul %7, %17, %cst_17 {dimension_numbers = #tpu.dot_dimension_numbers<[1], [0], [0], [1], [0, 0, 1, 1], [], []>} : vector<64x162xf32>, vector<162x98xf32>, vector<64x98xf32> -> vector<64x98xf32>
    %c1_18 = arith.constant 1 : index
    %c0_19 = arith.constant 0 : index
    %c0_20 = arith.constant 0 : index
    %19 = vector.load %arg4[%c1_18, %c0_19, %c0_20] : memref<9x64x64xf32, #tpu.memory_space<vmem>>, vector<1x64x64xf32>
    %20 = vector.shape_cast %19 : vector<1x64x64xf32> to vector<64x64xf32>
    %cst_21 = arith.constant dense<0.000000e+00> : vector<64x98xf32>
    %21 = tpu.matmul %20, %18, %cst_21 {dimension_numbers = #tpu.dot_dimension_numbers<[1], [0], [0], [1], [0, 0, 1, 1], [], []>} : vector<64x64xf32>, vector<64x98xf32>, vector<64x98xf32> -> vector<64x98xf32>
    %22 = arith.addf %15, %21 : vector<64x98xf32>
    %c2 = arith.constant 2 : index
    %c0_22 = arith.constant 0 : index
    %c0_23 = arith.constant 0 : index
    %23 = vector.load %arg6[%c2, %c0_22, %c0_23] : memref<9x162x98xf32, #tpu.memory_space<vmem>>, vector<1x162x98xf32>
    %24 = vector.shape_cast %23 : vector<1x162x98xf32> to vector<162x98xf32>
    %cst_24 = arith.constant dense<0.000000e+00> : vector<64x98xf32>
    %25 = tpu.matmul %7, %24, %cst_24 {dimension_numbers = #tpu.dot_dimension_numbers<[1], [0], [0], [1], [0, 0, 1, 1], [], []>} : vector<64x162xf32>, vector<162x98xf32>, vector<64x98xf32> -> vector<64x98xf32>
    %c2_25 = arith.constant 2 : index
    %c0_26 = arith.constant 0 : index
    %c0_27 = arith.constant 0 : index
    %26 = vector.load %arg4[%c2_25, %c0_26, %c0_27] : memref<9x64x64xf32, #tpu.memory_space<vmem>>, vector<1x64x64xf32>
    %27 = vector.shape_cast %26 : vector<1x64x64xf32> to vector<64x64xf32>
    %cst_28 = arith.constant dense<0.000000e+00> : vector<64x98xf32>
    %28 = tpu.matmul %27, %25, %cst_28 {dimension_numbers = #tpu.dot_dimension_numbers<[1], [0], [0], [1], [0, 0, 1, 1], [], []>} : vector<64x64xf32>, vector<64x98xf32>, vector<64x98xf32> -> vector<64x98xf32>
    %29 = arith.addf %22, %28 : vector<64x98xf32>
    %c3 = arith.constant 3 : index
    %c0_29 = arith.constant 0 : index
    %c0_30 = arith.constant 0 : index
    %30 = vector.load %arg6[%c3, %c0_29, %c0_30] : memref<9x162x98xf32, #tpu.memory_space<vmem>>, vector<1x162x98xf32>
    %31 = vector.shape_cast %30 : vector<1x162x98xf32> to vector<162x98xf32>
    %cst_31 = arith.constant dense<0.000000e+00> : vector<64x98xf32>
    %32 = tpu.matmul %7, %31, %cst_31 {dimension_numbers = #tpu.dot_dimension_numbers<[1], [0], [0], [1], [0, 0, 1, 1], [], []>} : vector<64x162xf32>, vector<162x98xf32>, vector<64x98xf32> -> vector<64x98xf32>
    %c3_32 = arith.constant 3 : index
    %c0_33 = arith.constant 0 : index
    %c0_34 = arith.constant 0 : index
    %33 = vector.load %arg4[%c3_32, %c0_33, %c0_34] : memref<9x64x64xf32, #tpu.memory_space<vmem>>, vector<1x64x64xf32>
    %34 = vector.shape_cast %33 : vector<1x64x64xf32> to vector<64x64xf32>
    %cst_35 = arith.constant dense<0.000000e+00> : vector<64x98xf32>
    %35 = tpu.matmul %34, %32, %cst_35 {dimension_numbers = #tpu.dot_dimension_numbers<[1], [0], [0], [1], [0, 0, 1, 1], [], []>} : vector<64x64xf32>, vector<64x98xf32>, vector<64x98xf32> -> vector<64x98xf32>
    %36 = arith.addf %29, %35 : vector<64x98xf32>
    %c4 = arith.constant 4 : index
    %c0_36 = arith.constant 0 : index
    %c0_37 = arith.constant 0 : index
    %37 = vector.load %arg6[%c4, %c0_36, %c0_37] : memref<9x162x98xf32, #tpu.memory_space<vmem>>, vector<1x162x98xf32>
    %38 = vector.shape_cast %37 : vector<1x162x98xf32> to vector<162x98xf32>
    %cst_38 = arith.constant dense<0.000000e+00> : vector<64x98xf32>
    %39 = tpu.matmul %7, %38, %cst_38 {dimension_numbers = #tpu.dot_dimension_numbers<[1], [0], [0], [1], [0, 0, 1, 1], [], []>} : vector<64x162xf32>, vector<162x98xf32>, vector<64x98xf32> -> vector<64x98xf32>
    %c4_39 = arith.constant 4 : index
    %c0_40 = arith.constant 0 : index
    %c0_41 = arith.constant 0 : index
    %40 = vector.load %arg4[%c4_39, %c0_40, %c0_41] : memref<9x64x64xf32, #tpu.memory_space<vmem>>, vector<1x64x64xf32>
    %41 = vector.shape_cast %40 : vector<1x64x64xf32> to vector<64x64xf32>
    %cst_42 = arith.constant dense<0.000000e+00> : vector<64x98xf32>
    %42 = tpu.matmul %41, %39, %cst_42 {dimension_numbers = #tpu.dot_dimension_numbers<[1], [0], [0], [1], [0, 0, 1, 1], [], []>} : vector<64x64xf32>, vector<64x98xf32>, vector<64x98xf32> -> vector<64x98xf32>
    %43 = arith.addf %36, %42 : vector<64x98xf32>
    %c5 = arith.constant 5 : index
    %c0_43 = arith.constant 0 : index
    %c0_44 = arith.constant 0 : index
    %44 = vector.load %arg6[%c5, %c0_43, %c0_44] : memref<9x162x98xf32, #tpu.memory_space<vmem>>, vector<1x162x98xf32>
    %45 = vector.shape_cast %44 : vector<1x162x98xf32> to vector<162x98xf32>
    %cst_45 = arith.constant dense<0.000000e+00> : vector<64x98xf32>
    %46 = tpu.matmul %7, %45, %cst_45 {dimension_numbers = #tpu.dot_dimension_numbers<[1], [0], [0], [1], [0, 0, 1, 1], [], []>} : vector<64x162xf32>, vector<162x98xf32>, vector<64x98xf32> -> vector<64x98xf32>
    %c5_46 = arith.constant 5 : index
    %c0_47 = arith.constant 0 : index
    %c0_48 = arith.constant 0 : index
    %47 = vector.load %arg4[%c5_46, %c0_47, %c0_48] : memref<9x64x64xf32, #tpu.memory_space<vmem>>, vector<1x64x64xf32>
    %48 = vector.shape_cast %47 : vector<1x64x64xf32> to vector<64x64xf32>
    %cst_49 = arith.constant dense<0.000000e+00> : vector<64x98xf32>
    %49 = tpu.matmul %48, %46, %cst_49 {dimension_numbers = #tpu.dot_dimension_numbers<[1], [0], [0], [1], [0, 0, 1, 1], [], []>} : vector<64x64xf32>, vector<64x98xf32>, vector<64x98xf32> -> vector<64x98xf32>
    %50 = arith.addf %43, %49 : vector<64x98xf32>
    %c6 = arith.constant 6 : index
    %c0_50 = arith.constant 0 : index
    %c0_51 = arith.constant 0 : index
    %51 = vector.load %arg6[%c6, %c0_50, %c0_51] : memref<9x162x98xf32, #tpu.memory_space<vmem>>, vector<1x162x98xf32>
    %52 = vector.shape_cast %51 : vector<1x162x98xf32> to vector<162x98xf32>
    %cst_52 = arith.constant dense<0.000000e+00> : vector<64x98xf32>
    %53 = tpu.matmul %7, %52, %cst_52 {dimension_numbers = #tpu.dot_dimension_numbers<[1], [0], [0], [1], [0, 0, 1, 1], [], []>} : vector<64x162xf32>, vector<162x98xf32>, vector<64x98xf32> -> vector<64x98xf32>
    %c6_53 = arith.constant 6 : index
    %c0_54 = arith.constant 0 : index
    %c0_55 = arith.constant 0 : index
    %54 = vector.load %arg4[%c6_53, %c0_54, %c0_55] : memref<9x64x64xf32, #tpu.memory_space<vmem>>, vector<1x64x64xf32>
    %55 = vector.shape_cast %54 : vector<1x64x64xf32> to vector<64x64xf32>
    %cst_56 = arith.constant dense<0.000000e+00> : vector<64x98xf32>
    %56 = tpu.matmul %55, %53, %cst_56 {dimension_numbers = #tpu.dot_dimension_numbers<[1], [0], [0], [1], [0, 0, 1, 1], [], []>} : vector<64x64xf32>, vector<64x98xf32>, vector<64x98xf32> -> vector<64x98xf32>
    %57 = arith.addf %50, %56 : vector<64x98xf32>
    %c7 = arith.constant 7 : index
    %c0_57 = arith.constant 0 : index
    %c0_58 = arith.constant 0 : index
    %58 = vector.load %arg6[%c7, %c0_57, %c0_58] : memref<9x162x98xf32, #tpu.memory_space<vmem>>, vector<1x162x98xf32>
    %59 = vector.shape_cast %58 : vector<1x162x98xf32> to vector<162x98xf32>
    %cst_59 = arith.constant dense<0.000000e+00> : vector<64x98xf32>
    %60 = tpu.matmul %7, %59, %cst_59 {dimension_numbers = #tpu.dot_dimension_numbers<[1], [0], [0], [1], [0, 0, 1, 1], [], []>} : vector<64x162xf32>, vector<162x98xf32>, vector<64x98xf32> -> vector<64x98xf32>
    %c7_60 = arith.constant 7 : index
    %c0_61 = arith.constant 0 : index
    %c0_62 = arith.constant 0 : index
    %61 = vector.load %arg4[%c7_60, %c0_61, %c0_62] : memref<9x64x64xf32, #tpu.memory_space<vmem>>, vector<1x64x64xf32>
    %62 = vector.shape_cast %61 : vector<1x64x64xf32> to vector<64x64xf32>
    %cst_63 = arith.constant dense<0.000000e+00> : vector<64x98xf32>
    %63 = tpu.matmul %62, %60, %cst_63 {dimension_numbers = #tpu.dot_dimension_numbers<[1], [0], [0], [1], [0, 0, 1, 1], [], []>} : vector<64x64xf32>, vector<64x98xf32>, vector<64x98xf32> -> vector<64x98xf32>
    %64 = arith.addf %57, %63 : vector<64x98xf32>
    %c8 = arith.constant 8 : index
    %c0_64 = arith.constant 0 : index
    %c0_65 = arith.constant 0 : index
    %65 = vector.load %arg6[%c8, %c0_64, %c0_65] : memref<9x162x98xf32, #tpu.memory_space<vmem>>, vector<1x162x98xf32>
    %66 = vector.shape_cast %65 : vector<1x162x98xf32> to vector<162x98xf32>
    %cst_66 = arith.constant dense<0.000000e+00> : vector<64x98xf32>
    %67 = tpu.matmul %7, %66, %cst_66 {dimension_numbers = #tpu.dot_dimension_numbers<[1], [0], [0], [1], [0, 0, 1, 1], [], []>} : vector<64x162xf32>, vector<162x98xf32>, vector<64x98xf32> -> vector<64x98xf32>
    %c8_67 = arith.constant 8 : index
    %c0_68 = arith.constant 0 : index
    %c0_69 = arith.constant 0 : index
    %68 = vector.load %arg4[%c8_67, %c0_68, %c0_69] : memref<9x64x64xf32, #tpu.memory_space<vmem>>, vector<1x64x64xf32>
    %69 = vector.shape_cast %68 : vector<1x64x64xf32> to vector<64x64xf32>
    %cst_70 = arith.constant dense<0.000000e+00> : vector<64x98xf32>
    %70 = tpu.matmul %69, %67, %cst_70 {dimension_numbers = #tpu.dot_dimension_numbers<[1], [0], [0], [1], [0, 0, 1, 1], [], []>} : vector<64x64xf32>, vector<64x98xf32>, vector<64x98xf32> -> vector<64x98xf32>
    %71 = arith.addf %64, %70 : vector<64x98xf32>
    %c0_71 = arith.constant 0 : index
    %c0_72 = arith.constant 0 : index
    %72 = vector.load %arg5[%c0_71, %c0_72] : memref<64x1xf32, #tpu.memory_space<vmem>>, vector<64x1xf32>
    %73 = vector.broadcast %72 : vector<64x1xf32> to vector<64x98xf32>
    %74 = arith.addf %71, %73 : vector<64x98xf32>
    %cst_73 = arith.constant 0.000000e+00 : f32
    %75 = vector.broadcast %cst_73 : f32 to vector<64x98xf32>
    %76 = arith.maximumf %74, %75 : vector<64x98xf32>
    %c0_74 = arith.constant 0 : index
    %c0_75 = arith.constant 0 : index
    %77 = vector.load %arg7[%c0_74, %c0_75] : memref<64x98xf32, #tpu.memory_space<vmem>>, vector<64x98xf32>
    tpu.vector_store %arg7[%c0_74, %c0_75], %76 {strides = array<i32>} : memref<64x98xf32, #tpu.memory_space<vmem>>, vector<64x98xf32>,
    return
  }
  func.func @transform_0(%arg0: i32) -> (i32, i32) {
    %c0_i32 = arith.constant 0 : i32
    %c0_i32_0 = arith.constant 0 : i32
    %c0_i32_1 = arith.constant 0 : i32
    return %c0_i32, %c0_i32_0 : i32, i32
  }
  func.func @transform_1(%arg0: i32) -> (i32, i32) {
    %c0_i32 = arith.constant 0 : i32
    %c0_i32_0 = arith.constant 0 : i32
    %c0_i32_1 = arith.constant 0 : i32
    return %c0_i32, %c0_i32_0 : i32, i32
  }
  func.func @transform_2(%arg0: i32) -> (i32, i32) {
    %c0_i32 = arith.constant 0 : i32
    %c0_i32_0 = arith.constant 0 : i32
    %c0_i32_1 = arith.constant 0 : i32
    return %c0_i32, %c0_i32_0 : i32, i32
  }
  func.func @transform_3(%arg0: i32) -> (i32, i32, i32) {
    %c0_i32 = arith.constant 0 : i32
    %c0_i32_0 = arith.constant 0 : i32
    %c0_i32_1 = arith.constant 0 : i32
    %c0_i32_2 = arith.constant 0 : i32
    return %c0_i32, %c0_i32_0, %c0_i32_1 : i32, i32, i32
  }
  func.func @transform_4(%arg0: i32) -> (i32, i32) {
    %c0_i32 = arith.constant 0 : i32
    %c0_i32_0 = arith.constant 0 : i32
    %c0_i32_1 = arith.constant 0 : i32
    return %c0_i32, %c0_i32_0 : i32, i32
  }
  func.func @transform_5(%arg0: i32) -> (i32, i32, i32) {
    %c0_i32 = arith.constant 0 : i32
    %c0_i32_0 = arith.constant 0 : i32
    %c0_i32_1 = arith.constant 0 : i32
    %c0_i32_2 = arith.constant 0 : i32
    return %c0_i32, %c0_i32_0, %c0_i32_1 : i32, i32, i32
  }
  func.func @transform_6(%arg0: i32) -> (i32, i32) {
    %c0_i32 = arith.constant 0 : i32
    %c0_i32_0 = arith.constant 0 : i32
    %c0_i32_1 = arith.constant 0 : i32
    return %c0_i32, %c0_i32_0 : i32, i32
  }
}

module attributes {stable_mosaic.version = 11 : i64} {
  func.func @_mlp_head_kernel(%arg0: i32, %arg1: memref<2x3136xf32, #tpu.memory_space<vmem>>, %arg2: memref<3136x512xbf16, #tpu.memory_space<vmem>>, %arg3: memref<1x512xf32, #tpu.memory_space<vmem>>, %arg4: memref<512x128xbf16, #tpu.memory_space<vmem>>, %arg5: memref<1x128xf32, #tpu.memory_space<vmem>>, %arg6: memref<2x128xf32, #tpu.memory_space<vmem>>) attributes {dimension_semantics = [#tpu.dimension_semantics<arbitrary>], iteration_bounds = array<i64: 1>, scalar_prefetch = 0 : i64, scratch_operands = 0 : i64, tpu.core_type = #tpu.core_type<tc>, window_params = [{pipeline_mode = #tpu.pipeline_mode<synchronous>, transform_indices = @transform_0, window_bounds = array<i64: 2, 3136>}, {pipeline_mode = #tpu.pipeline_mode<synchronous>, transform_indices = @transform_1, window_bounds = array<i64: 3136, 512>}, {pipeline_mode = #tpu.pipeline_mode<synchronous>, transform_indices = @transform_2, window_bounds = array<i64: 1, 512>}, {pipeline_mode = #tpu.pipeline_mode<synchronous>, transform_indices = @transform_3, window_bounds = array<i64: 512, 128>}, {pipeline_mode = #tpu.pipeline_mode<synchronous>, transform_indices = @transform_4, window_bounds = array<i64: 1, 128>}, {pipeline_mode = #tpu.pipeline_mode<synchronous>, transform_indices = @transform_5, window_bounds = array<i64: 2, 128>}]} {
    %c0 = arith.constant 0 : index
    %c0_0 = arith.constant 0 : index
    %0 = vector.load %arg1[%c0, %c0_0] : memref<2x3136xf32, #tpu.memory_space<vmem>>, vector<2x3136xf32>
    %1 = arith.truncf %0 : vector<2x3136xf32> to vector<2x3136xbf16>
    %c0_1 = arith.constant 0 : index
    %c0_2 = arith.constant 0 : index
    %2 = vector.load %arg2[%c0_1, %c0_2] : memref<3136x512xbf16, #tpu.memory_space<vmem>>, vector<3136x512xbf16>
    %cst = arith.constant dense<0.000000e+00> : vector<2x512xf32>
    %3 = tpu.matmul %1, %2, %cst {dimension_numbers = #tpu.dot_dimension_numbers<[1], [0], [0], [1], [0, 0, 1, 1], [], []>} : vector<2x3136xbf16>, vector<3136x512xbf16>, vector<2x512xf32> -> vector<2x512xf32>
    %c0_3 = arith.constant 0 : index
    %c0_4 = arith.constant 0 : index
    %4 = vector.load %arg3[%c0_3, %c0_4] : memref<1x512xf32, #tpu.memory_space<vmem>>, vector<1x512xf32>
    %5 = vector.broadcast %4 : vector<1x512xf32> to vector<2x512xf32>
    %6 = arith.addf %3, %5 : vector<2x512xf32>
    %cst_5 = arith.constant 0.000000e+00 : f32
    %7 = vector.broadcast %cst_5 : f32 to vector<2x512xf32>
    %8 = arith.maximumf %6, %7 : vector<2x512xf32>
    %9 = arith.truncf %8 : vector<2x512xf32> to vector<2x512xbf16>
    %c0_6 = arith.constant 0 : index
    %c0_7 = arith.constant 0 : index
    %10 = vector.load %arg4[%c0_6, %c0_7] : memref<512x128xbf16, #tpu.memory_space<vmem>>, vector<512x128xbf16>
    %cst_8 = arith.constant dense<0.000000e+00> : vector<2x128xf32>
    %11 = tpu.matmul %9, %10, %cst_8 {dimension_numbers = #tpu.dot_dimension_numbers<[1], [0], [0], [1], [0, 0, 1, 1], [], []>} : vector<2x512xbf16>, vector<512x128xbf16>, vector<2x128xf32> -> vector<2x128xf32>
    %c0_9 = arith.constant 0 : index
    %c0_10 = arith.constant 0 : index
    %12 = vector.load %arg5[%c0_9, %c0_10] : memref<1x128xf32, #tpu.memory_space<vmem>>, vector<1x128xf32>
    %13 = vector.broadcast %12 : vector<1x128xf32> to vector<2x128xf32>
    %14 = arith.addf %11, %13 : vector<2x128xf32>
    %c0_11 = arith.constant 0 : index
    %c0_12 = arith.constant 0 : index
    %15 = vector.load %arg6[%c0_11, %c0_12] : memref<2x128xf32, #tpu.memory_space<vmem>>, vector<2x128xf32>
    tpu.vector_store %arg6[%c0_11, %c0_12], %14 {strides = array<i32>} : memref<2x128xf32, #tpu.memory_space<vmem>>, vector<2x128xf32>,
    return
  }
  func.func @transform_0(%arg0: i32) -> (i32, i32) {
    %c0_i32 = arith.constant 0 : i32
    %c0_i32_0 = arith.constant 0 : i32
    %c0_i32_1 = arith.constant 0 : i32
    return %c0_i32, %c0_i32_0 : i32, i32
  }
  func.func @transform_1(%arg0: i32) -> (i32, i32) {
    %c0_i32 = arith.constant 0 : i32
    %c0_i32_0 = arith.constant 0 : i32
    %c0_i32_1 = arith.constant 0 : i32
    return %c0_i32, %c0_i32_0 : i32, i32
  }
  func.func @transform_2(%arg0: i32) -> (i32, i32) {
    %c0_i32 = arith.constant 0 : i32
    %c0_i32_0 = arith.constant 0 : i32
    %c0_i32_1 = arith.constant 0 : i32
    return %c0_i32, %c0_i32_0 : i32, i32
  }
  func.func @transform_3(%arg0: i32) -> (i32, i32) {
    %c0_i32 = arith.constant 0 : i32
    %c0_i32_0 = arith.constant 0 : i32
    %c0_i32_1 = arith.constant 0 : i32
    return %c0_i32, %c0_i32_0 : i32, i32
  }
  func.func @transform_4(%arg0: i32) -> (i32, i32) {
    %c0_i32 = arith.constant 0 : i32
    %c0_i32_0 = arith.constant 0 : i32
    %c0_i32_1 = arith.constant 0 : i32
    return %c0_i32, %c0_i32_0 : i32, i32
  }
  func.func @transform_5(%arg0: i32) -> (i32, i32) {
    %c0_i32 = arith.constant 0 : i32
    %c0_i32_0 = arith.constant 0 : i32
    %c0_i32_1 = arith.constant 0 : i32
    return %c0_i32, %c0_i32_0 : i32, i32
  }
}

</mosaic_0001>

<llo_original>
// kernel: network_forward.3
$region0: #{network_forward.3}
  #allocation0 [shape = 'u32[]', space=smem, size = 0x4, offset = 0x4, fixed_abs, tag = 'smem constant byte address 0x4 - core index']
  #allocation1 [shape = 'u32[144,128]{1,0:T(1,128)}', space=vmem, size = 0x12000, scoped, tag = 'internal scratch']
  %s0 = inlined_call_operand.vmem [shape: f32[32,256], index: 0, kind: input, shape index: {}]
  %s1 = inlined_call_operand.vmem [shape: f32[256,800], index: 1, kind: input, shape index: {}]
  %s2 = inlined_call_operand.vmem [shape: f32[32,1], index: 2, kind: input, shape index: {}]
  %s3 = inlined_call_operand.vmem [shape: f32[32,800], index: 3, kind: output, shape index: {}]
  %s4 = sld [smem:[#allocation0]]
  $region22: #{network_forward.3} parent=0
    _
  %s6 = ssub.s32 1, %s4
  %s7 = scalar_select 0, %s6, %s4
  // Predicated region
  $region2: #{network_forward.3} parent=0 // pred_check
    _
  $region3: #{network_forward.3} parent=0 // pred_check_branch
    %9 = sbr.rel (0) target = $region5
  $region4: #{network_forward.3} parent=0 // pred_region
    _
  $region5: #{network_forward.3} parent=0 // pred_fallthru
    _
  // Predicated region
  $region6: #{network_forward.3} parent=0 // pred_check
    _
  $region7: #{network_forward.3} parent=0 // pred_check_branch
    %11 = sbr.rel (0) target = $region9
  $region8: #{network_forward.3} parent=0 // pred_region
    _
  $region9: #{network_forward.3} parent=0 // pred_fallthru
    _
  // Predicated region
  $region10: #{network_forward.3} parent=0 // pred_check
    _
  $region11: #{network_forward.3} parent=0 // pred_check_branch
    %13 = sbr.rel (0) target = $region13
  $region12: #{network_forward.3} parent=0 // pred_region
    _
  $region13: #{network_forward.3} parent=0 // pred_fallthru
    _
  %v14 = vld [vmem:[%s0] sm:$0xff]
  %v15 = vld [vmem:[%s0 + $0x8] sm:$0xff]
  %v16 = vld [vmem:[%s0 + $0x10] sm:$0xff]
  %v17 = vld [vmem:[%s0 + $0x18] sm:$0xff]
  %v18 = vld [vmem:[%s0 + $0x20] sm:$0xff]
  %v19 = vld [vmem:[%s0 + $0x28] sm:$0xff]
  %v20 = vld [vmem:[%s0 + $0x30] sm:$0xff]
  %v21 = vld [vmem:[%s0 + $0x38] sm:$0xff]
  %v22 = vld [vmem:[%s1] sm:$0xff]
  %v23 = vld [vmem:[%s1 + $0x8] sm:$0xff]
  %v24 = vld [vmem:[%s1 + $0x10] sm:$0xff]
  %v25 = vld [vmem:[%s1 + $0x18] sm:$0xff]
  %v26 = vld [vmem:[%s1 + $0x20] sm:$0xff]
  %v27 = vld [vmem:[%s1 + $0x28] sm:$0xff]
  %v28 = vld [vmem:[%s1 + $0x30] sm:$0xff]
  %v29 = vld [vmem:[%s1 + $0x38] sm:$0xff]
  %v30 = vld [vmem:[%s1 + $0x40] sm:$0xff]
  %v31 = vld [vmem:[%s1 + $0x48] sm:$0xff]
  %v32 = vld [vmem:[%s1 + $0x50] sm:$0xff]
  %v33 = vld [vmem:[%s1 + $0x58] sm:$0xff]
  %v34 = vld [vmem:[%s1 + $0x60] sm:$0xff]
  %v35 = vld [vmem:[%s1 + $0x68] sm:$0xff]
  %v36 = vld [vmem:[%s1 + $0x70] sm:$0xff]
  %v37 = vld [vmem:[%s1 + $0x78] sm:$0xff]
  %v38 = vld [vmem:[%s1 + $0x80] sm:$0xff]
  %v39 = vld [vmem:[%s1 + $0x88] sm:$0xff]
  %v40 = vld [vmem:[%s1 + $0x90] sm:$0xff]
  %v41 = vld [vmem:[%s1 + $0x98] sm:$0xff]
  %v42 = vld [vmem:[%s1 + $0xa0] sm:$0xff]
  %v43 = vld [vmem:[%s1 + $0xa8] sm:$0xff]
  %v44 = vld [vmem:[%s1 + $0xb0] sm:$0xff]
  %v45 = vld [vmem:[%s1 + $0xb8] sm:$0xff]
  %v46 = vld [vmem:[%s1 + $0xc0] sm:$0xff]
  %v47 = vld [vmem:[%s1 + $0xc8] sm:$0xff]
  %v48 = vld [vmem:[%s1 + $0xd0] sm:$0xff]
  %v49 = vld [vmem:[%s1 + $0xd8] sm:$0xff]
  %v50 = vld [vmem:[%s1 + $0xe0] sm:$0xff]
  %v51 = vld [vmem:[%s1 + $0xe8] sm:$0xff]
  %v52 = vld [vmem:[%s1 + $0xf0] sm:$0xff]
  %v53 = vld [vmem:[%s1 + $0xf8] sm:$0xff]
  %v54 = vld [vmem:[%s1 + $0x100] sm:$0xff]
  %v55 = vld [vmem:[%s1 + $0x108] sm:$0xff]
  %v56 = vld [vmem:[%s1 + $0x110] sm:$0xff]
  %v57 = vld [vmem:[%s1 + $0x118] sm:$0xff]
  %v58 = vld [vmem:[%s1 + $0x120] sm:$0xff]
  %v59 = vld [vmem:[%s1 + $0x128] sm:$0xff]
  %v60 = vld [vmem:[%s1 + $0x130] sm:$0xff]
  %v61 = vld [vmem:[%s1 + $0x138] sm:$0xff]
  %v62 = vld [vmem:[%s1 + $0x140] sm:$0xff]
  %v63 = vld [vmem:[%s1 + $0x148] sm:$0xff]
  %v64 = vld [vmem:[%s1 + $0x150] sm:$0xff]
  %v65 = vld [vmem:[%s1 + $0x158] sm:$0xff]
  %v66 = vld [vmem:[%s1 + $0x160] sm:$0xff]
  %v67 = vld [vmem:[%s1 + $0x168] sm:$0xff]
  %v68 = vld [vmem:[%s1 + $0x170] sm:$0xff]
  %v69 = vld [vmem:[%s1 + $0x178] sm:$0xff]
  %v70 = vld [vmem:[%s1 + $0x180] sm:$0xff]
  %v71 = vld [vmem:[%s1 + $0x188] sm:$0xff]
  %v72 = vld [vmem:[%s1 + $0x190] sm:$0xff]
  %v73 = vld [vmem:[%s1 + $0x198] sm:$0xff]
  %v74 = vld [vmem:[%s1 + $0x1a0] sm:$0xff]
  %v75 = vld [vmem:[%s1 + $0x1a8] sm:$0xff]
  %v76 = vld [vmem:[%s1 + $0x1b0] sm:$0xff]
  %v77 = vld [vmem:[%s1 + $0x1b8] sm:$0xff]
  %v78 = vld [vmem:[%s1 + $0x1c0] sm:$0xff]
  %v79 = vld [vmem:[%s1 + $0x1c8] sm:$0xff]
  %v80 = vld [vmem:[%s1 + $0x1d0] sm:$0xff]
  %v81 = vld [vmem:[%s1 + $0x1d8] sm:$0xff]
  %v82 = vld [vmem:[%s1 + $0x1e0] sm:$0xff]
  %v83 = vld [vmem:[%s1 + $0x1e8] sm:$0xff]
  %v84 = vld [vmem:[%s1 + $0x1f0] sm:$0xff]
  %v85 = vld [vmem:[%s1 + $0x1f8] sm:$0xff]
  %v86 = vld [vmem:[%s1 + $0x200] sm:$0xff]
  %v87 = vld [vmem:[%s1 + $0x208] sm:$0xff]
  %v88 = vld [vmem:[%s1 + $0x210] sm:$0xff]
  %v89 = vld [vmem:[%s1 + $0x218] sm:$0xff]
  %v90 = vld [vmem:[%s1 + $0x220] sm:$0xff]
  %v91 = vld [vmem:[%s1 + $0x228] sm:$0xff]
  %v92 = vld [vmem:[%s1 + $0x230] sm:$0xff]
  %v93 = vld [vmem:[%s1 + $0x238] sm:$0xff]
  %v94 = vld [vmem:[%s1 + $0x240] sm:$0xff]
  %v95 = vld [vmem:[%s1 + $0x248] sm:$0xff]
  %v96 = vld [vmem:[%s1 + $0x250] sm:$0xff]
  %v97 = vld [vmem:[%s1 + $0x258] sm:$0xff]
  %v98 = vld [vmem:[%s1 + $0x260] sm:$0xff]
  %v99 = vld [vmem:[%s1 + $0x268] sm:$0xff]
  %v100 = vld [vmem:[%s1 + $0x270] sm:$0xff]
  %v101 = vld [vmem:[%s1 + $0x278] sm:$0xff]
  %v102 = vld [vmem:[%s1 + $0x280] sm:$0xff]
  %v103 = vld [vmem:[%s1 + $0x288] sm:$0xff]
  %v104 = vld [vmem:[%s1 + $0x290] sm:$0xff]
  %v105 = vld [vmem:[%s1 + $0x298] sm:$0xff]
  %v106 = vld [vmem:[%s1 + $0x2a0] sm:$0xff]
  %v107 = vld [vmem:[%s1 + $0x2a8] sm:$0xff]
  %v108 = vld [vmem:[%s1 + $0x2b0] sm:$0xff]
  %v109 = vld [vmem:[%s1 + $0x2b8] sm:$0xff]
  %v110 = vld [vmem:[%s1 + $0x2c0] sm:$0xff]
  %v111 = vld [vmem:[%s1 + $0x2c8] sm:$0xff]
  %v112 = vld [vmem:[%s1 + $0x2d0] sm:$0xff]
  %v113 = vld [vmem:[%s1 + $0x2d8] sm:$0xff]
  %v114 = vld [vmem:[%s1 + $0x2e0] sm:$0xff]
  %v115 = vld [vmem:[%s1 + $0x2e8] sm:$0xff]
  %v116 = vld [vmem:[%s1 + $0x2f0] sm:$0xff]
  %v117 = vld [vmem:[%s1 + $0x2f8] sm:$0xff]
  %v118 = vld [vmem:[%s1 + $0x300] sm:$0xff]
  %v119 = vld [vmem:[%s1 + $0x308] sm:$0xff]
  %v120 = vld [vmem:[%s1 + $0x310] sm:$0xff]
  %v121 = vld [vmem:[%s1 + $0x318] sm:$0xff]
  %v122 = vld [vmem:[%s1 + $0x320] sm:$0xff]
  %v123 = vld [vmem:[%s1 + $0x328] sm:$0xff]
  %v124 = vld [vmem:[%s1 + $0x330] sm:$0xff]
  %v125 = vld [vmem:[%s1 + $0x338] sm:$0xff]
  %v126 = vld [vmem:[%s1 + $0x340] sm:$0xff]
  %v127 = vld [vmem:[%s1 + $0x348] sm:$0xff]
  %v128 = vld [vmem:[%s1 + $0x350] sm:$0xff]
  %v129 = vld [vmem:[%s1 + $0x358] sm:$0xff]
  %v130 = vld [vmem:[%s1 + $0x360] sm:$0xff]
  %v131 = vld [vmem:[%s1 + $0x368] sm:$0xff]
  %v132 = vld [vmem:[%s1 + $0x370] sm:$0xff]
  %v133 = vld [vmem:[%s1 + $0x378] sm:$0xff]
  %v134 = vld [vmem:[%s1 + $0x380] sm:$0xff]
  %v135 = vld [vmem:[%s1 + $0x388] sm:$0xff]
  %v136 = vld [vmem:[%s1 + $0x390] sm:$0xff]
  %v137 = vld [vmem:[%s1 + $0x398] sm:$0xff]
  %v138 = vld [vmem:[%s1 + $0x3a0] sm:$0xff]
  %v139 = vld [vmem:[%s1 + $0x3a8] sm:$0xff]
  %v140 = vld [vmem:[%s1 + $0x3b0] sm:$0xff]
  %v141 = vld [vmem:[%s1 + $0x3b8] sm:$0xff]
  %v142 = vld [vmem:[%s1 + $0x3c0] sm:$0xff]
  %v143 = vld [vmem:[%s1 + $0x3c8] sm:$0xff]
  %v144 = vld [vmem:[%s1 + $0x3d0] sm:$0xff]
  %v145 = vld [vmem:[%s1 + $0x3d8] sm:$0xff]
  %v146 = vld [vmem:[%s1 + $0x3e0] sm:$0xff]
  %v147 = vld [vmem:[%s1 + $0x3e8] sm:$0xff]
  %v148 = vld [vmem:[%s1 + $0x3f0] sm:$0xff]
  %v149 = vld [vmem:[%s1 + $0x3f8] sm:$0xff]
  %v150 = vld [vmem:[%s1 + $0x400] sm:$0xff]
  %v151 = vld [vmem:[%s1 + $0x408] sm:$0xff]
  %v152 = vld [vmem:[%s1 + $0x410] sm:$0xff]
  %v153 = vld [vmem:[%s1 + $0x418] sm:$0xff]
  %v154 = vld [vmem:[%s1 + $0x420] sm:$0xff]
  %v155 = vld [vmem:[%s1 + $0x428] sm:$0xff]
  %v156 = vld [vmem:[%s1 + $0x430] sm:$0xff]
  %v157 = vld [vmem:[%s1 + $0x438] sm:$0xff]
  %v158 = vld [vmem:[%s1 + $0x440] sm:$0xff]
  %v159 = vld [vmem:[%s1 + $0x448] sm:$0xff]
  %v160 = vld [vmem:[%s1 + $0x450] sm:$0xff]
  %v161 = vld [vmem:[%s1 + $0x458] sm:$0xff]
  %v162 = vld [vmem:[%s1 + $0x460] sm:$0xff]
  %v163 = vld [vmem:[%s1 + $0x468] sm:$0xff]
  %v164 = vld [vmem:[%s1 + $0x470] sm:$0xff]
  %v165 = vld [vmem:[%s1 + $0x478] sm:$0xff]
  %v166 = vld [vmem:[%s1 + $0x480] sm:$0xff]
  %v167 = vld [vmem:[%s1 + $0x488] sm:$0xff]
  %v168 = vld [vmem:[%s1 + $0x490] sm:$0xff]
  %v169 = vld [vmem:[%s1 + $0x498] sm:$0xff]
  %v170 = vld [vmem:[%s1 + $0x4a0] sm:$0xff]
  %v171 = vld [vmem:[%s1 + $0x4a8] sm:$0xff]
  %v172 = vld [vmem:[%s1 + $0x4b0] sm:$0xff]
  %v173 = vld [vmem:[%s1 + $0x4b8] sm:$0xff]
  %v174 = vld [vmem:[%s1 + $0x4c0] sm:$0xff]
  %v175 = vld [vmem:[%s1 + $0x4c8] sm:$0xff]
  %v176 = vld [vmem:[%s1 + $0x4d0] sm:$0xff]
  %v177 = vld [vmem:[%s1 + $0x4d8] sm:$0xff]
  %v178 = vld [vmem:[%s1 + $0x4e0] sm:$0xff]
  %v179 = vld [vmem:[%s1 + $0x4e8] sm:$0xff]
  %v180 = vld [vmem:[%s1 + $0x4f0] sm:$0xff]
  %v181 = vld [vmem:[%s1 + $0x4f8] sm:$0xff]
  %v182 = vld [vmem:[%s1 + $0x500] sm:$0xff]
  %v183 = vld [vmem:[%s1 + $0x508] sm:$0xff]
  %v184 = vld [vmem:[%s1 + $0x510] sm:$0xff]
  %v185 = vld [vmem:[%s1 + $0x518] sm:$0xff]
  %v186 = vld [vmem:[%s1 + $0x520] sm:$0xff]
  %v187 = vld [vmem:[%s1 + $0x528] sm:$0xff]
  %v188 = vld [vmem:[%s1 + $0x530] sm:$0xff]
  %v189 = vld [vmem:[%s1 + $0x538] sm:$0xff]
  %v190 = vld [vmem:[%s1 + $0x540] sm:$0xff]
  %v191 = vld [vmem:[%s1 + $0x548] sm:$0xff]
  %v192 = vld [vmem:[%s1 + $0x550] sm:$0xff]
  %v193 = vld [vmem:[%s1 + $0x558] sm:$0xff]
  %v194 = vld [vmem:[%s1 + $0x560] sm:$0xff]
  %v195 = vld [vmem:[%s1 + $0x568] sm:$0xff]
  %v196 = vld [vmem:[%s1 + $0x570] sm:$0xff]
  %v197 = vld [vmem:[%s1 + $0x578] sm:$0xff]
  %v198 = vld [vmem:[%s1 + $0x580] sm:$0xff]
  %v199 = vld [vmem:[%s1 + $0x588] sm:$0xff]
  %v200 = vld [vmem:[%s1 + $0x590] sm:$0xff]
  %v201 = vld [vmem:[%s1 + $0x598] sm:$0xff]
  %v202 = vld [vmem:[%s1 + $0x5a0] sm:$0xff]
  %v203 = vld [vmem:[%s1 + $0x5a8] sm:$0xff]
  %v204 = vld [vmem:[%s1 + $0x5b0] sm:$0xff]
  %v205 = vld [vmem:[%s1 + $0x5b8] sm:$0xff]
  %v206 = vld [vmem:[%s1 + $0x5c0] sm:$0xff]
  %v207 = vld [vmem:[%s1 + $0x5c8] sm:$0xff]
  %v208 = vld [vmem:[%s1 + $0x5d0] sm:$0xff]
  %v209 = vld [vmem:[%s1 + $0x5d8] sm:$0xff]
  %v210 = vld [vmem:[%s1 + $0x5e0] sm:$0xff]
  %v211 = vld [vmem:[%s1 + $0x5e8] sm:$0xff]
  %v212 = vld [vmem:[%s1 + $0x5f0] sm:$0xff]
  %v213 = vld [vmem:[%s1 + $0x5f8] sm:$0xff]
  %v214 = vld [vmem:[%s1 + $0x600] sm:$0xff]
  %v215 = vld [vmem:[%s1 + $0x608] sm:$0xff]
  %v216 = vld [vmem:[%s1 + $0x610] sm:$0xff]
  %v217 = vld [vmem:[%s1 + $0x618] sm:$0xff]
  %v218 = vld [vmem:[%s1 + $0x620] sm:$0xff]
  %v219 = vld [vmem:[%s1 + $0x628] sm:$0xff]
  %v220 = vld [vmem:[%s1 + $0x630] sm:$0xff]
  %v221 = vld [vmem:[%s1 + $0x638] sm:$0xff]
  %v222 = vld [vmem:[%s1 + $0x640] sm:$0xff]
  %v223 = vld [vmem:[%s1 + $0x648] sm:$0xff]
  %v224 = vld [vmem:[%s1 + $0x650] sm:$0xff]
  %v225 = vld [vmem:[%s1 + $0x658] sm:$0xff]
  %v226 = vld [vmem:[%s1 + $0x660] sm:$0xff]
  %v227 = vld [vmem:[%s1 + $0x668] sm:$0xff]
  %v228 = vld [vmem:[%s1 + $0x670] sm:$0xff]
  %v229 = vld [vmem:[%s1 + $0x678] sm:$0xff]
  %v230 = vld [vmem:[%s1 + $0x680] sm:$0xff]
  %v231 = vld [vmem:[%s1 + $0x688] sm:$0xff]
  %v232 = vld [vmem:[%s1 + $0x690] sm:$0xff]
  %v233 = vld [vmem:[%s1 + $0x698] sm:$0xff]
  %v234 = vld [vmem:[%s1 + $0x6a0] sm:$0xff]
  %v235 = vld [vmem:[%s1 + $0x6a8] sm:$0xff]
  %v236 = vld [vmem:[%s1 + $0x6b0] sm:$0xff]
  %v237 = vld [vmem:[%s1 + $0x6b8] sm:$0xff]
  %v238 = vld [vmem:[%s1 + $0x6c0] sm:$0xff]
  %v239 = vld [vmem:[%s1 + $0x6c8] sm:$0xff]
  %v240 = vld [vmem:[%s1 + $0x6d0] sm:$0xff]
  %v241 = vld [vmem:[%s1 + $0x6d8] sm:$0xff]
  %v242 = vld [vmem:[%s1 + $0x6e0] sm:$0xff]
  %v243 = vld [vmem:[%s1 + $0x6e8] sm:$0xff]
  %v244 = vld [vmem:[%s1 + $0x6f0] sm:$0xff]
  %v245 = vld [vmem:[%s1 + $0x6f8] sm:$0xff]
  %v246 = vld [vmem:[%s2] sm:$0xff]
  %v247 = vld [vmem:[%s2 + $0x8] sm:$0xff]
  %v248 = vld [vmem:[%s2 + $0x10] sm:$0xff]
  %v249 = vld [vmem:[%s2 + $0x18] sm:$0xff]
  %251 = vset.pattern.permute.xlu0 0
  %252 = vperm.xlu0 %251, %v246
  %v253 = vpop.permute.xlu0 %252
  %256 = vset.pattern.permute.xlu0 0
  %257 = vperm.xlu0 %256, %v247
  %v258 = vpop.permute.xlu0 %257
  %261 = vset.pattern.permute.xlu0 0
  %262 = vperm.xlu0 %261, %v248
  %v263 = vpop.permute.xlu0 %262
  %266 = vset.pattern.permute.xlu0 0
  %267 = vperm.xlu0 %266, %v249
  %v268 = vpop.permute.xlu0 %267
  %270 = vmatprep.subr.mxu0 %v128
  %271 = vmatpush1.msra.mxu0 %v127
  %272 = vmatprep.subr.mxu0 %v121
  %273 = vmatpush1.msra.mxu0 %v120
  %274 = vmatprep.subr.mxu0 %v114
  %275 = vmatpush1.msra.mxu0 %v113
  %276 = vmatprep.subr.mxu0 %v107
  %277 = vmatpush1.msra.mxu0 %v106
  %278 = vmatprep.subr.mxu0 %v100
  %279 = vmatpush1.msra.mxu0 %v99
  %280 = vmatprep.subr.mxu0 %v93
  %281 = vmatpush1.msra.mxu0 %v92
  %282 = vmatprep.subr.mxu0 %v86
  %283 = vmatpush1.msra.mxu0 %v85
  %284 = vmatprep.subr.mxu0 %v79
  %285 = vmatpush1.msra.mxu0 %v78
  %286 = vmatprep.subr.mxu0 %v72
  %287 = vmatpush1.msra.mxu0 %v71
  %288 = vmatprep.subr.mxu0 %v65
  %289 = vmatpush1.msra.mxu0 %v64
  %290 = vmatprep.subr.mxu0 %v58
  %291 = vmatpush1.msra.mxu0 %v57
  %292 = vmatprep.subr.mxu0 %v51
  %293 = vmatpush1.msra.mxu0 %v50
  %294 = vmatprep.subr.mxu0 %v44
  %295 = vmatpush1.msra.mxu0 %v43
  %296 = vmatprep.subr.mxu0 %v37
  %297 = vmatpush1.msra.mxu0 %v36
  %298 = vmatprep.subr.mxu0 %v30
  %299 = vmatpush1.msra.mxu0 %v29
  %300 = vmatprep.subr.mxu0 %v23
  %301 = vmatpush1.msra.mxu0 %v22
  %302 = vmatprep.subr.mxu0 %v240
  %303 = vmatpush2.msra.mxu0 %v239
  %304 = vmatprep.subr.mxu0 %v233
  %305 = vmatpush2.msra.mxu0 %v232
  %306 = vmatprep.subr.mxu0 %v226
  %307 = vmatpush2.msra.mxu0 %v225
  %308 = vmatprep.subr.mxu0 %v219
  %309 = vmatpush2.msra.mxu0 %v218
  %310 = vmatprep.subr.mxu0 %v212
  %311 = vmatpush2.msra.mxu0 %v211
  %312 = vmatprep.subr.mxu0 %v205
  %313 = vmatpush2.msra.mxu0 %v204
  %314 = vmatprep.subr.mxu0 %v198
  %315 = vmatpush2.msra.mxu0 %v197
  %316 = vmatprep.subr.mxu0 %v191
  %317 = vmatpush2.msra.mxu0 %v190
  %318 = vmatprep.subr.mxu0 %v184
  %319 = vmatpush2.msra.mxu0 %v183
  %320 = vmatprep.subr.mxu0 %v177
  %321 = vmatpush2.msra.mxu0 %v176
  %322 = vmatprep.subr.mxu0 %v170
  %323 = vmatpush2.msra.mxu0 %v169
  %324 = vmatprep.subr.mxu0 %v163
  %325 = vmatpush2.msra.mxu0 %v162
  %326 = vmatprep.subr.mxu0 %v156
  %327 = vmatpush2.msra.mxu0 %v155
  %328 = vmatprep.subr.mxu0 %v149
  %329 = vmatpush2.msra.mxu0 %v148
  %330 = vmatprep.subr.mxu0 %v142
  %331 = vmatpush2.msra.mxu0 %v141
  %332 = vmatprep.subr.mxu0 %v135
  %333 = vmatpush2.msra.mxu0 %v134
  %334 = vmatprep.mubr.f32.mxu0 %v15
  %335 = vmatmul.mubr.f32.gmra.mxu0 %v14
  %v336 = vpop.f32.mrf.mxu0
  %v337 = vadd.f32 %v253, %v336
  %v338 = vpop.f32.mrf.mxu0
  %v339 = vadd.f32 %v253, %v338
  %340 = vmatprep.mubr.f32.mxu0 %v17
  %341 = vmatmul.mubr.f32.gmra.mxu0 %v16
  %v342 = vpop.f32.mrf.mxu0
  %v343 = vadd.f32 %v258, %v342
  %v344 = vpop.f32.mrf.mxu0
  %v345 = vadd.f32 %v258, %v344
  %346 = vmatprep.mubr.f32.mxu0 %v19
  %347 = vmatmul.mubr.f32.gmra.mxu0 %v18
  %v348 = vpop.f32.mrf.mxu0
  %v349 = vadd.f32 %v263, %v348
  %v350 = vpop.f32.mrf.mxu0
  %v351 = vadd.f32 %v263, %v350
  %352 = vmatprep.mubr.f32.mxu0 %v21
  %353 = vmatmul.mubr.f32.gmra.mxu0 %v20
  %v354 = vpop.f32.mrf.mxu0
  %v355 = vadd.f32 %v268, %v354
  %v356 = vpop.f32.mrf.mxu0
  %v357 = vadd.f32 %v268, %v356
  %358 = vdwg.mxu0
  %359 = vmatprep.subr.mxu0 %v130
  %360 = vmatpush1.msra.mxu0 %v129
  %361 = vmatprep.subr.mxu0 %v123
  %362 = vmatpush1.msra.mxu0 %v122
  %363 = vmatprep.subr.mxu0 %v116
  %364 = vmatpush1.msra.mxu0 %v115
  %365 = vmatprep.subr.mxu0 %v109
  %366 = vmatpush1.msra.mxu0 %v108
  %367 = vmatprep.subr.mxu0 %v102
  %368 = vmatpush1.msra.mxu0 %v101
  %369 = vmatprep.subr.mxu0 %v95
  %370 = vmatpush1.msra.mxu0 %v94
  %371 = vmatprep.subr.mxu0 %v88
  %372 = vmatpush1.msra.mxu0 %v87
  %373 = vmatprep.subr.mxu0 %v81
  %374 = vmatpush1.msra.mxu0 %v80
  %375 = vmatprep.subr.mxu0 %v74
  %376 = vmatpush1.msra.mxu0 %v73
  %377 = vmatprep.subr.mxu0 %v67
  %378 = vmatpush1.msra.mxu0 %v66
  %379 = vmatprep.subr.mxu0 %v60
  %380 = vmatpush1.msra.mxu0 %v59
  %381 = vmatprep.subr.mxu0 %v53
  %382 = vmatpush1.msra.mxu0 %v52
  %383 = vmatprep.subr.mxu0 %v46
  %384 = vmatpush1.msra.mxu0 %v45
  %385 = vmatprep.subr.mxu0 %v39
  %386 = vmatpush1.msra.mxu0 %v38
  %387 = vmatprep.subr.mxu0 %v32
  %388 = vmatpush1.msra.mxu0 %v31
  %389 = vmatprep.subr.mxu0 %v25
  %390 = vmatpush1.msra.mxu0 %v24
  %391 = vmatprep.subr.mxu0 %v242
  %392 = vmatpush2.msra.mxu0 %v241
  %393 = vmatprep.subr.mxu0 %v235
  %394 = vmatpush2.msra.mxu0 %v234
  %395 = vmatprep.subr.mxu0 %v228
  %396 = vmatpush2.msra.mxu0 %v227
  %397 = vmatprep.subr.mxu0 %v221
  %398 = vmatpush2.msra.mxu0 %v220
  %399 = vmatprep.subr.mxu0 %v214
  %400 = vmatpush2.msra.mxu0 %v213
  %401 = vmatprep.subr.mxu0 %v207
  %402 = vmatpush2.msra.mxu0 %v206
  %403 = vmatprep.subr.mxu0 %v200
  %404 = vmatpush2.msra.mxu0 %v199
  %405 = vmatprep.subr.mxu0 %v193
  %406 = vmatpush2.msra.mxu0 %v192
  %407 = vmatprep.subr.mxu0 %v186
  %408 = vmatpush2.msra.mxu0 %v185
  %409 = vmatprep.subr.mxu0 %v179
  %410 = vmatpush2.msra.mxu0 %v178
  %411 = vmatprep.subr.mxu0 %v172
  %412 = vmatpush2.msra.mxu0 %v171
  %413 = vmatprep.subr.mxu0 %v165
  %414 = vmatpush2.msra.mxu0 %v164
  %415 = vmatprep.subr.mxu0 %v158
  %416 = vmatpush2.msra.mxu0 %v157
  %417 = vmatprep.subr.mxu0 %v151
  %418 = vmatpush2.msra.mxu0 %v150
  %419 = vmatprep.subr.mxu0 %v144
  %420 = vmatpush2.msra.mxu0 %v143
  %421 = vmatprep.subr.mxu0 %v137
  %422 = vmatpush2.msra.mxu0 %v136
  %423 = vmatprep.mubr.f32.mxu0 %v15
  %424 = vmatmul.mubr.f32.gmra.mxu0 %v14
  %v425 = vpop.f32.mrf.mxu0
  %v426 = vadd.f32 %v253, %v425
  %v427 = vpop.f32.mrf.mxu0
  %v428 = vadd.f32 %v253, %v427
  %429 = vmatprep.mubr.f32.mxu0 %v17
  %430 = vmatmul.mubr.f32.gmra.mxu0 %v16
  %v431 = vpop.f32.mrf.mxu0
  %v432 = vadd.f32 %v258, %v431
  %v433 = vpop.f32.mrf.mxu0
  %v434 = vadd.f32 %v258, %v433
  %435 = vmatprep.mubr.f32.mxu0 %v19
  %436 = vmatmul.mubr.f32.gmra.mxu0 %v18
  %v437 = vpop.f32.mrf.mxu0
  %v438 = vadd.f32 %v263, %v437
  %v439 = vpop.f32.mrf.mxu0
  %v440 = vadd.f32 %v263, %v439
  %441 = vmatprep.mubr.f32.mxu0 %v21
  %442 = vmatmul.mubr.f32.gmra.mxu0 %v20
  %v443 = vpop.f32.mrf.mxu0
  %v444 = vadd.f32 %v268, %v443
  %v445 = vpop.f32.mrf.mxu0
  %v446 = vadd.f32 %v268, %v445
  %447 = vdwg.mxu0
  %448 = vmatprep.subr.mxu0 %v132
  %449 = vmatpush1.msra.mxu0 %v131
  %450 = vmatprep.subr.mxu0 %v125
  %451 = vmatpush1.msra.mxu0 %v124
  %452 = vmatprep.subr.mxu0 %v118
  %453 = vmatpush1.msra.mxu0 %v117
  %454 = vmatprep.subr.mxu0 %v111
  %455 = vmatpush1.msra.mxu0 %v110
  %456 = vmatprep.subr.mxu0 %v104
  %457 = vmatpush1.msra.mxu0 %v103
  %458 = vmatprep.subr.mxu0 %v97
  %459 = vmatpush1.msra.mxu0 %v96
  %460 = vmatprep.subr.mxu0 %v90
  %461 = vmatpush1.msra.mxu0 %v89
  %462 = vmatprep.subr.mxu0 %v83
  %463 = vmatpush1.msra.mxu0 %v82
  %464 = vmatprep.subr.mxu0 %v76
  %465 = vmatpush1.msra.mxu0 %v75
  %466 = vmatprep.subr.mxu0 %v69
  %467 = vmatpush1.msra.mxu0 %v68
  %468 = vmatprep.subr.mxu0 %v62
  %469 = vmatpush1.msra.mxu0 %v61
  %470 = vmatprep.subr.mxu0 %v55
  %471 = vmatpush1.msra.mxu0 %v54
  %472 = vmatprep.subr.mxu0 %v48
  %473 = vmatpush1.msra.mxu0 %v47
  %474 = vmatprep.subr.mxu0 %v41
  %475 = vmatpush1.msra.mxu0 %v40
  %476 = vmatprep.subr.mxu0 %v34
  %477 = vmatpush1.msra.mxu0 %v33
  %478 = vmatprep.subr.mxu0 %v27
  %479 = vmatpush1.msra.mxu0 %v26
  %480 = vmatprep.subr.mxu0 %v244
  %481 = vmatpush2.msra.mxu0 %v243
  %482 = vmatprep.subr.mxu0 %v237
  %483 = vmatpush2.msra.mxu0 %v236
  %484 = vmatprep.subr.mxu0 %v230
  %485 = vmatpush2.msra.mxu0 %v229
  %486 = vmatprep.subr.mxu0 %v223
  %487 = vmatpush2.msra.mxu0 %v222
  %488 = vmatprep.subr.mxu0 %v216
  %489 = vmatpush2.msra.mxu0 %v215
  %490 = vmatprep.subr.mxu0 %v209
  %491 = vmatpush2.msra.mxu0 %v208
  %492 = vmatprep.subr.mxu0 %v202
  %493 = vmatpush2.msra.mxu0 %v201
  %494 = vmatprep.subr.mxu0 %v195
  %495 = vmatpush2.msra.mxu0 %v194
  %496 = vmatprep.subr.mxu0 %v188
  %497 = vmatpush2.msra.mxu0 %v187
  %498 = vmatprep.subr.mxu0 %v181
  %499 = vmatpush2.msra.mxu0 %v180
  %500 = vmatprep.subr.mxu0 %v174
  %501 = vmatpush2.msra.mxu0 %v173
  %502 = vmatprep.subr.mxu0 %v167
  %503 = vmatpush2.msra.mxu0 %v166
  %504 = vmatprep.subr.mxu0 %v160
  %505 = vmatpush2.msra.mxu0 %v159
  %506 = vmatprep.subr.mxu0 %v153
  %507 = vmatpush2.msra.mxu0 %v152
  %508 = vmatprep.subr.mxu0 %v146
  %509 = vmatpush2.msra.mxu0 %v145
  %510 = vmatprep.subr.mxu0 %v139
  %511 = vmatpush2.msra.mxu0 %v138
  %512 = vmatprep.mubr.f32.mxu0 %v15
  %513 = vmatmul.mubr.f32.gmra.mxu0 %v14
  %v514 = vpop.f32.mrf.mxu0
  %v515 = vadd.f32 %v253, %v514
  %v516 = vpop.f32.mrf.mxu0
  %v517 = vadd.f32 %v253, %v516
  %518 = vmatprep.mubr.f32.mxu0 %v17
  %519 = vmatmul.mubr.f32.gmra.mxu0 %v16
  %v520 = vpop.f32.mrf.mxu0
  %v521 = vadd.f32 %v258, %v520
  %v522 = vpop.f32.mrf.mxu0
  %v523 = vadd.f32 %v258, %v522
  %524 = vmatprep.mubr.f32.mxu0 %v19
  %525 = vmatmul.mubr.f32.gmra.mxu0 %v18
  %v526 = vpop.f32.mrf.mxu0
  %v527 = vadd.f32 %v263, %v526
  %v528 = vpop.f32.mrf.mxu0
  %v529 = vadd.f32 %v263, %v528
  %530 = vmatprep.mubr.f32.mxu0 %v21
  %531 = vmatmul.mubr.f32.gmra.mxu0 %v20
  %v532 = vpop.f32.mrf.mxu0
  %v533 = vadd.f32 %v268, %v532
  %v534 = vpop.f32.mrf.mxu0
  %v535 = vadd.f32 %v268, %v534
  %536 = vdwg.mxu0
  %537 = vmatprep.subr.mxu0 0.0
  %538 = vmatpush1.msra.mxu0 %v133
  %539 = vmatprep.subr.mxu0 0.0
  %540 = vmatpush1.msra.mxu0 %v126
  %541 = vmatprep.subr.mxu0 0.0
  %542 = vmatpush1.msra.mxu0 %v119
  %543 = vmatprep.subr.mxu0 0.0
  %544 = vmatpush1.msra.mxu0 %v112
  %545 = vmatprep.subr.mxu0 0.0
  %546 = vmatpush1.msra.mxu0 %v105
  %547 = vmatprep.subr.mxu0 0.0
  %548 = vmatpush1.msra.mxu0 %v98
  %549 = vmatprep.subr.mxu0 0.0
  %550 = vmatpush1.msra.mxu0 %v91
  %551 = vmatprep.subr.mxu0 0.0
  %552 = vmatpush1.msra.mxu0 %v84
  %553 = vmatprep.subr.mxu0 0.0
  %554 = vmatpush1.msra.mxu0 %v77
  %555 = vmatprep.subr.mxu0 0.0
  %556 = vmatpush1.msra.mxu0 %v70
  %557 = vmatprep.subr.mxu0 0.0
  %558 = vmatpush1.msra.mxu0 %v63
  %559 = vmatprep.subr.mxu0 0.0
  %560 = vmatpush1.msra.mxu0 %v56
  %561 = vmatprep.subr.mxu0 0.0
  %562 = vmatpush1.msra.mxu0 %v49
  %563 = vmatprep.subr.mxu0 0.0
  %564 = vmatpush1.msra.mxu0 %v42
  %565 = vmatprep.subr.mxu0 0.0
  %566 = vmatpush1.msra.mxu0 %v35
  %567 = vmatprep.subr.mxu0 0.0
  %568 = vmatpush1.msra.mxu0 %v28
  %569 = vmatprep.subr.mxu0 0.0
  %570 = vmatpush2.msra.mxu0 %v245
  %571 = vmatprep.subr.mxu0 0.0
  %572 = vmatpush2.msra.mxu0 %v238
  %573 = vmatprep.subr.mxu0 0.0
  %574 = vmatpush2.msra.mxu0 %v231
  %575 = vmatprep.subr.mxu0 0.0
  %576 = vmatpush2.msra.mxu0 %v224
  %577 = vmatprep.subr.mxu0 0.0
  %578 = vmatpush2.msra.mxu0 %v217
  %579 = vmatprep.subr.mxu0 0.0
  %580 = vmatpush2.msra.mxu0 %v210
  %581 = vmatprep.subr.mxu0 0.0
  %582 = vmatpush2.msra.mxu0 %v203
  %583 = vmatprep.subr.mxu0 0.0
  %584 = vmatpush2.msra.mxu0 %v196
  %585 = vmatprep.subr.mxu0 0.0
  %586 = vmatpush2.msra.mxu0 %v189
  %587 = vmatprep.subr.mxu0 0.0
  %588 = vmatpush2.msra.mxu0 %v182
  %589 = vmatprep.subr.mxu0 0.0
  %590 = vmatpush2.msra.mxu0 %v175
  %591 = vmatprep.subr.mxu0 0.0
  %592 = vmatpush2.msra.mxu0 %v168
  %593 = vmatprep.subr.mxu0 0.0
  %594 = vmatpush2.msra.mxu0 %v161
  %595 = vmatprep.subr.mxu0 0.0
  %596 = vmatpush2.msra.mxu0 %v154
  %597 = vmatprep.subr.mxu0 0.0
  %598 = vmatpush2.msra.mxu0 %v147
  %599 = vmatprep.subr.mxu0 0.0
  %600 = vmatpush2.msra.mxu0 %v140
  %601 = vmatprep.mubr.f32.mxu0 %v15
  %602 = vmatmul.mubr.f32.gmra.mxu0 %v14
  %v603 = vpop.f32.mrf.mxu0
  %v604 = vadd.f32 %v253, %v603
  %v605 = vpop.f32.mrf.mxu0
  %606 = vmatprep.mubr.f32.mxu0 %v17
  %607 = vmatmul.mubr.f32.gmra.mxu0 %v16
  %v608 = vpop.f32.mrf.mxu0
  %v609 = vadd.f32 %v258, %v608
  %v610 = vpop.f32.mrf.mxu0
  %611 = vmatprep.mubr.f32.mxu0 %v19
  %612 = vmatmul.mubr.f32.gmra.mxu0 %v18
  %v613 = vpop.f32.mrf.mxu0
  %v614 = vadd.f32 %v263, %v613
  %v615 = vpop.f32.mrf.mxu0
  %616 = vmatprep.mubr.f32.mxu0 %v21
  %617 = vmatmul.mubr.f32.gmra.mxu0 %v20
  %v618 = vpop.f32.mrf.mxu0
  %v619 = vadd.f32 %v268, %v618
  %v620 = vpop.f32.mrf.mxu0
  %621 = vdwg.mxu0
  %v622 = vmax.f32 %v337, 0.0
  %v623 = vmax.f32 %v339, 0.0
  %v624 = vmax.f32 %v426, 0.0
  %v625 = vmax.f32 %v428, 0.0
  %v626 = vmax.f32 %v515, 0.0
  %v627 = vmax.f32 %v517, 0.0
  %v628 = vmax.f32 %v604, 0.0
  %v629 = vmax.f32 %v343, 0.0
  %v630 = vmax.f32 %v345, 0.0
  %v631 = vmax.f32 %v432, 0.0
  %v632 = vmax.f32 %v434, 0.0
  %v633 = vmax.f32 %v521, 0.0
  %v634 = vmax.f32 %v523, 0.0
  %v635 = vmax.f32 %v609, 0.0
  %v636 = vmax.f32 %v349, 0.0
  %v637 = vmax.f32 %v351, 0.0
  %v638 = vmax.f32 %v438, 0.0
  %v639 = vmax.f32 %v440, 0.0
  %v640 = vmax.f32 %v527, 0.0
  %v641 = vmax.f32 %v529, 0.0
  %v642 = vmax.f32 %v614, 0.0
  %v643 = vmax.f32 %v355, 0.0
  %v644 = vmax.f32 %v357, 0.0
  %v645 = vmax.f32 %v444, 0.0
  %v646 = vmax.f32 %v446, 0.0
  %v647 = vmax.f32 %v533, 0.0
  %v648 = vmax.f32 %v535, 0.0
  %v649 = vmax.f32 %v619, 0.0
  %650 = vst [vmem:[%s3] sm:$0xff] %v622
  %651 = vst [vmem:[%s3 + $0x8] sm:$0xff] %v623
  %652 = vst [vmem:[%s3 + $0x10] sm:$0xff] %v624
  %653 = vst [vmem:[%s3 + $0x18] sm:$0xff] %v625
  %654 = vst [vmem:[%s3 + $0x20] sm:$0xff] %v626
  %655 = vst [vmem:[%s3 + $0x28] sm:$0xff] %v627
  %vm656 = vcmask 261120
  %657 = vst.msk [vmem:[%s3 + $0x30] sm:$0xff] %vm656, %v628
  %658 = vst [vmem:[%s3 + $0x38] sm:$0xff] %v629
  %659 = vst [vmem:[%s3 + $0x40] sm:$0xff] %v630
  %660 = vst [vmem:[%s3 + $0x48] sm:$0xff] %v631
  %661 = vst [vmem:[%s3 + $0x50] sm:$0xff] %v632
  %662 = vst [vmem:[%s3 + $0x58] sm:$0xff] %v633
  %663 = vst [vmem:[%s3 + $0x60] sm:$0xff] %v634
  %664 = vst.msk [vmem:[%s3 + $0x68] sm:$0xff] %vm656, %v635
  %665 = vst [vmem:[%s3 + $0x70] sm:$0xff] %v636
  %666 = vst [vmem:[%s3 + $0x78] sm:$0xff] %v637
  %667 = vst [vmem:[%s3 + $0x80] sm:$0xff] %v638
  %668 = vst [vmem:[%s3 + $0x88] sm:$0xff] %v639
  %669 = vst [vmem:[%s3 + $0x90] sm:$0xff] %v640
  %670 = vst [vmem:[%s3 + $0x98] sm:$0xff] %v641
  %671 = vst.msk [vmem:[%s3 + $0xa0] sm:$0xff] %vm656, %v642
  %672 = vst [vmem:[%s3 + $0xa8] sm:$0xff] %v643
  %673 = vst [vmem:[%s3 + $0xb0] sm:$0xff] %v644
  %674 = vst [vmem:[%s3 + $0xb8] sm:$0xff] %v645
  %675 = vst [vmem:[%s3 + $0xc0] sm:$0xff] %v646
  %676 = vst [vmem:[%s3 + $0xc8] sm:$0xff] %v647
  %677 = vst [vmem:[%s3 + $0xd0] sm:$0xff] %v648
  %678 = vst.msk [vmem:[%s3 + $0xd8] sm:$0xff] %vm656, %v649
  // Predicated region
  $region14: #{network_forward.3} parent=0 // pred_check
    _
  $region15: #{network_forward.3} parent=0 // pred_check_branch
    %680 = sbr.rel (0) target = $region17
  $region16: #{network_forward.3} parent=0 // pred_region
    _
  $region17: #{network_forward.3} parent=0 // pred_fallthru
    _
  // Predicated region
  $region18: #{network_forward.3} parent=0 // pred_check
    _
  $region19: #{network_forward.3} parent=0 // pred_check_branch
    %682 = sbr.rel (0) target = $region21
  $region20: #{network_forward.3} parent=0 // pred_region
    _
  $region21: #{network_forward.3} parent=0 // pred_fallthru
    _

// kernel: network_forward.4
$region0: #{network_forward.4}
  #allocation0 [shape = 'u32[]', space=smem, size = 0x4, offset = 0x4, fixed_abs, tag = 'smem constant byte address 0x4 - core index']
  #allocation1 [shape = 'u32[144,128]{1,0:T(1,128)}', space=vmem, size = 0x12000, scoped, tag = 'internal scratch']
  %s0 = inlined_call_operand.vmem [shape: f32[512,162], index: 0, kind: input, shape index: {}]
  %s1 = inlined_call_operand.vmem [shape: f32[64,512], index: 1, kind: input, shape index: {}]
  %s2 = inlined_call_operand.vmem [shape: f32[64,1], index: 2, kind: input, shape index: {}]
  %s3 = inlined_call_operand.vmem [shape: f32[9,64,64], index: 3, kind: input, shape index: {}]
  %s4 = inlined_call_operand.vmem [shape: f32[64,1], index: 4, kind: input, shape index: {}]
  %s5 = inlined_call_operand.vmem [shape: f32[9,162,98], index: 5, kind: input, shape index: {}]
  %s6 = inlined_call_operand.vmem [shape: f32[64,98], index: 6, kind: output, shape index: {}]
  %s7 = sld [smem:[#allocation0]]
  $region34: #{network_forward.4} parent=0
    _
  %s9 = ssub.s32 1, %s7
  %s10 = scalar_select 0, %s9, %s7
  // Predicated region
  $region2: #{network_forward.4} parent=0 // pred_check
    _
  $region3: #{network_forward.4} parent=0 // pred_check_branch
    %12 = sbr.rel (0) target = $region5
  $region4: #{network_forward.4} parent=0 // pred_region
    _
  $region5: #{network_forward.4} parent=0 // pred_fallthru
    _
  // Predicated region
  $region6: #{network_forward.4} parent=0 // pred_check
    _
  $region7: #{network_forward.4} parent=0 // pred_check_branch
    %14 = sbr.rel (0) target = $region9
  $region8: #{network_forward.4} parent=0 // pred_region
    _
  $region9: #{network_forward.4} parent=0 // pred_fallthru
    _
  // Predicated region
  $region10: #{network_forward.4} parent=0 // pred_check
    _
  $region11: #{network_forward.4} parent=0 // pred_check_branch
    %16 = sbr.rel (0) target = $region13
  $region12: #{network_forward.4} parent=0 // pred_region
    _
  $region13: #{network_forward.4} parent=0 // pred_fallthru
    _
  // Predicated region
  $region14: #{network_forward.4} parent=0 // pred_check
    _
  $region15: #{network_forward.4} parent=0 // pred_check_branch
    %18 = sbr.rel (0) target = $region17
  $region16: #{network_forward.4} parent=0 // pred_region
    _
  $region17: #{network_forward.4} parent=0 // pred_fallthru
    _
  // Predicated region
  $region18: #{network_forward.4} parent=0 // pred_check
    _
  $region19: #{network_forward.4} parent=0 // pred_check_branch
    %20 = sbr.rel (0) target = $region21
  $region20: #{network_forward.4} parent=0 // pred_region
    _
  $region21: #{network_forward.4} parent=0 // pred_fallthru
    _
  // Predicated region
  $region22: #{network_forward.4} parent=0 // pred_check
    _
  $region23: #{network_forward.4} parent=0 // pred_check_branch
    %22 = sbr.rel (0) target = $region25
  $region24: #{network_forward.4} parent=0 // pred_region
    _
  $region25: #{network_forward.4} parent=0 // pred_fallthru
    _
  %v23 = vld [vmem:[%s1] sm:$0xff]
  %v24 = vld [vmem:[%s1 + $0x8] sm:$0xff]
  %v25 = vld [vmem:[%s1 + $0x10] sm:$0xff]
  %v26 = vld [vmem:[%s1 + $0x18] sm:$0xff]
  %v27 = vld [vmem:[%s1 + $0x20] sm:$0xff]
  %v28 = vld [vmem:[%s1 + $0x28] sm:$0xff]
  %v29 = vld [vmem:[%s1 + $0x30] sm:$0xff]
  %v30 = vld [vmem:[%s1 + $0x38] sm:$0xff]
  %v31 = vld [vmem:[%s1 + $0x40] sm:$0xff]
  %v32 = vld [vmem:[%s1 + $0x48] sm:$0xff]
  %v33 = vld [vmem:[%s1 + $0x50] sm:$0xff]
  %v34 = vld [vmem:[%s1 + $0x58] sm:$0xff]
  %v35 = vld [vmem:[%s1 + $0x60] sm:$0xff]
  %v36 = vld [vmem:[%s1 + $0x68] sm:$0xff]
  %v37 = vld [vmem:[%s1 + $0x70] sm:$0xff]
  %v38 = vld [vmem:[%s1 + $0x78] sm:$0xff]
  %v39 = vld [vmem:[%s1 + $0x80] sm:$0xff]
  %v40 = vld [vmem:[%s1 + $0x88] sm:$0xff]
  %v41 = vld [vmem:[%s1 + $0x90] sm:$0xff]
  %v42 = vld [vmem:[%s1 + $0x98] sm:$0xff]
  %v43 = vld [vmem:[%s1 + $0xa0] sm:$0xff]
  %v44 = vld [vmem:[%s1 + $0xa8] sm:$0xff]
  %v45 = vld [vmem:[%s1 + $0xb0] sm:$0xff]
  %v46 = vld [vmem:[%s1 + $0xb8] sm:$0xff]
  %v47 = vld [vmem:[%s1 + $0xc0] sm:$0xff]
  %v48 = vld [vmem:[%s1 + $0xc8] sm:$0xff]
  %v49 = vld [vmem:[%s1 + $0xd0] sm:$0xff]
  %v50 = vld [vmem:[%s1 + $0xd8] sm:$0xff]
  %v51 = vld [vmem:[%s1 + $0xe0] sm:$0xff]
  %v52 = vld [vmem:[%s1 + $0xe8] sm:$0xff]
  %v53 = vld [vmem:[%s1 + $0xf0] sm:$0xff]
  %v54 = vld [vmem:[%s1 + $0xf8] sm:$0xff]
  %v55 = vld [vmem:[%s0] sm:$0xff]
  %v56 = vld [vmem:[%s0 + $0x8] sm:$0xff]
  %v57 = vld [vmem:[%s0 + $0x10] sm:$0xff]
  %v58 = vld [vmem:[%s0 + $0x18] sm:$0xff]
  %v59 = vld [vmem:[%s0 + $0x20] sm:$0xff]
  %v60 = vld [vmem:[%s0 + $0x28] sm:$0xff]
  %v61 = vld [vmem:[%s0 + $0x30] sm:$0xff]
  %v62 = vld [vmem:[%s0 + $0x38] sm:$0xff]
  %v63 = vld [vmem:[%s0 + $0x40] sm:$0xff]
  %v64 = vld [vmem:[%s0 + $0x48] sm:$0xff]
  %v65 = vld [vmem:[%s0 + $0x50] sm:$0xff]
  %v66 = vld [vmem:[%s0 + $0x58] sm:$0xff]
  %v67 = vld [vmem:[%s0 + $0x60] sm:$0xff]
  %v68 = vld [vmem:[%s0 + $0x68] sm:$0xff]
  %v69 = vld [vmem:[%s0 + $0x70] sm:$0xff]
  %v70 = vld [vmem:[%s0 + $0x78] sm:$0xff]
  %v71 = vld [vmem:[%s0 + $0x80] sm:$0xff]
  %v72 = vld [vmem:[%s0 + $0x88] sm:$0xff]
  %v73 = vld [vmem:[%s0 + $0x90] sm:$0xff]
  %v74 = vld [vmem:[%s0 + $0x98] sm:$0xff]
  %v75 = vld [vmem:[%s0 + $0xa0] sm:$0xff]
  %v76 = vld [vmem:[%s0 + $0xa8] sm:$0xff]
  %v77 = vld [vmem:[%s0 + $0xb0] sm:$0xff]
  %v78 = vld [vmem:[%s0 + $0xb8] sm:$0xff]
  %v79 = vld [vmem:[%s0 + $0xc0] sm:$0xff]
  %v80 = vld [vmem:[%s0 + $0xc8] sm:$0xff]
  %v81 = vld [vmem:[%s0 + $0xd0] sm:$0xff]
  %v82 = vld [vmem:[%s0 + $0xd8] sm:$0xff]
  %v83 = vld [vmem:[%s0 + $0xe0] sm:$0xff]
  %v84 = vld [vmem:[%s0 + $0xe8] sm:$0xff]
  %v85 = vld [vmem:[%s0 + $0xf0] sm:$0xff]
  %v86 = vld [vmem:[%s0 + $0xf8] sm:$0xff]
  %v87 = vld [vmem:[%s0 + $0x100] sm:$0xff]
  %v88 = vld [vmem:[%s0 + $0x108] sm:$0xff]
  %v89 = vld [vmem:[%s0 + $0x110] sm:$0xff]
  %v90 = vld [vmem:[%s0 + $0x118] sm:$0xff]
  %v91 = vld [vmem:[%s0 + $0x120] sm:$0xff]
  %v92 = vld [vmem:[%s0 + $0x128] sm:$0xff]
  %v93 = vld [vmem:[%s0 + $0x130] sm:$0xff]
  %v94 = vld [vmem:[%s0 + $0x138] sm:$0xff]
  %v95 = vld [vmem:[%s0 + $0x140] sm:$0xff]
  %v96 = vld [vmem:[%s0 + $0x148] sm:$0xff]
  %v97 = vld [vmem:[%s0 + $0x150] sm:$0xff]
  %v98 = vld [vmem:[%s0 + $0x158] sm:$0xff]
  %v99 = vld [vmem:[%s0 + $0x160] sm:$0xff]
  %v100 = vld [vmem:[%s0 + $0x168] sm:$0xff]
  %v101 = vld [vmem:[%s0 + $0x170] sm:$0xff]
  %v102 = vld [vmem:[%s0 + $0x178] sm:$0xff]
  %v103 = vld [vmem:[%s0 + $0x180] sm:$0xff]
  %v104 = vld [vmem:[%s0 + $0x188] sm:$0xff]
  %v105 = vld [vmem:[%s0 + $0x190] sm:$0xff]
  %v106 = vld [vmem:[%s0 + $0x198] sm:$0xff]
  %v107 = vld [vmem:[%s0 + $0x1a0] sm:$0xff]
  %v108 = vld [vmem:[%s0 + $0x1a8] sm:$0xff]
  %v109 = vld [vmem:[%s0 + $0x1b0] sm:$0xff]
  %v110 = vld [vmem:[%s0 + $0x1b8] sm:$0xff]
  %v111 = vld [vmem:[%s0 + $0x1c0] sm:$0xff]
  %v112 = vld [vmem:[%s0 + $0x1c8] sm:$0xff]
  %v113 = vld [vmem:[%s0 + $0x1d0] sm:$0xff]
  %v114 = vld [vmem:[%s0 + $0x1d8] sm:$0xff]
  %v115 = vld [vmem:[%s0 + $0x1e0] sm:$0xff]
  %v116 = vld [vmem:[%s0 + $0x1e8] sm:$0xff]
  %v117 = vld [vmem:[%s0 + $0x1f0] sm:$0xff]
  %v118 = vld [vmem:[%s0 + $0x1f8] sm:$0xff]
  %v119 = vld [vmem:[%s0 + $0x200] sm:$0xff]
  %v120 = vld [vmem:[%s0 + $0x208] sm:$0xff]
  %v121 = vld [vmem:[%s0 + $0x210] sm:$0xff]
  %v122 = vld [vmem:[%s0 + $0x218] sm:$0xff]
  %v123 = vld [vmem:[%s0 + $0x220] sm:$0xff]
  %v124 = vld [vmem:[%s0 + $0x228] sm:$0xff]
  %v125 = vld [vmem:[%s0 + $0x230] sm:$0xff]
  %v126 = vld [vmem:[%s0 + $0x238] sm:$0xff]
  %v127 = vld [vmem:[%s0 + $0x240] sm:$0xff]
  %v128 = vld [vmem:[%s0 + $0x248] sm:$0xff]
  %v129 = vld [vmem:[%s0 + $0x250] sm:$0xff]
  %v130 = vld [vmem:[%s0 + $0x258] sm:$0xff]
  %v131 = vld [vmem:[%s0 + $0x260] sm:$0xff]
  %v132 = vld [vmem:[%s0 + $0x268] sm:$0xff]
  %v133 = vld [vmem:[%s0 + $0x270] sm:$0xff]
  %v134 = vld [vmem:[%s0 + $0x278] sm:$0xff]
  %v135 = vld [vmem:[%s0 + $0x280] sm:$0xff]
  %v136 = vld [vmem:[%s0 + $0x288] sm:$0xff]
  %v137 = vld [vmem:[%s0 + $0x290] sm:$0xff]
  %v138 = vld [vmem:[%s0 + $0x298] sm:$0xff]
  %v139 = vld [vmem:[%s0 + $0x2a0] sm:$0xff]
  %v140 = vld [vmem:[%s0 + $0x2a8] sm:$0xff]
  %v141 = vld [vmem:[%s0 + $0x2b0] sm:$0xff]
  %v142 = vld [vmem:[%s0 + $0x2b8] sm:$0xff]
  %v143 = vld [vmem:[%s0 + $0x2c0] sm:$0xff]
  %v144 = vld [vmem:[%s0 + $0x2c8] sm:$0xff]
  %v145 = vld [vmem:[%s0 + $0x2d0] sm:$0xff]
  %v146 = vld [vmem:[%s0 + $0x2d8] sm:$0xff]
  %v147 = vld [vmem:[%s0 + $0x2e0] sm:$0xff]
  %v148 = vld [vmem:[%s0 + $0x2e8] sm:$0xff]
  %v149 = vld [vmem:[%s0 + $0x2f0] sm:$0xff]
  %v150 = vld [vmem:[%s0 + $0x2f8] sm:$0xff]
  %v151 = vld [vmem:[%s0 + $0x300] sm:$0xff]
  %v152 = vld [vmem:[%s0 + $0x308] sm:$0xff]
  %v153 = vld [vmem:[%s0 + $0x310] sm:$0xff]
  %v154 = vld [vmem:[%s0 + $0x318] sm:$0xff]
  %v155 = vld [vmem:[%s0 + $0x320] sm:$0xff]
  %v156 = vld [vmem:[%s0 + $0x328] sm:$0xff]
  %v157 = vld [vmem:[%s0 + $0x330] sm:$0xff]
  %v158 = vld [vmem:[%s0 + $0x338] sm:$0xff]
  %v159 = vld [vmem:[%s0 + $0x340] sm:$0xff]
  %v160 = vld [vmem:[%s0 + $0x348] sm:$0xff]
  %v161 = vld [vmem:[%s0 + $0x350] sm:$0xff]
  %v162 = vld [vmem:[%s0 + $0x358] sm:$0xff]
  %v163 = vld [vmem:[%s0 + $0x360] sm:$0xff]
  %v164 = vld [vmem:[%s0 + $0x368] sm:$0xff]
  %v165 = vld [vmem:[%s0 + $0x370] sm:$0xff]
  %v166 = vld [vmem:[%s0 + $0x378] sm:$0xff]
  %v167 = vld [vmem:[%s0 + $0x380] sm:$0xff]
  %v168 = vld [vmem:[%s0 + $0x388] sm:$0xff]
  %v169 = vld [vmem:[%s0 + $0x390] sm:$0xff]
  %v170 = vld [vmem:[%s0 + $0x398] sm:$0xff]
  %v171 = vld [vmem:[%s0 + $0x3a0] sm:$0xff]
  %v172 = vld [vmem:[%s0 + $0x3a8] sm:$0xff]
  %v173 = vld [vmem:[%s0 + $0x3b0] sm:$0xff]
  %v174 = vld [vmem:[%s0 + $0x3b8] sm:$0xff]
  %v175 = vld [vmem:[%s0 + $0x3c0] sm:$0xff]
  %v176 = vld [vmem:[%s0 + $0x3c8] sm:$0xff]
  %v177 = vld [vmem:[%s0 + $0x3d0] sm:$0xff]
  %v178 = vld [vmem:[%s0 + $0x3d8] sm:$0xff]
  %v179 = vld [vmem:[%s0 + $0x3e0] sm:$0xff]
  %v180 = vld [vmem:[%s0 + $0x3e8] sm:$0xff]
  %v181 = vld [vmem:[%s0 + $0x3f0] sm:$0xff]
  %v182 = vld [vmem:[%s0 + $0x3f8] sm:$0xff]
  %v183 = vld [vmem:[%s2] sm:$0xff]
  %v184 = vld [vmem:[%s2 + $0x8] sm:$0xff]
  %v185 = vld [vmem:[%s2 + $0x10] sm:$0xff]
  %v186 = vld [vmem:[%s2 + $0x18] sm:$0xff]
  %v187 = vld [vmem:[%s2 + $0x20] sm:$0xff]
  %v188 = vld [vmem:[%s2 + $0x28] sm:$0xff]
  %v189 = vld [vmem:[%s2 + $0x30] sm:$0xff]
  %v190 = vld [vmem:[%s2 + $0x38] sm:$0xff]
  %192 = vset.pattern.permute.xlu0 0
  %193 = vperm.xlu0 %192, %v183
  %v194 = vpop.permute.xlu0 %193
  %197 = vset.pattern.permute.xlu0 0
  %198 = vperm.xlu0 %197, %v184
  %v199 = vpop.permute.xlu0 %198
  %202 = vset.pattern.permute.xlu0 0
  %203 = vperm.xlu0 %202, %v185
  %v204 = vpop.permute.xlu0 %203
  %207 = vset.pattern.permute.xlu0 0
  %208 = vperm.xlu0 %207, %v186
  %v209 = vpop.permute.xlu0 %208
  %212 = vset.pattern.permute.xlu0 0
  %213 = vperm.xlu0 %212, %v187
  %v214 = vpop.permute.xlu0 %213
  %217 = vset.pattern.permute.xlu0 0
  %218 = vperm.xlu0 %217, %v188
  %v219 = vpop.permute.xlu0 %218
  %222 = vset.pattern.permute.xlu0 0
  %223 = vperm.xlu0 %222, %v189
  %v224 = vpop.permute.xlu0 %223
  %227 = vset.pattern.permute.xlu0 0
  %228 = vperm.xlu0 %227, %v190
  %v229 = vpop.permute.xlu0 %228
  %231 = vmatprep.subr.mxu0 %v86
  %232 = vmatpush1.msra.mxu0 %v85
  %233 = vmatprep.subr.mxu0 %v84
  %234 = vmatpush1.msra.mxu0 %v83
  %235 = vmatprep.subr.mxu0 %v82
  %236 = vmatpush1.msra.mxu0 %v81
  %237 = vmatprep.subr.mxu0 %v80
  %238 = vmatpush1.msra.mxu0 %v79
  %239 = vmatprep.subr.mxu0 %v78
  %240 = vmatpush1.msra.mxu0 %v77
  %241 = vmatprep.subr.mxu0 %v76
  %242 = vmatpush1.msra.mxu0 %v75
  %243 = vmatprep.subr.mxu0 %v74
  %244 = vmatpush1.msra.mxu0 %v73
  %245 = vmatprep.subr.mxu0 %v72
  %246 = vmatpush1.msra.mxu0 %v71
  %247 = vmatprep.subr.mxu0 %v70
  %248 = vmatpush1.msra.mxu0 %v69
  %249 = vmatprep.subr.mxu0 %v68
  %250 = vmatpush1.msra.mxu0 %v67
  %251 = vmatprep.subr.mxu0 %v66
  %252 = vmatpush1.msra.mxu0 %v65
  %253 = vmatprep.subr.mxu0 %v64
  %254 = vmatpush1.msra.mxu0 %v63
  %255 = vmatprep.subr.mxu0 %v62
  %256 = vmatpush1.msra.mxu0 %v61
  %257 = vmatprep.subr.mxu0 %v60
  %258 = vmatpush1.msra.mxu0 %v59
  %259 = vmatprep.subr.mxu0 %v58
  %260 = vmatpush1.msra.mxu0 %v57
  %261 = vmatprep.subr.mxu0 %v56
  %262 = vmatpush1.msra.mxu0 %v55
  %263 = vmatprep.subr.mxu0 %v118
  %264 = vmatpush2.msra.mxu0 %v117
  %265 = vmatprep.subr.mxu0 %v116
  %266 = vmatpush2.msra.mxu0 %v115
  %267 = vmatprep.subr.mxu0 %v114
  %268 = vmatpush2.msra.mxu0 %v113
  %269 = vmatprep.subr.mxu0 %v112
  %270 = vmatpush2.msra.mxu0 %v111
  %271 = vmatprep.subr.mxu0 %v110
  %272 = vmatpush2.msra.mxu0 %v109
  %273 = vmatprep.subr.mxu0 %v108
  %274 = vmatpush2.msra.mxu0 %v107
  %275 = vmatprep.subr.mxu0 %v106
  %276 = vmatpush2.msra.mxu0 %v105
  %277 = vmatprep.subr.mxu0 %v104
  %278 = vmatpush2.msra.mxu0 %v103
  %279 = vmatprep.subr.mxu0 %v102
  %280 = vmatpush2.msra.mxu0 %v101
  %281 = vmatprep.subr.mxu0 %v100
  %282 = vmatpush2.msra.mxu0 %v99
  %283 = vmatprep.subr.mxu0 %v98
  %284 = vmatpush2.msra.mxu0 %v97
  %285 = vmatprep.subr.mxu0 %v96
  %286 = vmatpush2.msra.mxu0 %v95
  %287 = vmatprep.subr.mxu0 %v94
  %288 = vmatpush2.msra.mxu0 %v93
  %289 = vmatprep.subr.mxu0 %v92
  %290 = vmatpush2.msra.mxu0 %v91
  %291 = vmatprep.subr.mxu0 %v90
  %292 = vmatpush2.msra.mxu0 %v89
  %293 = vmatprep.subr.mxu0 %v88
  %294 = vmatpush2.msra.mxu0 %v87
  %295 = vmatprep.mubr.f32.mxu0 %v24
  %296 = vmatmul.mubr.f32.gmra.mxu0 %v23
  %v297 = vpop.f32.mrf.mxu0
  %v298 = vadd.f32 %v194, %v297
  %v299 = vpop.f32.mrf.mxu0
  %v300 = vadd.f32 %v194, %v299
  %301 = vmatprep.mubr.f32.mxu0 %v28
  %302 = vmatmul.mubr.f32.gmra.mxu0 %v27
  %v303 = vpop.f32.mrf.mxu0
  %v304 = vadd.f32 %v199, %v303
  %v305 = vpop.f32.mrf.mxu0
  %v306 = vadd.f32 %v199, %v305
  %307 = vmatprep.mubr.f32.mxu0 %v32
  %308 = vmatmul.mubr.f32.gmra.mxu0 %v31
  %v309 = vpop.f32.mrf.mxu0
  %v310 = vadd.f32 %v204, %v309
  %v311 = vpop.f32.mrf.mxu0
  %v312 = vadd.f32 %v204, %v311
  %313 = vmatprep.mubr.f32.mxu0 %v36
  %314 = vmatmul.mubr.f32.gmra.mxu0 %v35
  %v315 = vpop.f32.mrf.mxu0
  %v316 = vadd.f32 %v209, %v315
  %v317 = vpop.f32.mrf.mxu0
  %v318 = vadd.f32 %v209, %v317
  %319 = vmatprep.mubr.f32.mxu0 %v40
  %320 = vmatmul.mubr.f32.gmra.mxu0 %v39
  %v321 = vpop.f32.mrf.mxu0
  %v322 = vadd.f32 %v214, %v321
  %v323 = vpop.f32.mrf.mxu0
  %v324 = vadd.f32 %v214, %v323
  %325 = vmatprep.mubr.f32.mxu0 %v44
  %326 = vmatmul.mubr.f32.gmra.mxu0 %v43
  %v327 = vpop.f32.mrf.mxu0
  %v328 = vadd.f32 %v219, %v327
  %v329 = vpop.f32.mrf.mxu0
  %v330 = vadd.f32 %v219, %v329
  %331 = vmatprep.mubr.f32.mxu0 %v48
  %332 = vmatmul.mubr.f32.gmra.mxu0 %v47
  %v333 = vpop.f32.mrf.mxu0
  %v334 = vadd.f32 %v224, %v333
  %v335 = vpop.f32.mrf.mxu0
  %v336 = vadd.f32 %v224, %v335
  %337 = vmatprep.mubr.f32.mxu0 %v52
  %338 = vmatmul.mubr.f32.gmra.mxu0 %v51
  %v339 = vpop.f32.mrf.mxu0
  %v340 = vadd.f32 %v229, %v339
  %v341 = vpop.f32.mrf.mxu0
  %v342 = vadd.f32 %v229, %v341
  %343 = vdwg.mxu0
  %344 = vmatprep.subr.mxu0 %v150
  %345 = vmatpush1.msra.mxu0 %v149
  %346 = vmatprep.subr.mxu0 %v148
  %347 = vmatpush1.msra.mxu0 %v147
  %348 = vmatprep.subr.mxu0 %v146
  %349 = vmatpush1.msra.mxu0 %v145
  %350 = vmatprep.subr.mxu0 %v144
  %351 = vmatpush1.msra.mxu0 %v143
  %352 = vmatprep.subr.mxu0 %v142
  %353 = vmatpush1.msra.mxu0 %v141
  %354 = vmatprep.subr.mxu0 %v140
  %355 = vmatpush1.msra.mxu0 %v139
  %356 = vmatprep.subr.mxu0 %v138
  %357 = vmatpush1.msra.mxu0 %v137
  %358 = vmatprep.subr.mxu0 %v136
  %359 = vmatpush1.msra.mxu0 %v135
  %360 = vmatprep.subr.mxu0 %v134
  %361 = vmatpush1.msra.mxu0 %v133
  %362 = vmatprep.subr.mxu0 %v132
  %363 = vmatpush1.msra.mxu0 %v131
  %364 = vmatprep.subr.mxu0 %v130
  %365 = vmatpush1.msra.mxu0 %v129
  %366 = vmatprep.subr.mxu0 %v128
  %367 = vmatpush1.msra.mxu0 %v127
  %368 = vmatprep.subr.mxu0 %v126
  %369 = vmatpush1.msra.mxu0 %v125
  %370 = vmatprep.subr.mxu0 %v124
  %371 = vmatpush1.msra.mxu0 %v123
  %372 = vmatprep.subr.mxu0 %v122
  %373 = vmatpush1.msra.mxu0 %v121
  %374 = vmatprep.subr.mxu0 %v120
  %375 = vmatpush1.msra.mxu0 %v119
  %376 = vmatprep.subr.mxu0 %v182
  %377 = vmatpush2.msra.mxu0 %v181
  %378 = vmatprep.subr.mxu0 %v180
  %379 = vmatpush2.msra.mxu0 %v179
  %380 = vmatprep.subr.mxu0 %v178
  %381 = vmatpush2.msra.mxu0 %v177
  %382 = vmatprep.subr.mxu0 %v176
  %383 = vmatpush2.msra.mxu0 %v175
  %384 = vmatprep.subr.mxu0 %v174
  %385 = vmatpush2.msra.mxu0 %v173
  %386 = vmatprep.subr.mxu0 %v172
  %387 = vmatpush2.msra.mxu0 %v171
  %388 = vmatprep.subr.mxu0 %v170
  %389 = vmatpush2.msra.mxu0 %v169
  %390 = vmatprep.subr.mxu0 %v168
  %391 = vmatpush2.msra.mxu0 %v167
  %392 = vmatprep.subr.mxu0 %v166
  %393 = vmatpush2.msra.mxu0 %v165
  %394 = vmatprep.subr.mxu0 %v164
  %395 = vmatpush2.msra.mxu0 %v163
  %396 = vmatprep.subr.mxu0 %v162
  %397 = vmatpush2.msra.mxu0 %v161
  %398 = vmatprep.subr.mxu0 %v160
  %399 = vmatpush2.msra.mxu0 %v159
  %400 = vmatprep.subr.mxu0 %v158
  %401 = vmatpush2.msra.mxu0 %v157
  %402 = vmatprep.subr.mxu0 %v156
  %403 = vmatpush2.msra.mxu0 %v155
  %404 = vmatprep.subr.mxu0 %v154
  %405 = vmatpush2.msra.mxu0 %v153
  %406 = vmatprep.subr.mxu0 %v152
  %407 = vmatpush2.msra.mxu0 %v151
  %408 = vmatprep.mubr.f32.mxu0 %v26
  %409 = vmatmul.mubr.f32.gmra.mxu0 %v25
  %v410 = vpop.f32.mrf.mxu0
  %v411 = vadd.f32 %v298, %v410
  %v412 = vpop.f32.mrf.mxu0
  %v413 = vadd.f32 %v300, %v412
  %414 = vmatprep.mubr.f32.mxu0 %v30
  %415 = vmatmul.mubr.f32.gmra.mxu0 %v29
  %v416 = vpop.f32.mrf.mxu0
  %v417 = vadd.f32 %v304, %v416
  %v418 = vpop.f32.mrf.mxu0
  %v419 = vadd.f32 %v306, %v418
  %420 = vmatprep.mubr.f32.mxu0 %v34
  %421 = vmatmul.mubr.f32.gmra.mxu0 %v33
  %v422 = vpop.f32.mrf.mxu0
  %v423 = vadd.f32 %v310, %v422
  %v424 = vpop.f32.mrf.mxu0
  %v425 = vadd.f32 %v312, %v424
  %426 = vmatprep.mubr.f32.mxu0 %v38
  %427 = vmatmul.mubr.f32.gmra.mxu0 %v37
  %v428 = vpop.f32.mrf.mxu0
  %v429 = vadd.f32 %v316, %v428
  %v430 = vpop.f32.mrf.mxu0
  %v431 = vadd.f32 %v318, %v430
  %432 = vmatprep.mubr.f32.mxu0 %v42
  %433 = vmatmul.mubr.f32.gmra.mxu0 %v41
  %v434 = vpop.f32.mrf.mxu0
  %v435 = vadd.f32 %v322, %v434
  %v436 = vpop.f32.mrf.mxu0
  %v437 = vadd.f32 %v324, %v436
  %438 = vmatprep.mubr.f32.mxu0 %v46
  %439 = vmatmul.mubr.f32.gmra.mxu0 %v45
  %v440 = vpop.f32.mrf.mxu0
  %v441 = vadd.f32 %v328, %v440
  %v442 = vpop.f32.mrf.mxu0
  %v443 = vadd.f32 %v330, %v442
  %444 = vmatprep.mubr.f32.mxu0 %v50
  %445 = vmatmul.mubr.f32.gmra.mxu0 %v49
  %v446 = vpop.f32.mrf.mxu0
  %v447 = vadd.f32 %v334, %v446
  %v448 = vpop.f32.mrf.mxu0
  %v449 = vadd.f32 %v336, %v448
  %450 = vmatprep.mubr.f32.mxu0 %v54
  %451 = vmatmul.mubr.f32.gmra.mxu0 %v53
  %v452 = vpop.f32.mrf.mxu0
  %v453 = vadd.f32 %v340, %v452
  %v454 = vpop.f32.mrf.mxu0
  %v455 = vadd.f32 %v342, %v454
  %456 = vdwg.mxu0
  %v457 = vmax.f32 %v411, 0.0
  %v458 = vmax.f32 %v413, 0.0
  %v459 = vmax.f32 %v417, 0.0
  %v460 = vmax.f32 %v419, 0.0
  %v461 = vmax.f32 %v423, 0.0
  %v462 = vmax.f32 %v425, 0.0
  %v463 = vmax.f32 %v429, 0.0
  %v464 = vmax.f32 %v431, 0.0
  %v465 = vmax.f32 %v435, 0.0
  %v466 = vmax.f32 %v437, 0.0
  %v467 = vmax.f32 %v441, 0.0
  %v468 = vmax.f32 %v443, 0.0
  %v469 = vmax.f32 %v447, 0.0
  %v470 = vmax.f32 %v449, 0.0
  %v471 = vmax.f32 %v453, 0.0
  %v472 = vmax.f32 %v455, 0.0
  %v473 = vld [vmem:[%s5] sm:$0xff]
  %v474 = vld [vmem:[%s5 + $0x8] sm:$0xff]
  %v475 = vld [vmem:[%s5 + $0x10] sm:$0xff]
  %v476 = vld [vmem:[%s5 + $0x18] sm:$0xff]
  %v477 = vld [vmem:[%s5 + $0x20] sm:$0xff]
  %v478 = vld [vmem:[%s5 + $0x28] sm:$0xff]
  %v479 = vld [vmem:[%s5 + $0x30] sm:$0xff]
  %v480 = vld [vmem:[%s5 + $0x38] sm:$0xff]
  %v481 = vld [vmem:[%s5 + $0x40] sm:$0xff]
  %v482 = vld [vmem:[%s5 + $0x48] sm:$0xff]
  %v483 = vld [vmem:[%s5 + $0x50] sm:$0xff]
  %v484 = vld [vmem:[%s5 + $0x58] sm:$0xff]
  %v485 = vld [vmem:[%s5 + $0x60] sm:$0xff]
  %v486 = vld [vmem:[%s5 + $0x68] sm:$0xff]
  %v487 = vld [vmem:[%s5 + $0x70] sm:$0xff]
  %v488 = vld [vmem:[%s5 + $0x78] sm:$0xff]
  %v489 = vld [vmem:[%s5 + $0x80] sm:$0xff]
  %v490 = vld [vmem:[%s5 + $0x88] sm:$0xff]
  %v491 = vld [vmem:[%s5 + $0x90] sm:$0xff]
  %v492 = vld [vmem:[%s5 + $0x98] sm:$0xff]
  %v493 = vld [vmem:[%s5 + $0xa0] sm:$0x3]
  %vm494 = vcmask 277504
  %v496 = vsel %vm494, %v458, 0
  %v499 = vsel %vm494, %v460, 0
  %v502 = vsel %vm494, %v462, 0
  %v505 = vsel %vm494, %v464, 0
  %v508 = vsel %vm494, %v466, 0
  %v511 = vsel %vm494, %v468, 0
  %v514 = vsel %vm494, %v470, 0
  %v517 = vsel %vm494, %v472, 0
  %vm519 = vcmask 1041408
  %v521 = vsel %vm519, %v493, 0
  %523 = vmatprep.subr.mxu0 0.0
  %524 = vmatpush1.msra.mxu0 %v488
  %525 = vmatprep.subr.mxu0 0.0
  %526 = vmatpush1.msra.mxu0 %v487
  %527 = vmatprep.subr.mxu0 0.0
  %528 = vmatpush1.msra.mxu0 %v486
  %529 = vmatprep.subr.mxu0 0.0
  %530 = vmatpush1.msra.mxu0 %v485
  %531 = vmatprep.subr.mxu0 0.0
  %532 = vmatpush1.msra.mxu0 %v484
  %533 = vmatprep.subr.mxu0 0.0
  %534 = vmatpush1.msra.mxu0 %v483
  %535 = vmatprep.subr.mxu0 0.0
  %536 = vmatpush1.msra.mxu0 %v482
  %537 = vmatprep.subr.mxu0 0.0
  %538 = vmatpush1.msra.mxu0 %v481
  %539 = vmatprep.subr.mxu0 0.0
  %540 = vmatpush1.msra.mxu0 %v480
  %541 = vmatprep.subr.mxu0 0.0
  %542 = vmatpush1.msra.mxu0 %v479
  %543 = vmatprep.subr.mxu0 0.0
  %544 = vmatpush1.msra.mxu0 %v478
  %545 = vmatprep.subr.mxu0 0.0
  %546 = vmatpush1.msra.mxu0 %v477
  %547 = vmatprep.subr.mxu0 0.0
  %548 = vmatpush1.msra.mxu0 %v476
  %549 = vmatprep.subr.mxu0 0.0
  %550 = vmatpush1.msra.mxu0 %v475
  %551 = vmatprep.subr.mxu0 0.0
  %552 = vmatpush1.msra.mxu0 %v474
  %553 = vmatprep.subr.mxu0 0.0
  %554 = vmatpush1.msra.mxu0 %v473
  %555 = vmatprep.subr.mxu0 0.0
  %556 = vmatpush2.msra.mxu0 0.0
  %557 = vmatprep.subr.mxu0 0.0
  %558 = vmatpush2.msra.mxu0 0.0
  %559 = vmatprep.subr.mxu0 0.0
  %560 = vmatpush2.msra.mxu0 0.0
  %561 = vmatprep.subr.mxu0 0.0
  %562 = vmatpush2.msra.mxu0 0.0
  %563 = vmatprep.subr.mxu0 0.0
  %564 = vmatpush2.msra.mxu0 0.0
  %565 = vmatprep.subr.mxu0 0.0
  %566 = vmatpush2.msra.mxu0 0.0
  %567 = vmatprep.subr.mxu0 0.0
  %568 = vmatpush2.msra.mxu0 0.0
  %569 = vmatprep.subr.mxu0 0.0
  %570 = vmatpush2.msra.mxu0 0.0
  %571 = vmatprep.subr.mxu0 0.0
  %572 = vmatpush2.msra.mxu0 0.0
  %573 = vmatprep.subr.mxu0 0.0
  %574 = vmatpush2.msra.mxu0 0.0
  %575 = vmatprep.subr.mxu0 0.0
  %576 = vmatpush2.msra.mxu0 0.0
  %577 = vmatprep.subr.mxu0 0.0
  %578 = vmatpush2.msra.mxu0 %v521
  %579 = vmatprep.subr.mxu0 0.0
  %580 = vmatpush2.msra.mxu0 %v492
  %581 = vmatprep.subr.mxu0 0.0
  %582 = vmatpush2.msra.mxu0 %v491
  %583 = vmatprep.subr.mxu0 0.0
  %584 = vmatpush2.msra.mxu0 %v490
  %585 = vmatprep.subr.mxu0 0.0
  %586 = vmatpush2.msra.mxu0 %v489
  %587 = vmatprep.mubr.f32.mxu0 %v496
  %588 = vmatmul.mubr.f32.gmra.mxu0 %v457
  %v589 = vpop.f32.mrf.mxu0
  %v590 = vadd.f32 0.0, %v589
  %v591 = vpop.f32.mrf.mxu0
  %592 = vmatprep.mubr.f32.mxu0 %v499
  %593 = vmatmul.mubr.f32.gmra.mxu0 %v459
  %v594 = vpop.f32.mrf.mxu0
  %v595 = vadd.f32 0.0, %v594
  %v596 = vpop.f32.mrf.mxu0
  %597 = vmatprep.mubr.f32.mxu0 %v502
  %598 = vmatmul.mubr.f32.gmra.mxu0 %v461
  %v599 = vpop.f32.mrf.mxu0
  %v600 = vadd.f32 0.0, %v599
  %v601 = vpop.f32.mrf.mxu0
  %602 = vmatprep.mubr.f32.mxu0 %v505
  %603 = vmatmul.mubr.f32.gmra.mxu0 %v463
  %v604 = vpop.f32.mrf.mxu0
  %v605 = vadd.f32 0.0, %v604
  %v606 = vpop.f32.mrf.mxu0
  %607 = vmatprep.mubr.f32.mxu0 %v508
  %608 = vmatmul.mubr.f32.gmra.mxu0 %v465
  %v609 = vpop.f32.mrf.mxu0
  %v610 = vadd.f32 0.0, %v609
  %v611 = vpop.f32.mrf.mxu0
  %612 = vmatprep.mubr.f32.mxu0 %v511
  %613 = vmatmul.mubr.f32.gmra.mxu0 %v467
  %v614 = vpop.f32.mrf.mxu0
  %v615 = vadd.f32 0.0, %v614
  %v616 = vpop.f32.mrf.mxu0
  %617 = vmatprep.mubr.f32.mxu0 %v514
  %618 = vmatmul.mubr.f32.gmra.mxu0 %v469
  %v619 = vpop.f32.mrf.mxu0
  %v620 = vadd.f32 0.0, %v619
  %v621 = vpop.f32.mrf.mxu0
  %622 = vmatprep.mubr.f32.mxu0 %v517
  %623 = vmatmul.mubr.f32.gmra.mxu0 %v471
  %v624 = vpop.f32.mrf.mxu0
  %v625 = vadd.f32 0.0, %v624
  %v626 = vpop.f32.mrf.mxu0
  %627 = vdwg.mxu0
  %v628 = vld [vmem:[%s3] sm:$0xff]
  %v629 = vld [vmem:[%s3 + $0x8] sm:$0xff]
  %v630 = vld [vmem:[%s3 + $0x10] sm:$0xff]
  %v631 = vld [vmem:[%s3 + $0x18] sm:$0xff]
  %v632 = vld [vmem:[%s3 + $0x20] sm:$0xff]
  %v633 = vld [vmem:[%s3 + $0x28] sm:$0xff]
  %v634 = vld [vmem:[%s3 + $0x30] sm:$0xff]
  %v635 = vld [vmem:[%s3 + $0x38] sm:$0xff]
  %s636 = scalar_lea.vmem %s5, 168
  %v637 = vld [vmem:[%s636] sm:$0xff]
  %v638 = vld [vmem:[%s636 + $0x8] sm:$0xff]
  %v639 = vld [vmem:[%s636 + $0x10] sm:$0xff]
  %v640 = vld [vmem:[%s636 + $0x18] sm:$0xff]
  %v641 = vld [vmem:[%s636 + $0x20] sm:$0xff]
  %v642 = vld [vmem:[%s636 + $0x28] sm:$0xff]
  %v643 = vld [vmem:[%s636 + $0x30] sm:$0xff]
  %v644 = vld [vmem:[%s636 + $0x38] sm:$0xff]
  %v645 = vld [vmem:[%s636 + $0x40] sm:$0xff]
  %v646 = vld [vmem:[%s636 + $0x48] sm:$0xff]
  %v647 = vld [vmem:[%s636 + $0x50] sm:$0xff]
  %v648 = vld [vmem:[%s636 + $0x58] sm:$0xff]
  %v649 = vld [vmem:[%s636 + $0x60] sm:$0xff]
  %v650 = vld [vmem:[%s636 + $0x68] sm:$0xff]
  %v651 = vld [vmem:[%s636 + $0x70] sm:$0xff]
  %v652 = vld [vmem:[%s636 + $0x78] sm:$0xff]
  %v653 = vld [vmem:[%s636 + $0x80] sm:$0xff]
  %v654 = vld [vmem:[%s636 + $0x88] sm:$0xff]
  %v655 = vld [vmem:[%s636 + $0x90] sm:$0xff]
  %v656 = vld [vmem:[%s636 + $0x98] sm:$0xff]
  %v657 = vld [vmem:[%s636 + $0xa0] sm:$0x3]
  %v659 = vsel %vm519, %v657, 0
  %661 = vmatprep.subr.mxu0 0.0
  %662 = vmatpush1.msra.mxu0 %v652
  %663 = vmatprep.subr.mxu0 0.0
  %664 = vmatpush1.msra.mxu0 %v651
  %665 = vmatprep.subr.mxu0 0.0
  %666 = vmatpush1.msra.mxu0 %v650
  %667 = vmatprep.subr.mxu0 0.0
  %668 = vmatpush1.msra.mxu0 %v649
  %669 = vmatprep.subr.mxu0 0.0
  %670 = vmatpush1.msra.mxu0 %v648
  %671 = vmatprep.subr.mxu0 0.0
  %672 = vmatpush1.msra.mxu0 %v647
  %673 = vmatprep.subr.mxu0 0.0
  %674 = vmatpush1.msra.mxu0 %v646
  %675 = vmatprep.subr.mxu0 0.0
  %676 = vmatpush1.msra.mxu0 %v645
  %677 = vmatprep.subr.mxu0 0.0
  %678 = vmatpush1.msra.mxu0 %v644
  %679 = vmatprep.subr.mxu0 0.0
  %680 = vmatpush1.msra.mxu0 %v643
  %681 = vmatprep.subr.mxu0 0.0
  %682 = vmatpush1.msra.mxu0 %v642
  %683 = vmatprep.subr.mxu0 0.0
  %684 = vmatpush1.msra.mxu0 %v641
  %685 = vmatprep.subr.mxu0 0.0
  %686 = vmatpush1.msra.mxu0 %v640
  %687 = vmatprep.subr.mxu0 0.0
  %688 = vmatpush1.msra.mxu0 %v639
  %689 = vmatprep.subr.mxu0 0.0
  %690 = vmatpush1.msra.mxu0 %v638
  %691 = vmatprep.subr.mxu0 0.0
  %692 = vmatpush1.msra.mxu0 %v637
  %693 = vmatprep.subr.mxu0 0.0
  %694 = vmatpush2.msra.mxu0 0.0
  %695 = vmatprep.subr.mxu0 0.0
  %696 = vmatpush2.msra.mxu0 0.0
  %697 = vmatprep.subr.mxu0 0.0
  %698 = vmatpush2.msra.mxu0 0.0
  %699 = vmatprep.subr.mxu0 0.0
  %700 = vmatpush2.msra.mxu0 0.0
  %701 = vmatprep.subr.mxu0 0.0
  %702 = vmatpush2.msra.mxu0 0.0
  %703 = vmatprep.subr.mxu0 0.0
  %704 = vmatpush2.msra.mxu0 0.0
  %705 = vmatprep.subr.mxu0 0.0
  %706 = vmatpush2.msra.mxu0 0.0
  %707 = vmatprep.subr.mxu0 0.0
  %708 = vmatpush2.msra.mxu0 0.0
  %709 = vmatprep.subr.mxu0 0.0
  %710 = vmatpush2.msra.mxu0 0.0
  %711 = vmatprep.subr.mxu0 0.0
  %712 = vmatpush2.msra.mxu0 0.0
  %713 = vmatprep.subr.mxu0 0.0
  %714 = vmatpush2.msra.mxu0 0.0
  %715 = vmatprep.subr.mxu0 0.0
  %716 = vmatpush2.msra.mxu0 %v659
  %717 = vmatprep.subr.mxu0 0.0
  %718 = vmatpush2.msra.mxu0 %v656
  %719 = vmatprep.subr.mxu0 0.0
  %720 = vmatpush2.msra.mxu0 %v655
  %721 = vmatprep.subr.mxu0 0.0
  %722 = vmatpush2.msra.mxu0 %v654
  %723 = vmatprep.subr.mxu0 0.0
  %724 = vmatpush2.msra.mxu0 %v653
  %725 = vmatprep.mubr.f32.mxu0 %v496
  %726 = vmatmul.mubr.f32.gmra.mxu0 %v457
  %v727 = vpop.f32.mrf.mxu0
  %v728 = vadd.f32 0.0, %v727
  %v729 = vpop.f32.mrf.mxu0
  %730 = vmatprep.mubr.f32.mxu0 %v499
  %731 = vmatmul.mubr.f32.gmra.mxu0 %v459
  %v732 = vpop.f32.mrf.mxu0
  %v733 = vadd.f32 0.0, %v732
  %v734 = vpop.f32.mrf.mxu0
  %735 = vmatprep.mubr.f32.mxu0 %v502
  %736 = vmatmul.mubr.f32.gmra.mxu0 %v461
  %v737 = vpop.f32.mrf.mxu0
  %v738 = vadd.f32 0.0, %v737
  %v739 = vpop.f32.mrf.mxu0
  %740 = vmatprep.mubr.f32.mxu0 %v505
  %741 = vmatmul.mubr.f32.gmra.mxu0 %v463
  %v742 = vpop.f32.mrf.mxu0
  %v743 = vadd.f32 0.0, %v742
  %v744 = vpop.f32.mrf.mxu0
  %745 = vmatprep.mubr.f32.mxu0 %v508
  %746 = vmatmul.mubr.f32.gmra.mxu0 %v465
  %v747 = vpop.f32.mrf.mxu0
  %v748 = vadd.f32 0.0, %v747
  %v749 = vpop.f32.mrf.mxu0
  %750 = vmatprep.mubr.f32.mxu0 %v511
  %751 = vmatmul.mubr.f32.gmra.mxu0 %v467
  %v752 = vpop.f32.mrf.mxu0
  %v753 = vadd.f32 0.0, %v752
  %v754 = vpop.f32.mrf.mxu0
  %755 = vmatprep.mubr.f32.mxu0 %v514
  %756 = vmatmul.mubr.f32.gmra.mxu0 %v469
  %v757 = vpop.f32.mrf.mxu0
  %v758 = vadd.f32 0.0, %v757
  %v759 = vpop.f32.mrf.mxu0
  %760 = vmatprep.mubr.f32.mxu0 %v517
  %761 = vmatmul.mubr.f32.gmra.mxu0 %v471
  %v762 = vpop.f32.mrf.mxu0
  %v763 = vadd.f32 0.0, %v762
  %v764 = vpop.f32.mrf.mxu0
  %765 = vdwg.mxu0
  %s766 = scalar_lea.vmem %s3, 64
  %v767 = vld [vmem:[%s766] sm:$0xff]
  %v768 = vld [vmem:[%s766 + $0x8] sm:$0xff]
  %v769 = vld [vmem:[%s766 + $0x10] sm:$0xff]
  %v770 = vld [vmem:[%s766 + $0x18] sm:$0xff]
  %v771 = vld [vmem:[%s766 + $0x20] sm:$0xff]
  %v772 = vld [vmem:[%s766 + $0x28] sm:$0xff]
  %v773 = vld [vmem:[%s766 + $0x30] sm:$0xff]
  %v774 = vld [vmem:[%s766 + $0x38] sm:$0xff]
  %vm775 = vcmask 523264
  %v777 = vsel %vm775, %v767, 0
  %v780 = vsel %vm775, %v768, 0
  %v783 = vsel %vm775, %v769, 0
  %v786 = vsel %vm775, %v770, 0
  %v789 = vsel %vm775, %v771, 0
  %v792 = vsel %vm775, %v772, 0
  %v795 = vsel %vm775, %v773, 0
  %v798 = vsel %vm775, %v774, 0
  %800 = vmatprep.subr.mxu0 0.0
  %801 = vmatpush1.msra.mxu0 0.0
  %802 = vmatprep.subr.mxu0 0.0
  %803 = vmatpush1.msra.mxu0 0.0
  %804 = vmatprep.subr.mxu0 0.0
  %805 = vmatpush1.msra.mxu0 0.0
  %806 = vmatprep.subr.mxu0 0.0
  %807 = vmatpush1.msra.mxu0 0.0
  %808 = vmatprep.subr.mxu0 0.0
  %809 = vmatpush1.msra.mxu0 0.0
  %810 = vmatprep.subr.mxu0 0.0
  %811 = vmatpush1.msra.mxu0 0.0
  %812 = vmatprep.subr.mxu0 0.0
  %813 = vmatpush1.msra.mxu0 0.0
  %814 = vmatprep.subr.mxu0 0.0
  %815 = vmatpush1.msra.mxu0 0.0
  %816 = vmatprep.subr.mxu0 0.0
  %817 = vmatpush1.msra.mxu0 %v763
  %818 = vmatprep.subr.mxu0 0.0
  %819 = vmatpush1.msra.mxu0 %v758
  %820 = vmatprep.subr.mxu0 0.0
  %821 = vmatpush1.msra.mxu0 %v753
  %822 = vmatprep.subr.mxu0 0.0
  %823 = vmatpush1.msra.mxu0 %v748
  %824 = vmatprep.subr.mxu0 0.0
  %825 = vmatpush1.msra.mxu0 %v743
  %826 = vmatprep.subr.mxu0 0.0
  %827 = vmatpush1.msra.mxu0 %v738
  %828 = vmatprep.subr.mxu0 0.0
  %829 = vmatpush1.msra.mxu0 %v733
  %830 = vmatprep.subr.mxu0 0.0
  %831 = vmatpush1.msra.mxu0 %v728
  %832 = vmatprep.subr.mxu0 0.0
  %833 = vmatpush2.msra.mxu0 0.0
  %834 = vmatprep.subr.mxu0 0.0
  %835 = vmatpush2.msra.mxu0 0.0
  %836 = vmatprep.subr.mxu0 0.0
  %837 = vmatpush2.msra.mxu0 0.0
  %838 = vmatprep.subr.mxu0 0.0
  %839 = vmatpush2.msra.mxu0 0.0
  %840 = vmatprep.subr.mxu0 0.0
  %841 = vmatpush2.msra.mxu0 0.0
  %842 = vmatprep.subr.mxu0 0.0
  %843 = vmatpush2.msra.mxu0 0.0
  %844 = vmatprep.subr.mxu0 0.0
  %845 = vmatpush2.msra.mxu0 0.0
  %846 = vmatprep.subr.mxu0 0.0
  %847 = vmatpush2.msra.mxu0 0.0
  %848 = vmatprep.subr.mxu0 0.0
  %849 = vmatpush2.msra.mxu0 0.0
  %850 = vmatprep.subr.mxu0 0.0
  %851 = vmatpush2.msra.mxu0 0.0
  %852 = vmatprep.subr.mxu0 0.0
  %853 = vmatpush2.msra.mxu0 0.0
  %854 = vmatprep.subr.mxu0 0.0
  %855 = vmatpush2.msra.mxu0 0.0
  %856 = vmatprep.subr.mxu0 0.0
  %857 = vmatpush2.msra.mxu0 0.0
  %858 = vmatprep.subr.mxu0 0.0
  %859 = vmatpush2.msra.mxu0 0.0
  %860 = vmatprep.subr.mxu0 0.0
  %861 = vmatpush2.msra.mxu0 0.0
  %862 = vmatprep.subr.mxu0 0.0
  %863 = vmatpush2.msra.mxu0 0.0
  %864 = vmatprep.mubr.f32.mxu0 0.0
  %865 = vmatmul.mubr.f32.gmra.mxu0 %v777
  %v866 = vpop.f32.mrf.mxu0
  %v867 = vadd.f32 0.0, %v866
  %v868 = vpop.f32.mrf.mxu0
  %869 = vmatprep.mubr.f32.mxu0 0.0
  %870 = vmatmul.mubr.f32.gmra.mxu0 %v780
  %v871 = vpop.f32.mrf.mxu0
  %v872 = vadd.f32 0.0, %v871
  %v873 = vpop.f32.mrf.mxu0
  %874 = vmatprep.mubr.f32.mxu0 0.0
  %875 = vmatmul.mubr.f32.gmra.mxu0 %v783
  %v876 = vpop.f32.mrf.mxu0
  %v877 = vadd.f32 0.0, %v876
  %v878 = vpop.f32.mrf.mxu0
  %879 = vmatprep.mubr.f32.mxu0 0.0
  %880 = vmatmul.mubr.f32.gmra.mxu0 %v786
  %v881 = vpop.f32.mrf.mxu0
  %v882 = vadd.f32 0.0, %v881
  %v883 = vpop.f32.mrf.mxu0
  %884 = vmatprep.mubr.f32.mxu0 0.0
  %885 = vmatmul.mubr.f32.gmra.mxu0 %v789
  %v886 = vpop.f32.mrf.mxu0
  %v887 = vadd.f32 0.0, %v886
  %v888 = vpop.f32.mrf.mxu0
  %889 = vmatprep.mubr.f32.mxu0 0.0
  %890 = vmatmul.mubr.f32.gmra.mxu0 %v792
  %v891 = vpop.f32.mrf.mxu0
  %v892 = vadd.f32 0.0, %v891
  %v893 = vpop.f32.mrf.mxu0
  %894 = vmatprep.mubr.f32.mxu0 0.0
  %895 = vmatmul.mubr.f32.gmra.mxu0 %v795
  %v896 = vpop.f32.mrf.mxu0
  %v897 = vadd.f32 0.0, %v896
  %v898 = vpop.f32.mrf.mxu0
  %899 = vmatprep.mubr.f32.mxu0 0.0
  %900 = vmatmul.mubr.f32.gmra.mxu0 %v798
  %v901 = vpop.f32.mrf.mxu0
  %v902 = vadd.f32 0.0, %v901
  %v903 = vpop.f32.mrf.mxu0
  %904 = vdwg.mxu0
  %v906 = vsel %vm775, %v628, 0
  %v909 = vsel %vm775, %v629, 0
  %v912 = vsel %vm775, %v630, 0
  %v915 = vsel %vm775, %v631, 0
  %v918 = vsel %vm775, %v632, 0
  %v921 = vsel %vm775, %v633, 0
  %v924 = vsel %vm775, %v634, 0
  %v927 = vsel %vm775, %v635, 0
  %929 = vmatprep.subr.mxu0 0.0
  %930 = vmatpush1.msra.mxu0 0.0
  %931 = vmatprep.subr.mxu0 0.0
  %932 = vmatpush1.msra.mxu0 0.0
  %933 = vmatprep.subr.mxu0 0.0
  %934 = vmatpush1.msra.mxu0 0.0
  %935 = vmatprep.subr.mxu0 0.0
  %936 = vmatpush1.msra.mxu0 0.0
  %937 = vmatprep.subr.mxu0 0.0
  %938 = vmatpush1.msra.mxu0 0.0
  %939 = vmatprep.subr.mxu0 0.0
  %940 = vmatpush1.msra.mxu0 0.0
  %941 = vmatprep.subr.mxu0 0.0
  %942 = vmatpush1.msra.mxu0 0.0
  %943 = vmatprep.subr.mxu0 0.0
  %944 = vmatpush1.msra.mxu0 0.0
  %945 = vmatprep.subr.mxu0 0.0
  %946 = vmatpush1.msra.mxu0 %v625
  %947 = vmatprep.subr.mxu0 0.0
  %948 = vmatpush1.msra.mxu0 %v620
  %949 = vmatprep.subr.mxu0 0.0
  %950 = vmatpush1.msra.mxu0 %v615
  %951 = vmatprep.subr.mxu0 0.0
  %952 = vmatpush1.msra.mxu0 %v610
  %953 = vmatprep.subr.mxu0 0.0
  %954 = vmatpush1.msra.mxu0 %v605
  %955 = vmatprep.subr.mxu0 0.0
  %956 = vmatpush1.msra.mxu0 %v600
  %957 = vmatprep.subr.mxu0 0.0
  %958 = vmatpush1.msra.mxu0 %v595
  %959 = vmatprep.subr.mxu0 0.0
  %960 = vmatpush1.msra.mxu0 %v590
  %961 = vmatprep.subr.mxu0 0.0
  %962 = vmatpush2.msra.mxu0 0.0
  %963 = vmatprep.subr.mxu0 0.0
  %964 = vmatpush2.msra.mxu0 0.0
  %965 = vmatprep.subr.mxu0 0.0
  %966 = vmatpush2.msra.mxu0 0.0
  %967 = vmatprep.subr.mxu0 0.0
  %968 = vmatpush2.msra.mxu0 0.0
  %969 = vmatprep.subr.mxu0 0.0
  %970 = vmatpush2.msra.mxu0 0.0
  %971 = vmatprep.subr.mxu0 0.0
  %972 = vmatpush2.msra.mxu0 0.0
  %973 = vmatprep.subr.mxu0 0.0
  %974 = vmatpush2.msra.mxu0 0.0
  %975 = vmatprep.subr.mxu0 0.0
  %976 = vmatpush2.msra.mxu0 0.0
  %977 = vmatprep.subr.mxu0 0.0
  %978 = vmatpush2.msra.mxu0 0.0
  %979 = vmatprep.subr.mxu0 0.0
  %980 = vmatpush2.msra.mxu0 0.0
  %981 = vmatprep.subr.mxu0 0.0
  %982 = vmatpush2.msra.mxu0 0.0
  %983 = vmatprep.subr.mxu0 0.0
  %984 = vmatpush2.msra.mxu0 0.0
  %985 = vmatprep.subr.mxu0 0.0
  %986 = vmatpush2.msra.mxu0 0.0
  %987 = vmatprep.subr.mxu0 0.0
  %988 = vmatpush2.msra.mxu0 0.0
  %989 = vmatprep.subr.mxu0 0.0
  %990 = vmatpush2.msra.mxu0 0.0
  %991 = vmatprep.subr.mxu0 0.0
  %992 = vmatpush2.msra.mxu0 0.0
  %993 = vmatprep.mubr.f32.mxu0 0.0
  %994 = vmatmul.mubr.f32.gmra.mxu0 %v906
  %v995 = vpop.f32.mrf.mxu0
  %v996 = vadd.f32 %v867, %v995
  %v997 = vpop.f32.mrf.mxu0
  %998 = vmatprep.mubr.f32.mxu0 0.0
  %999 = vmatmul.mubr.f32.gmra.mxu0 %v909
  %v1000 = vpop.f32.mrf.mxu0
  %v1001 = vadd.f32 %v872, %v1000
  %v1002 = vpop.f32.mrf.mxu0
  %1003 = vmatprep.mubr.f32.mxu0 0.0
  %1004 = vmatmul.mubr.f32.gmra.mxu0 %v912
  %v1005 = vpop.f32.mrf.mxu0
  %v1006 = vadd.f32 %v877, %v1005
  %v1007 = vpop.f32.mrf.mxu0
  %1008 = vmatprep.mubr.f32.mxu0 0.0
  %1009 = vmatmul.mubr.f32.gmra.mxu0 %v915
  %v1010 = vpop.f32.mrf.mxu0
  %v1011 = vadd.f32 %v882, %v1010
  %v1012 = vpop.f32.mrf.mxu0
  %1013 = vmatprep.mubr.f32.mxu0 0.0
  %1014 = vmatmul.mubr.f32.gmra.mxu0 %v918
  %v1015 = vpop.f32.mrf.mxu0
  %v1016 = vadd.f32 %v887, %v1015
  %v1017 = vpop.f32.mrf.mxu0
  %1018 = vmatprep.mubr.f32.mxu0 0.0
  %1019 = vmatmul.mubr.f32.gmra.mxu0 %v921
  %v1020 = vpop.f32.mrf.mxu0
  %v1021 = vadd.f32 %v892, %v1020
  %v1022 = vpop.f32.mrf.mxu0
  %1023 = vmatprep.mubr.f32.mxu0 0.0
  %1024 = vmatmul.mubr.f32.gmra.mxu0 %v924
  %v1025 = vpop.f32.mrf.mxu0
  %v1026 = vadd.f32 %v897, %v1025
  %v1027 = vpop.f32.mrf.mxu0
  %1028 = vmatprep.mubr.f32.mxu0 0.0
  %1029 = vmatmul.mubr.f32.gmra.mxu0 %v927
  %v1030 = vpop.f32.mrf.mxu0
  %v1031 = vadd.f32 %v902, %v1030
  %v1032 = vpop.f32.mrf.mxu0
  %1033 = vdwg.mxu0
  %s1034 = scalar_lea.vmem %s5, 336
  %v1035 = vld [vmem:[%s1034] sm:$0xff]
  %v1036 = vld [vmem:[%s1034 + $0x8] sm:$0xff]
  %v1037 = vld [vmem:[%s1034 + $0x10] sm:$0xff]
  %v1038 = vld [vmem:[%s1034 + $0x18] sm:$0xff]
  %v1039 = vld [vmem:[%s1034 + $0x20] sm:$0xff]
  %v1040 = vld [vmem:[%s1034 + $0x28] sm:$0xff]
  %v1041 = vld [vmem:[%s1034 + $0x30] sm:$0xff]
  %v1042 = vld [vmem:[%s1034 + $0x38] sm:$0xff]
  %v1043 = vld [vmem:[%s1034 + $0x40] sm:$0xff]
  %v1044 = vld [vmem:[%s1034 + $0x48] sm:$0xff]
  %v1045 = vld [vmem:[%s1034 + $0x50] sm:$0xff]
  %v1046 = vld [vmem:[%s1034 + $0x58] sm:$0xff]
  %v1047 = vld [vmem:[%s1034 + $0x60] sm:$0xff]
  %v1048 = vld [vmem:[%s1034 + $0x68] sm:$0xff]
  %v1049 = vld [vmem:[%s1034 + $0x70] sm:$0xff]
  %v1050 = vld [vmem:[%s1034 + $0x78] sm:$0xff]
  %v1051 = vld [vmem:[%s1034 + $0x80] sm:$0xff]
  %v1052 = vld [vmem:[%s1034 + $0x88] sm:$0xff]
  %v1053 = vld [vmem:[%s1034 + $0x90] sm:$0xff]
  %v1054 = vld [vmem:[%s1034 + $0x98] sm:$0xff]
  %v1055 = vld [vmem:[%s1034 + $0xa0] sm:$0x3]
  %v1057 = vsel %vm519, %v1055, 0
  %1059 = vmatprep.subr.mxu0 0.0
  %1060 = vmatpush1.msra.mxu0 %v1050
  %1061 = vmatprep.subr.mxu0 0.0
  %1062 = vmatpush1.msra.mxu0 %v1049
  %1063 = vmatprep.subr.mxu0 0.0
  %1064 = vmatpush1.msra.mxu0 %v1048
  %1065 = vmatprep.subr.mxu0 0.0
  %1066 = vmatpush1.msra.mxu0 %v1047
  %1067 = vmatprep.subr.mxu0 0.0
  %1068 = vmatpush1.msra.mxu0 %v1046
  %1069 = vmatprep.subr.mxu0 0.0
  %1070 = vmatpush1.msra.mxu0 %v1045
  %1071 = vmatprep.subr.mxu0 0.0
  %1072 = vmatpush1.msra.mxu0 %v1044
  %1073 = vmatprep.subr.mxu0 0.0
  %1074 = vmatpush1.msra.mxu0 %v1043
  %1075 = vmatprep.subr.mxu0 0.0
  %1076 = vmatpush1.msra.mxu0 %v1042
  %1077 = vmatprep.subr.mxu0 0.0
  %1078 = vmatpush1.msra.mxu0 %v1041
  %1079 = vmatprep.subr.mxu0 0.0
  %1080 = vmatpush1.msra.mxu0 %v1040
  %1081 = vmatprep.subr.mxu0 0.0
  %1082 = vmatpush1.msra.mxu0 %v1039
  %1083 = vmatprep.subr.mxu0 0.0
  %1084 = vmatpush1.msra.mxu0 %v1038
  %1085 = vmatprep.subr.mxu0 0.0
  %1086 = vmatpush1.msra.mxu0 %v1037
  %1087 = vmatprep.subr.mxu0 0.0
  %1088 = vmatpush1.msra.mxu0 %v1036
  %1089 = vmatprep.subr.mxu0 0.0
  %1090 = vmatpush1.msra.mxu0 %v1035
  %1091 = vmatprep.subr.mxu0 0.0
  %1092 = vmatpush2.msra.mxu0 0.0
  %1093 = vmatprep.subr.mxu0 0.0
  %1094 = vmatpush2.msra.mxu0 0.0
  %1095 = vmatprep.subr.mxu0 0.0
  %1096 = vmatpush2.msra.mxu0 0.0
  %1097 = vmatprep.subr.mxu0 0.0
  %1098 = vmatpush2.msra.mxu0 0.0
  %1099 = vmatprep.subr.mxu0 0.0
  %1100 = vmatpush2.msra.mxu0 0.0
  %1101 = vmatprep.subr.mxu0 0.0
  %1102 = vmatpush2.msra.mxu0 0.0
  %1103 = vmatprep.subr.mxu0 0.0
  %1104 = vmatpush2.msra.mxu0 0.0
  %1105 = vmatprep.subr.mxu0 0.0
  %1106 = vmatpush2.msra.mxu0 0.0
  %1107 = vmatprep.subr.mxu0 0.0
  %1108 = vmatpush2.msra.mxu0 0.0
  %1109 = vmatprep.subr.mxu0 0.0
  %1110 = vmatpush2.msra.mxu0 0.0
  %1111 = vmatprep.subr.mxu0 0.0
  %1112 = vmatpush2.msra.mxu0 0.0
  %1113 = vmatprep.subr.mxu0 0.0
  %1114 = vmatpush2.msra.mxu0 %v1057
  %1115 = vmatprep.subr.mxu0 0.0
  %1116 = vmatpush2.msra.mxu0 %v1054
  %1117 = vmatprep.subr.mxu0 0.0
  %1118 = vmatpush2.msra.mxu0 %v1053
  %1119 = vmatprep.subr.mxu0 0.0
  %1120 = vmatpush2.msra.mxu0 %v1052
  %1121 = vmatprep.subr.mxu0 0.0
  %1122 = vmatpush2.msra.mxu0 %v1051
  %1123 = vmatprep.mubr.f32.mxu0 %v496
  %1124 = vmatmul.mubr.f32.gmra.mxu0 %v457
  %v1125 = vpop.f32.mrf.mxu0
  %v1126 = vadd.f32 0.0, %v1125
  %v1127 = vpop.f32.mrf.mxu0
  %1128 = vmatprep.mubr.f32.mxu0 %v499
  %1129 = vmatmul.mubr.f32.gmra.mxu0 %v459
  %v1130 = vpop.f32.mrf.mxu0
  %v1131 = vadd.f32 0.0, %v1130
  %v1132 = vpop.f32.mrf.mxu0
  %1133 = vmatprep.mubr.f32.mxu0 %v502
  %1134 = vmatmul.mubr.f32.gmra.mxu0 %v461
  %v1135 = vpop.f32.mrf.mxu0
  %v1136 = vadd.f32 0.0, %v1135
  %v1137 = vpop.f32.mrf.mxu0
  %1138 = vmatprep.mubr.f32.mxu0 %v505
  %1139 = vmatmul.mubr.f32.gmra.mxu0 %v463
  %v1140 = vpop.f32.mrf.mxu0
  %v1141 = vadd.f32 0.0, %v1140
  %v1142 = vpop.f32.mrf.mxu0
  %1143 = vmatprep.mubr.f32.mxu0 %v508
  %1144 = vmatmul.mubr.f32.gmra.mxu0 %v465
  %v1145 = vpop.f32.mrf.mxu0
  %v1146 = vadd.f32 0.0, %v1145
  %v1147 = vpop.f32.mrf.mxu0
  %1148 = vmatprep.mubr.f32.mxu0 %v511
  %1149 = vmatmul.mubr.f32.gmra.mxu0 %v467
  %v1150 = vpop.f32.mrf.mxu0
  %v1151 = vadd.f32 0.0, %v1150
  %v1152 = vpop.f32.mrf.mxu0
  %1153 = vmatprep.mubr.f32.mxu0 %v514
  %1154 = vmatmul.mubr.f32.gmra.mxu0 %v469
  %v1155 = vpop.f32.mrf.mxu0
  %v1156 = vadd.f32 0.0, %v1155
  %v1157 = vpop.f32.mrf.mxu0
  %1158 = vmatprep.mubr.f32.mxu0 %v517
  %1159 = vmatmul.mubr.f32.gmra.mxu0 %v471
  %v1160 = vpop.f32.mrf.mxu0
  %v1161 = vadd.f32 0.0, %v1160
  %v1162 = vpop.f32.mrf.mxu0
  %1163 = vdwg.mxu0
  %s1164 = scalar_lea.vmem %s3, 128
  %v1165 = vld [vmem:[%s1164] sm:$0xff]
  %v1166 = vld [vmem:[%s1164 + $0x8] sm:$0xff]
  %v1167 = vld [vmem:[%s1164 + $0x10] sm:$0xff]
  %v1168 = vld [vmem:[%s1164 + $0x18] sm:$0xff]
  %v1169 = vld [vmem:[%s1164 + $0x20] sm:$0xff]
  %v1170 = vld [vmem:[%s1164 + $0x28] sm:$0xff]
  %v1171 = vld [vmem:[%s1164 + $0x30] sm:$0xff]
  %v1172 = vld [vmem:[%s1164 + $0x38] sm:$0xff]
  %v1174 = vsel %vm775, %v1165, 0
  %v1177 = vsel %vm775, %v1166, 0
  %v1180 = vsel %vm775, %v1167, 0
  %v1183 = vsel %vm775, %v1168, 0
  %v1186 = vsel %vm775, %v1169, 0
  %v1189 = vsel %vm775, %v1170, 0
  %v1192 = vsel %vm775, %v1171, 0
  %v1195 = vsel %vm775, %v1172, 0
  %1197 = vmatprep.subr.mxu0 0.0
  %1198 = vmatpush1.msra.mxu0 0.0
  %1199 = vmatprep.subr.mxu0 0.0
  %1200 = vmatpush1.msra.mxu0 0.0
  %1201 = vmatprep.subr.mxu0 0.0
  %1202 = vmatpush1.msra.mxu0 0.0
  %1203 = vmatprep.subr.mxu0 0.0
  %1204 = vmatpush1.msra.mxu0 0.0
  %1205 = vmatprep.subr.mxu0 0.0
  %1206 = vmatpush1.msra.mxu0 0.0
  %1207 = vmatprep.subr.mxu0 0.0
  %1208 = vmatpush1.msra.mxu0 0.0
  %1209 = vmatprep.subr.mxu0 0.0
  %1210 = vmatpush1.msra.mxu0 0.0
  %1211 = vmatprep.subr.mxu0 0.0
  %1212 = vmatpush1.msra.mxu0 0.0
  %1213 = vmatprep.subr.mxu0 0.0
  %1214 = vmatpush1.msra.mxu0 %v1161
  %1215 = vmatprep.subr.mxu0 0.0
  %1216 = vmatpush1.msra.mxu0 %v1156
  %1217 = vmatprep.subr.mxu0 0.0
  %1218 = vmatpush1.msra.mxu0 %v1151
  %1219 = vmatprep.subr.mxu0 0.0
  %1220 = vmatpush1.msra.mxu0 %v1146
  %1221 = vmatprep.subr.mxu0 0.0
  %1222 = vmatpush1.msra.mxu0 %v1141
  %1223 = vmatprep.subr.mxu0 0.0
  %1224 = vmatpush1.msra.mxu0 %v1136
  %1225 = vmatprep.subr.mxu0 0.0
  %1226 = vmatpush1.msra.mxu0 %v1131
  %1227 = vmatprep.subr.mxu0 0.0
  %1228 = vmatpush1.msra.mxu0 %v1126
  %1229 = vmatprep.subr.mxu0 0.0
  %1230 = vmatpush2.msra.mxu0 0.0
  %1231 = vmatprep.subr.mxu0 0.0
  %1232 = vmatpush2.msra.mxu0 0.0
  %1233 = vmatprep.subr.mxu0 0.0
  %1234 = vmatpush2.msra.mxu0 0.0
  %1235 = vmatprep.subr.mxu0 0.0
  %1236 = vmatpush2.msra.mxu0 0.0
  %1237 = vmatprep.subr.mxu0 0.0
  %1238 = vmatpush2.msra.mxu0 0.0
  %1239 = vmatprep.subr.mxu0 0.0
  %1240 = vmatpush2.msra.mxu0 0.0
  %1241 = vmatprep.subr.mxu0 0.0
  %1242 = vmatpush2.msra.mxu0 0.0
  %1243 = vmatprep.subr.mxu0 0.0
  %1244 = vmatpush2.msra.mxu0 0.0
  %1245 = vmatprep.subr.mxu0 0.0
  %1246 = vmatpush2.msra.mxu0 0.0
  %1247 = vmatprep.subr.mxu0 0.0
  %1248 = vmatpush2.msra.mxu0 0.0
  %1249 = vmatprep.subr.mxu0 0.0
  %1250 = vmatpush2.msra.mxu0 0.0
  %1251 = vmatprep.subr.mxu0 0.0
  %1252 = vmatpush2.msra.mxu0 0.0
  %1253 = vmatprep.subr.mxu0 0.0
  %1254 = vmatpush2.msra.mxu0 0.0
  %1255 = vmatprep.subr.mxu0 0.0
  %1256 = vmatpush2.msra.mxu0 0.0
  %1257 = vmatprep.subr.mxu0 0.0
  %1258 = vmatpush2.msra.mxu0 0.0
  %1259 = vmatprep.subr.mxu0 0.0
  %1260 = vmatpush2.msra.mxu0 0.0
  %1261 = vmatprep.mubr.f32.mxu0 0.0
  %1262 = vmatmul.mubr.f32.gmra.mxu0 %v1174
  %v1263 = vpop.f32.mrf.mxu0
  %v1264 = vadd.f32 0.0, %v1263
  %v1265 = vpop.f32.mrf.mxu0
  %1266 = vmatprep.mubr.f32.mxu0 0.0
  %1267 = vmatmul.mubr.f32.gmra.mxu0 %v1177
  %v1268 = vpop.f32.mrf.mxu0
  %v1269 = vadd.f32 0.0, %v1268
  %v1270 = vpop.f32.mrf.mxu0
  %1271 = vmatprep.mubr.f32.mxu0 0.0
  %1272 = vmatmul.mubr.f32.gmra.mxu0 %v1180
  %v1273 = vpop.f32.mrf.mxu0
  %v1274 = vadd.f32 0.0, %v1273
  %v1275 = vpop.f32.mrf.mxu0
  %1276 = vmatprep.mubr.f32.mxu0 0.0
  %1277 = vmatmul.mubr.f32.gmra.mxu0 %v1183
  %v1278 = vpop.f32.mrf.mxu0
  %v1279 = vadd.f32 0.0, %v1278
  %v1280 = vpop.f32.mrf.mxu0
  %1281 = vmatprep.mubr.f32.mxu0 0.0
  %1282 = vmatmul.mubr.f32.gmra.mxu0 %v1186
  %v1283 = vpop.f32.mrf.mxu0
  %v1284 = vadd.f32 0.0, %v1283
  %v1285 = vpop.f32.mrf.mxu0
  %1286 = vmatprep.mubr.f32.mxu0 0.0
  %1287 = vmatmul.mubr.f32.gmra.mxu0 %v1189
  %v1288 = vpop.f32.mrf.mxu0
  %v1289 = vadd.f32 0.0, %v1288
  %v1290 = vpop.f32.mrf.mxu0
  %1291 = vmatprep.mubr.f32.mxu0 0.0
  %1292 = vmatmul.mubr.f32.gmra.mxu0 %v1192
  %v1293 = vpop.f32.mrf.mxu0
  %v1294 = vadd.f32 0.0, %v1293
  %v1295 = vpop.f32.mrf.mxu0
  %1296 = vmatprep.mubr.f32.mxu0 0.0
  %1297 = vmatmul.mubr.f32.gmra.mxu0 %v1195
  %v1298 = vpop.f32.mrf.mxu0
  %v1299 = vadd.f32 0.0, %v1298
  %v1300 = vpop.f32.mrf.mxu0
  %1301 = vdwg.mxu0
  %v1302 = vadd.f32 %v996, %v1264
  %v1303 = vadd.f32 %v1001, %v1269
  %v1304 = vadd.f32 %v1006, %v1274
  %v1305 = vadd.f32 %v1011, %v1279
  %v1306 = vadd.f32 %v1016, %v1284
  %v1307 = vadd.f32 %v1021, %v1289
  %v1308 = vadd.f32 %v1026, %v1294
  %v1309 = vadd.f32 %v1031, %v1299
  %s1310 = scalar_lea.vmem %s5, 504
  %v1311 = vld [vmem:[%s1310] sm:$0xff]
  %v1312 = vld [vmem:[%s1310 + $0x8] sm:$0xff]
  %v1313 = vld [vmem:[%s1310 + $0x10] sm:$0xff]
  %v1314 = vld [vmem:[%s1310 + $0x18] sm:$0xff]
  %v1315 = vld [vmem:[%s1310 + $0x20] sm:$0xff]
  %v1316 = vld [vmem:[%s1310 + $0x28] sm:$0xff]
  %v1317 = vld [vmem:[%s1310 + $0x30] sm:$0xff]
  %v1318 = vld [vmem:[%s1310 + $0x38] sm:$0xff]
  %v1319 = vld [vmem:[%s1310 + $0x40] sm:$0xff]
  %v1320 = vld [vmem:[%s1310 + $0x48] sm:$0xff]
  %v1321 = vld [vmem:[%s1310 + $0x50] sm:$0xff]
  %v1322 = vld [vmem:[%s1310 + $0x58] sm:$0xff]
  %v1323 = vld [vmem:[%s1310 + $0x60] sm:$0xff]
  %v1324 = vld [vmem:[%s1310 + $0x68] sm:$0xff]
  %v1325 = vld [vmem:[%s1310 + $0x70] sm:$0xff]
  %v1326 = vld [vmem:[%s1310 + $0x78] sm:$0xff]
  %v1327 = vld [vmem:[%s1310 + $0x80] sm:$0xff]
  %v1328 = vld [vmem:[%s1310 + $0x88] sm:$0xff]
  %v1329 = vld [vmem:[%s1310 + $0x90] sm:$0xff]
  %v1330 = vld [vmem:[%s1310 + $0x98] sm:$0xff]
  %v1331 = vld [vmem:[%s1310 + $0xa0] sm:$0x3]
  %v1333 = vsel %vm519, %v1331, 0
  %1335 = vmatprep.subr.mxu0 0.0
  %1336 = vmatpush1.msra.mxu0 %v1326
  %1337 = vmatprep.subr.mxu0 0.0
  %1338 = vmatpush1.msra.mxu0 %v1325
  %1339 = vmatprep.subr.mxu0 0.0
  %1340 = vmatpush1.msra.mxu0 %v1324
  %1341 = vmatprep.subr.mxu0 0.0
  %1342 = vmatpush1.msra.mxu0 %v1323
  %1343 = vmatprep.subr.mxu0 0.0
  %1344 = vmatpush1.msra.mxu0 %v1322
  %1345 = vmatprep.subr.mxu0 0.0
  %1346 = vmatpush1.msra.mxu0 %v1321
  %1347 = vmatprep.subr.mxu0 0.0
  %1348 = vmatpush1.msra.mxu0 %v1320
  %1349 = vmatprep.subr.mxu0 0.0
  %1350 = vmatpush1.msra.mxu0 %v1319
  %1351 = vmatprep.subr.mxu0 0.0
  %1352 = vmatpush1.msra.mxu0 %v1318
  %1353 = vmatprep.subr.mxu0 0.0
  %1354 = vmatpush1.msra.mxu0 %v1317
  %1355 = vmatprep.subr.mxu0 0.0
  %1356 = vmatpush1.msra.mxu0 %v1316
  %1357 = vmatprep.subr.mxu0 0.0
  %1358 = vmatpush1.msra.mxu0 %v1315
  %1359 = vmatprep.subr.mxu0 0.0
  %1360 = vmatpush1.msra.mxu0 %v1314
  %1361 = vmatprep.subr.mxu0 0.0
  %1362 = vmatpush1.msra.mxu0 %v1313
  %1363 = vmatprep.subr.mxu0 0.0
  %1364 = vmatpush1.msra.mxu0 %v1312
  %1365 = vmatprep.subr.mxu0 0.0
  %1366 = vmatpush1.msra.mxu0 %v1311
  %1367 = vmatprep.subr.mxu0 0.0
  %1368 = vmatpush2.msra.mxu0 0.0
  %1369 = vmatprep.subr.mxu0 0.0
  %1370 = vmatpush2.msra.mxu0 0.0
  %1371 = vmatprep.subr.mxu0 0.0
  %1372 = vmatpush2.msra.mxu0 0.0
  %1373 = vmatprep.subr.mxu0 0.0
  %1374 = vmatpush2.msra.mxu0 0.0
  %1375 = vmatprep.subr.mxu0 0.0
  %1376 = vmatpush2.msra.mxu0 0.0
  %1377 = vmatprep.subr.mxu0 0.0
  %1378 = vmatpush2.msra.mxu0 0.0
  %1379 = vmatprep.subr.mxu0 0.0
  %1380 = vmatpush2.msra.mxu0 0.0
  %1381 = vmatprep.subr.mxu0 0.0
  %1382 = vmatpush2.msra.mxu0 0.0
  %1383 = vmatprep.subr.mxu0 0.0
  %1384 = vmatpush2.msra.mxu0 0.0
  %1385 = vmatprep.subr.mxu0 0.0
  %1386 = vmatpush2.msra.mxu0 0.0
  %1387 = vmatprep.subr.mxu0 0.0
  %1388 = vmatpush2.msra.mxu0 0.0
  %1389 = vmatprep.subr.mxu0 0.0
  %1390 = vmatpush2.msra.mxu0 %v1333
  %1391 = vmatprep.subr.mxu0 0.0
  %1392 = vmatpush2.msra.mxu0 %v1330
  %1393 = vmatprep.subr.mxu0 0.0
  %1394 = vmatpush2.msra.mxu0 %v1329
  %1395 = vmatprep.subr.mxu0 0.0
  %1396 = vmatpush2.msra.mxu0 %v1328
  %1397 = vmatprep.subr.mxu0 0.0
  %1398 = vmatpush2.msra.mxu0 %v1327
  %1399 = vmatprep.mubr.f32.mxu0 %v496
  %1400 = vmatmul.mubr.f32.gmra.mxu0 %v457
  %v1401 = vpop.f32.mrf.mxu0
  %v1402 = vadd.f32 0.0, %v1401
  %v1403 = vpop.f32.mrf.mxu0
  %1404 = vmatprep.mubr.f32.mxu0 %v499
  %1405 = vmatmul.mubr.f32.gmra.mxu0 %v459
  %v1406 = vpop.f32.mrf.mxu0
  %v1407 = vadd.f32 0.0, %v1406
  %v1408 = vpop.f32.mrf.mxu0
  %1409 = vmatprep.mubr.f32.mxu0 %v502
  %1410 = vmatmul.mubr.f32.gmra.mxu0 %v461
  %v1411 = vpop.f32.mrf.mxu0
  %v1412 = vadd.f32 0.0, %v1411
  %v1413 = vpop.f32.mrf.mxu0
  %1414 = vmatprep.mubr.f32.mxu0 %v505
  %1415 = vmatmul.mubr.f32.gmra.mxu0 %v463
  %v1416 = vpop.f32.mrf.mxu0
  %v1417 = vadd.f32 0.0, %v1416
  %v1418 = vpop.f32.mrf.mxu0
  %1419 = vmatprep.mubr.f32.mxu0 %v508
  %1420 = vmatmul.mubr.f32.gmra.mxu0 %v465
  %v1421 = vpop.f32.mrf.mxu0
  %v1422 = vadd.f32 0.0, %v1421
  %v1423 = vpop.f32.mrf.mxu0
  %1424 = vmatprep.mubr.f32.mxu0 %v511
  %1425 = vmatmul.mubr.f32.gmra.mxu0 %v467
  %v1426 = vpop.f32.mrf.mxu0
  %v1427 = vadd.f32 0.0, %v1426
  %v1428 = vpop.f32.mrf.mxu0
  %1429 = vmatprep.mubr.f32.mxu0 %v514
  %1430 = vmatmul.mubr.f32.gmra.mxu0 %v469
  %v1431 = vpop.f32.mrf.mxu0
  %v1432 = vadd.f32 0.0, %v1431
  %v1433 = vpop.f32.mrf.mxu0
  %1434 = vmatprep.mubr.f32.mxu0 %v517
  %1435 = vmatmul.mubr.f32.gmra.mxu0 %v471
  %v1436 = vpop.f32.mrf.mxu0
  %v1437 = vadd.f32 0.0, %v1436
  %v1438 = vpop.f32.mrf.mxu0
  %1439 = vdwg.mxu0
  %s1440 = scalar_lea.vmem %s3, 192
  %v1441 = vld [vmem:[%s1440] sm:$0xff]
  %v1442 = vld [vmem:[%s1440 + $0x8] sm:$0xff]
  %v1443 = vld [vmem:[%s1440 + $0x10] sm:$0xff]
  %v1444 = vld [vmem:[%s1440 + $0x18] sm:$0xff]
  %v1445 = vld [vmem:[%s1440 + $0x20] sm:$0xff]
  %v1446 = vld [vmem:[%s1440 + $0x28] sm:$0xff]
  %v1447 = vld [vmem:[%s1440 + $0x30] sm:$0xff]
  %v1448 = vld [vmem:[%s1440 + $0x38] sm:$0xff]
  %v1450 = vsel %vm775, %v1441, 0
  %v1453 = vsel %vm775, %v1442, 0
  %v1456 = vsel %vm775, %v1443, 0
  %v1459 = vsel %vm775, %v1444, 0
  %v1462 = vsel %vm775, %v1445, 0
  %v1465 = vsel %vm775, %v1446, 0
  %v1468 = vsel %vm775, %v1447, 0
  %v1471 = vsel %vm775, %v1448, 0
  %1473 = vmatprep.subr.mxu0 0.0
  %1474 = vmatpush1.msra.mxu0 0.0
  %1475 = vmatprep.subr.mxu0 0.0
  %1476 = vmatpush1.msra.mxu0 0.0
  %1477 = vmatprep.subr.mxu0 0.0
  %1478 = vmatpush1.msra.mxu0 0.0
  %1479 = vmatprep.subr.mxu0 0.0
  %1480 = vmatpush1.msra.mxu0 0.0
  %1481 = vmatprep.subr.mxu0 0.0
  %1482 = vmatpush1.msra.mxu0 0.0
  %1483 = vmatprep.subr.mxu0 0.0
  %1484 = vmatpush1.msra.mxu0 0.0
  %1485 = vmatprep.subr.mxu0 0.0
  %1486 = vmatpush1.msra.mxu0 0.0
  %1487 = vmatprep.subr.mxu0 0.0
  %1488 = vmatpush1.msra.mxu0 0.0
  %1489 = vmatprep.subr.mxu0 0.0
  %1490 = vmatpush1.msra.mxu0 %v1437
  %1491 = vmatprep.subr.mxu0 0.0
  %1492 = vmatpush1.msra.mxu0 %v1432
  %1493 = vmatprep.subr.mxu0 0.0
  %1494 = vmatpush1.msra.mxu0 %v1427
  %1495 = vmatprep.subr.mxu0 0.0
  %1496 = vmatpush1.msra.mxu0 %v1422
  %1497 = vmatprep.subr.mxu0 0.0
  %1498 = vmatpush1.msra.mxu0 %v1417
  %1499 = vmatprep.subr.mxu0 0.0
  %1500 = vmatpush1.msra.mxu0 %v1412
  %1501 = vmatprep.subr.mxu0 0.0
  %1502 = vmatpush1.msra.mxu0 %v1407
  %1503 = vmatprep.subr.mxu0 0.0
  %1504 = vmatpush1.msra.mxu0 %v1402
  %1505 = vmatprep.subr.mxu0 0.0
  %1506 = vmatpush2.msra.mxu0 0.0
  %1507 = vmatprep.subr.mxu0 0.0
  %1508 = vmatpush2.msra.mxu0 0.0
  %1509 = vmatprep.subr.mxu0 0.0
  %1510 = vmatpush2.msra.mxu0 0.0
  %1511 = vmatprep.subr.mxu0 0.0
  %1512 = vmatpush2.msra.mxu0 0.0
  %1513 = vmatprep.subr.mxu0 0.0
  %1514 = vmatpush2.msra.mxu0 0.0
  %1515 = vmatprep.subr.mxu0 0.0
  %1516 = vmatpush2.msra.mxu0 0.0
  %1517 = vmatprep.subr.mxu0 0.0
  %1518 = vmatpush2.msra.mxu0 0.0
  %1519 = vmatprep.subr.mxu0 0.0
  %1520 = vmatpush2.msra.mxu0 0.0
  %1521 = vmatprep.subr.mxu0 0.0
  %1522 = vmatpush2.msra.mxu0 0.0
  %1523 = vmatprep.subr.mxu0 0.0
  %1524 = vmatpush2.msra.mxu0 0.0
  %1525 = vmatprep.subr.mxu0 0.0
  %1526 = vmatpush2.msra.mxu0 0.0
  %1527 = vmatprep.subr.mxu0 0.0
  %1528 = vmatpush2.msra.mxu0 0.0
  %1529 = vmatprep.subr.mxu0 0.0
  %1530 = vmatpush2.msra.mxu0 0.0
  %1531 = vmatprep.subr.mxu0 0.0
  %1532 = vmatpush2.msra.mxu0 0.0
  %1533 = vmatprep.subr.mxu0 0.0
  %1534 = vmatpush2.msra.mxu0 0.0
  %1535 = vmatprep.subr.mxu0 0.0
  %1536 = vmatpush2.msra.mxu0 0.0
  %1537 = vmatprep.mubr.f32.mxu0 0.0
  %1538 = vmatmul.mubr.f32.gmra.mxu0 %v1450
  %v1539 = vpop.f32.mrf.mxu0
  %v1540 = vadd.f32 0.0, %v1539
  %v1541 = vpop.f32.mrf.mxu0
  %1542 = vmatprep.mubr.f32.mxu0 0.0
  %1543 = vmatmul.mubr.f32.gmra.mxu0 %v1453
  %v1544 = vpop.f32.mrf.mxu0
  %v1545 = vadd.f32 0.0, %v1544
  %v1546 = vpop.f32.mrf.mxu0
  %1547 = vmatprep.mubr.f32.mxu0 0.0
  %1548 = vmatmul.mubr.f32.gmra.mxu0 %v1456
  %v1549 = vpop.f32.mrf.mxu0
  %v1550 = vadd.f32 0.0, %v1549
  %v1551 = vpop.f32.mrf.mxu0
  %1552 = vmatprep.mubr.f32.mxu0 0.0
  %1553 = vmatmul.mubr.f32.gmra.mxu0 %v1459
  %v1554 = vpop.f32.mrf.mxu0
  %v1555 = vadd.f32 0.0, %v1554
  %v1556 = vpop.f32.mrf.mxu0
  %1557 = vmatprep.mubr.f32.mxu0 0.0
  %1558 = vmatmul.mubr.f32.gmra.mxu0 %v1462
  %v1559 = vpop.f32.mrf.mxu0
  %v1560 = vadd.f32 0.0, %v1559
  %v1561 = vpop.f32.mrf.mxu0
  %1562 = vmatprep.mubr.f32.mxu0 0.0
  %1563 = vmatmul.mubr.f32.gmra.mxu0 %v1465
  %v1564 = vpop.f32.mrf.mxu0
  %v1565 = vadd.f32 0.0, %v1564
  %v1566 = vpop.f32.mrf.mxu0
  %1567 = vmatprep.mubr.f32.mxu0 0.0
  %1568 = vmatmul.mubr.f32.gmra.mxu0 %v1468
  %v1569 = vpop.f32.mrf.mxu0
  %v1570 = vadd.f32 0.0, %v1569
  %v1571 = vpop.f32.mrf.mxu0
  %1572 = vmatprep.mubr.f32.mxu0 0.0
  %1573 = vmatmul.mubr.f32.gmra.mxu0 %v1471
  %v1574 = vpop.f32.mrf.mxu0
  %v1575 = vadd.f32 0.0, %v1574
  %v1576 = vpop.f32.mrf.mxu0
  %1577 = vdwg.mxu0
  %v1578 = vadd.f32 %v1302, %v1540
  %v1579 = vadd.f32 %v1303, %v1545
  %v1580 = vadd.f32 %v1304, %v1550
  %v1581 = vadd.f32 %v1305, %v1555
  %v1582 = vadd.f32 %v1306, %v1560
  %v1583 = vadd.f32 %v1307, %v1565
  %v1584 = vadd.f32 %v1308, %v1570
  %v1585 = vadd.f32 %v1309, %v1575
  %s1586 = scalar_lea.vmem %s5, 672
  %v1587 = vld [vmem:[%s1586] sm:$0xff]
  %v1588 = vld [vmem:[%s1586 + $0x8] sm:$0xff]
  %v1589 = vld [vmem:[%s1586 + $0x10] sm:$0xff]
  %v1590 = vld [vmem:[%s1586 + $0x18] sm:$0xff]
  %v1591 = vld [vmem:[%s1586 + $0x20] sm:$0xff]
  %v1592 = vld [vmem:[%s1586 + $0x28] sm:$0xff]
  %v1593 = vld [vmem:[%s1586 + $0x30] sm:$0xff]
  %v1594 = vld [vmem:[%s1586 + $0x38] sm:$0xff]
  %v1595 = vld [vmem:[%s1586 + $0x40] sm:$0xff]
  %v1596 = vld [vmem:[%s1586 + $0x48] sm:$0xff]
  %v1597 = vld [vmem:[%s1586 + $0x50] sm:$0xff]
  %v1598 = vld [vmem:[%s1586 + $0x58] sm:$0xff]
  %v1599 = vld [vmem:[%s1586 + $0x60] sm:$0xff]
  %v1600 = vld [vmem:[%s1586 + $0x68] sm:$0xff]
  %v1601 = vld [vmem:[%s1586 + $0x70] sm:$0xff]
  %v1602 = vld [vmem:[%s1586 + $0x78] sm:$0xff]
  %v1603 = vld [vmem:[%s1586 + $0x80] sm:$0xff]
  %v1604 = vld [vmem:[%s1586 + $0x88] sm:$0xff]
  %v1605 = vld [vmem:[%s1586 + $0x90] sm:$0xff]
  %v1606 = vld [vmem:[%s1586 + $0x98] sm:$0xff]
  %v1607 = vld [vmem:[%s1586 + $0xa0] sm:$0x3]
  %v1609 = vsel %vm519, %v1607, 0
  %1611 = vmatprep.subr.mxu0 0.0
  %1612 = vmatpush1.msra.mxu0 %v1602
  %1613 = vmatprep.subr.mxu0 0.0
  %1614 = vmatpush1.msra.mxu0 %v1601
  %1615 = vmatprep.subr.mxu0 0.0
  %1616 = vmatpush1.msra.mxu0 %v1600
  %1617 = vmatprep.subr.mxu0 0.0
  %1618 = vmatpush1.msra.mxu0 %v1599
  %1619 = vmatprep.subr.mxu0 0.0
  %1620 = vmatpush1.msra.mxu0 %v1598
  %1621 = vmatprep.subr.mxu0 0.0
  %1622 = vmatpush1.msra.mxu0 %v1597
  %1623 = vmatprep.subr.mxu0 0.0
  %1624 = vmatpush1.msra.mxu0 %v1596
  %1625 = vmatprep.subr.mxu0 0.0
  %1626 = vmatpush1.msra.mxu0 %v1595
  %1627 = vmatprep.subr.mxu0 0.0
  %1628 = vmatpush1.msra.mxu0 %v1594
  %1629 = vmatprep.subr.mxu0 0.0
  %1630 = vmatpush1.msra.mxu0 %v1593
  %1631 = vmatprep.subr.mxu0 0.0
  %1632 = vmatpush1.msra.mxu0 %v1592
  %1633 = vmatprep.subr.mxu0 0.0
  %1634 = vmatpush1.msra.mxu0 %v1591
  %1635 = vmatprep.subr.mxu0 0.0
  %1636 = vmatpush1.msra.mxu0 %v1590
  %1637 = vmatprep.subr.mxu0 0.0
  %1638 = vmatpush1.msra.mxu0 %v1589
  %1639 = vmatprep.subr.mxu0 0.0
  %1640 = vmatpush1.msra.mxu0 %v1588
  %1641 = vmatprep.subr.mxu0 0.0
  %1642 = vmatpush1.msra.mxu0 %v1587
  %1643 = vmatprep.subr.mxu0 0.0
  %1644 = vmatpush2.msra.mxu0 0.0
  %1645 = vmatprep.subr.mxu0 0.0
  %1646 = vmatpush2.msra.mxu0 0.0
  %1647 = vmatprep.subr.mxu0 0.0
  %1648 = vmatpush2.msra.mxu0 0.0
  %1649 = vmatprep.subr.mxu0 0.0
  %1650 = vmatpush2.msra.mxu0 0.0
  %1651 = vmatprep.subr.mxu0 0.0
  %1652 = vmatpush2.msra.mxu0 0.0
  %1653 = vmatprep.subr.mxu0 0.0
  %1654 = vmatpush2.msra.mxu0 0.0
  %1655 = vmatprep.subr.mxu0 0.0
  %1656 = vmatpush2.msra.mxu0 0.0
  %1657 = vmatprep.subr.mxu0 0.0
  %1658 = vmatpush2.msra.mxu0 0.0
  %1659 = vmatprep.subr.mxu0 0.0
  %1660 = vmatpush2.msra.mxu0 0.0
  %1661 = vmatprep.subr.mxu0 0.0
  %1662 = vmatpush2.msra.mxu0 0.0
  %1663 = vmatprep.subr.mxu0 0.0
  %1664 = vmatpush2.msra.mxu0 0.0
  %1665 = vmatprep.subr.mxu0 0.0
  %1666 = vmatpush2.msra.mxu0 %v1609
  %1667 = vmatprep.subr.mxu0 0.0
  %1668 = vmatpush2.msra.mxu0 %v1606
  %1669 = vmatprep.subr.mxu0 0.0
  %1670 = vmatpush2.msra.mxu0 %v1605
  %1671 = vmatprep.subr.mxu0 0.0
  %1672 = vmatpush2.msra.mxu0 %v1604
  %1673 = vmatprep.subr.mxu0 0.0
  %1674 = vmatpush2.msra.mxu0 %v1603
  %1675 = vmatprep.mubr.f32.mxu0 %v496
  %1676 = vmatmul.mubr.f32.gmra.mxu0 %v457
  %v1677 = vpop.f32.mrf.mxu0
  %v1678 = vadd.f32 0.0, %v1677
  %v1679 = vpop.f32.mrf.mxu0
  %1680 = vmatprep.mubr.f32.mxu0 %v499
  %1681 = vmatmul.mubr.f32.gmra.mxu0 %v459
  %v1682 = vpop.f32.mrf.mxu0
  %v1683 = vadd.f32 0.0, %v1682
  %v1684 = vpop.f32.mrf.mxu0
  %1685 = vmatprep.mubr.f32.mxu0 %v502
  %1686 = vmatmul.mubr.f32.gmra.mxu0 %v461
  %v1687 = vpop.f32.mrf.mxu0
  %v1688 = vadd.f32 0.0, %v1687
  %v1689 = vpop.f32.mrf.mxu0
  %1690 = vmatprep.mubr.f32.mxu0 %v505
  %1691 = vmatmul.mubr.f32.gmra.mxu0 %v463
  %v1692 = vpop.f32.mrf.mxu0
  %v1693 = vadd.f32 0.0, %v1692
  %v1694 = vpop.f32.mrf.mxu0
  %1695 = vmatprep.mubr.f32.mxu0 %v508
  %1696 = vmatmul.mubr.f32.gmra.mxu0 %v465
  %v1697 = vpop.f32.mrf.mxu0
  %v1698 = vadd.f32 0.0, %v1697
  %v1699 = vpop.f32.mrf.mxu0
  %1700 = vmatprep.mubr.f32.mxu0 %v511
  %1701 = vmatmul.mubr.f32.gmra.mxu0 %v467
  %v1702 = vpop.f32.mrf.mxu0
  %v1703 = vadd.f32 0.0, %v1702
  %v1704 = vpop.f32.mrf.mxu0
  %1705 = vmatprep.mubr.f32.mxu0 %v514
  %1706 = vmatmul.mubr.f32.gmra.mxu0 %v469
  %v1707 = vpop.f32.mrf.mxu0
  %v1708 = vadd.f32 0.0, %v1707
  %v1709 = vpop.f32.mrf.mxu0
  %1710 = vmatprep.mubr.f32.mxu0 %v517
  %1711 = vmatmul.mubr.f32.gmra.mxu0 %v471
  %v1712 = vpop.f32.mrf.mxu0
  %v1713 = vadd.f32 0.0, %v1712
  %v1714 = vpop.f32.mrf.mxu0
  %1715 = vdwg.mxu0
  %s1716 = scalar_lea.vmem %s3, 256
  %v1717 = vld [vmem:[%s1716] sm:$0xff]
  %v1718 = vld [vmem:[%s1716 + $0x8] sm:$0xff]
  %v1719 = vld [vmem:[%s1716 + $0x10] sm:$0xff]
  %v1720 = vld [vmem:[%s1716 + $0x18] sm:$0xff]
  %v1721 = vld [vmem:[%s1716 + $0x20] sm:$0xff]
  %v1722 = vld [vmem:[%s1716 + $0x28] sm:$0xff]
  %v1723 = vld [vmem:[%s1716 + $0x30] sm:$0xff]
  %v1724 = vld [vmem:[%s1716 + $0x38] sm:$0xff]
  %v1726 = vsel %vm775, %v1717, 0
  %v1729 = vsel %vm775, %v1718, 0
  %v1732 = vsel %vm775, %v1719, 0
  %v1735 = vsel %vm775, %v1720, 0
  %v1738 = vsel %vm775, %v1721, 0
  %v1741 = vsel %vm775, %v1722, 0
  %v1744 = vsel %vm775, %v1723, 0
  %v1747 = vsel %vm775, %v1724, 0
  %1749 = vmatprep.subr.mxu0 0.0
  %1750 = vmatpush1.msra.mxu0 0.0
  %1751 = vmatprep.subr.mxu0 0.0
  %1752 = vmatpush1.msra.mxu0 0.0
  %1753 = vmatprep.subr.mxu0 0.0
  %1754 = vmatpush1.msra.mxu0 0.0
  %1755 = vmatprep.subr.mxu0 0.0
  %1756 = vmatpush1.msra.mxu0 0.0
  %1757 = vmatprep.subr.mxu0 0.0
  %1758 = vmatpush1.msra.mxu0 0.0
  %1759 = vmatprep.subr.mxu0 0.0
  %1760 = vmatpush1.msra.mxu0 0.0
  %1761 = vmatprep.subr.mxu0 0.0
  %1762 = vmatpush1.msra.mxu0 0.0
  %1763 = vmatprep.subr.mxu0 0.0
  %1764 = vmatpush1.msra.mxu0 0.0
  %1765 = vmatprep.subr.mxu0 0.0
  %1766 = vmatpush1.msra.mxu0 %v1713
  %1767 = vmatprep.subr.mxu0 0.0
  %1768 = vmatpush1.msra.mxu0 %v1708
  %1769 = vmatprep.subr.mxu0 0.0
  %1770 = vmatpush1.msra.mxu0 %v1703
  %1771 = vmatprep.subr.mxu0 0.0
  %1772 = vmatpush1.msra.mxu0 %v1698
  %1773 = vmatprep.subr.mxu0 0.0
  %1774 = vmatpush1.msra.mxu0 %v1693
  %1775 = vmatprep.subr.mxu0 0.0
  %1776 = vmatpush1.msra.mxu0 %v1688
  %1777 = vmatprep.subr.mxu0 0.0
  %1778 = vmatpush1.msra.mxu0 %v1683
  %1779 = vmatprep.subr.mxu0 0.0
  %1780 = vmatpush1.msra.mxu0 %v1678
  %1781 = vmatprep.subr.mxu0 0.0
  %1782 = vmatpush2.msra.mxu0 0.0
  %1783 = vmatprep.subr.mxu0 0.0
  %1784 = vmatpush2.msra.mxu0 0.0
  %1785 = vmatprep.subr.mxu0 0.0
  %1786 = vmatpush2.msra.mxu0 0.0
  %1787 = vmatprep.subr.mxu0 0.0
  %1788 = vmatpush2.msra.mxu0 0.0
  %1789 = vmatprep.subr.mxu0 0.0
  %1790 = vmatpush2.msra.mxu0 0.0
  %1791 = vmatprep.subr.mxu0 0.0
  %1792 = vmatpush2.msra.mxu0 0.0
  %1793 = vmatprep.subr.mxu0 0.0
  %1794 = vmatpush2.msra.mxu0 0.0
  %1795 = vmatprep.subr.mxu0 0.0
  %1796 = vmatpush2.msra.mxu0 0.0
  %1797 = vmatprep.subr.mxu0 0.0
  %1798 = vmatpush2.msra.mxu0 0.0
  %1799 = vmatprep.subr.mxu0 0.0
  %1800 = vmatpush2.msra.mxu0 0.0
  %1801 = vmatprep.subr.mxu0 0.0
  %1802 = vmatpush2.msra.mxu0 0.0
  %1803 = vmatprep.subr.mxu0 0.0
  %1804 = vmatpush2.msra.mxu0 0.0
  %1805 = vmatprep.subr.mxu0 0.0
  %1806 = vmatpush2.msra.mxu0 0.0
  %1807 = vmatprep.subr.mxu0 0.0
  %1808 = vmatpush2.msra.mxu0 0.0
  %1809 = vmatprep.subr.mxu0 0.0
  %1810 = vmatpush2.msra.mxu0 0.0
  %1811 = vmatprep.subr.mxu0 0.0
  %1812 = vmatpush2.msra.mxu0 0.0
  %1813 = vmatprep.mubr.f32.mxu0 0.0
  %1814 = vmatmul.mubr.f32.gmra.mxu0 %v1726
  %v1815 = vpop.f32.mrf.mxu0
  %v1816 = vadd.f32 0.0, %v1815
  %v1817 = vpop.f32.mrf.mxu0
  %1818 = vmatprep.mubr.f32.mxu0 0.0
  %1819 = vmatmul.mubr.f32.gmra.mxu0 %v1729
  %v1820 = vpop.f32.mrf.mxu0
  %v1821 = vadd.f32 0.0, %v1820
  %v1822 = vpop.f32.mrf.mxu0
  %1823 = vmatprep.mubr.f32.mxu0 0.0
  %1824 = vmatmul.mubr.f32.gmra.mxu0 %v1732
  %v1825 = vpop.f32.mrf.mxu0
  %v1826 = vadd.f32 0.0, %v1825
  %v1827 = vpop.f32.mrf.mxu0
  %1828 = vmatprep.mubr.f32.mxu0 0.0
  %1829 = vmatmul.mubr.f32.gmra.mxu0 %v1735
  %v1830 = vpop.f32.mrf.mxu0
  %v1831 = vadd.f32 0.0, %v1830
  %v1832 = vpop.f32.mrf.mxu0
  %1833 = vmatprep.mubr.f32.mxu0 0.0
  %1834 = vmatmul.mubr.f32.gmra.mxu0 %v1738
  %v1835 = vpop.f32.mrf.mxu0
  %v1836 = vadd.f32 0.0, %v1835
  %v1837 = vpop.f32.mrf.mxu0
  %1838 = vmatprep.mubr.f32.mxu0 0.0
  %1839 = vmatmul.mubr.f32.gmra.mxu0 %v1741
  %v1840 = vpop.f32.mrf.mxu0
  %v1841 = vadd.f32 0.0, %v1840
  %v1842 = vpop.f32.mrf.mxu0
  %1843 = vmatprep.mubr.f32.mxu0 0.0
  %1844 = vmatmul.mubr.f32.gmra.mxu0 %v1744
  %v1845 = vpop.f32.mrf.mxu0
  %v1846 = vadd.f32 0.0, %v1845
  %v1847 = vpop.f32.mrf.mxu0
  %1848 = vmatprep.mubr.f32.mxu0 0.0
  %1849 = vmatmul.mubr.f32.gmra.mxu0 %v1747
  %v1850 = vpop.f32.mrf.mxu0
  %v1851 = vadd.f32 0.0, %v1850
  %v1852 = vpop.f32.mrf.mxu0
  %1853 = vdwg.mxu0
  %v1854 = vadd.f32 %v1578, %v1816
  %v1855 = vadd.f32 %v1579, %v1821
  %v1856 = vadd.f32 %v1580, %v1826
  %v1857 = vadd.f32 %v1581, %v1831
  %v1858 = vadd.f32 %v1582, %v1836
  %v1859 = vadd.f32 %v1583, %v1841
  %v1860 = vadd.f32 %v1584, %v1846
  %v1861 = vadd.f32 %v1585, %v1851
  %s1862 = scalar_lea.vmem %s5, 840
  %v1863 = vld [vmem:[%s1862] sm:$0xff]
  %v1864 = vld [vmem:[%s1862 + $0x8] sm:$0xff]
  %v1865 = vld [vmem:[%s1862 + $0x10] sm:$0xff]
  %v1866 = vld [vmem:[%s1862 + $0x18] sm:$0xff]
  %v1867 = vld [vmem:[%s1862 + $0x20] sm:$0xff]
  %v1868 = vld [vmem:[%s1862 + $0x28] sm:$0xff]
  %v1869 = vld [vmem:[%s1862 + $0x30] sm:$0xff]
  %v1870 = vld [vmem:[%s1862 + $0x38] sm:$0xff]
  %v1871 = vld [vmem:[%s1862 + $0x40] sm:$0xff]
  %v1872 = vld [vmem:[%s1862 + $0x48] sm:$0xff]
  %v1873 = vld [vmem:[%s1862 + $0x50] sm:$0xff]
  %v1874 = vld [vmem:[%s1862 + $0x58] sm:$0xff]
  %v1875 = vld [vmem:[%s1862 + $0x60] sm:$0xff]
  %v1876 = vld [vmem:[%s1862 + $0x68] sm:$0xff]
  %v1877 = vld [vmem:[%s1862 + $0x70] sm:$0xff]
  %v1878 = vld [vmem:[%s1862 + $0x78] sm:$0xff]
  %v1879 = vld [vmem:[%s1862 + $0x80] sm:$0xff]
  %v1880 = vld [vmem:[%s1862 + $0x88] sm:$0xff]
  %v1881 = vld [vmem:[%s1862 + $0x90] sm:$0xff]
  %v1882 = vld [vmem:[%s1862 + $0x98] sm:$0xff]
  %v1883 = vld [vmem:[%s1862 + $0xa0] sm:$0x3]
  %v1885 = vsel %vm519, %v1883, 0
  %1887 = vmatprep.subr.mxu0 0.0
  %1888 = vmatpush1.msra.mxu0 %v1878
  %1889 = vmatprep.subr.mxu0 0.0
  %1890 = vmatpush1.msra.mxu0 %v1877
  %1891 = vmatprep.subr.mxu0 0.0
  %1892 = vmatpush1.msra.mxu0 %v1876
  %1893 = vmatprep.subr.mxu0 0.0
  %1894 = vmatpush1.msra.mxu0 %v1875
  %1895 = vmatprep.subr.mxu0 0.0
  %1896 = vmatpush1.msra.mxu0 %v1874
  %1897 = vmatprep.subr.mxu0 0.0
  %1898 = vmatpush1.msra.mxu0 %v1873
  %1899 = vmatprep.subr.mxu0 0.0
  %1900 = vmatpush1.msra.mxu0 %v1872
  %1901 = vmatprep.subr.mxu0 0.0
  %1902 = vmatpush1.msra.mxu0 %v1871
  %1903 = vmatprep.subr.mxu0 0.0
  %1904 = vmatpush1.msra.mxu0 %v1870
  %1905 = vmatprep.subr.mxu0 0.0
  %1906 = vmatpush1.msra.mxu0 %v1869
  %1907 = vmatprep.subr.mxu0 0.0
  %1908 = vmatpush1.msra.mxu0 %v1868
  %1909 = vmatprep.subr.mxu0 0.0
  %1910 = vmatpush1.msra.mxu0 %v1867
  %1911 = vmatprep.subr.mxu0 0.0
  %1912 = vmatpush1.msra.mxu0 %v1866
  %1913 = vmatprep.subr.mxu0 0.0
  %1914 = vmatpush1.msra.mxu0 %v1865
  %1915 = vmatprep.subr.mxu0 0.0
  %1916 = vmatpush1.msra.mxu0 %v1864
  %1917 = vmatprep.subr.mxu0 0.0
  %1918 = vmatpush1.msra.mxu0 %v1863
  %1919 = vmatprep.subr.mxu0 0.0
  %1920 = vmatpush2.msra.mxu0 0.0
  %1921 = vmatprep.subr.mxu0 0.0
  %1922 = vmatpush2.msra.mxu0 0.0
  %1923 = vmatprep.subr.mxu0 0.0
  %1924 = vmatpush2.msra.mxu0 0.0
  %1925 = vmatprep.subr.mxu0 0.0
  %1926 = vmatpush2.msra.mxu0 0.0
  %1927 = vmatprep.subr.mxu0 0.0
  %1928 = vmatpush2.msra.mxu0 0.0
  %1929 = vmatprep.subr.mxu0 0.0
  %1930 = vmatpush2.msra.mxu0 0.0
  %1931 = vmatprep.subr.mxu0 0.0
  %1932 = vmatpush2.msra.mxu0 0.0
  %1933 = vmatprep.subr.mxu0 0.0
  %1934 = vmatpush2.msra.mxu0 0.0
  %1935 = vmatprep.subr.mxu0 0.0
  %1936 = vmatpush2.msra.mxu0 0.0
  %1937 = vmatprep.subr.mxu0 0.0
  %1938 = vmatpush2.msra.mxu0 0.0
  %1939 = vmatprep.subr.mxu0 0.0
  %1940 = vmatpush2.msra.mxu0 0.0
  %1941 = vmatprep.subr.mxu0 0.0
  %1942 = vmatpush2.msra.mxu0 %v1885
  %1943 = vmatprep.subr.mxu0 0.0
  %1944 = vmatpush2.msra.mxu0 %v1882
  %1945 = vmatprep.subr.mxu0 0.0
  %1946 = vmatpush2.msra.mxu0 %v1881
  %1947 = vmatprep.subr.mxu0 0.0
  %1948 = vmatpush2.msra.mxu0 %v1880
  %1949 = vmatprep.subr.mxu0 0.0
  %1950 = vmatpush2.msra.mxu0 %v1879
  %1951 = vmatprep.mubr.f32.mxu0 %v496
  %1952 = vmatmul.mubr.f32.gmra.mxu0 %v457
  %v1953 = vpop.f32.mrf.mxu0
  %v1954 = vadd.f32 0.0, %v1953
  %v1955 = vpop.f32.mrf.mxu0
  %1956 = vmatprep.mubr.f32.mxu0 %v499
  %1957 = vmatmul.mubr.f32.gmra.mxu0 %v459
  %v1958 = vpop.f32.mrf.mxu0
  %v1959 = vadd.f32 0.0, %v1958
  %v1960 = vpop.f32.mrf.mxu0
  %1961 = vmatprep.mubr.f32.mxu0 %v502
  %1962 = vmatmul.mubr.f32.gmra.mxu0 %v461
  %v1963 = vpop.f32.mrf.mxu0
  %v1964 = vadd.f32 0.0, %v1963
  %v1965 = vpop.f32.mrf.mxu0
  %1966 = vmatprep.mubr.f32.mxu0 %v505
  %1967 = vmatmul.mubr.f32.gmra.mxu0 %v463
  %v1968 = vpop.f32.mrf.mxu0
  %v1969 = vadd.f32 0.0, %v1968
  %v1970 = vpop.f32.mrf.mxu0
  %1971 = vmatprep.mubr.f32.mxu0 %v508
  %1972 = vmatmul.mubr.f32.gmra.mxu0 %v465
  %v1973 = vpop.f32.mrf.mxu0
  %v1974 = vadd.f32 0.0, %v1973
  %v1975 = vpop.f32.mrf.mxu0
  %1976 = vmatprep.mubr.f32.mxu0 %v511
  %1977 = vmatmul.mubr.f32.gmra.mxu0 %v467
  %v1978 = vpop.f32.mrf.mxu0
  %v1979 = vadd.f32 0.0, %v1978
  %v1980 = vpop.f32.mrf.mxu0
  %1981 = vmatprep.mubr.f32.mxu0 %v514
  %1982 = vmatmul.mubr.f32.gmra.mxu0 %v469
  %v1983 = vpop.f32.mrf.mxu0
  %v1984 = vadd.f32 0.0, %v1983
  %v1985 = vpop.f32.mrf.mxu0
  %1986 = vmatprep.mubr.f32.mxu0 %v517
  %1987 = vmatmul.mubr.f32.gmra.mxu0 %v471
  %v1988 = vpop.f32.mrf.mxu0
  %v1989 = vadd.f32 0.0, %v1988
  %v1990 = vpop.f32.mrf.mxu0
  %1991 = vdwg.mxu0
  %s1992 = scalar_lea.vmem %s3, 320
  %v1993 = vld [vmem:[%s1992] sm:$0xff]
  %v1994 = vld [vmem:[%s1992 + $0x8] sm:$0xff]
  %v1995 = vld [vmem:[%s1992 + $0x10] sm:$0xff]
  %v1996 = vld [vmem:[%s1992 + $0x18] sm:$0xff]
  %v1997 = vld [vmem:[%s1992 + $0x20] sm:$0xff]
  %v1998 = vld [vmem:[%s1992 + $0x28] sm:$0xff]
  %v1999 = vld [vmem:[%s1992 + $0x30] sm:$0xff]
  %v2000 = vld [vmem:[%s1992 + $0x38] sm:$0xff]
  %v2002 = vsel %vm775, %v1993, 0
  %v2005 = vsel %vm775, %v1994, 0
  %v2008 = vsel %vm775, %v1995, 0
  %v2011 = vsel %vm775, %v1996, 0
  %v2014 = vsel %vm775, %v1997, 0
  %v2017 = vsel %vm775, %v1998, 0
  %v2020 = vsel %vm775, %v1999, 0
  %v2023 = vsel %vm775, %v2000, 0
  %2025 = vmatprep.subr.mxu0 0.0
  %2026 = vmatpush1.msra.mxu0 0.0
  %2027 = vmatprep.subr.mxu0 0.0
  %2028 = vmatpush1.msra.mxu0 0.0
  %2029 = vmatprep.subr.mxu0 0.0
  %2030 = vmatpush1.msra.mxu0 0.0
  %2031 = vmatprep.subr.mxu0 0.0
  %2032 = vmatpush1.msra.mxu0 0.0
  %2033 = vmatprep.subr.mxu0 0.0
  %2034 = vmatpush1.msra.mxu0 0.0
  %2035 = vmatprep.subr.mxu0 0.0
  %2036 = vmatpush1.msra.mxu0 0.0
  %2037 = vmatprep.subr.mxu0 0.0
  %2038 = vmatpush1.msra.mxu0 0.0
  %2039 = vmatprep.subr.mxu0 0.0
  %2040 = vmatpush1.msra.mxu0 0.0
  %2041 = vmatprep.subr.mxu0 0.0
  %2042 = vmatpush1.msra.mxu0 %v1989
  %2043 = vmatprep.subr.mxu0 0.0
  %2044 = vmatpush1.msra.mxu0 %v1984
  %2045 = vmatprep.subr.mxu0 0.0
  %2046 = vmatpush1.msra.mxu0 %v1979
  %2047 = vmatprep.subr.mxu0 0.0
  %2048 = vmatpush1.msra.mxu0 %v1974
  %2049 = vmatprep.subr.mxu0 0.0
  %2050 = vmatpush1.msra.mxu0 %v1969
  %2051 = vmatprep.subr.mxu0 0.0
  %2052 = vmatpush1.msra.mxu0 %v1964
  %2053 = vmatprep.subr.mxu0 0.0
  %2054 = vmatpush1.msra.mxu0 %v1959
  %2055 = vmatprep.subr.mxu0 0.0
  %2056 = vmatpush1.msra.mxu0 %v1954
  %2057 = vmatprep.subr.mxu0 0.0
  %2058 = vmatpush2.msra.mxu0 0.0
  %2059 = vmatprep.subr.mxu0 0.0
  %2060 = vmatpush2.msra.mxu0 0.0
  %2061 = vmatprep.subr.mxu0 0.0
  %2062 = vmatpush2.msra.mxu0 0.0
  %2063 = vmatprep.subr.mxu0 0.0
  %2064 = vmatpush2.msra.mxu0 0.0
  %2065 = vmatprep.subr.mxu0 0.0
  %2066 = vmatpush2.msra.mxu0 0.0
  %2067 = vmatprep.subr.mxu0 0.0
  %2068 = vmatpush2.msra.mxu0 0.0
  %2069 = vmatprep.subr.mxu0 0.0
  %2070 = vmatpush2.msra.mxu0 0.0
  %2071 = vmatprep.subr.mxu0 0.0
  %2072 = vmatpush2.msra.mxu0 0.0
  %2073 = vmatprep.subr.mxu0 0.0
  %2074 = vmatpush2.msra.mxu0 0.0
  %2075 = vmatprep.subr.mxu0 0.0
  %2076 = vmatpush2.msra.mxu0 0.0
  %2077 = vmatprep.subr.mxu0 0.0
  %2078 = vmatpush2.msra.mxu0 0.0
  %2079 = vmatprep.subr.mxu0 0.0
  %2080 = vmatpush2.msra.mxu0 0.0
  %2081 = vmatprep.subr.mxu0 0.0
  %2082 = vmatpush2.msra.mxu0 0.0
  %2083 = vmatprep.subr.mxu0 0.0
  %2084 = vmatpush2.msra.mxu0 0.0
  %2085 = vmatprep.subr.mxu0 0.0
  %2086 = vmatpush2.msra.mxu0 0.0
  %2087 = vmatprep.subr.mxu0 0.0
  %2088 = vmatpush2.msra.mxu0 0.0
  %2089 = vmatprep.mubr.f32.mxu0 0.0
  %2090 = vmatmul.mubr.f32.gmra.mxu0 %v2002
  %v2091 = vpop.f32.mrf.mxu0
  %v2092 = vadd.f32 0.0, %v2091
  %v2093 = vpop.f32.mrf.mxu0
  %2094 = vmatprep.mubr.f32.mxu0 0.0
  %2095 = vmatmul.mubr.f32.gmra.mxu0 %v2005
  %v2096 = vpop.f32.mrf.mxu0
  %v2097 = vadd.f32 0.0, %v2096
  %v2098 = vpop.f32.mrf.mxu0
  %2099 = vmatprep.mubr.f32.mxu0 0.0
  %2100 = vmatmul.mubr.f32.gmra.mxu0 %v2008
  %v2101 = vpop.f32.mrf.mxu0
  %v2102 = vadd.f32 0.0, %v2101
  %v2103 = vpop.f32.mrf.mxu0
  %2104 = vmatprep.mubr.f32.mxu0 0.0
  %2105 = vmatmul.mubr.f32.gmra.mxu0 %v2011
  %v2106 = vpop.f32.mrf.mxu0
  %v2107 = vadd.f32 0.0, %v2106
  %v2108 = vpop.f32.mrf.mxu0
  %2109 = vmatprep.mubr.f32.mxu0 0.0
  %2110 = vmatmul.mubr.f32.gmra.mxu0 %v2014
  %v2111 = vpop.f32.mrf.mxu0
  %v2112 = vadd.f32 0.0, %v2111
  %v2113 = vpop.f32.mrf.mxu0
  %2114 = vmatprep.mubr.f32.mxu0 0.0
  %2115 = vmatmul.mubr.f32.gmra.mxu0 %v2017
  %v2116 = vpop.f32.mrf.mxu0
  %v2117 = vadd.f32 0.0, %v2116
  %v2118 = vpop.f32.mrf.mxu0
  %2119 = vmatprep.mubr.f32.mxu0 0.0
  %2120 = vmatmul.mubr.f32.gmra.mxu0 %v2020
  %v2121 = vpop.f32.mrf.mxu0
  %v2122 = vadd.f32 0.0, %v2121
  %v2123 = vpop.f32.mrf.mxu0
  %2124 = vmatprep.mubr.f32.mxu0 0.0
  %2125 = vmatmul.mubr.f32.gmra.mxu0 %v2023
  %v2126 = vpop.f32.mrf.mxu0
  %v2127 = vadd.f32 0.0, %v2126
  %v2128 = vpop.f32.mrf.mxu0
  %2129 = vdwg.mxu0
  %v2130 = vadd.f32 %v1854, %v2092
  %v2131 = vadd.f32 %v1855, %v2097
  %v2132 = vadd.f32 %v1856, %v2102
  %v2133 = vadd.f32 %v1857, %v2107
  %v2134 = vadd.f32 %v1858, %v2112
  %v2135 = vadd.f32 %v1859, %v2117
  %v2136 = vadd.f32 %v1860, %v2122
  %v2137 = vadd.f32 %v1861, %v2127
  %s2138 = scalar_lea.vmem %s5, 1008
  %v2139 = vld [vmem:[%s2138] sm:$0xff]
  %v2140 = vld [vmem:[%s2138 + $0x8] sm:$0xff]
  %v2141 = vld [vmem:[%s2138 + $0x10] sm:$0xff]
  %v2142 = vld [vmem:[%s2138 + $0x18] sm:$0xff]
  %v2143 = vld [vmem:[%s2138 + $0x20] sm:$0xff]
  %v2144 = vld [vmem:[%s2138 + $0x28] sm:$0xff]
  %v2145 = vld [vmem:[%s2138 + $0x30] sm:$0xff]
  %v2146 = vld [vmem:[%s2138 + $0x38] sm:$0xff]
  %v2147 = vld [vmem:[%s2138 + $0x40] sm:$0xff]
  %v2148 = vld [vmem:[%s2138 + $0x48] sm:$0xff]
  %v2149 = vld [vmem:[%s2138 + $0x50] sm:$0xff]
  %v2150 = vld [vmem:[%s2138 + $0x58] sm:$0xff]
  %v2151 = vld [vmem:[%s2138 + $0x60] sm:$0xff]
  %v2152 = vld [vmem:[%s2138 + $0x68] sm:$0xff]
  %v2153 = vld [vmem:[%s2138 + $0x70] sm:$0xff]
  %v2154 = vld [vmem:[%s2138 + $0x78] sm:$0xff]
  %v2155 = vld [vmem:[%s2138 + $0x80] sm:$0xff]
  %v2156 = vld [vmem:[%s2138 + $0x88] sm:$0xff]
  %v2157 = vld [vmem:[%s2138 + $0x90] sm:$0xff]
  %v2158 = vld [vmem:[%s2138 + $0x98] sm:$0xff]
  %v2159 = vld [vmem:[%s2138 + $0xa0] sm:$0x3]
  %v2161 = vsel %vm519, %v2159, 0
  %2163 = vmatprep.subr.mxu0 0.0
  %2164 = vmatpush1.msra.mxu0 %v2154
  %2165 = vmatprep.subr.mxu0 0.0
  %2166 = vmatpush1.msra.mxu0 %v2153
  %2167 = vmatprep.subr.mxu0 0.0
  %2168 = vmatpush1.msra.mxu0 %v2152
  %2169 = vmatprep.subr.mxu0 0.0
  %2170 = vmatpush1.msra.mxu0 %v2151
  %2171 = vmatprep.subr.mxu0 0.0
  %2172 = vmatpush1.msra.mxu0 %v2150
  %2173 = vmatprep.subr.mxu0 0.0
  %2174 = vmatpush1.msra.mxu0 %v2149
  %2175 = vmatprep.subr.mxu0 0.0
  %2176 = vmatpush1.msra.mxu0 %v2148
  %2177 = vmatprep.subr.mxu0 0.0
  %2178 = vmatpush1.msra.mxu0 %v2147
  %2179 = vmatprep.subr.mxu0 0.0
  %2180 = vmatpush1.msra.mxu0 %v2146
  %2181 = vmatprep.subr.mxu0 0.0
  %2182 = vmatpush1.msra.mxu0 %v2145
  %2183 = vmatprep.subr.mxu0 0.0
  %2184 = vmatpush1.msra.mxu0 %v2144
  %2185 = vmatprep.subr.mxu0 0.0
  %2186 = vmatpush1.msra.mxu0 %v2143
  %2187 = vmatprep.subr.mxu0 0.0
  %2188 = vmatpush1.msra.mxu0 %v2142
  %2189 = vmatprep.subr.mxu0 0.0
  %2190 = vmatpush1.msra.mxu0 %v2141
  %2191 = vmatprep.subr.mxu0 0.0
  %2192 = vmatpush1.msra.mxu0 %v2140
  %2193 = vmatprep.subr.mxu0 0.0
  %2194 = vmatpush1.msra.mxu0 %v2139
  %2195 = vmatprep.subr.mxu0 0.0
  %2196 = vmatpush2.msra.mxu0 0.0
  %2197 = vmatprep.subr.mxu0 0.0
  %2198 = vmatpush2.msra.mxu0 0.0
  %2199 = vmatprep.subr.mxu0 0.0
  %2200 = vmatpush2.msra.mxu0 0.0
  %2201 = vmatprep.subr.mxu0 0.0
  %2202 = vmatpush2.msra.mxu0 0.0
  %2203 = vmatprep.subr.mxu0 0.0
  %2204 = vmatpush2.msra.mxu0 0.0
  %2205 = vmatprep.subr.mxu0 0.0
  %2206 = vmatpush2.msra.mxu0 0.0
  %2207 = vmatprep.subr.mxu0 0.0
  %2208 = vmatpush2.msra.mxu0 0.0
  %2209 = vmatprep.subr.mxu0 0.0
  %2210 = vmatpush2.msra.mxu0 0.0
  %2211 = vmatprep.subr.mxu0 0.0
  %2212 = vmatpush2.msra.mxu0 0.0
  %2213 = vmatprep.subr.mxu0 0.0
  %2214 = vmatpush2.msra.mxu0 0.0
  %2215 = vmatprep.subr.mxu0 0.0
  %2216 = vmatpush2.msra.mxu0 0.0
  %2217 = vmatprep.subr.mxu0 0.0
  %2218 = vmatpush2.msra.mxu0 %v2161
  %2219 = vmatprep.subr.mxu0 0.0
  %2220 = vmatpush2.msra.mxu0 %v2158
  %2221 = vmatprep.subr.mxu0 0.0
  %2222 = vmatpush2.msra.mxu0 %v2157
  %2223 = vmatprep.subr.mxu0 0.0
  %2224 = vmatpush2.msra.mxu0 %v2156
  %2225 = vmatprep.subr.mxu0 0.0
  %2226 = vmatpush2.msra.mxu0 %v2155
  %2227 = vmatprep.mubr.f32.mxu0 %v496
  %2228 = vmatmul.mubr.f32.gmra.mxu0 %v457
  %v2229 = vpop.f32.mrf.mxu0
  %v2230 = vadd.f32 0.0, %v2229
  %v2231 = vpop.f32.mrf.mxu0
  %2232 = vmatprep.mubr.f32.mxu0 %v499
  %2233 = vmatmul.mubr.f32.gmra.mxu0 %v459
  %v2234 = vpop.f32.mrf.mxu0
  %v2235 = vadd.f32 0.0, %v2234
  %v2236 = vpop.f32.mrf.mxu0
  %2237 = vmatprep.mubr.f32.mxu0 %v502
  %2238 = vmatmul.mubr.f32.gmra.mxu0 %v461
  %v2239 = vpop.f32.mrf.mxu0
  %v2240 = vadd.f32 0.0, %v2239
  %v2241 = vpop.f32.mrf.mxu0
  %2242 = vmatprep.mubr.f32.mxu0 %v505
  %2243 = vmatmul.mubr.f32.gmra.mxu0 %v463
  %v2244 = vpop.f32.mrf.mxu0
  %v2245 = vadd.f32 0.0, %v2244
  %v2246 = vpop.f32.mrf.mxu0
  %2247 = vmatprep.mubr.f32.mxu0 %v508
  %2248 = vmatmul.mubr.f32.gmra.mxu0 %v465
  %v2249 = vpop.f32.mrf.mxu0
  %v2250 = vadd.f32 0.0, %v2249
  %v2251 = vpop.f32.mrf.mxu0
  %2252 = vmatprep.mubr.f32.mxu0 %v511
  %2253 = vmatmul.mubr.f32.gmra.mxu0 %v467
  %v2254 = vpop.f32.mrf.mxu0
  %v2255 = vadd.f32 0.0, %v2254
  %v2256 = vpop.f32.mrf.mxu0
  %2257 = vmatprep.mubr.f32.mxu0 %v514
  %2258 = vmatmul.mubr.f32.gmra.mxu0 %v469
  %v2259 = vpop.f32.mrf.mxu0
  %v2260 = vadd.f32 0.0, %v2259
  %v2261 = vpop.f32.mrf.mxu0
  %2262 = vmatprep.mubr.f32.mxu0 %v517
  %2263 = vmatmul.mubr.f32.gmra.mxu0 %v471
  %v2264 = vpop.f32.mrf.mxu0
  %v2265 = vadd.f32 0.0, %v2264
  %v2266 = vpop.f32.mrf.mxu0
  %2267 = vdwg.mxu0
  %s2268 = scalar_lea.vmem %s3, 384
  %v2269 = vld [vmem:[%s2268] sm:$0xff]
  %v2270 = vld [vmem:[%s2268 + $0x8] sm:$0xff]
  %v2271 = vld [vmem:[%s2268 + $0x10] sm:$0xff]
  %v2272 = vld [vmem:[%s2268 + $0x18] sm:$0xff]
  %v2273 = vld [vmem:[%s2268 + $0x20] sm:$0xff]
  %v2274 = vld [vmem:[%s2268 + $0x28] sm:$0xff]
  %v2275 = vld [vmem:[%s2268 + $0x30] sm:$0xff]
  %v2276 = vld [vmem:[%s2268 + $0x38] sm:$0xff]
  %v2278 = vsel %vm775, %v2269, 0
  %v2281 = vsel %vm775, %v2270, 0
  %v2284 = vsel %vm775, %v2271, 0
  %v2287 = vsel %vm775, %v2272, 0
  %v2290 = vsel %vm775, %v2273, 0
  %v2293 = vsel %vm775, %v2274, 0
  %v2296 = vsel %vm775, %v2275, 0
  %v2299 = vsel %vm775, %v2276, 0
  %2301 = vmatprep.subr.mxu0 0.0
  %2302 = vmatpush1.msra.mxu0 0.0
  %2303 = vmatprep.subr.mxu0 0.0
  %2304 = vmatpush1.msra.mxu0 0.0
  %2305 = vmatprep.subr.mxu0 0.0
  %2306 = vmatpush1.msra.mxu0 0.0
  %2307 = vmatprep.subr.mxu0 0.0
  %2308 = vmatpush1.msra.mxu0 0.0
  %2309 = vmatprep.subr.mxu0 0.0
  %2310 = vmatpush1.msra.mxu0 0.0
  %2311 = vmatprep.subr.mxu0 0.0
  %2312 = vmatpush1.msra.mxu0 0.0
  %2313 = vmatprep.subr.mxu0 0.0
  %2314 = vmatpush1.msra.mxu0 0.0
  %2315 = vmatprep.subr.mxu0 0.0
  %2316 = vmatpush1.msra.mxu0 0.0
  %2317 = vmatprep.subr.mxu0 0.0
  %2318 = vmatpush1.msra.mxu0 %v2265
  %2319 = vmatprep.subr.mxu0 0.0
  %2320 = vmatpush1.msra.mxu0 %v2260
  %2321 = vmatprep.subr.mxu0 0.0
  %2322 = vmatpush1.msra.mxu0 %v2255
  %2323 = vmatprep.subr.mxu0 0.0
  %2324 = vmatpush1.msra.mxu0 %v2250
  %2325 = vmatprep.subr.mxu0 0.0
  %2326 = vmatpush1.msra.mxu0 %v2245
  %2327 = vmatprep.subr.mxu0 0.0
  %2328 = vmatpush1.msra.mxu0 %v2240
  %2329 = vmatprep.subr.mxu0 0.0
  %2330 = vmatpush1.msra.mxu0 %v2235
  %2331 = vmatprep.subr.mxu0 0.0
  %2332 = vmatpush1.msra.mxu0 %v2230
  %2333 = vmatprep.subr.mxu0 0.0
  %2334 = vmatpush2.msra.mxu0 0.0
  %2335 = vmatprep.subr.mxu0 0.0
  %2336 = vmatpush2.msra.mxu0 0.0
  %2337 = vmatprep.subr.mxu0 0.0
  %2338 = vmatpush2.msra.mxu0 0.0
  %2339 = vmatprep.subr.mxu0 0.0
  %2340 = vmatpush2.msra.mxu0 0.0
  %2341 = vmatprep.subr.mxu0 0.0
  %2342 = vmatpush2.msra.mxu0 0.0
  %2343 = vmatprep.subr.mxu0 0.0
  %2344 = vmatpush2.msra.mxu0 0.0
  %2345 = vmatprep.subr.mxu0 0.0
  %2346 = vmatpush2.msra.mxu0 0.0
  %2347 = vmatprep.subr.mxu0 0.0
  %2348 = vmatpush2.msra.mxu0 0.0
  %2349 = vmatprep.subr.mxu0 0.0
  %2350 = vmatpush2.msra.mxu0 0.0
  %2351 = vmatprep.subr.mxu0 0.0
  %2352 = vmatpush2.msra.mxu0 0.0
  %2353 = vmatprep.subr.mxu0 0.0
  %2354 = vmatpush2.msra.mxu0 0.0
  %2355 = vmatprep.subr.mxu0 0.0
  %2356 = vmatpush2.msra.mxu0 0.0
  %2357 = vmatprep.subr.mxu0 0.0
  %2358 = vmatpush2.msra.mxu0 0.0
  %2359 = vmatprep.subr.mxu0 0.0
  %2360 = vmatpush2.msra.mxu0 0.0
  %2361 = vmatprep.subr.mxu0 0.0
  %2362 = vmatpush2.msra.mxu0 0.0
  %2363 = vmatprep.subr.mxu0 0.0
  %2364 = vmatpush2.msra.mxu0 0.0
  %2365 = vmatprep.mubr.f32.mxu0 0.0
  %2366 = vmatmul.mubr.f32.gmra.mxu0 %v2278
  %v2367 = vpop.f32.mrf.mxu0
  %v2368 = vadd.f32 0.0, %v2367
  %v2369 = vpop.f32.mrf.mxu0
  %2370 = vmatprep.mubr.f32.mxu0 0.0
  %2371 = vmatmul.mubr.f32.gmra.mxu0 %v2281
  %v2372 = vpop.f32.mrf.mxu0
  %v2373 = vadd.f32 0.0, %v2372
  %v2374 = vpop.f32.mrf.mxu0
  %2375 = vmatprep.mubr.f32.mxu0 0.0
  %2376 = vmatmul.mubr.f32.gmra.mxu0 %v2284
  %v2377 = vpop.f32.mrf.mxu0
  %v2378 = vadd.f32 0.0, %v2377
  %v2379 = vpop.f32.mrf.mxu0
  %2380 = vmatprep.mubr.f32.mxu0 0.0
  %2381 = vmatmul.mubr.f32.gmra.mxu0 %v2287
  %v2382 = vpop.f32.mrf.mxu0
  %v2383 = vadd.f32 0.0, %v2382
  %v2384 = vpop.f32.mrf.mxu0
  %2385 = vmatprep.mubr.f32.mxu0 0.0
  %2386 = vmatmul.mubr.f32.gmra.mxu0 %v2290
  %v2387 = vpop.f32.mrf.mxu0
  %v2388 = vadd.f32 0.0, %v2387
  %v2389 = vpop.f32.mrf.mxu0
  %2390 = vmatprep.mubr.f32.mxu0 0.0
  %2391 = vmatmul.mubr.f32.gmra.mxu0 %v2293
  %v2392 = vpop.f32.mrf.mxu0
  %v2393 = vadd.f32 0.0, %v2392
  %v2394 = vpop.f32.mrf.mxu0
  %2395 = vmatprep.mubr.f32.mxu0 0.0
  %2396 = vmatmul.mubr.f32.gmra.mxu0 %v2296
  %v2397 = vpop.f32.mrf.mxu0
  %v2398 = vadd.f32 0.0, %v2397
  %v2399 = vpop.f32.mrf.mxu0
  %2400 = vmatprep.mubr.f32.mxu0 0.0
  %2401 = vmatmul.mubr.f32.gmra.mxu0 %v2299
  %v2402 = vpop.f32.mrf.mxu0
  %v2403 = vadd.f32 0.0, %v2402
  %v2404 = vpop.f32.mrf.mxu0
  %2405 = vdwg.mxu0
  %v2406 = vadd.f32 %v2130, %v2368
  %v2407 = vadd.f32 %v2131, %v2373
  %v2408 = vadd.f32 %v2132, %v2378
  %v2409 = vadd.f32 %v2133, %v2383
  %v2410 = vadd.f32 %v2134, %v2388
  %v2411 = vadd.f32 %v2135, %v2393
  %v2412 = vadd.f32 %v2136, %v2398
  %v2413 = vadd.f32 %v2137, %v2403
  %s2414 = scalar_lea.vmem %s5, 1176
  %v2415 = vld [vmem:[%s2414] sm:$0xff]
  %v2416 = vld [vmem:[%s2414 + $0x8] sm:$0xff]
  %v2417 = vld [vmem:[%s2414 + $0x10] sm:$0xff]
  %v2418 = vld [vmem:[%s2414 + $0x18] sm:$0xff]
  %v2419 = vld [vmem:[%s2414 + $0x20] sm:$0xff]
  %v2420 = vld [vmem:[%s2414 + $0x28] sm:$0xff]
  %v2421 = vld [vmem:[%s2414 + $0x30] sm:$0xff]
  %v2422 = vld [vmem:[%s2414 + $0x38] sm:$0xff]
  %v2423 = vld [vmem:[%s2414 + $0x40] sm:$0xff]
  %v2424 = vld [vmem:[%s2414 + $0x48] sm:$0xff]
  %v2425 = vld [vmem:[%s2414 + $0x50] sm:$0xff]
  %v2426 = vld [vmem:[%s2414 + $0x58] sm:$0xff]
  %v2427 = vld [vmem:[%s2414 + $0x60] sm:$0xff]
  %v2428 = vld [vmem:[%s2414 + $0x68] sm:$0xff]
  %v2429 = vld [vmem:[%s2414 + $0x70] sm:$0xff]
  %v2430 = vld [vmem:[%s2414 + $0x78] sm:$0xff]
  %v2431 = vld [vmem:[%s2414 + $0x80] sm:$0xff]
  %v2432 = vld [vmem:[%s2414 + $0x88] sm:$0xff]
  %v2433 = vld [vmem:[%s2414 + $0x90] sm:$0xff]
  %v2434 = vld [vmem:[%s2414 + $0x98] sm:$0xff]
  %v2435 = vld [vmem:[%s2414 + $0xa0] sm:$0x3]
  %v2437 = vsel %vm519, %v2435, 0
  %2439 = vmatprep.subr.mxu0 0.0
  %2440 = vmatpush1.msra.mxu0 %v2430
  %2441 = vmatprep.subr.mxu0 0.0
  %2442 = vmatpush1.msra.mxu0 %v2429
  %2443 = vmatprep.subr.mxu0 0.0
  %2444 = vmatpush1.msra.mxu0 %v2428
  %2445 = vmatprep.subr.mxu0 0.0
  %2446 = vmatpush1.msra.mxu0 %v2427
  %2447 = vmatprep.subr.mxu0 0.0
  %2448 = vmatpush1.msra.mxu0 %v2426
  %2449 = vmatprep.subr.mxu0 0.0
  %2450 = vmatpush1.msra.mxu0 %v2425
  %2451 = vmatprep.subr.mxu0 0.0
  %2452 = vmatpush1.msra.mxu0 %v2424
  %2453 = vmatprep.subr.mxu0 0.0
  %2454 = vmatpush1.msra.mxu0 %v2423
  %2455 = vmatprep.subr.mxu0 0.0
  %2456 = vmatpush1.msra.mxu0 %v2422
  %2457 = vmatprep.subr.mxu0 0.0
  %2458 = vmatpush1.msra.mxu0 %v2421
  %2459 = vmatprep.subr.mxu0 0.0
  %2460 = vmatpush1.msra.mxu0 %v2420
  %2461 = vmatprep.subr.mxu0 0.0
  %2462 = vmatpush1.msra.mxu0 %v2419
  %2463 = vmatprep.subr.mxu0 0.0
  %2464 = vmatpush1.msra.mxu0 %v2418
  %2465 = vmatprep.subr.mxu0 0.0
  %2466 = vmatpush1.msra.mxu0 %v2417
  %2467 = vmatprep.subr.mxu0 0.0
  %2468 = vmatpush1.msra.mxu0 %v2416
  %2469 = vmatprep.subr.mxu0 0.0
  %2470 = vmatpush1.msra.mxu0 %v2415
  %2471 = vmatprep.subr.mxu0 0.0
  %2472 = vmatpush2.msra.mxu0 0.0
  %2473 = vmatprep.subr.mxu0 0.0
  %2474 = vmatpush2.msra.mxu0 0.0
  %2475 = vmatprep.subr.mxu0 0.0
  %2476 = vmatpush2.msra.mxu0 0.0
  %2477 = vmatprep.subr.mxu0 0.0
  %2478 = vmatpush2.msra.mxu0 0.0
  %2479 = vmatprep.subr.mxu0 0.0
  %2480 = vmatpush2.msra.mxu0 0.0
  %2481 = vmatprep.subr.mxu0 0.0
  %2482 = vmatpush2.msra.mxu0 0.0
  %2483 = vmatprep.subr.mxu0 0.0
  %2484 = vmatpush2.msra.mxu0 0.0
  %2485 = vmatprep.subr.mxu0 0.0
  %2486 = vmatpush2.msra.mxu0 0.0
  %2487 = vmatprep.subr.mxu0 0.0
  %2488 = vmatpush2.msra.mxu0 0.0
  %2489 = vmatprep.subr.mxu0 0.0
  %2490 = vmatpush2.msra.mxu0 0.0
  %2491 = vmatprep.subr.mxu0 0.0
  %2492 = vmatpush2.msra.mxu0 0.0
  %2493 = vmatprep.subr.mxu0 0.0
  %2494 = vmatpush2.msra.mxu0 %v2437
  %2495 = vmatprep.subr.mxu0 0.0
  %2496 = vmatpush2.msra.mxu0 %v2434
  %2497 = vmatprep.subr.mxu0 0.0
  %2498 = vmatpush2.msra.mxu0 %v2433
  %2499 = vmatprep.subr.mxu0 0.0
  %2500 = vmatpush2.msra.mxu0 %v2432
  %2501 = vmatprep.subr.mxu0 0.0
  %2502 = vmatpush2.msra.mxu0 %v2431
  %2503 = vmatprep.mubr.f32.mxu0 %v496
  %2504 = vmatmul.mubr.f32.gmra.mxu0 %v457
  %v2505 = vpop.f32.mrf.mxu0
  %v2506 = vadd.f32 0.0, %v2505
  %v2507 = vpop.f32.mrf.mxu0
  %2508 = vmatprep.mubr.f32.mxu0 %v499
  %2509 = vmatmul.mubr.f32.gmra.mxu0 %v459
  %v2510 = vpop.f32.mrf.mxu0
  %v2511 = vadd.f32 0.0, %v2510
  %v2512 = vpop.f32.mrf.mxu0
  %2513 = vmatprep.mubr.f32.mxu0 %v502
  %2514 = vmatmul.mubr.f32.gmra.mxu0 %v461
  %v2515 = vpop.f32.mrf.mxu0
  %v2516 = vadd.f32 0.0, %v2515
  %v2517 = vpop.f32.mrf.mxu0
  %2518 = vmatprep.mubr.f32.mxu0 %v505
  %2519 = vmatmul.mubr.f32.gmra.mxu0 %v463
  %v2520 = vpop.f32.mrf.mxu0
  %v2521 = vadd.f32 0.0, %v2520
  %v2522 = vpop.f32.mrf.mxu0
  %2523 = vmatprep.mubr.f32.mxu0 %v508
  %2524 = vmatmul.mubr.f32.gmra.mxu0 %v465
  %v2525 = vpop.f32.mrf.mxu0
  %v2526 = vadd.f32 0.0, %v2525
  %v2527 = vpop.f32.mrf.mxu0
  %2528 = vmatprep.mubr.f32.mxu0 %v511
  %2529 = vmatmul.mubr.f32.gmra.mxu0 %v467
  %v2530 = vpop.f32.mrf.mxu0
  %v2531 = vadd.f32 0.0, %v2530
  %v2532 = vpop.f32.mrf.mxu0
  %2533 = vmatprep.mubr.f32.mxu0 %v514
  %2534 = vmatmul.mubr.f32.gmra.mxu0 %v469
  %v2535 = vpop.f32.mrf.mxu0
  %v2536 = vadd.f32 0.0, %v2535
  %v2537 = vpop.f32.mrf.mxu0
  %2538 = vmatprep.mubr.f32.mxu0 %v517
  %2539 = vmatmul.mubr.f32.gmra.mxu0 %v471
  %v2540 = vpop.f32.mrf.mxu0
  %v2541 = vadd.f32 0.0, %v2540
  %v2542 = vpop.f32.mrf.mxu0
  %2543 = vdwg.mxu0
  %s2544 = scalar_lea.vmem %s3, 448
  %v2545 = vld [vmem:[%s2544] sm:$0xff]
  %v2546 = vld [vmem:[%s2544 + $0x8] sm:$0xff]
  %v2547 = vld [vmem:[%s2544 + $0x10] sm:$0xff]
  %v2548 = vld [vmem:[%s2544 + $0x18] sm:$0xff]
  %v2549 = vld [vmem:[%s2544 + $0x20] sm:$0xff]
  %v2550 = vld [vmem:[%s2544 + $0x28] sm:$0xff]
  %v2551 = vld [vmem:[%s2544 + $0x30] sm:$0xff]
  %v2552 = vld [vmem:[%s2544 + $0x38] sm:$0xff]
  %v2554 = vsel %vm775, %v2545, 0
  %v2557 = vsel %vm775, %v2546, 0
  %v2560 = vsel %vm775, %v2547, 0
  %v2563 = vsel %vm775, %v2548, 0
  %v2566 = vsel %vm775, %v2549, 0
  %v2569 = vsel %vm775, %v2550, 0
  %v2572 = vsel %vm775, %v2551, 0
  %v2575 = vsel %vm775, %v2552, 0
  %2577 = vmatprep.subr.mxu0 0.0
  %2578 = vmatpush1.msra.mxu0 0.0
  %2579 = vmatprep.subr.mxu0 0.0
  %2580 = vmatpush1.msra.mxu0 0.0
  %2581 = vmatprep.subr.mxu0 0.0
  %2582 = vmatpush1.msra.mxu0 0.0
  %2583 = vmatprep.subr.mxu0 0.0
  %2584 = vmatpush1.msra.mxu0 0.0
  %2585 = vmatprep.subr.mxu0 0.0
  %2586 = vmatpush1.msra.mxu0 0.0
  %2587 = vmatprep.subr.mxu0 0.0
  %2588 = vmatpush1.msra.mxu0 0.0
  %2589 = vmatprep.subr.mxu0 0.0
  %2590 = vmatpush1.msra.mxu0 0.0
  %2591 = vmatprep.subr.mxu0 0.0
  %2592 = vmatpush1.msra.mxu0 0.0
  %2593 = vmatprep.subr.mxu0 0.0
  %2594 = vmatpush1.msra.mxu0 %v2541
  %2595 = vmatprep.subr.mxu0 0.0
  %2596 = vmatpush1.msra.mxu0 %v2536
  %2597 = vmatprep.subr.mxu0 0.0
  %2598 = vmatpush1.msra.mxu0 %v2531
  %2599 = vmatprep.subr.mxu0 0.0
  %2600 = vmatpush1.msra.mxu0 %v2526
  %2601 = vmatprep.subr.mxu0 0.0
  %2602 = vmatpush1.msra.mxu0 %v2521
  %2603 = vmatprep.subr.mxu0 0.0
  %2604 = vmatpush1.msra.mxu0 %v2516
  %2605 = vmatprep.subr.mxu0 0.0
  %2606 = vmatpush1.msra.mxu0 %v2511
  %2607 = vmatprep.subr.mxu0 0.0
  %2608 = vmatpush1.msra.mxu0 %v2506
  %2609 = vmatprep.subr.mxu0 0.0
  %2610 = vmatpush2.msra.mxu0 0.0
  %2611 = vmatprep.subr.mxu0 0.0
  %2612 = vmatpush2.msra.mxu0 0.0
  %2613 = vmatprep.subr.mxu0 0.0
  %2614 = vmatpush2.msra.mxu0 0.0
  %2615 = vmatprep.subr.mxu0 0.0
  %2616 = vmatpush2.msra.mxu0 0.0
  %2617 = vmatprep.subr.mxu0 0.0
  %2618 = vmatpush2.msra.mxu0 0.0
  %2619 = vmatprep.subr.mxu0 0.0
  %2620 = vmatpush2.msra.mxu0 0.0
  %2621 = vmatprep.subr.mxu0 0.0
  %2622 = vmatpush2.msra.mxu0 0.0
  %2623 = vmatprep.subr.mxu0 0.0
  %2624 = vmatpush2.msra.mxu0 0.0
  %2625 = vmatprep.subr.mxu0 0.0
  %2626 = vmatpush2.msra.mxu0 0.0
  %2627 = vmatprep.subr.mxu0 0.0
  %2628 = vmatpush2.msra.mxu0 0.0
  %2629 = vmatprep.subr.mxu0 0.0
  %2630 = vmatpush2.msra.mxu0 0.0
  %2631 = vmatprep.subr.mxu0 0.0
  %2632 = vmatpush2.msra.mxu0 0.0
  %2633 = vmatprep.subr.mxu0 0.0
  %2634 = vmatpush2.msra.mxu0 0.0
  %2635 = vmatprep.subr.mxu0 0.0
  %2636 = vmatpush2.msra.mxu0 0.0
  %2637 = vmatprep.subr.mxu0 0.0
  %2638 = vmatpush2.msra.mxu0 0.0
  %2639 = vmatprep.subr.mxu0 0.0
  %2640 = vmatpush2.msra.mxu0 0.0
  %2641 = vmatprep.mubr.f32.mxu0 0.0
  %2642 = vmatmul.mubr.f32.gmra.mxu0 %v2554
  %v2643 = vpop.f32.mrf.mxu0
  %v2644 = vadd.f32 0.0, %v2643
  %v2645 = vpop.f32.mrf.mxu0
  %2646 = vmatprep.mubr.f32.mxu0 0.0
  %2647 = vmatmul.mubr.f32.gmra.mxu0 %v2557
  %v2648 = vpop.f32.mrf.mxu0
  %v2649 = vadd.f32 0.0, %v2648
  %v2650 = vpop.f32.mrf.mxu0
  %2651 = vmatprep.mubr.f32.mxu0 0.0
  %2652 = vmatmul.mubr.f32.gmra.mxu0 %v2560
  %v2653 = vpop.f32.mrf.mxu0
  %v2654 = vadd.f32 0.0, %v2653
  %v2655 = vpop.f32.mrf.mxu0
  %2656 = vmatprep.mubr.f32.mxu0 0.0
  %2657 = vmatmul.mubr.f32.gmra.mxu0 %v2563
  %v2658 = vpop.f32.mrf.mxu0
  %v2659 = vadd.f32 0.0, %v2658
  %v2660 = vpop.f32.mrf.mxu0
  %2661 = vmatprep.mubr.f32.mxu0 0.0
  %2662 = vmatmul.mubr.f32.gmra.mxu0 %v2566
  %v2663 = vpop.f32.mrf.mxu0
  %v2664 = vadd.f32 0.0, %v2663
  %v2665 = vpop.f32.mrf.mxu0
  %2666 = vmatprep.mubr.f32.mxu0 0.0
  %2667 = vmatmul.mubr.f32.gmra.mxu0 %v2569
  %v2668 = vpop.f32.mrf.mxu0
  %v2669 = vadd.f32 0.0, %v2668
  %v2670 = vpop.f32.mrf.mxu0
  %2671 = vmatprep.mubr.f32.mxu0 0.0
  %2672 = vmatmul.mubr.f32.gmra.mxu0 %v2572
  %v2673 = vpop.f32.mrf.mxu0
  %v2674 = vadd.f32 0.0, %v2673
  %v2675 = vpop.f32.mrf.mxu0
  %2676 = vmatprep.mubr.f32.mxu0 0.0
  %2677 = vmatmul.mubr.f32.gmra.mxu0 %v2575
  %v2678 = vpop.f32.mrf.mxu0
  %v2679 = vadd.f32 0.0, %v2678
  %v2680 = vpop.f32.mrf.mxu0
  %2681 = vdwg.mxu0
  %v2682 = vadd.f32 %v2406, %v2644
  %v2683 = vadd.f32 %v2407, %v2649
  %v2684 = vadd.f32 %v2408, %v2654
  %v2685 = vadd.f32 %v2409, %v2659
  %v2686 = vadd.f32 %v2410, %v2664
  %v2687 = vadd.f32 %v2411, %v2669
  %v2688 = vadd.f32 %v2412, %v2674
  %v2689 = vadd.f32 %v2413, %v2679
  %s2690 = scalar_lea.vmem %s5, 1344
  %v2691 = vld [vmem:[%s2690] sm:$0xff]
  %v2692 = vld [vmem:[%s2690 + $0x8] sm:$0xff]
  %v2693 = vld [vmem:[%s2690 + $0x10] sm:$0xff]
  %v2694 = vld [vmem:[%s2690 + $0x18] sm:$0xff]
  %v2695 = vld [vmem:[%s2690 + $0x20] sm:$0xff]
  %v2696 = vld [vmem:[%s2690 + $0x28] sm:$0xff]
  %v2697 = vld [vmem:[%s2690 + $0x30] sm:$0xff]
  %v2698 = vld [vmem:[%s2690 + $0x38] sm:$0xff]
  %v2699 = vld [vmem:[%s2690 + $0x40] sm:$0xff]
  %v2700 = vld [vmem:[%s2690 + $0x48] sm:$0xff]
  %v2701 = vld [vmem:[%s2690 + $0x50] sm:$0xff]
  %v2702 = vld [vmem:[%s2690 + $0x58] sm:$0xff]
  %v2703 = vld [vmem:[%s2690 + $0x60] sm:$0xff]
  %v2704 = vld [vmem:[%s2690 + $0x68] sm:$0xff]
  %v2705 = vld [vmem:[%s2690 + $0x70] sm:$0xff]
  %v2706 = vld [vmem:[%s2690 + $0x78] sm:$0xff]
  %v2707 = vld [vmem:[%s2690 + $0x80] sm:$0xff]
  %v2708 = vld [vmem:[%s2690 + $0x88] sm:$0xff]
  %v2709 = vld [vmem:[%s2690 + $0x90] sm:$0xff]
  %v2710 = vld [vmem:[%s2690 + $0x98] sm:$0xff]
  %v2711 = vld [vmem:[%s2690 + $0xa0] sm:$0x3]
  %v2713 = vsel %vm519, %v2711, 0
  %2715 = vmatprep.subr.mxu0 0.0
  %2716 = vmatpush1.msra.mxu0 %v2706
  %2717 = vmatprep.subr.mxu0 0.0
  %2718 = vmatpush1.msra.mxu0 %v2705
  %2719 = vmatprep.subr.mxu0 0.0
  %2720 = vmatpush1.msra.mxu0 %v2704
  %2721 = vmatprep.subr.mxu0 0.0
  %2722 = vmatpush1.msra.mxu0 %v2703
  %2723 = vmatprep.subr.mxu0 0.0
  %2724 = vmatpush1.msra.mxu0 %v2702
  %2725 = vmatprep.subr.mxu0 0.0
  %2726 = vmatpush1.msra.mxu0 %v2701
  %2727 = vmatprep.subr.mxu0 0.0
  %2728 = vmatpush1.msra.mxu0 %v2700
  %2729 = vmatprep.subr.mxu0 0.0
  %2730 = vmatpush1.msra.mxu0 %v2699
  %2731 = vmatprep.subr.mxu0 0.0
  %2732 = vmatpush1.msra.mxu0 %v2698
  %2733 = vmatprep.subr.mxu0 0.0
  %2734 = vmatpush1.msra.mxu0 %v2697
  %2735 = vmatprep.subr.mxu0 0.0
  %2736 = vmatpush1.msra.mxu0 %v2696
  %2737 = vmatprep.subr.mxu0 0.0
  %2738 = vmatpush1.msra.mxu0 %v2695
  %2739 = vmatprep.subr.mxu0 0.0
  %2740 = vmatpush1.msra.mxu0 %v2694
  %2741 = vmatprep.subr.mxu0 0.0
  %2742 = vmatpush1.msra.mxu0 %v2693
  %2743 = vmatprep.subr.mxu0 0.0
  %2744 = vmatpush1.msra.mxu0 %v2692
  %2745 = vmatprep.subr.mxu0 0.0
  %2746 = vmatpush1.msra.mxu0 %v2691
  %2747 = vmatprep.subr.mxu0 0.0
  %2748 = vmatpush2.msra.mxu0 0.0
  %2749 = vmatprep.subr.mxu0 0.0
  %2750 = vmatpush2.msra.mxu0 0.0
  %2751 = vmatprep.subr.mxu0 0.0
  %2752 = vmatpush2.msra.mxu0 0.0
  %2753 = vmatprep.subr.mxu0 0.0
  %2754 = vmatpush2.msra.mxu0 0.0
  %2755 = vmatprep.subr.mxu0 0.0
  %2756 = vmatpush2.msra.mxu0 0.0
  %2757 = vmatprep.subr.mxu0 0.0
  %2758 = vmatpush2.msra.mxu0 0.0
  %2759 = vmatprep.subr.mxu0 0.0
  %2760 = vmatpush2.msra.mxu0 0.0
  %2761 = vmatprep.subr.mxu0 0.0
  %2762 = vmatpush2.msra.mxu0 0.0
  %2763 = vmatprep.subr.mxu0 0.0
  %2764 = vmatpush2.msra.mxu0 0.0
  %2765 = vmatprep.subr.mxu0 0.0
  %2766 = vmatpush2.msra.mxu0 0.0
  %2767 = vmatprep.subr.mxu0 0.0
  %2768 = vmatpush2.msra.mxu0 0.0
  %2769 = vmatprep.subr.mxu0 0.0
  %2770 = vmatpush2.msra.mxu0 %v2713
  %2771 = vmatprep.subr.mxu0 0.0
  %2772 = vmatpush2.msra.mxu0 %v2710
  %2773 = vmatprep.subr.mxu0 0.0
  %2774 = vmatpush2.msra.mxu0 %v2709
  %2775 = vmatprep.subr.mxu0 0.0
  %2776 = vmatpush2.msra.mxu0 %v2708
  %2777 = vmatprep.subr.mxu0 0.0
  %2778 = vmatpush2.msra.mxu0 %v2707
  %2779 = vmatprep.mubr.f32.mxu0 %v496
  %2780 = vmatmul.mubr.f32.gmra.mxu0 %v457
  %v2781 = vpop.f32.mrf.mxu0
  %v2782 = vadd.f32 0.0, %v2781
  %v2783 = vpop.f32.mrf.mxu0
  %2784 = vmatprep.mubr.f32.mxu0 %v499
  %2785 = vmatmul.mubr.f32.gmra.mxu0 %v459
  %v2786 = vpop.f32.mrf.mxu0
  %v2787 = vadd.f32 0.0, %v2786
  %v2788 = vpop.f32.mrf.mxu0
  %2789 = vmatprep.mubr.f32.mxu0 %v502
  %2790 = vmatmul.mubr.f32.gmra.mxu0 %v461
  %v2791 = vpop.f32.mrf.mxu0
  %v2792 = vadd.f32 0.0, %v2791
  %v2793 = vpop.f32.mrf.mxu0
  %2794 = vmatprep.mubr.f32.mxu0 %v505
  %2795 = vmatmul.mubr.f32.gmra.mxu0 %v463
  %v2796 = vpop.f32.mrf.mxu0
  %v2797 = vadd.f32 0.0, %v2796
  %v2798 = vpop.f32.mrf.mxu0
  %2799 = vmatprep.mubr.f32.mxu0 %v508
  %2800 = vmatmul.mubr.f32.gmra.mxu0 %v465
  %v2801 = vpop.f32.mrf.mxu0
  %v2802 = vadd.f32 0.0, %v2801
  %v2803 = vpop.f32.mrf.mxu0
  %2804 = vmatprep.mubr.f32.mxu0 %v511
  %2805 = vmatmul.mubr.f32.gmra.mxu0 %v467
  %v2806 = vpop.f32.mrf.mxu0
  %v2807 = vadd.f32 0.0, %v2806
  %v2808 = vpop.f32.mrf.mxu0
  %2809 = vmatprep.mubr.f32.mxu0 %v514
  %2810 = vmatmul.mubr.f32.gmra.mxu0 %v469
  %v2811 = vpop.f32.mrf.mxu0
  %v2812 = vadd.f32 0.0, %v2811
  %v2813 = vpop.f32.mrf.mxu0
  %2814 = vmatprep.mubr.f32.mxu0 %v517
  %2815 = vmatmul.mubr.f32.gmra.mxu0 %v471
  %v2816 = vpop.f32.mrf.mxu0
  %v2817 = vadd.f32 0.0, %v2816
  %v2818 = vpop.f32.mrf.mxu0
  %2819 = vdwg.mxu0
  %s2820 = scalar_lea.vmem %s3, 512
  %v2821 = vld [vmem:[%s2820] sm:$0xff]
  %v2822 = vld [vmem:[%s2820 + $0x8] sm:$0xff]
  %v2823 = vld [vmem:[%s2820 + $0x10] sm:$0xff]
  %v2824 = vld [vmem:[%s2820 + $0x18] sm:$0xff]
  %v2825 = vld [vmem:[%s2820 + $0x20] sm:$0xff]
  %v2826 = vld [vmem:[%s2820 + $0x28] sm:$0xff]
  %v2827 = vld [vmem:[%s2820 + $0x30] sm:$0xff]
  %v2828 = vld [vmem:[%s2820 + $0x38] sm:$0xff]
  %v2830 = vsel %vm775, %v2821, 0
  %v2833 = vsel %vm775, %v2822, 0
  %v2836 = vsel %vm775, %v2823, 0
  %v2839 = vsel %vm775, %v2824, 0
  %v2842 = vsel %vm775, %v2825, 0
  %v2845 = vsel %vm775, %v2826, 0
  %v2848 = vsel %vm775, %v2827, 0
  %v2851 = vsel %vm775, %v2828, 0
  %2853 = vmatprep.subr.mxu0 0.0
  %2854 = vmatpush1.msra.mxu0 0.0
  %2855 = vmatprep.subr.mxu0 0.0
  %2856 = vmatpush1.msra.mxu0 0.0
  %2857 = vmatprep.subr.mxu0 0.0
  %2858 = vmatpush1.msra.mxu0 0.0
  %2859 = vmatprep.subr.mxu0 0.0
  %2860 = vmatpush1.msra.mxu0 0.0
  %2861 = vmatprep.subr.mxu0 0.0
  %2862 = vmatpush1.msra.mxu0 0.0
  %2863 = vmatprep.subr.mxu0 0.0
  %2864 = vmatpush1.msra.mxu0 0.0
  %2865 = vmatprep.subr.mxu0 0.0
  %2866 = vmatpush1.msra.mxu0 0.0
  %2867 = vmatprep.subr.mxu0 0.0
  %2868 = vmatpush1.msra.mxu0 0.0
  %2869 = vmatprep.subr.mxu0 0.0
  %2870 = vmatpush1.msra.mxu0 %v2817
  %2871 = vmatprep.subr.mxu0 0.0
  %2872 = vmatpush1.msra.mxu0 %v2812
  %2873 = vmatprep.subr.mxu0 0.0
  %2874 = vmatpush1.msra.mxu0 %v2807
  %2875 = vmatprep.subr.mxu0 0.0
  %2876 = vmatpush1.msra.mxu0 %v2802
  %2877 = vmatprep.subr.mxu0 0.0
  %2878 = vmatpush1.msra.mxu0 %v2797
  %2879 = vmatprep.subr.mxu0 0.0
  %2880 = vmatpush1.msra.mxu0 %v2792
  %2881 = vmatprep.subr.mxu0 0.0
  %2882 = vmatpush1.msra.mxu0 %v2787
  %2883 = vmatprep.subr.mxu0 0.0
  %2884 = vmatpush1.msra.mxu0 %v2782
  %2885 = vmatprep.subr.mxu0 0.0
  %2886 = vmatpush2.msra.mxu0 0.0
  %2887 = vmatprep.subr.mxu0 0.0
  %2888 = vmatpush2.msra.mxu0 0.0
  %2889 = vmatprep.subr.mxu0 0.0
  %2890 = vmatpush2.msra.mxu0 0.0
  %2891 = vmatprep.subr.mxu0 0.0
  %2892 = vmatpush2.msra.mxu0 0.0
  %2893 = vmatprep.subr.mxu0 0.0
  %2894 = vmatpush2.msra.mxu0 0.0
  %2895 = vmatprep.subr.mxu0 0.0
  %2896 = vmatpush2.msra.mxu0 0.0
  %2897 = vmatprep.subr.mxu0 0.0
  %2898 = vmatpush2.msra.mxu0 0.0
  %2899 = vmatprep.subr.mxu0 0.0
  %2900 = vmatpush2.msra.mxu0 0.0
  %2901 = vmatprep.subr.mxu0 0.0
  %2902 = vmatpush2.msra.mxu0 0.0
  %2903 = vmatprep.subr.mxu0 0.0
  %2904 = vmatpush2.msra.mxu0 0.0
  %2905 = vmatprep.subr.mxu0 0.0
  %2906 = vmatpush2.msra.mxu0 0.0
  %2907 = vmatprep.subr.mxu0 0.0
  %2908 = vmatpush2.msra.mxu0 0.0
  %2909 = vmatprep.subr.mxu0 0.0
  %2910 = vmatpush2.msra.mxu0 0.0
  %2911 = vmatprep.subr.mxu0 0.0
  %2912 = vmatpush2.msra.mxu0 0.0
  %2913 = vmatprep.subr.mxu0 0.0
  %2914 = vmatpush2.msra.mxu0 0.0
  %2915 = vmatprep.subr.mxu0 0.0
  %2916 = vmatpush2.msra.mxu0 0.0
  %2917 = vmatprep.mubr.f32.mxu0 0.0
  %2918 = vmatmul.mubr.f32.gmra.mxu0 %v2830
  %v2919 = vpop.f32.mrf.mxu0
  %v2920 = vadd.f32 0.0, %v2919
  %v2921 = vpop.f32.mrf.mxu0
  %2922 = vmatprep.mubr.f32.mxu0 0.0
  %2923 = vmatmul.mubr.f32.gmra.mxu0 %v2833
  %v2924 = vpop.f32.mrf.mxu0
  %v2925 = vadd.f32 0.0, %v2924
  %v2926 = vpop.f32.mrf.mxu0
  %2927 = vmatprep.mubr.f32.mxu0 0.0
  %2928 = vmatmul.mubr.f32.gmra.mxu0 %v2836
  %v2929 = vpop.f32.mrf.mxu0
  %v2930 = vadd.f32 0.0, %v2929
  %v2931 = vpop.f32.mrf.mxu0
  %2932 = vmatprep.mubr.f32.mxu0 0.0
  %2933 = vmatmul.mubr.f32.gmra.mxu0 %v2839
  %v2934 = vpop.f32.mrf.mxu0
  %v2935 = vadd.f32 0.0, %v2934
  %v2936 = vpop.f32.mrf.mxu0
  %2937 = vmatprep.mubr.f32.mxu0 0.0
  %2938 = vmatmul.mubr.f32.gmra.mxu0 %v2842
  %v2939 = vpop.f32.mrf.mxu0
  %v2940 = vadd.f32 0.0, %v2939
  %v2941 = vpop.f32.mrf.mxu0
  %2942 = vmatprep.mubr.f32.mxu0 0.0
  %2943 = vmatmul.mubr.f32.gmra.mxu0 %v2845
  %v2944 = vpop.f32.mrf.mxu0
  %v2945 = vadd.f32 0.0, %v2944
  %v2946 = vpop.f32.mrf.mxu0
  %2947 = vmatprep.mubr.f32.mxu0 0.0
  %2948 = vmatmul.mubr.f32.gmra.mxu0 %v2848
  %v2949 = vpop.f32.mrf.mxu0
  %v2950 = vadd.f32 0.0, %v2949
  %v2951 = vpop.f32.mrf.mxu0
  %2952 = vmatprep.mubr.f32.mxu0 0.0
  %2953 = vmatmul.mubr.f32.gmra.mxu0 %v2851
  %v2954 = vpop.f32.mrf.mxu0
  %v2955 = vadd.f32 0.0, %v2954
  %v2956 = vpop.f32.mrf.mxu0
  %2957 = vdwg.mxu0
  %v2958 = vadd.f32 %v2682, %v2920
  %v2959 = vadd.f32 %v2683, %v2925
  %v2960 = vadd.f32 %v2684, %v2930
  %v2961 = vadd.f32 %v2685, %v2935
  %v2962 = vadd.f32 %v2686, %v2940
  %v2963 = vadd.f32 %v2687, %v2945
  %v2964 = vadd.f32 %v2688, %v2950
  %v2965 = vadd.f32 %v2689, %v2955
  %v2966 = vld [vmem:[%s4] sm:$0xff]
  %v2967 = vld [vmem:[%s4 + $0x8] sm:$0xff]
  %v2968 = vld [vmem:[%s4 + $0x10] sm:$0xff]
  %v2969 = vld [vmem:[%s4 + $0x18] sm:$0xff]
  %v2970 = vld [vmem:[%s4 + $0x20] sm:$0xff]
  %v2971 = vld [vmem:[%s4 + $0x28] sm:$0xff]
  %v2972 = vld [vmem:[%s4 + $0x30] sm:$0xff]
  %v2973 = vld [vmem:[%s4 + $0x38] sm:$0xff]
  %2975 = vset.pattern.permute.xlu0 0
  %2976 = vperm.xlu0 %2975, %v2966
  %v2977 = vpop.permute.xlu0 %2976
  %2980 = vset.pattern.permute.xlu0 0
  %2981 = vperm.xlu0 %2980, %v2967
  %v2982 = vpop.permute.xlu0 %2981
  %2985 = vset.pattern.permute.xlu0 0
  %2986 = vperm.xlu0 %2985, %v2968
  %v2987 = vpop.permute.xlu0 %2986
  %2990 = vset.pattern.permute.xlu0 0
  %2991 = vperm.xlu0 %2990, %v2969
  %v2992 = vpop.permute.xlu0 %2991
  %2995 = vset.pattern.permute.xlu0 0
  %2996 = vperm.xlu0 %2995, %v2970
  %v2997 = vpop.permute.xlu0 %2996
  %3000 = vset.pattern.permute.xlu0 0
  %3001 = vperm.xlu0 %3000, %v2971
  %v3002 = vpop.permute.xlu0 %3001
  %3005 = vset.pattern.permute.xlu0 0
  %3006 = vperm.xlu0 %3005, %v2972
  %v3007 = vpop.permute.xlu0 %3006
  %3010 = vset.pattern.permute.xlu0 0
  %3011 = vperm.xlu0 %3010, %v2973
  %v3012 = vpop.permute.xlu0 %3011
  %v3014 = vadd.f32 %v2958, %v2977
  %v3015 = vadd.f32 %v2959, %v2982
  %v3016 = vadd.f32 %v2960, %v2987
  %v3017 = vadd.f32 %v2961, %v2992
  %v3018 = vadd.f32 %v2962, %v2997
  %v3019 = vadd.f32 %v2963, %v3002
  %v3020 = vadd.f32 %v2964, %v3007
  %v3021 = vadd.f32 %v2965, %v3012
  %v3022 = vmax.f32 %v3014, 0.0
  %v3023 = vmax.f32 %v3015, 0.0
  %v3024 = vmax.f32 %v3016, 0.0
  %v3025 = vmax.f32 %v3017, 0.0
  %v3026 = vmax.f32 %v3018, 0.0
  %v3027 = vmax.f32 %v3019, 0.0
  %v3028 = vmax.f32 %v3020, 0.0
  %v3029 = vmax.f32 %v3021, 0.0
  %vm3030 = vcmask 801792
  %3031 = vst.msk [vmem:[%s6] sm:$0xff] %vm3030, %v3022
  %3032 = vst.msk [vmem:[%s6 + $0x8] sm:$0xff] %vm3030, %v3023
  %3033 = vst.msk [vmem:[%s6 + $0x10] sm:$0xff] %vm3030, %v3024
  %3034 = vst.msk [vmem:[%s6 + $0x18] sm:$0xff] %vm3030, %v3025
  %3035 = vst.msk [vmem:[%s6 + $0x20] sm:$0xff] %vm3030, %v3026
  %3036 = vst.msk [vmem:[%s6 + $0x28] sm:$0xff] %vm3030, %v3027
  %3037 = vst.msk [vmem:[%s6 + $0x30] sm:$0xff] %vm3030, %v3028
  %3038 = vst.msk [vmem:[%s6 + $0x38] sm:$0xff] %vm3030, %v3029
  // Predicated region
  $region26: #{network_forward.4} parent=0 // pred_check
    _
  $region27: #{network_forward.4} parent=0 // pred_check_branch
    %3040 = sbr.rel (0) target = $region29
  $region28: #{network_forward.4} parent=0 // pred_region
    _
  $region29: #{network_forward.4} parent=0 // pred_fallthru
    _
  // Predicated region
  $region30: #{network_forward.4} parent=0 // pred_check
    _
  $region31: #{network_forward.4} parent=0 // pred_check_branch
    %3042 = sbr.rel (0) target = $region33
  $region32: #{network_forward.4} parent=0 // pred_region
    _
  $region33: #{network_forward.4} parent=0 // pred_fallthru
    _

// kernel: network_forward.5
$region0: #{network_forward.5}
  #allocation0 [shape = 'u32[]', space=smem, size = 0x4, offset = 0x4, fixed_abs, tag = 'smem constant byte address 0x4 - core index']
  #allocation1 [shape = 'u32[144,128]{1,0:T(1,128)}', space=vmem, size = 0x12000, scoped, tag = 'internal scratch']
  %s0 = inlined_call_operand.vmem [shape: f32[2,3136], index: 0, kind: input, shape index: {}]
  %s1 = inlined_call_operand.vmem [shape: bf16[3136,512], index: 1, kind: input, shape index: {}]
  %s2 = inlined_call_operand.vmem [shape: f32[1,512], index: 2, kind: input, shape index: {}]
  %s3 = inlined_call_operand.vmem [shape: bf16[512,128], index: 3, kind: input, shape index: {}]
  %s4 = inlined_call_operand.vmem [shape: f32[1,128], index: 4, kind: input, shape index: {}]
  %s5 = inlined_call_operand.hbm [shape: f32[2,128], index: 5, kind: output, shape index: {}]
  %s6 = sld [smem:[#allocation0]]
  $region30: #{network_forward.5} parent=0
    _
  %s8 = ssub.s32 1, %s6
  %s9 = scalar_select 0, %s8, %s6
  $region1: #{network_forward.5} parent=0
    #allocation2 [shape = 'u8[1024]{0}', space=vmem, size = 0x400, scoped, tag = 'output window, operand 0, single buffered']
    #allocation3 [shape = 's32[1]{0}', space=sflag, size = 0x4, scoped, tag = 'scoped memory for network_forward.5']
    %10 = vsyncpa [#allocation3], 0
    // Predicated region
    $region2: #{network_forward.5} parent=1 // pred_check
      _
    $region3: #{network_forward.5} parent=1 // pred_check_branch
      %12 = sbr.rel (0) target = $region5
    $region4: #{network_forward.5} parent=1 // pred_region
      _
    $region5: #{network_forward.5} parent=1 // pred_fallthru
      _
    // Predicated region
    $region6: #{network_forward.5} parent=1 // pred_check
      _
    $region7: #{network_forward.5} parent=1 // pred_check_branch
      %14 = sbr.rel (0) target = $region9
    $region8: #{network_forward.5} parent=1 // pred_region
      _
    $region9: #{network_forward.5} parent=1 // pred_fallthru
      _
    // Predicated region
    $region10: #{network_forward.5} parent=1 // pred_check
      _
    $region11: #{network_forward.5} parent=1 // pred_check_branch
      %16 = sbr.rel (0) target = $region13
    $region12: #{network_forward.5} parent=1 // pred_region
      _
    $region13: #{network_forward.5} parent=1 // pred_fallthru
      _
    // Predicated region
    $region14: #{network_forward.5} parent=1 // pred_check
      _
    $region15: #{network_forward.5} parent=1 // pred_check_branch
      %18 = sbr.rel (0) target = $region17
    $region16: #{network_forward.5} parent=1 // pred_region
      _
    $region17: #{network_forward.5} parent=1 // pred_fallthru
      _
    // Predicated region
    $region18: #{network_forward.5} parent=1 // pred_check
      _
    $region19: #{network_forward.5} parent=1 // pred_check_branch
      %20 = sbr.rel (0) target = $region21
    $region20: #{network_forward.5} parent=1 // pred_region
      _
    $region21: #{network_forward.5} parent=1 // pred_fallthru
      _
    %v22 = vld [vmem:[%s0] sm:$0xff]
    %v23 = vld [vmem:[%s0 + $0x8] sm:$0xff]
    %v24 = vld [vmem:[%s0 + $0x10] sm:$0xff]
    %v25 = vld [vmem:[%s0 + $0x18] sm:$0xff]
    %v26 = vld [vmem:[%s0 + $0x20] sm:$0xff]
    %v27 = vld [vmem:[%s0 + $0x28] sm:$0xff]
    %v28 = vld [vmem:[%s0 + $0x30] sm:$0x3]
    %v36 = vcombine.high %v22, %v22
    %v38 = vunpack.c.l.s4 1983009808
    %v39 = vunpack.c.0.s8 %v38
    %v40 = vlaneseq
    %v41 = vshrl.u32 %v40, 7
    %v42 = vsub.s32 %v39, %v41
    %v43 = vrot.slane %v22, %v42
    %v45 = vunpack.c.l.s4 1983009808
    %v46 = vunpack.c.0.s8 %v45
    %v47 = vlaneseq
    %v48 = vshrl.u32 %v47, 7
    %v49 = vsub.s32 %v46, %v48
    %v50 = vrot.slane %v36, %v49
    %v51 = vcombine.high %v43, %v43
    %v52 = vcombine.high %v50, %v50
    %v53 = vcombine.high %v23, %v23
    %v55 = vunpack.c.l.s4 1983009808
    %v56 = vunpack.c.0.s8 %v55
    %v57 = vlaneseq
    %v58 = vshrl.u32 %v57, 7
    %v59 = vsub.s32 %v56, %v58
    %v60 = vrot.slane %v23, %v59
    %v62 = vunpack.c.l.s4 1983009808
    %v63 = vunpack.c.0.s8 %v62
    %v64 = vlaneseq
    %v65 = vshrl.u32 %v64, 7
    %v66 = vsub.s32 %v63, %v65
    %v67 = vrot.slane %v53, %v66
    %v68 = vcombine.high %v60, %v60
    %v69 = vcombine.high %v67, %v67
    %v70 = vcombine.high %v24, %v24
    %v72 = vunpack.c.l.s4 1983009808
    %v73 = vunpack.c.0.s8 %v72
    %v74 = vlaneseq
    %v75 = vshrl.u32 %v74, 7
    %v76 = vsub.s32 %v73, %v75
    %v77 = vrot.slane %v24, %v76
    %v79 = vunpack.c.l.s4 1983009808
    %v80 = vunpack.c.0.s8 %v79
    %v81 = vlaneseq
    %v82 = vshrl.u32 %v81, 7
    %v83 = vsub.s32 %v80, %v82
    %v84 = vrot.slane %v70, %v83
    %v85 = vcombine.high %v77, %v77
    %v86 = vcombine.high %v84, %v84
    %v87 = vcombine.high %v25, %v25
    %v89 = vunpack.c.l.s4 1983009808
    %v90 = vunpack.c.0.s8 %v89
    %v91 = vlaneseq
    %v92 = vshrl.u32 %v91, 7
    %v93 = vsub.s32 %v90, %v92
    %v94 = vrot.slane %v25, %v93
    %v96 = vunpack.c.l.s4 1983009808
    %v97 = vunpack.c.0.s8 %v96
    %v98 = vlaneseq
    %v99 = vshrl.u32 %v98, 7
    %v100 = vsub.s32 %v97, %v99
    %v101 = vrot.slane %v87, %v100
    %v102 = vcombine.high %v94, %v94
    %v103 = vcombine.high %v101, %v101
    %v104 = vcombine.high %v26, %v26
    %v106 = vunpack.c.l.s4 1983009808
    %v107 = vunpack.c.0.s8 %v106
    %v108 = vlaneseq
    %v109 = vshrl.u32 %v108, 7
    %v110 = vsub.s32 %v107, %v109
    %v111 = vrot.slane %v26, %v110
    %v113 = vunpack.c.l.s4 1983009808
    %v114 = vunpack.c.0.s8 %v113
    %v115 = vlaneseq
    %v116 = vshrl.u32 %v115, 7
    %v117 = vsub.s32 %v114, %v116
    %v118 = vrot.slane %v104, %v117
    %v119 = vcombine.high %v111, %v111
    %v120 = vcombine.high %v118, %v118
    %v121 = vcombine.high %v27, %v27
    %v123 = vunpack.c.l.s4 1983009808
    %v124 = vunpack.c.0.s8 %v123
    %v125 = vlaneseq
    %v126 = vshrl.u32 %v125, 7
    %v127 = vsub.s32 %v124, %v126
    %v128 = vrot.slane %v27, %v127
    %v130 = vunpack.c.l.s4 1983009808
    %v131 = vunpack.c.0.s8 %v130
    %v132 = vlaneseq
    %v133 = vshrl.u32 %v132, 7
    %v134 = vsub.s32 %v131, %v133
    %v135 = vrot.slane %v121, %v134
    %v136 = vcombine.high %v128, %v128
    %v137 = vcombine.high %v135, %v135
    %v139 = vunpack.c.l.s4 1983009808
    %v140 = vunpack.c.0.s8 %v139
    %v141 = vlaneseq
    %v142 = vshrl.u32 %v141, 7
    %v143 = vsub.s32 %v140, %v142
    %v144 = vrot.slane %v28, %v143
    %v170 = vpack.c.bf16 %v43, %v43
    %v171 = vpack.c.bf16 %v51, %v51
    %v172 = vpack.c.bf16 %v50, %v50
    %v173 = vpack.c.bf16 %v52, %v52
    %v174 = vpack.c.bf16 %v60, %v60
    %v175 = vpack.c.bf16 %v68, %v68
    %v176 = vpack.c.bf16 %v67, %v67
    %v177 = vpack.c.bf16 %v69, %v69
    %v178 = vpack.c.bf16 %v77, %v77
    %v179 = vpack.c.bf16 %v85, %v85
    %v180 = vpack.c.bf16 %v84, %v84
    %v181 = vpack.c.bf16 %v86, %v86
    %v182 = vpack.c.bf16 %v94, %v94
    %v183 = vpack.c.bf16 %v102, %v102
    %v184 = vpack.c.bf16 %v101, %v101
    %v185 = vpack.c.bf16 %v103, %v103
    %v186 = vpack.c.bf16 %v111, %v111
    %v187 = vpack.c.bf16 %v119, %v119
    %v188 = vpack.c.bf16 %v118, %v118
    %v189 = vpack.c.bf16 %v120, %v120
    %v190 = vpack.c.bf16 %v128, %v128
    %v191 = vpack.c.bf16 %v136, %v136
    %v192 = vpack.c.bf16 %v135, %v135
    %v193 = vpack.c.bf16 %v137, %v137
    %v194 = vpack.c.bf16 %v144, %v144
    %v195 = vld [vmem:[%s1] sm:$0xff]
    %v196 = vld [vmem:[%s1 + $0x8] sm:$0xff]
    %v197 = vld [vmem:[%s1 + $0x10] sm:$0xff]
    %v198 = vld [vmem:[%s1 + $0x18] sm:$0xff]
    %v199 = vld [vmem:[%s1 + $0x20] sm:$0xff]
    %v200 = vld [vmem:[%s1 + $0x28] sm:$0xff]
    %v201 = vld [vmem:[%s1 + $0x30] sm:$0xff]
    %v202 = vld [vmem:[%s1 + $0x38] sm:$0xff]
    %v203 = vld [vmem:[%s1 + $0x40] sm:$0xff]
    %v204 = vld [vmem:[%s1 + $0x48] sm:$0xff]
    %v205 = vld [vmem:[%s1 + $0x50] sm:$0xff]
    %v206 = vld [vmem:[%s1 + $0x58] sm:$0xff]
    %v207 = vld [vmem:[%s1 + $0x60] sm:$0xff]
    %v208 = vld [vmem:[%s1 + $0x68] sm:$0xff]
    %v209 = vld [vmem:[%s1 + $0x70] sm:$0xff]
    %v210 = vld [vmem:[%s1 + $0x78] sm:$0xff]
    %v211 = vld [vmem:[%s1 + $0x80] sm:$0xff]
    %v212 = vld [vmem:[%s1 + $0x88] sm:$0xff]
    %v213 = vld [vmem:[%s1 + $0x90] sm:$0xff]
    %v214 = vld [vmem:[%s1 + $0x98] sm:$0xff]
    %v215 = vld [vmem:[%s1 + $0xa0] sm:$0xff]
    %v216 = vld [vmem:[%s1 + $0xa8] sm:$0xff]
    %v217 = vld [vmem:[%s1 + $0xb0] sm:$0xff]
    %v218 = vld [vmem:[%s1 + $0xb8] sm:$0xff]
    %v219 = vld [vmem:[%s1 + $0xc0] sm:$0xff]
    %v220 = vld [vmem:[%s1 + $0xc8] sm:$0xff]
    %v221 = vld [vmem:[%s1 + $0xd0] sm:$0xff]
    %v222 = vld [vmem:[%s1 + $0xd8] sm:$0xff]
    %v223 = vld [vmem:[%s1 + $0xe0] sm:$0xff]
    %v224 = vld [vmem:[%s1 + $0xe8] sm:$0xff]
    %v225 = vld [vmem:[%s1 + $0xf0] sm:$0xff]
    %v226 = vld [vmem:[%s1 + $0xf8] sm:$0xff]
    %v227 = vld [vmem:[%s1 + $0x100] sm:$0xff]
    %v228 = vld [vmem:[%s1 + $0x108] sm:$0xff]
    %v229 = vld [vmem:[%s1 + $0x110] sm:$0xff]
    %v230 = vld [vmem:[%s1 + $0x118] sm:$0xff]
    %v231 = vld [vmem:[%s1 + $0x120] sm:$0xff]
    %v232 = vld [vmem:[%s1 + $0x128] sm:$0xff]
    %v233 = vld [vmem:[%s1 + $0x130] sm:$0xff]
    %v234 = vld [vmem:[%s1 + $0x138] sm:$0xff]
    %v235 = vld [vmem:[%s1 + $0x140] sm:$0xff]
    %v236 = vld [vmem:[%s1 + $0x148] sm:$0xff]
    %v237 = vld [vmem:[%s1 + $0x150] sm:$0xff]
    %v238 = vld [vmem:[%s1 + $0x158] sm:$0xff]
    %v239 = vld [vmem:[%s1 + $0x160] sm:$0xff]
    %v240 = vld [vmem:[%s1 + $0x168] sm:$0xff]
    %v241 = vld [vmem:[%s1 + $0x170] sm:$0xff]
    %v242 = vld [vmem:[%s1 + $0x178] sm:$0xff]
    %v243 = vld [vmem:[%s1 + $0x180] sm:$0xff]
    %v244 = vld [vmem:[%s1 + $0x188] sm:$0xff]
    %v245 = vld [vmem:[%s1 + $0x190] sm:$0xff]
    %v246 = vld [vmem:[%s1 + $0x198] sm:$0xff]
    %v247 = vld [vmem:[%s1 + $0x1a0] sm:$0xff]
    %v248 = vld [vmem:[%s1 + $0x1a8] sm:$0xff]
    %v249 = vld [vmem:[%s1 + $0x1b0] sm:$0xff]
    %v250 = vld [vmem:[%s1 + $0x1b8] sm:$0xff]
    %v251 = vld [vmem:[%s1 + $0x1c0] sm:$0xff]
    %v252 = vld [vmem:[%s1 + $0x1c8] sm:$0xff]
    %v253 = vld [vmem:[%s1 + $0x1d0] sm:$0xff]
    %v254 = vld [vmem:[%s1 + $0x1d8] sm:$0xff]
    %v255 = vld [vmem:[%s1 + $0x1e0] sm:$0xff]
    %v256 = vld [vmem:[%s1 + $0x1e8] sm:$0xff]
    %v257 = vld [vmem:[%s1 + $0x1f0] sm:$0xff]
    %v258 = vld [vmem:[%s1 + $0x1f8] sm:$0xff]
    %v259 = vld [vmem:[%s1 + $0x200] sm:$0xff]
    %v260 = vld [vmem:[%s1 + $0x208] sm:$0xff]
    %v261 = vld [vmem:[%s1 + $0x210] sm:$0xff]
    %v262 = vld [vmem:[%s1 + $0x218] sm:$0xff]
    %v263 = vld [vmem:[%s1 + $0x220] sm:$0xff]
    %v264 = vld [vmem:[%s1 + $0x228] sm:$0xff]
    %v265 = vld [vmem:[%s1 + $0x230] sm:$0xff]
    %v266 = vld [vmem:[%s1 + $0x238] sm:$0xff]
    %v267 = vld [vmem:[%s1 + $0x240] sm:$0xff]
    %v268 = vld [vmem:[%s1 + $0x248] sm:$0xff]
    %v269 = vld [vmem:[%s1 + $0x250] sm:$0xff]
    %v270 = vld [vmem:[%s1 + $0x258] sm:$0xff]
    %v271 = vld [vmem:[%s1 + $0x260] sm:$0xff]
    %v272 = vld [vmem:[%s1 + $0x268] sm:$0xff]
    %v273 = vld [vmem:[%s1 + $0x270] sm:$0xff]
    %v274 = vld [vmem:[%s1 + $0x278] sm:$0xff]
    %v275 = vld [vmem:[%s1 + $0x280] sm:$0xff]
    %v276 = vld [vmem:[%s1 + $0x288] sm:$0xff]
    %v277 = vld [vmem:[%s1 + $0x290] sm:$0xff]
    %v278 = vld [vmem:[%s1 + $0x298] sm:$0xff]
    %v279 = vld [vmem:[%s1 + $0x2a0] sm:$0xff]
    %v280 = vld [vmem:[%s1 + $0x2a8] sm:$0xff]
    %v281 = vld [vmem:[%s1 + $0x2b0] sm:$0xff]
    %v282 = vld [vmem:[%s1 + $0x2b8] sm:$0xff]
    %v283 = vld [vmem:[%s1 + $0x2c0] sm:$0xff]
    %v284 = vld [vmem:[%s1 + $0x2c8] sm:$0xff]
    %v285 = vld [vmem:[%s1 + $0x2d0] sm:$0xff]
    %v286 = vld [vmem:[%s1 + $0x2d8] sm:$0xff]
    %v287 = vld [vmem:[%s1 + $0x2e0] sm:$0xff]
    %v288 = vld [vmem:[%s1 + $0x2e8] sm:$0xff]
    %v289 = vld [vmem:[%s1 + $0x2f0] sm:$0xff]
    %v290 = vld [vmem:[%s1 + $0x2f8] sm:$0xff]
    %v291 = vld [vmem:[%s1 + $0x300] sm:$0xff]
    %v292 = vld [vmem:[%s1 + $0x308] sm:$0xff]
    %v293 = vld [vmem:[%s1 + $0x310] sm:$0xff]
    %v294 = vld [vmem:[%s1 + $0x318] sm:$0xff]
    %v295 = vld [vmem:[%s1 + $0x320] sm:$0xff]
    %v296 = vld [vmem:[%s1 + $0x328] sm:$0xff]
    %v297 = vld [vmem:[%s1 + $0x330] sm:$0xff]
    %v298 = vld [vmem:[%s1 + $0x338] sm:$0xff]
    %v299 = vld [vmem:[%s1 + $0x340] sm:$0xff]
    %v300 = vld [vmem:[%s1 + $0x348] sm:$0xff]
    %v301 = vld [vmem:[%s1 + $0x350] sm:$0xff]
    %v302 = vld [vmem:[%s1 + $0x358] sm:$0xff]
    %v303 = vld [vmem:[%s1 + $0x360] sm:$0xff]
    %v304 = vld [vmem:[%s1 + $0x368] sm:$0xff]
    %v305 = vld [vmem:[%s1 + $0x370] sm:$0xff]
    %v306 = vld [vmem:[%s1 + $0x378] sm:$0xff]
    %v307 = vld [vmem:[%s1 + $0x380] sm:$0xff]
    %v308 = vld [vmem:[%s1 + $0x388] sm:$0xff]
    %v309 = vld [vmem:[%s1 + $0x390] sm:$0xff]
    %v310 = vld [vmem:[%s1 + $0x398] sm:$0xff]
    %v311 = vld [vmem:[%s1 + $0x3a0] sm:$0xff]
    %v312 = vld [vmem:[%s1 + $0x3a8] sm:$0xff]
    %v313 = vld [vmem:[%s1 + $0x3b0] sm:$0xff]
    %v314 = vld [vmem:[%s1 + $0x3b8] sm:$0xff]
    %v315 = vld [vmem:[%s1 + $0x3c0] sm:$0xff]
    %v316 = vld [vmem:[%s1 + $0x3c8] sm:$0xff]
    %v317 = vld [vmem:[%s1 + $0x3d0] sm:$0xff]
    %v318 = vld [vmem:[%s1 + $0x3d8] sm:$0xff]
    %v319 = vld [vmem:[%s1 + $0x3e0] sm:$0xff]
    %v320 = vld [vmem:[%s1 + $0x3e8] sm:$0xff]
    %v321 = vld [vmem:[%s1 + $0x3f0] sm:$0xff]
    %v322 = vld [vmem:[%s1 + $0x3f8] sm:$0xff]
    %v323 = vld [vmem:[%s1 + $0x400] sm:$0xff]
    %v324 = vld [vmem:[%s1 + $0x408] sm:$0xff]
    %v325 = vld [vmem:[%s1 + $0x410] sm:$0xff]
    %v326 = vld [vmem:[%s1 + $0x418] sm:$0xff]
    %v327 = vld [vmem:[%s1 + $0x420] sm:$0xff]
    %v328 = vld [vmem:[%s1 + $0x428] sm:$0xff]
    %v329 = vld [vmem:[%s1 + $0x430] sm:$0xff]
    %v330 = vld [vmem:[%s1 + $0x438] sm:$0xff]
    %v331 = vld [vmem:[%s1 + $0x440] sm:$0xff]
    %v332 = vld [vmem:[%s1 + $0x448] sm:$0xff]
    %v333 = vld [vmem:[%s1 + $0x450] sm:$0xff]
    %v334 = vld [vmem:[%s1 + $0x458] sm:$0xff]
    %v335 = vld [vmem:[%s1 + $0x460] sm:$0xff]
    %v336 = vld [vmem:[%s1 + $0x468] sm:$0xff]
    %v337 = vld [vmem:[%s1 + $0x470] sm:$0xff]
    %v338 = vld [vmem:[%s1 + $0x478] sm:$0xff]
    %v339 = vld [vmem:[%s1 + $0x480] sm:$0xff]
    %v340 = vld [vmem:[%s1 + $0x488] sm:$0xff]
    %v341 = vld [vmem:[%s1 + $0x490] sm:$0xff]
    %v342 = vld [vmem:[%s1 + $0x498] sm:$0xff]
    %v343 = vld [vmem:[%s1 + $0x4a0] sm:$0xff]
    %v344 = vld [vmem:[%s1 + $0x4a8] sm:$0xff]
    %v345 = vld [vmem:[%s1 + $0x4b0] sm:$0xff]
    %v346 = vld [vmem:[%s1 + $0x4b8] sm:$0xff]
    %v347 = vld [vmem:[%s1 + $0x4c0] sm:$0xff]
    %v348 = vld [vmem:[%s1 + $0x4c8] sm:$0xff]
    %v349 = vld [vmem:[%s1 + $0x4d0] sm:$0xff]
    %v350 = vld [vmem:[%s1 + $0x4d8] sm:$0xff]
    %v351 = vld [vmem:[%s1 + $0x4e0] sm:$0xff]
    %v352 = vld [vmem:[%s1 + $0x4e8] sm:$0xff]
    %v353 = vld [vmem:[%s1 + $0x4f0] sm:$0xff]
    %v354 = vld [vmem:[%s1 + $0x4f8] sm:$0xff]
    %v355 = vld [vmem:[%s1 + $0x500] sm:$0xff]
    %v356 = vld [vmem:[%s1 + $0x508] sm:$0xff]
    %v357 = vld [vmem:[%s1 + $0x510] sm:$0xff]
    %v358 = vld [vmem:[%s1 + $0x518] sm:$0xff]
    %v359 = vld [vmem:[%s1 + $0x520] sm:$0xff]
    %v360 = vld [vmem:[%s1 + $0x528] sm:$0xff]
    %v361 = vld [vmem:[%s1 + $0x530] sm:$0xff]
    %v362 = vld [vmem:[%s1 + $0x538] sm:$0xff]
    %v363 = vld [vmem:[%s1 + $0x540] sm:$0xff]
    %v364 = vld [vmem:[%s1 + $0x548] sm:$0xff]
    %v365 = vld [vmem:[%s1 + $0x550] sm:$0xff]
    %v366 = vld [vmem:[%s1 + $0x558] sm:$0xff]
    %v367 = vld [vmem:[%s1 + $0x560] sm:$0xff]
    %v368 = vld [vmem:[%s1 + $0x568] sm:$0xff]
    %v369 = vld [vmem:[%s1 + $0x570] sm:$0xff]
    %v370 = vld [vmem:[%s1 + $0x578] sm:$0xff]
    %v371 = vld [vmem:[%s1 + $0x580] sm:$0xff]
    %v372 = vld [vmem:[%s1 + $0x588] sm:$0xff]
    %v373 = vld [vmem:[%s1 + $0x590] sm:$0xff]
    %v374 = vld [vmem:[%s1 + $0x598] sm:$0xff]
    %v375 = vld [vmem:[%s1 + $0x5a0] sm:$0xff]
    %v376 = vld [vmem:[%s1 + $0x5a8] sm:$0xff]
    %v377 = vld [vmem:[%s1 + $0x5b0] sm:$0xff]
    %v378 = vld [vmem:[%s1 + $0x5b8] sm:$0xff]
    %v379 = vld [vmem:[%s1 + $0x5c0] sm:$0xff]
    %v380 = vld [vmem:[%s1 + $0x5c8] sm:$0xff]
    %v381 = vld [vmem:[%s1 + $0x5d0] sm:$0xff]
    %v382 = vld [vmem:[%s1 + $0x5d8] sm:$0xff]
    %v383 = vld [vmem:[%s1 + $0x5e0] sm:$0xff]
    %v384 = vld [vmem:[%s1 + $0x5e8] sm:$0xff]
    %v385 = vld [vmem:[%s1 + $0x5f0] sm:$0xff]
    %v386 = vld [vmem:[%s1 + $0x5f8] sm:$0xff]
    %v387 = vld [vmem:[%s1 + $0x600] sm:$0xff]
    %v388 = vld [vmem:[%s1 + $0x608] sm:$0xff]
    %v389 = vld [vmem:[%s1 + $0x610] sm:$0xff]
    %v390 = vld [vmem:[%s1 + $0x618] sm:$0xff]
    %v391 = vld [vmem:[%s1 + $0x620] sm:$0xff]
    %v392 = vld [vmem:[%s1 + $0x628] sm:$0xff]
    %v393 = vld [vmem:[%s1 + $0x630] sm:$0xff]
    %v394 = vld [vmem:[%s1 + $0x638] sm:$0xff]
    %v395 = vld [vmem:[%s1 + $0x640] sm:$0xff]
    %v396 = vld [vmem:[%s1 + $0x648] sm:$0xff]
    %v397 = vld [vmem:[%s1 + $0x650] sm:$0xff]
    %v398 = vld [vmem:[%s1 + $0x658] sm:$0xff]
    %v399 = vld [vmem:[%s1 + $0x660] sm:$0xff]
    %v400 = vld [vmem:[%s1 + $0x668] sm:$0xff]
    %v401 = vld [vmem:[%s1 + $0x670] sm:$0xff]
    %v402 = vld [vmem:[%s1 + $0x678] sm:$0xff]
    %v403 = vld [vmem:[%s1 + $0x680] sm:$0xff]
    %v404 = vld [vmem:[%s1 + $0x688] sm:$0xff]
    %v405 = vld [vmem:[%s1 + $0x690] sm:$0xff]
    %v406 = vld [vmem:[%s1 + $0x698] sm:$0xff]
    %v407 = vld [vmem:[%s1 + $0x6a0] sm:$0xff]
    %v408 = vld [vmem:[%s1 + $0x6a8] sm:$0xff]
    %v409 = vld [vmem:[%s1 + $0x6b0] sm:$0xff]
    %v410 = vld [vmem:[%s1 + $0x6b8] sm:$0xff]
    %v411 = vld [vmem:[%s1 + $0x6c0] sm:$0xff]
    %v412 = vld [vmem:[%s1 + $0x6c8] sm:$0xff]
    %v413 = vld [vmem:[%s1 + $0x6d0] sm:$0xff]
    %v414 = vld [vmem:[%s1 + $0x6d8] sm:$0xff]
    %v415 = vld [vmem:[%s1 + $0x6e0] sm:$0xff]
    %v416 = vld [vmem:[%s1 + $0x6e8] sm:$0xff]
    %v417 = vld [vmem:[%s1 + $0x6f0] sm:$0xff]
    %v418 = vld [vmem:[%s1 + $0x6f8] sm:$0xff]
    %v419 = vld [vmem:[%s1 + $0x700] sm:$0xff]
    %v420 = vld [vmem:[%s1 + $0x708] sm:$0xff]
    %v421 = vld [vmem:[%s1 + $0x710] sm:$0xff]
    %v422 = vld [vmem:[%s1 + $0x718] sm:$0xff]
    %v423 = vld [vmem:[%s1 + $0x720] sm:$0xff]
    %v424 = vld [vmem:[%s1 + $0x728] sm:$0xff]
    %v425 = vld [vmem:[%s1 + $0x730] sm:$0xff]
    %v426 = vld [vmem:[%s1 + $0x738] sm:$0xff]
    %v427 = vld [vmem:[%s1 + $0x740] sm:$0xff]
    %v428 = vld [vmem:[%s1 + $0x748] sm:$0xff]
    %v429 = vld [vmem:[%s1 + $0x750] sm:$0xff]
    %v430 = vld [vmem:[%s1 + $0x758] sm:$0xff]
    %v431 = vld [vmem:[%s1 + $0x760] sm:$0xff]
    %v432 = vld [vmem:[%s1 + $0x768] sm:$0xff]
    %v433 = vld [vmem:[%s1 + $0x770] sm:$0xff]
    %v434 = vld [vmem:[%s1 + $0x778] sm:$0xff]
    %v435 = vld [vmem:[%s1 + $0x780] sm:$0xff]
    %v436 = vld [vmem:[%s1 + $0x788] sm:$0xff]
    %v437 = vld [vmem:[%s1 + $0x790] sm:$0xff]
    %v438 = vld [vmem:[%s1 + $0x798] sm:$0xff]
    %v439 = vld [vmem:[%s1 + $0x7a0] sm:$0xff]
    %v440 = vld [vmem:[%s1 + $0x7a8] sm:$0xff]
    %v441 = vld [vmem:[%s1 + $0x7b0] sm:$0xff]
    %v442 = vld [vmem:[%s1 + $0x7b8] sm:$0xff]
    %v443 = vld [vmem:[%s1 + $0x7c0] sm:$0xff]
    %v444 = vld [vmem:[%s1 + $0x7c8] sm:$0xff]
    %v445 = vld [vmem:[%s1 + $0x7d0] sm:$0xff]
    %v446 = vld [vmem:[%s1 + $0x7d8] sm:$0xff]
    %v447 = vld [vmem:[%s1 + $0x7e0] sm:$0xff]
    %v448 = vld [vmem:[%s1 + $0x7e8] sm:$0xff]
    %v449 = vld [vmem:[%s1 + $0x7f0] sm:$0xff]
    %v450 = vld [vmem:[%s1 + $0x7f8] sm:$0xff]
    %v451 = vld [vmem:[%s1 + $0x800] sm:$0xff]
    %v452 = vld [vmem:[%s1 + $0x808] sm:$0xff]
    %v453 = vld [vmem:[%s1 + $0x810] sm:$0xff]
    %v454 = vld [vmem:[%s1 + $0x818] sm:$0xff]
    %v455 = vld [vmem:[%s1 + $0x820] sm:$0xff]
    %v456 = vld [vmem:[%s1 + $0x828] sm:$0xff]
    %v457 = vld [vmem:[%s1 + $0x830] sm:$0xff]
    %v458 = vld [vmem:[%s1 + $0x838] sm:$0xff]
    %v459 = vld [vmem:[%s1 + $0x840] sm:$0xff]
    %v460 = vld [vmem:[%s1 + $0x848] sm:$0xff]
    %v461 = vld [vmem:[%s1 + $0x850] sm:$0xff]
    %v462 = vld [vmem:[%s1 + $0x858] sm:$0xff]
    %v463 = vld [vmem:[%s1 + $0x860] sm:$0xff]
    %v464 = vld [vmem:[%s1 + $0x868] sm:$0xff]
    %v465 = vld [vmem:[%s1 + $0x870] sm:$0xff]
    %v466 = vld [vmem:[%s1 + $0x878] sm:$0xff]
    %v467 = vld [vmem:[%s1 + $0x880] sm:$0xff]
    %v468 = vld [vmem:[%s1 + $0x888] sm:$0xff]
    %v469 = vld [vmem:[%s1 + $0x890] sm:$0xff]
    %v470 = vld [vmem:[%s1 + $0x898] sm:$0xff]
    %v471 = vld [vmem:[%s1 + $0x8a0] sm:$0xff]
    %v472 = vld [vmem:[%s1 + $0x8a8] sm:$0xff]
    %v473 = vld [vmem:[%s1 + $0x8b0] sm:$0xff]
    %v474 = vld [vmem:[%s1 + $0x8b8] sm:$0xff]
    %v475 = vld [vmem:[%s1 + $0x8c0] sm:$0xff]
    %v476 = vld [vmem:[%s1 + $0x8c8] sm:$0xff]
    %v477 = vld [vmem:[%s1 + $0x8d0] sm:$0xff]
    %v478 = vld [vmem:[%s1 + $0x8d8] sm:$0xff]
    %v479 = vld [vmem:[%s1 + $0x8e0] sm:$0xff]
    %v480 = vld [vmem:[%s1 + $0x8e8] sm:$0xff]
    %v481 = vld [vmem:[%s1 + $0x8f0] sm:$0xff]
    %v482 = vld [vmem:[%s1 + $0x8f8] sm:$0xff]
    %v483 = vld [vmem:[%s1 + $0x900] sm:$0xff]
    %v484 = vld [vmem:[%s1 + $0x908] sm:$0xff]
    %v485 = vld [vmem:[%s1 + $0x910] sm:$0xff]
    %v486 = vld [vmem:[%s1 + $0x918] sm:$0xff]
    %v487 = vld [vmem:[%s1 + $0x920] sm:$0xff]
    %v488 = vld [vmem:[%s1 + $0x928] sm:$0xff]
    %v489 = vld [vmem:[%s1 + $0x930] sm:$0xff]
    %v490 = vld [vmem:[%s1 + $0x938] sm:$0xff]
    %v491 = vld [vmem:[%s1 + $0x940] sm:$0xff]
    %v492 = vld [vmem:[%s1 + $0x948] sm:$0xff]
    %v493 = vld [vmem:[%s1 + $0x950] sm:$0xff]
    %v494 = vld [vmem:[%s1 + $0x958] sm:$0xff]
    %v495 = vld [vmem:[%s1 + $0x960] sm:$0xff]
    %v496 = vld [vmem:[%s1 + $0x968] sm:$0xff]
    %v497 = vld [vmem:[%s1 + $0x970] sm:$0xff]
    %v498 = vld [vmem:[%s1 + $0x978] sm:$0xff]
    %v499 = vld [vmem:[%s1 + $0x980] sm:$0xff]
    %v500 = vld [vmem:[%s1 + $0x988] sm:$0xff]
    %v501 = vld [vmem:[%s1 + $0x990] sm:$0xff]
    %v502 = vld [vmem:[%s1 + $0x998] sm:$0xff]
    %v503 = vld [vmem:[%s1 + $0x9a0] sm:$0xff]
    %v504 = vld [vmem:[%s1 + $0x9a8] sm:$0xff]
    %v505 = vld [vmem:[%s1 + $0x9b0] sm:$0xff]
    %v506 = vld [vmem:[%s1 + $0x9b8] sm:$0xff]
    %v507 = vld [vmem:[%s1 + $0x9c0] sm:$0xff]
    %v508 = vld [vmem:[%s1 + $0x9c8] sm:$0xff]
    %v509 = vld [vmem:[%s1 + $0x9d0] sm:$0xff]
    %v510 = vld [vmem:[%s1 + $0x9d8] sm:$0xff]
    %v511 = vld [vmem:[%s1 + $0x9e0] sm:$0xff]
    %v512 = vld [vmem:[%s1 + $0x9e8] sm:$0xff]
    %v513 = vld [vmem:[%s1 + $0x9f0] sm:$0xff]
    %v514 = vld [vmem:[%s1 + $0x9f8] sm:$0xff]
    %v515 = vld [vmem:[%s1 + $0xa00] sm:$0xff]
    %v516 = vld [vmem:[%s1 + $0xa08] sm:$0xff]
    %v517 = vld [vmem:[%s1 + $0xa10] sm:$0xff]
    %v518 = vld [vmem:[%s1 + $0xa18] sm:$0xff]
    %v519 = vld [vmem:[%s1 + $0xa20] sm:$0xff]
    %v520 = vld [vmem:[%s1 + $0xa28] sm:$0xff]
    %v521 = vld [vmem:[%s1 + $0xa30] sm:$0xff]
    %v522 = vld [vmem:[%s1 + $0xa38] sm:$0xff]
    %v523 = vld [vmem:[%s1 + $0xa40] sm:$0xff]
    %v524 = vld [vmem:[%s1 + $0xa48] sm:$0xff]
    %v525 = vld [vmem:[%s1 + $0xa50] sm:$0xff]
    %v526 = vld [vmem:[%s1 + $0xa58] sm:$0xff]
    %v527 = vld [vmem:[%s1 + $0xa60] sm:$0xff]
    %v528 = vld [vmem:[%s1 + $0xa68] sm:$0xff]
    %v529 = vld [vmem:[%s1 + $0xa70] sm:$0xff]
    %v530 = vld [vmem:[%s1 + $0xa78] sm:$0xff]
    %v531 = vld [vmem:[%s1 + $0xa80] sm:$0xff]
    %v532 = vld [vmem:[%s1 + $0xa88] sm:$0xff]
    %v533 = vld [vmem:[%s1 + $0xa90] sm:$0xff]
    %v534 = vld [vmem:[%s1 + $0xa98] sm:$0xff]
    %v535 = vld [vmem:[%s1 + $0xaa0] sm:$0xff]
    %v536 = vld [vmem:[%s1 + $0xaa8] sm:$0xff]
    %v537 = vld [vmem:[%s1 + $0xab0] sm:$0xff]
    %v538 = vld [vmem:[%s1 + $0xab8] sm:$0xff]
    %v539 = vld [vmem:[%s1 + $0xac0] sm:$0xff]
    %v540 = vld [vmem:[%s1 + $0xac8] sm:$0xff]
    %v541 = vld [vmem:[%s1 + $0xad0] sm:$0xff]
    %v542 = vld [vmem:[%s1 + $0xad8] sm:$0xff]
    %v543 = vld [vmem:[%s1 + $0xae0] sm:$0xff]
    %v544 = vld [vmem:[%s1 + $0xae8] sm:$0xff]
    %v545 = vld [vmem:[%s1 + $0xaf0] sm:$0xff]
    %v546 = vld [vmem:[%s1 + $0xaf8] sm:$0xff]
    %v547 = vld [vmem:[%s1 + $0xb00] sm:$0xff]
    %v548 = vld [vmem:[%s1 + $0xb08] sm:$0xff]
    %v549 = vld [vmem:[%s1 + $0xb10] sm:$0xff]
    %v550 = vld [vmem:[%s1 + $0xb18] sm:$0xff]
    %v551 = vld [vmem:[%s1 + $0xb20] sm:$0xff]
    %v552 = vld [vmem:[%s1 + $0xb28] sm:$0xff]
    %v553 = vld [vmem:[%s1 + $0xb30] sm:$0xff]
    %v554 = vld [vmem:[%s1 + $0xb38] sm:$0xff]
    %v555 = vld [vmem:[%s1 + $0xb40] sm:$0xff]
    %v556 = vld [vmem:[%s1 + $0xb48] sm:$0xff]
    %v557 = vld [vmem:[%s1 + $0xb50] sm:$0xff]
    %v558 = vld [vmem:[%s1 + $0xb58] sm:$0xff]
    %v559 = vld [vmem:[%s1 + $0xb60] sm:$0xff]
    %v560 = vld [vmem:[%s1 + $0xb68] sm:$0xff]
    %v561 = vld [vmem:[%s1 + $0xb70] sm:$0xff]
    %v562 = vld [vmem:[%s1 + $0xb78] sm:$0xff]
    %v563 = vld [vmem:[%s1 + $0xb80] sm:$0xff]
    %v564 = vld [vmem:[%s1 + $0xb88] sm:$0xff]
    %v565 = vld [vmem:[%s1 + $0xb90] sm:$0xff]
    %v566 = vld [vmem:[%s1 + $0xb98] sm:$0xff]
    %v567 = vld [vmem:[%s1 + $0xba0] sm:$0xff]
    %v568 = vld [vmem:[%s1 + $0xba8] sm:$0xff]
    %v569 = vld [vmem:[%s1 + $0xbb0] sm:$0xff]
    %v570 = vld [vmem:[%s1 + $0xbb8] sm:$0xff]
    %v571 = vld [vmem:[%s1 + $0xbc0] sm:$0xff]
    %v572 = vld [vmem:[%s1 + $0xbc8] sm:$0xff]
    %v573 = vld [vmem:[%s1 + $0xbd0] sm:$0xff]
    %v574 = vld [vmem:[%s1 + $0xbd8] sm:$0xff]
    %v575 = vld [vmem:[%s1 + $0xbe0] sm:$0xff]
    %v576 = vld [vmem:[%s1 + $0xbe8] sm:$0xff]
    %v577 = vld [vmem:[%s1 + $0xbf0] sm:$0xff]
    %v578 = vld [vmem:[%s1 + $0xbf8] sm:$0xff]
    %v579 = vld [vmem:[%s1 + $0xc00] sm:$0xff]
    %v580 = vld [vmem:[%s1 + $0xc08] sm:$0xff]
    %v581 = vld [vmem:[%s1 + $0xc10] sm:$0xff]
    %v582 = vld [vmem:[%s1 + $0xc18] sm:$0xff]
    %v583 = vld [vmem:[%s1 + $0xc20] sm:$0xff]
    %v584 = vld [vmem:[%s1 + $0xc28] sm:$0xff]
    %v585 = vld [vmem:[%s1 + $0xc30] sm:$0xff]
    %v586 = vld [vmem:[%s1 + $0xc38] sm:$0xff]
    %v587 = vld [vmem:[%s1 + $0xc40] sm:$0xff]
    %v588 = vld [vmem:[%s1 + $0xc48] sm:$0xff]
    %v589 = vld [vmem:[%s1 + $0xc50] sm:$0xff]
    %v590 = vld [vmem:[%s1 + $0xc58] sm:$0xff]
    %v591 = vld [vmem:[%s1 + $0xc60] sm:$0xff]
    %v592 = vld [vmem:[%s1 + $0xc68] sm:$0xff]
    %v593 = vld [vmem:[%s1 + $0xc70] sm:$0xff]
    %v594 = vld [vmem:[%s1 + $0xc78] sm:$0xff]
    %v595 = vld [vmem:[%s1 + $0xc80] sm:$0xff]
    %v596 = vld [vmem:[%s1 + $0xc88] sm:$0xff]
    %v597 = vld [vmem:[%s1 + $0xc90] sm:$0xff]
    %v598 = vld [vmem:[%s1 + $0xc98] sm:$0xff]
    %v599 = vld [vmem:[%s1 + $0xca0] sm:$0xff]
    %v600 = vld [vmem:[%s1 + $0xca8] sm:$0xff]
    %v601 = vld [vmem:[%s1 + $0xcb0] sm:$0xff]
    %v602 = vld [vmem:[%s1 + $0xcb8] sm:$0xff]
    %v603 = vld [vmem:[%s1 + $0xcc0] sm:$0xff]
    %v604 = vld [vmem:[%s1 + $0xcc8] sm:$0xff]
    %v605 = vld [vmem:[%s1 + $0xcd0] sm:$0xff]
    %v606 = vld [vmem:[%s1 + $0xcd8] sm:$0xff]
    %v607 = vld [vmem:[%s1 + $0xce0] sm:$0xff]
    %v608 = vld [vmem:[%s1 + $0xce8] sm:$0xff]
    %v609 = vld [vmem:[%s1 + $0xcf0] sm:$0xff]
    %v610 = vld [vmem:[%s1 + $0xcf8] sm:$0xff]
    %v611 = vld [vmem:[%s1 + $0xd00] sm:$0xff]
    %v612 = vld [vmem:[%s1 + $0xd08] sm:$0xff]
    %v613 = vld [vmem:[%s1 + $0xd10] sm:$0xff]
    %v614 = vld [vmem:[%s1 + $0xd18] sm:$0xff]
    %v615 = vld [vmem:[%s1 + $0xd20] sm:$0xff]
    %v616 = vld [vmem:[%s1 + $0xd28] sm:$0xff]
    %v617 = vld [vmem:[%s1 + $0xd30] sm:$0xff]
    %v618 = vld [vmem:[%s1 + $0xd38] sm:$0xff]
    %v619 = vld [vmem:[%s1 + $0xd40] sm:$0xff]
    %v620 = vld [vmem:[%s1 + $0xd48] sm:$0xff]
    %v621 = vld [vmem:[%s1 + $0xd50] sm:$0xff]
    %v622 = vld [vmem:[%s1 + $0xd58] sm:$0xff]
    %v623 = vld [vmem:[%s1 + $0xd60] sm:$0xff]
    %v624 = vld [vmem:[%s1 + $0xd68] sm:$0xff]
    %v625 = vld [vmem:[%s1 + $0xd70] sm:$0xff]
    %v626 = vld [vmem:[%s1 + $0xd78] sm:$0xff]
    %v627 = vld [vmem:[%s1 + $0xd80] sm:$0xff]
    %v628 = vld [vmem:[%s1 + $0xd88] sm:$0xff]
    %v629 = vld [vmem:[%s1 + $0xd90] sm:$0xff]
    %v630 = vld [vmem:[%s1 + $0xd98] sm:$0xff]
    %v631 = vld [vmem:[%s1 + $0xda0] sm:$0xff]
    %v632 = vld [vmem:[%s1 + $0xda8] sm:$0xff]
    %v633 = vld [vmem:[%s1 + $0xdb0] sm:$0xff]
    %v634 = vld [vmem:[%s1 + $0xdb8] sm:$0xff]
    %v635 = vld [vmem:[%s1 + $0xdc0] sm:$0xff]
    %v636 = vld [vmem:[%s1 + $0xdc8] sm:$0xff]
    %v637 = vld [vmem:[%s1 + $0xdd0] sm:$0xff]
    %v638 = vld [vmem:[%s1 + $0xdd8] sm:$0xff]
    %v639 = vld [vmem:[%s1 + $0xde0] sm:$0xff]
    %v640 = vld [vmem:[%s1 + $0xde8] sm:$0xff]
    %v641 = vld [vmem:[%s1 + $0xdf0] sm:$0xff]
    %v642 = vld [vmem:[%s1 + $0xdf8] sm:$0xff]
    %v643 = vld [vmem:[%s1 + $0xe00] sm:$0xff]
    %v644 = vld [vmem:[%s1 + $0xe08] sm:$0xff]
    %v645 = vld [vmem:[%s1 + $0xe10] sm:$0xff]
    %v646 = vld [vmem:[%s1 + $0xe18] sm:$0xff]
    %v647 = vld [vmem:[%s1 + $0xe20] sm:$0xff]
    %v648 = vld [vmem:[%s1 + $0xe28] sm:$0xff]
    %v649 = vld [vmem:[%s1 + $0xe30] sm:$0xff]
    %v650 = vld [vmem:[%s1 + $0xe38] sm:$0xff]
    %v651 = vld [vmem:[%s1 + $0xe40] sm:$0xff]
    %v652 = vld [vmem:[%s1 + $0xe48] sm:$0xff]
    %v653 = vld [vmem:[%s1 + $0xe50] sm:$0xff]
    %v654 = vld [vmem:[%s1 + $0xe58] sm:$0xff]
    %v655 = vld [vmem:[%s1 + $0xe60] sm:$0xff]
    %v656 = vld [vmem:[%s1 + $0xe68] sm:$0xff]
    %v657 = vld [vmem:[%s1 + $0xe70] sm:$0xff]
    %v658 = vld [vmem:[%s1 + $0xe78] sm:$0xff]
    %v659 = vld [vmem:[%s1 + $0xe80] sm:$0xff]
    %v660 = vld [vmem:[%s1 + $0xe88] sm:$0xff]
    %v661 = vld [vmem:[%s1 + $0xe90] sm:$0xff]
    %v662 = vld [vmem:[%s1 + $0xe98] sm:$0xff]
    %v663 = vld [vmem:[%s1 + $0xea0] sm:$0xff]
    %v664 = vld [vmem:[%s1 + $0xea8] sm:$0xff]
    %v665 = vld [vmem:[%s1 + $0xeb0] sm:$0xff]
    %v666 = vld [vmem:[%s1 + $0xeb8] sm:$0xff]
    %v667 = vld [vmem:[%s1 + $0xec0] sm:$0xff]
    %v668 = vld [vmem:[%s1 + $0xec8] sm:$0xff]
    %v669 = vld [vmem:[%s1 + $0xed0] sm:$0xff]
    %v670 = vld [vmem:[%s1 + $0xed8] sm:$0xff]
    %v671 = vld [vmem:[%s1 + $0xee0] sm:$0xff]
    %v672 = vld [vmem:[%s1 + $0xee8] sm:$0xff]
    %v673 = vld [vmem:[%s1 + $0xef0] sm:$0xff]
    %v674 = vld [vmem:[%s1 + $0xef8] sm:$0xff]
    %v675 = vld [vmem:[%s1 + $0xf00] sm:$0xff]
    %v676 = vld [vmem:[%s1 + $0xf08] sm:$0xff]
    %v677 = vld [vmem:[%s1 + $0xf10] sm:$0xff]
    %v678 = vld [vmem:[%s1 + $0xf18] sm:$0xff]
    %v679 = vld [vmem:[%s1 + $0xf20] sm:$0xff]
    %v680 = vld [vmem:[%s1 + $0xf28] sm:$0xff]
    %v681 = vld [vmem:[%s1 + $0xf30] sm:$0xff]
    %v682 = vld [vmem:[%s1 + $0xf38] sm:$0xff]
    %v683 = vld [vmem:[%s1 + $0xf40] sm:$0xff]
    %v684 = vld [vmem:[%s1 + $0xf48] sm:$0xff]
    %v685 = vld [vmem:[%s1 + $0xf50] sm:$0xff]
    %v686 = vld [vmem:[%s1 + $0xf58] sm:$0xff]
    %v687 = vld [vmem:[%s1 + $0xf60] sm:$0xff]
    %v688 = vld [vmem:[%s1 + $0xf68] sm:$0xff]
    %v689 = vld [vmem:[%s1 + $0xf70] sm:$0xff]
    %v690 = vld [vmem:[%s1 + $0xf78] sm:$0xff]
    %v691 = vld [vmem:[%s1 + $0xf80] sm:$0xff]
    %v692 = vld [vmem:[%s1 + $0xf88] sm:$0xff]
    %v693 = vld [vmem:[%s1 + $0xf90] sm:$0xff]
    %v694 = vld [vmem:[%s1 + $0xf98] sm:$0xff]
    %v695 = vld [vmem:[%s1 + $0xfa0] sm:$0xff]
    %v696 = vld [vmem:[%s1 + $0xfa8] sm:$0xff]
    %v697 = vld [vmem:[%s1 + $0xfb0] sm:$0xff]
    %v698 = vld [vmem:[%s1 + $0xfb8] sm:$0xff]
    %v699 = vld [vmem:[%s1 + $0xfc0] sm:$0xff]
    %v700 = vld [vmem:[%s1 + $0xfc8] sm:$0xff]
    %v701 = vld [vmem:[%s1 + $0xfd0] sm:$0xff]
    %v702 = vld [vmem:[%s1 + $0xfd8] sm:$0xff]
    %v703 = vld [vmem:[%s1 + $0xfe0] sm:$0xff]
    %v704 = vld [vmem:[%s1 + $0xfe8] sm:$0xff]
    %v705 = vld [vmem:[%s1 + $0xff0] sm:$0xff]
    %v706 = vld [vmem:[%s1 + $0xff8] sm:$0xff]
    %v707 = vld [vmem:[%s1 + $0x1000] sm:$0xff]
    %v708 = vld [vmem:[%s1 + $0x1008] sm:$0xff]
    %v709 = vld [vmem:[%s1 + $0x1010] sm:$0xff]
    %v710 = vld [vmem:[%s1 + $0x1018] sm:$0xff]
    %v711 = vld [vmem:[%s1 + $0x1020] sm:$0xff]
    %v712 = vld [vmem:[%s1 + $0x1028] sm:$0xff]
    %v713 = vld [vmem:[%s1 + $0x1030] sm:$0xff]
    %v714 = vld [vmem:[%s1 + $0x1038] sm:$0xff]
    %v715 = vld [vmem:[%s1 + $0x1040] sm:$0xff]
    %v716 = vld [vmem:[%s1 + $0x1048] sm:$0xff]
    %v717 = vld [vmem:[%s1 + $0x1050] sm:$0xff]
    %v718 = vld [vmem:[%s1 + $0x1058] sm:$0xff]
    %v719 = vld [vmem:[%s1 + $0x1060] sm:$0xff]
    %v720 = vld [vmem:[%s1 + $0x1068] sm:$0xff]
    %v721 = vld [vmem:[%s1 + $0x1070] sm:$0xff]
    %v722 = vld [vmem:[%s1 + $0x1078] sm:$0xff]
    %v723 = vld [vmem:[%s1 + $0x1080] sm:$0xff]
    %v724 = vld [vmem:[%s1 + $0x1088] sm:$0xff]
    %v725 = vld [vmem:[%s1 + $0x1090] sm:$0xff]
    %v726 = vld [vmem:[%s1 + $0x1098] sm:$0xff]
    %v727 = vld [vmem:[%s1 + $0x10a0] sm:$0xff]
    %v728 = vld [vmem:[%s1 + $0x10a8] sm:$0xff]
    %v729 = vld [vmem:[%s1 + $0x10b0] sm:$0xff]
    %v730 = vld [vmem:[%s1 + $0x10b8] sm:$0xff]
    %v731 = vld [vmem:[%s1 + $0x10c0] sm:$0xff]
    %v732 = vld [vmem:[%s1 + $0x10c8] sm:$0xff]
    %v733 = vld [vmem:[%s1 + $0x10d0] sm:$0xff]
    %v734 = vld [vmem:[%s1 + $0x10d8] sm:$0xff]
    %v735 = vld [vmem:[%s1 + $0x10e0] sm:$0xff]
    %v736 = vld [vmem:[%s1 + $0x10e8] sm:$0xff]
    %v737 = vld [vmem:[%s1 + $0x10f0] sm:$0xff]
    %v738 = vld [vmem:[%s1 + $0x10f8] sm:$0xff]
    %v739 = vld [vmem:[%s1 + $0x1100] sm:$0xff]
    %v740 = vld [vmem:[%s1 + $0x1108] sm:$0xff]
    %v741 = vld [vmem:[%s1 + $0x1110] sm:$0xff]
    %v742 = vld [vmem:[%s1 + $0x1118] sm:$0xff]
    %v743 = vld [vmem:[%s1 + $0x1120] sm:$0xff]
    %v744 = vld [vmem:[%s1 + $0x1128] sm:$0xff]
    %v745 = vld [vmem:[%s1 + $0x1130] sm:$0xff]
    %v746 = vld [vmem:[%s1 + $0x1138] sm:$0xff]
    %v747 = vld [vmem:[%s1 + $0x1140] sm:$0xff]
    %v748 = vld [vmem:[%s1 + $0x1148] sm:$0xff]
    %v749 = vld [vmem:[%s1 + $0x1150] sm:$0xff]
    %v750 = vld [vmem:[%s1 + $0x1158] sm:$0xff]
    %v751 = vld [vmem:[%s1 + $0x1160] sm:$0xff]
    %v752 = vld [vmem:[%s1 + $0x1168] sm:$0xff]
    %v753 = vld [vmem:[%s1 + $0x1170] sm:$0xff]
    %v754 = vld [vmem:[%s1 + $0x1178] sm:$0xff]
    %v755 = vld [vmem:[%s1 + $0x1180] sm:$0xff]
    %v756 = vld [vmem:[%s1 + $0x1188] sm:$0xff]
    %v757 = vld [vmem:[%s1 + $0x1190] sm:$0xff]
    %v758 = vld [vmem:[%s1 + $0x1198] sm:$0xff]
    %v759 = vld [vmem:[%s1 + $0x11a0] sm:$0xff]
    %v760 = vld [vmem:[%s1 + $0x11a8] sm:$0xff]
    %v761 = vld [vmem:[%s1 + $0x11b0] sm:$0xff]
    %v762 = vld [vmem:[%s1 + $0x11b8] sm:$0xff]
    %v763 = vld [vmem:[%s1 + $0x11c0] sm:$0xff]
    %v764 = vld [vmem:[%s1 + $0x11c8] sm:$0xff]
    %v765 = vld [vmem:[%s1 + $0x11d0] sm:$0xff]
    %v766 = vld [vmem:[%s1 + $0x11d8] sm:$0xff]
    %v767 = vld [vmem:[%s1 + $0x11e0] sm:$0xff]
    %v768 = vld [vmem:[%s1 + $0x11e8] sm:$0xff]
    %v769 = vld [vmem:[%s1 + $0x11f0] sm:$0xff]
    %v770 = vld [vmem:[%s1 + $0x11f8] sm:$0xff]
    %v771 = vld [vmem:[%s1 + $0x1200] sm:$0xff]
    %v772 = vld [vmem:[%s1 + $0x1208] sm:$0xff]
    %v773 = vld [vmem:[%s1 + $0x1210] sm:$0xff]
    %v774 = vld [vmem:[%s1 + $0x1218] sm:$0xff]
    %v775 = vld [vmem:[%s1 + $0x1220] sm:$0xff]
    %v776 = vld [vmem:[%s1 + $0x1228] sm:$0xff]
    %v777 = vld [vmem:[%s1 + $0x1230] sm:$0xff]
    %v778 = vld [vmem:[%s1 + $0x1238] sm:$0xff]
    %v779 = vld [vmem:[%s1 + $0x1240] sm:$0xff]
    %v780 = vld [vmem:[%s1 + $0x1248] sm:$0xff]
    %v781 = vld [vmem:[%s1 + $0x1250] sm:$0xff]
    %v782 = vld [vmem:[%s1 + $0x1258] sm:$0xff]
    %v783 = vld [vmem:[%s1 + $0x1260] sm:$0xff]
    %v784 = vld [vmem:[%s1 + $0x1268] sm:$0xff]
    %v785 = vld [vmem:[%s1 + $0x1270] sm:$0xff]
    %v786 = vld [vmem:[%s1 + $0x1278] sm:$0xff]
    %v787 = vld [vmem:[%s1 + $0x1280] sm:$0xff]
    %v788 = vld [vmem:[%s1 + $0x1288] sm:$0xff]
    %v789 = vld [vmem:[%s1 + $0x1290] sm:$0xff]
    %v790 = vld [vmem:[%s1 + $0x1298] sm:$0xff]
    %v791 = vld [vmem:[%s1 + $0x12a0] sm:$0xff]
    %v792 = vld [vmem:[%s1 + $0x12a8] sm:$0xff]
    %v793 = vld [vmem:[%s1 + $0x12b0] sm:$0xff]
    %v794 = vld [vmem:[%s1 + $0x12b8] sm:$0xff]
    %v795 = vld [vmem:[%s1 + $0x12c0] sm:$0xff]
    %v796 = vld [vmem:[%s1 + $0x12c8] sm:$0xff]
    %v797 = vld [vmem:[%s1 + $0x12d0] sm:$0xff]
    %v798 = vld [vmem:[%s1 + $0x12d8] sm:$0xff]
    %v799 = vld [vmem:[%s1 + $0x12e0] sm:$0xff]
    %v800 = vld [vmem:[%s1 + $0x12e8] sm:$0xff]
    %v801 = vld [vmem:[%s1 + $0x12f0] sm:$0xff]
    %v802 = vld [vmem:[%s1 + $0x12f8] sm:$0xff]
    %v803 = vld [vmem:[%s1 + $0x1300] sm:$0xff]
    %v804 = vld [vmem:[%s1 + $0x1308] sm:$0xff]
    %v805 = vld [vmem:[%s1 + $0x1310] sm:$0xff]
    %v806 = vld [vmem:[%s1 + $0x1318] sm:$0xff]
    %v807 = vld [vmem:[%s1 + $0x1320] sm:$0xff]
    %v808 = vld [vmem:[%s1 + $0x1328] sm:$0xff]
    %v809 = vld [vmem:[%s1 + $0x1330] sm:$0xff]
    %v810 = vld [vmem:[%s1 + $0x1338] sm:$0xff]
    %v811 = vld [vmem:[%s1 + $0x1340] sm:$0xff]
    %v812 = vld [vmem:[%s1 + $0x1348] sm:$0xff]
    %v813 = vld [vmem:[%s1 + $0x1350] sm:$0xff]
    %v814 = vld [vmem:[%s1 + $0x1358] sm:$0xff]
    %v815 = vld [vmem:[%s1 + $0x1360] sm:$0xff]
    %v816 = vld [vmem:[%s1 + $0x1368] sm:$0xff]
    %v817 = vld [vmem:[%s1 + $0x1370] sm:$0xff]
    %v818 = vld [vmem:[%s1 + $0x1378] sm:$0xff]
    %v819 = vld [vmem:[%s1 + $0x1380] sm:$0xff]
    %v820 = vld [vmem:[%s1 + $0x1388] sm:$0xff]
    %v821 = vld [vmem:[%s1 + $0x1390] sm:$0xff]
    %v822 = vld [vmem:[%s1 + $0x1398] sm:$0xff]
    %v823 = vld [vmem:[%s1 + $0x13a0] sm:$0xff]
    %v824 = vld [vmem:[%s1 + $0x13a8] sm:$0xff]
    %v825 = vld [vmem:[%s1 + $0x13b0] sm:$0xff]
    %v826 = vld [vmem:[%s1 + $0x13b8] sm:$0xff]
    %v827 = vld [vmem:[%s1 + $0x13c0] sm:$0xff]
    %v828 = vld [vmem:[%s1 + $0x13c8] sm:$0xff]
    %v829 = vld [vmem:[%s1 + $0x13d0] sm:$0xff]
    %v830 = vld [vmem:[%s1 + $0x13d8] sm:$0xff]
    %v831 = vld [vmem:[%s1 + $0x13e0] sm:$0xff]
    %v832 = vld [vmem:[%s1 + $0x13e8] sm:$0xff]
    %v833 = vld [vmem:[%s1 + $0x13f0] sm:$0xff]
    %v834 = vld [vmem:[%s1 + $0x13f8] sm:$0xff]
    %v835 = vld [vmem:[%s1 + $0x1400] sm:$0xff]
    %v836 = vld [vmem:[%s1 + $0x1408] sm:$0xff]
    %v837 = vld [vmem:[%s1 + $0x1410] sm:$0xff]
    %v838 = vld [vmem:[%s1 + $0x1418] sm:$0xff]
    %v839 = vld [vmem:[%s1 + $0x1420] sm:$0xff]
    %v840 = vld [vmem:[%s1 + $0x1428] sm:$0xff]
    %v841 = vld [vmem:[%s1 + $0x1430] sm:$0xff]
    %v842 = vld [vmem:[%s1 + $0x1438] sm:$0xff]
    %v843 = vld [vmem:[%s1 + $0x1440] sm:$0xff]
    %v844 = vld [vmem:[%s1 + $0x1448] sm:$0xff]
    %v845 = vld [vmem:[%s1 + $0x1450] sm:$0xff]
    %v846 = vld [vmem:[%s1 + $0x1458] sm:$0xff]
    %v847 = vld [vmem:[%s1 + $0x1460] sm:$0xff]
    %v848 = vld [vmem:[%s1 + $0x1468] sm:$0xff]
    %v849 = vld [vmem:[%s1 + $0x1470] sm:$0xff]
    %v850 = vld [vmem:[%s1 + $0x1478] sm:$0xff]
    %v851 = vld [vmem:[%s1 + $0x1480] sm:$0xff]
    %v852 = vld [vmem:[%s1 + $0x1488] sm:$0xff]
    %v853 = vld [vmem:[%s1 + $0x1490] sm:$0xff]
    %v854 = vld [vmem:[%s1 + $0x1498] sm:$0xff]
    %v855 = vld [vmem:[%s1 + $0x14a0] sm:$0xff]
    %v856 = vld [vmem:[%s1 + $0x14a8] sm:$0xff]
    %v857 = vld [vmem:[%s1 + $0x14b0] sm:$0xff]
    %v858 = vld [vmem:[%s1 + $0x14b8] sm:$0xff]
    %v859 = vld [vmem:[%s1 + $0x14c0] sm:$0xff]
    %v860 = vld [vmem:[%s1 + $0x14c8] sm:$0xff]
    %v861 = vld [vmem:[%s1 + $0x14d0] sm:$0xff]
    %v862 = vld [vmem:[%s1 + $0x14d8] sm:$0xff]
    %v863 = vld [vmem:[%s1 + $0x14e0] sm:$0xff]
    %v864 = vld [vmem:[%s1 + $0x14e8] sm:$0xff]
    %v865 = vld [vmem:[%s1 + $0x14f0] sm:$0xff]
    %v866 = vld [vmem:[%s1 + $0x14f8] sm:$0xff]
    %v867 = vld [vmem:[%s1 + $0x1500] sm:$0xff]
    %v868 = vld [vmem:[%s1 + $0x1508] sm:$0xff]
    %v869 = vld [vmem:[%s1 + $0x1510] sm:$0xff]
    %v870 = vld [vmem:[%s1 + $0x1518] sm:$0xff]
    %v871 = vld [vmem:[%s1 + $0x1520] sm:$0xff]
    %v872 = vld [vmem:[%s1 + $0x1528] sm:$0xff]
    %v873 = vld [vmem:[%s1 + $0x1530] sm:$0xff]
    %v874 = vld [vmem:[%s1 + $0x1538] sm:$0xff]
    %v875 = vld [vmem:[%s1 + $0x1540] sm:$0xff]
    %v876 = vld [vmem:[%s1 + $0x1548] sm:$0xff]
    %v877 = vld [vmem:[%s1 + $0x1550] sm:$0xff]
    %v878 = vld [vmem:[%s1 + $0x1558] sm:$0xff]
    %v879 = vld [vmem:[%s1 + $0x1560] sm:$0xff]
    %v880 = vld [vmem:[%s1 + $0x1568] sm:$0xff]
    %v881 = vld [vmem:[%s1 + $0x1570] sm:$0xff]
    %v882 = vld [vmem:[%s1 + $0x1578] sm:$0xff]
    %v883 = vld [vmem:[%s1 + $0x1580] sm:$0xff]
    %v884 = vld [vmem:[%s1 + $0x1588] sm:$0xff]
    %v885 = vld [vmem:[%s1 + $0x1590] sm:$0xff]
    %v886 = vld [vmem:[%s1 + $0x1598] sm:$0xff]
    %v887 = vld [vmem:[%s1 + $0x15a0] sm:$0xff]
    %v888 = vld [vmem:[%s1 + $0x15a8] sm:$0xff]
    %v889 = vld [vmem:[%s1 + $0x15b0] sm:$0xff]
    %v890 = vld [vmem:[%s1 + $0x15b8] sm:$0xff]
    %v891 = vld [vmem:[%s1 + $0x15c0] sm:$0xff]
    %v892 = vld [vmem:[%s1 + $0x15c8] sm:$0xff]
    %v893 = vld [vmem:[%s1 + $0x15d0] sm:$0xff]
    %v894 = vld [vmem:[%s1 + $0x15d8] sm:$0xff]
    %v895 = vld [vmem:[%s1 + $0x15e0] sm:$0xff]
    %v896 = vld [vmem:[%s1 + $0x15e8] sm:$0xff]
    %v897 = vld [vmem:[%s1 + $0x15f0] sm:$0xff]
    %v898 = vld [vmem:[%s1 + $0x15f8] sm:$0xff]
    %v899 = vld [vmem:[%s1 + $0x1600] sm:$0xff]
    %v900 = vld [vmem:[%s1 + $0x1608] sm:$0xff]
    %v901 = vld [vmem:[%s1 + $0x1610] sm:$0xff]
    %v902 = vld [vmem:[%s1 + $0x1618] sm:$0xff]
    %v903 = vld [vmem:[%s1 + $0x1620] sm:$0xff]
    %v904 = vld [vmem:[%s1 + $0x1628] sm:$0xff]
    %v905 = vld [vmem:[%s1 + $0x1630] sm:$0xff]
    %v906 = vld [vmem:[%s1 + $0x1638] sm:$0xff]
    %v907 = vld [vmem:[%s1 + $0x1640] sm:$0xff]
    %v908 = vld [vmem:[%s1 + $0x1648] sm:$0xff]
    %v909 = vld [vmem:[%s1 + $0x1650] sm:$0xff]
    %v910 = vld [vmem:[%s1 + $0x1658] sm:$0xff]
    %v911 = vld [vmem:[%s1 + $0x1660] sm:$0xff]
    %v912 = vld [vmem:[%s1 + $0x1668] sm:$0xff]
    %v913 = vld [vmem:[%s1 + $0x1670] sm:$0xff]
    %v914 = vld [vmem:[%s1 + $0x1678] sm:$0xff]
    %v915 = vld [vmem:[%s1 + $0x1680] sm:$0xff]
    %v916 = vld [vmem:[%s1 + $0x1688] sm:$0xff]
    %v917 = vld [vmem:[%s1 + $0x1690] sm:$0xff]
    %v918 = vld [vmem:[%s1 + $0x1698] sm:$0xff]
    %v919 = vld [vmem:[%s1 + $0x16a0] sm:$0xff]
    %v920 = vld [vmem:[%s1 + $0x16a8] sm:$0xff]
    %v921 = vld [vmem:[%s1 + $0x16b0] sm:$0xff]
    %v922 = vld [vmem:[%s1 + $0x16b8] sm:$0xff]
    %v923 = vld [vmem:[%s1 + $0x16c0] sm:$0xff]
    %v924 = vld [vmem:[%s1 + $0x16c8] sm:$0xff]
    %v925 = vld [vmem:[%s1 + $0x16d0] sm:$0xff]
    %v926 = vld [vmem:[%s1 + $0x16d8] sm:$0xff]
    %v927 = vld [vmem:[%s1 + $0x16e0] sm:$0xff]
    %v928 = vld [vmem:[%s1 + $0x16e8] sm:$0xff]
    %v929 = vld [vmem:[%s1 + $0x16f0] sm:$0xff]
    %v930 = vld [vmem:[%s1 + $0x16f8] sm:$0xff]
    %v931 = vld [vmem:[%s1 + $0x1700] sm:$0xff]
    %v932 = vld [vmem:[%s1 + $0x1708] sm:$0xff]
    %v933 = vld [vmem:[%s1 + $0x1710] sm:$0xff]
    %v934 = vld [vmem:[%s1 + $0x1718] sm:$0xff]
    %v935 = vld [vmem:[%s1 + $0x1720] sm:$0xff]
    %v936 = vld [vmem:[%s1 + $0x1728] sm:$0xff]
    %v937 = vld [vmem:[%s1 + $0x1730] sm:$0xff]
    %v938 = vld [vmem:[%s1 + $0x1738] sm:$0xff]
    %v939 = vld [vmem:[%s1 + $0x1740] sm:$0xff]
    %v940 = vld [vmem:[%s1 + $0x1748] sm:$0xff]
    %v941 = vld [vmem:[%s1 + $0x1750] sm:$0xff]
    %v942 = vld [vmem:[%s1 + $0x1758] sm:$0xff]
    %v943 = vld [vmem:[%s1 + $0x1760] sm:$0xff]
    %v944 = vld [vmem:[%s1 + $0x1768] sm:$0xff]
    %v945 = vld [vmem:[%s1 + $0x1770] sm:$0xff]
    %v946 = vld [vmem:[%s1 + $0x1778] sm:$0xff]
    %v947 = vld [vmem:[%s1 + $0x1780] sm:$0xff]
    %v948 = vld [vmem:[%s1 + $0x1788] sm:$0xff]
    %v949 = vld [vmem:[%s1 + $0x1790] sm:$0xff]
    %v950 = vld [vmem:[%s1 + $0x1798] sm:$0xff]
    %v951 = vld [vmem:[%s1 + $0x17a0] sm:$0xff]
    %v952 = vld [vmem:[%s1 + $0x17a8] sm:$0xff]
    %v953 = vld [vmem:[%s1 + $0x17b0] sm:$0xff]
    %v954 = vld [vmem:[%s1 + $0x17b8] sm:$0xff]
    %v955 = vld [vmem:[%s1 + $0x17c0] sm:$0xff]
    %v956 = vld [vmem:[%s1 + $0x17c8] sm:$0xff]
    %v957 = vld [vmem:[%s1 + $0x17d0] sm:$0xff]
    %v958 = vld [vmem:[%s1 + $0x17d8] sm:$0xff]
    %v959 = vld [vmem:[%s1 + $0x17e0] sm:$0xff]
    %v960 = vld [vmem:[%s1 + $0x17e8] sm:$0xff]
    %v961 = vld [vmem:[%s1 + $0x17f0] sm:$0xff]
    %v962 = vld [vmem:[%s1 + $0x17f8] sm:$0xff]
    %v963 = vld [vmem:[%s1 + $0x1800] sm:$0xff]
    %v964 = vld [vmem:[%s1 + $0x1808] sm:$0xff]
    %v965 = vld [vmem:[%s1 + $0x1810] sm:$0xff]
    %v966 = vld [vmem:[%s1 + $0x1818] sm:$0xff]
    %v967 = vld [vmem:[%s1 + $0x1820] sm:$0xff]
    %v968 = vld [vmem:[%s1 + $0x1828] sm:$0xff]
    %v969 = vld [vmem:[%s1 + $0x1830] sm:$0xff]
    %v970 = vld [vmem:[%s1 + $0x1838] sm:$0xff]
    %v971 = vld [vmem:[%s1 + $0x1840] sm:$0xff]
    %v972 = vld [vmem:[%s1 + $0x1848] sm:$0xff]
    %v973 = vld [vmem:[%s1 + $0x1850] sm:$0xff]
    %v974 = vld [vmem:[%s1 + $0x1858] sm:$0xff]
    %v975 = vld [vmem:[%s1 + $0x1860] sm:$0xff]
    %v976 = vld [vmem:[%s1 + $0x1868] sm:$0xff]
    %v977 = vld [vmem:[%s1 + $0x1870] sm:$0xff]
    %v978 = vld [vmem:[%s1 + $0x1878] sm:$0xff]
    %v979 = vld [vmem:[%s2] sm:$0xf]
    %v981 = vlaneseq
    %v982 = vshrl.u32 %v981, 7
    %v983 = vsub.s32 0, %v982
    %v984 = vrot.slane %v979, %v983
    %v985 = vlaneseq
    %v986 = vshrl.u32 %v985, 7
    %v987 = vsub.s32 1, %v986
    %v988 = vrot.slane %v979, %v987
    %v989 = vlaneseq
    %v990 = vshrl.u32 %v989, 7
    %v991 = vsub.s32 2, %v990
    %v992 = vrot.slane %v979, %v991
    %v993 = vlaneseq
    %v994 = vshrl.u32 %v993, 7
    %v995 = vsub.s32 3, %v994
    %v996 = vrot.slane %v979, %v995
    %v1785 = vunpack.c.l.b16 %v195
    %v1786 = vunpack.c.h.b16 %v195
    %v1787 = vunpack.c.l.b16 %v196
    %v1788 = vunpack.c.h.b16 %v196
    %v1789 = vunpack.c.l.b16 %v197
    %v1790 = vunpack.c.h.b16 %v197
    %v1791 = vunpack.c.l.b16 %v198
    %v1792 = vunpack.c.h.b16 %v198
    %v1793 = vunpack.c.l.b16 %v199
    %v1794 = vunpack.c.h.b16 %v199
    %v1795 = vunpack.c.l.b16 %v200
    %v1796 = vunpack.c.h.b16 %v200
    %v1797 = vunpack.c.l.b16 %v201
    %v1798 = vunpack.c.h.b16 %v201
    %v1799 = vunpack.c.l.b16 %v202
    %v1800 = vunpack.c.h.b16 %v202
    %v1801 = vunpack.c.l.b16 %v203
    %v1802 = vunpack.c.h.b16 %v203
    %v1803 = vunpack.c.l.b16 %v204
    %v1804 = vunpack.c.h.b16 %v204
    %v1805 = vunpack.c.l.b16 %v205
    %v1806 = vunpack.c.h.b16 %v205
    %v1807 = vunpack.c.l.b16 %v206
    %v1808 = vunpack.c.h.b16 %v206
    %v1809 = vunpack.c.l.b16 %v207
    %v1810 = vunpack.c.h.b16 %v207
    %v1811 = vunpack.c.l.b16 %v208
    %v1812 = vunpack.c.h.b16 %v208
    %v1813 = vunpack.c.l.b16 %v209
    %v1814 = vunpack.c.h.b16 %v209
    %v1815 = vunpack.c.l.b16 %v210
    %v1816 = vunpack.c.h.b16 %v210
    %v1817 = vunpack.c.l.b16 %v211
    %v1818 = vunpack.c.h.b16 %v211
    %v1819 = vunpack.c.l.b16 %v212
    %v1820 = vunpack.c.h.b16 %v212
    %v1821 = vunpack.c.l.b16 %v213
    %v1822 = vunpack.c.h.b16 %v213
    %v1823 = vunpack.c.l.b16 %v214
    %v1824 = vunpack.c.h.b16 %v214
    %v1825 = vunpack.c.l.b16 %v215
    %v1826 = vunpack.c.h.b16 %v215
    %v1827 = vunpack.c.l.b16 %v216
    %v1828 = vunpack.c.h.b16 %v216
    %v1829 = vunpack.c.l.b16 %v217
    %v1830 = vunpack.c.h.b16 %v217
    %v1831 = vunpack.c.l.b16 %v218
    %v1832 = vunpack.c.h.b16 %v218
    %v1833 = vunpack.c.l.b16 %v219
    %v1834 = vunpack.c.h.b16 %v219
    %v1835 = vunpack.c.l.b16 %v220
    %v1836 = vunpack.c.h.b16 %v220
    %v1837 = vunpack.c.l.b16 %v221
    %v1838 = vunpack.c.h.b16 %v221
    %v1839 = vunpack.c.l.b16 %v222
    %v1840 = vunpack.c.h.b16 %v222
    %v1841 = vunpack.c.l.b16 %v223
    %v1842 = vunpack.c.h.b16 %v223
    %v1843 = vunpack.c.l.b16 %v224
    %v1844 = vunpack.c.h.b16 %v224
    %v1845 = vunpack.c.l.b16 %v225
    %v1846 = vunpack.c.h.b16 %v225
    %v1847 = vunpack.c.l.b16 %v226
    %v1848 = vunpack.c.h.b16 %v226
    %v1849 = vunpack.c.l.b16 %v227
    %v1850 = vunpack.c.h.b16 %v227
    %v1851 = vunpack.c.l.b16 %v228
    %v1852 = vunpack.c.h.b16 %v228
    %v1853 = vunpack.c.l.b16 %v229
    %v1854 = vunpack.c.h.b16 %v229
    %v1855 = vunpack.c.l.b16 %v230
    %v1856 = vunpack.c.h.b16 %v230
    %v1857 = vunpack.c.l.b16 %v231
    %v1858 = vunpack.c.h.b16 %v231
    %v1859 = vunpack.c.l.b16 %v232
    %v1860 = vunpack.c.h.b16 %v232
    %v1861 = vunpack.c.l.b16 %v233
    %v1862 = vunpack.c.h.b16 %v233
    %v1863 = vunpack.c.l.b16 %v234
    %v1864 = vunpack.c.h.b16 %v234
    %v1865 = vunpack.c.l.b16 %v235
    %v1866 = vunpack.c.h.b16 %v235
    %v1867 = vunpack.c.l.b16 %v236
    %v1868 = vunpack.c.h.b16 %v236
    %v1869 = vunpack.c.l.b16 %v237
    %v1870 = vunpack.c.h.b16 %v237
    %v1871 = vunpack.c.l.b16 %v238
    %v1872 = vunpack.c.h.b16 %v238
    %v1873 = vunpack.c.l.b16 %v239
    %v1874 = vunpack.c.h.b16 %v239
    %v1875 = vunpack.c.l.b16 %v240
    %v1876 = vunpack.c.h.b16 %v240
    %v1877 = vunpack.c.l.b16 %v241
    %v1878 = vunpack.c.h.b16 %v241
    %v1879 = vunpack.c.l.b16 %v242
    %v1880 = vunpack.c.h.b16 %v242
    %v1881 = vunpack.c.l.b16 %v243
    %v1882 = vunpack.c.h.b16 %v243
    %v1883 = vunpack.c.l.b16 %v244
    %v1884 = vunpack.c.h.b16 %v244
    %v1885 = vunpack.c.l.b16 %v245
    %v1886 = vunpack.c.h.b16 %v245
    %v1887 = vunpack.c.l.b16 %v246
    %v1888 = vunpack.c.h.b16 %v246
    %v1889 = vunpack.c.l.b16 %v247
    %v1890 = vunpack.c.h.b16 %v247
    %v1891 = vunpack.c.l.b16 %v248
    %v1892 = vunpack.c.h.b16 %v248
    %v1893 = vunpack.c.l.b16 %v249
    %v1894 = vunpack.c.h.b16 %v249
    %v1895 = vunpack.c.l.b16 %v250
    %v1896 = vunpack.c.h.b16 %v250
    %v1897 = vunpack.c.l.b16 %v251
    %v1898 = vunpack.c.h.b16 %v251
    %v1899 = vunpack.c.l.b16 %v252
    %v1900 = vunpack.c.h.b16 %v252
    %v1901 = vunpack.c.l.b16 %v253
    %v1902 = vunpack.c.h.b16 %v253
    %v1903 = vunpack.c.l.b16 %v254
    %v1904 = vunpack.c.h.b16 %v254
    %v1905 = vunpack.c.l.b16 %v255
    %v1906 = vunpack.c.h.b16 %v255
    %v1907 = vunpack.c.l.b16 %v256
    %v1908 = vunpack.c.h.b16 %v256
    %v1909 = vunpack.c.l.b16 %v257
    %v1910 = vunpack.c.h.b16 %v257
    %v1911 = vunpack.c.l.b16 %v258
    %v1912 = vunpack.c.h.b16 %v258
    %v1913 = vunpack.c.l.b16 %v259
    %v1914 = vunpack.c.h.b16 %v259
    %v1915 = vunpack.c.l.b16 %v260
    %v1916 = vunpack.c.h.b16 %v260
    %v1917 = vunpack.c.l.b16 %v261
    %v1918 = vunpack.c.h.b16 %v261
    %v1919 = vunpack.c.l.b16 %v262
    %v1920 = vunpack.c.h.b16 %v262
    %v1921 = vunpack.c.l.b16 %v263
    %v1922 = vunpack.c.h.b16 %v263
    %v1923 = vunpack.c.l.b16 %v264
    %v1924 = vunpack.c.h.b16 %v264
    %v1925 = vunpack.c.l.b16 %v265
    %v1926 = vunpack.c.h.b16 %v265
    %v1927 = vunpack.c.l.b16 %v266
    %v1928 = vunpack.c.h.b16 %v266
    %v1929 = vunpack.c.l.b16 %v267
    %v1930 = vunpack.c.h.b16 %v267
    %v1931 = vunpack.c.l.b16 %v268
    %v1932 = vunpack.c.h.b16 %v268
    %v1933 = vunpack.c.l.b16 %v269
    %v1934 = vunpack.c.h.b16 %v269
    %v1935 = vunpack.c.l.b16 %v270
    %v1936 = vunpack.c.h.b16 %v270
    %v1937 = vunpack.c.l.b16 %v271
    %v1938 = vunpack.c.h.b16 %v271
    %v1939 = vunpack.c.l.b16 %v272
    %v1940 = vunpack.c.h.b16 %v272
    %v1941 = vunpack.c.l.b16 %v273
    %v1942 = vunpack.c.h.b16 %v273
    %v1943 = vunpack.c.l.b16 %v274
    %v1944 = vunpack.c.h.b16 %v274
    %v1945 = vunpack.c.l.b16 %v275
    %v1946 = vunpack.c.h.b16 %v275
    %v1947 = vunpack.c.l.b16 %v276
    %v1948 = vunpack.c.h.b16 %v276
    %v1949 = vunpack.c.l.b16 %v277
    %v1950 = vunpack.c.h.b16 %v277
    %v1951 = vunpack.c.l.b16 %v278
    %v1952 = vunpack.c.h.b16 %v278
    %v1953 = vunpack.c.l.b16 %v279
    %v1954 = vunpack.c.h.b16 %v279
    %v1955 = vunpack.c.l.b16 %v280
    %v1956 = vunpack.c.h.b16 %v280
    %v1957 = vunpack.c.l.b16 %v281
    %v1958 = vunpack.c.h.b16 %v281
    %v1959 = vunpack.c.l.b16 %v282
    %v1960 = vunpack.c.h.b16 %v282
    %v1961 = vunpack.c.l.b16 %v283
    %v1962 = vunpack.c.h.b16 %v283
    %v1963 = vunpack.c.l.b16 %v284
    %v1964 = vunpack.c.h.b16 %v284
    %v1965 = vunpack.c.l.b16 %v285
    %v1966 = vunpack.c.h.b16 %v285
    %v1967 = vunpack.c.l.b16 %v286
    %v1968 = vunpack.c.h.b16 %v286
    %v1969 = vunpack.c.l.b16 %v287
    %v1970 = vunpack.c.h.b16 %v287
    %v1971 = vunpack.c.l.b16 %v288
    %v1972 = vunpack.c.h.b16 %v288
    %v1973 = vunpack.c.l.b16 %v289
    %v1974 = vunpack.c.h.b16 %v289
    %v1975 = vunpack.c.l.b16 %v290
    %v1976 = vunpack.c.h.b16 %v290
    %v1977 = vunpack.c.l.b16 %v291
    %v1978 = vunpack.c.h.b16 %v291
    %v1979 = vunpack.c.l.b16 %v292
    %v1980 = vunpack.c.h.b16 %v292
    %v1981 = vunpack.c.l.b16 %v293
    %v1982 = vunpack.c.h.b16 %v293
    %v1983 = vunpack.c.l.b16 %v294
    %v1984 = vunpack.c.h.b16 %v294
    %v1985 = vunpack.c.l.b16 %v295
    %v1986 = vunpack.c.h.b16 %v295
    %v1987 = vunpack.c.l.b16 %v296
    %v1988 = vunpack.c.h.b16 %v296
    %v1989 = vunpack.c.l.b16 %v297
    %v1990 = vunpack.c.h.b16 %v297
    %v1991 = vunpack.c.l.b16 %v298
    %v1992 = vunpack.c.h.b16 %v298
    %v1993 = vunpack.c.l.b16 %v299
    %v1994 = vunpack.c.h.b16 %v299
    %v1995 = vunpack.c.l.b16 %v300
    %v1996 = vunpack.c.h.b16 %v300
    %v1997 = vunpack.c.l.b16 %v301
    %v1998 = vunpack.c.h.b16 %v301
    %v1999 = vunpack.c.l.b16 %v302
    %v2000 = vunpack.c.h.b16 %v302
    %v2001 = vunpack.c.l.b16 %v303
    %v2002 = vunpack.c.h.b16 %v303
    %v2003 = vunpack.c.l.b16 %v304
    %v2004 = vunpack.c.h.b16 %v304
    %v2005 = vunpack.c.l.b16 %v305
    %v2006 = vunpack.c.h.b16 %v305
    %v2007 = vunpack.c.l.b16 %v306
    %v2008 = vunpack.c.h.b16 %v306
    %v2009 = vunpack.c.l.b16 %v307
    %v2010 = vunpack.c.h.b16 %v307
    %v2011 = vunpack.c.l.b16 %v308
    %v2012 = vunpack.c.h.b16 %v308
    %v2013 = vunpack.c.l.b16 %v309
    %v2014 = vunpack.c.h.b16 %v309
    %v2015 = vunpack.c.l.b16 %v310
    %v2016 = vunpack.c.h.b16 %v310
    %v2017 = vunpack.c.l.b16 %v311
    %v2018 = vunpack.c.h.b16 %v311
    %v2019 = vunpack.c.l.b16 %v312
    %v2020 = vunpack.c.h.b16 %v312
    %v2021 = vunpack.c.l.b16 %v313
    %v2022 = vunpack.c.h.b16 %v313
    %v2023 = vunpack.c.l.b16 %v314
    %v2024 = vunpack.c.h.b16 %v314
    %v2025 = vunpack.c.l.b16 %v315
    %v2026 = vunpack.c.h.b16 %v315
    %v2027 = vunpack.c.l.b16 %v316
    %v2028 = vunpack.c.h.b16 %v316
    %v2029 = vunpack.c.l.b16 %v317
    %v2030 = vunpack.c.h.b16 %v317
    %v2031 = vunpack.c.l.b16 %v318
    %v2032 = vunpack.c.h.b16 %v318
    %v2033 = vunpack.c.l.b16 %v319
    %v2034 = vunpack.c.h.b16 %v319
    %v2035 = vunpack.c.l.b16 %v320
    %v2036 = vunpack.c.h.b16 %v320
    %v2037 = vunpack.c.l.b16 %v321
    %v2038 = vunpack.c.h.b16 %v321
    %v2039 = vunpack.c.l.b16 %v322
    %v2040 = vunpack.c.h.b16 %v322
    %v2041 = vunpack.c.l.b16 %v323
    %v2042 = vunpack.c.h.b16 %v323
    %v2043 = vunpack.c.l.b16 %v324
    %v2044 = vunpack.c.h.b16 %v324
    %v2045 = vunpack.c.l.b16 %v325
    %v2046 = vunpack.c.h.b16 %v325
    %v2047 = vunpack.c.l.b16 %v326
    %v2048 = vunpack.c.h.b16 %v326
    %v2049 = vunpack.c.l.b16 %v327
    %v2050 = vunpack.c.h.b16 %v327
    %v2051 = vunpack.c.l.b16 %v328
    %v2052 = vunpack.c.h.b16 %v328
    %v2053 = vunpack.c.l.b16 %v329
    %v2054 = vunpack.c.h.b16 %v329
    %v2055 = vunpack.c.l.b16 %v330
    %v2056 = vunpack.c.h.b16 %v330
    %v2057 = vunpack.c.l.b16 %v331
    %v2058 = vunpack.c.h.b16 %v331
    %v2059 = vunpack.c.l.b16 %v332
    %v2060 = vunpack.c.h.b16 %v332
    %v2061 = vunpack.c.l.b16 %v333
    %v2062 = vunpack.c.h.b16 %v333
    %v2063 = vunpack.c.l.b16 %v334
    %v2064 = vunpack.c.h.b16 %v334
    %v2065 = vunpack.c.l.b16 %v335
    %v2066 = vunpack.c.h.b16 %v335
    %v2067 = vunpack.c.l.b16 %v336
    %v2068 = vunpack.c.h.b16 %v336
    %v2069 = vunpack.c.l.b16 %v337
    %v2070 = vunpack.c.h.b16 %v337
    %v2071 = vunpack.c.l.b16 %v338
    %v2072 = vunpack.c.h.b16 %v338
    %v2073 = vunpack.c.l.b16 %v339
    %v2074 = vunpack.c.h.b16 %v339
    %v2075 = vunpack.c.l.b16 %v340
    %v2076 = vunpack.c.h.b16 %v340
    %v2077 = vunpack.c.l.b16 %v341
    %v2078 = vunpack.c.h.b16 %v341
    %v2079 = vunpack.c.l.b16 %v342
    %v2080 = vunpack.c.h.b16 %v342
    %v2081 = vunpack.c.l.b16 %v343
    %v2082 = vunpack.c.h.b16 %v343
    %v2083 = vunpack.c.l.b16 %v344
    %v2084 = vunpack.c.h.b16 %v344
    %v2085 = vunpack.c.l.b16 %v345
    %v2086 = vunpack.c.h.b16 %v345
    %v2087 = vunpack.c.l.b16 %v346
    %v2088 = vunpack.c.h.b16 %v346
    %v2089 = vunpack.c.l.b16 %v347
    %v2090 = vunpack.c.h.b16 %v347
    %v2091 = vunpack.c.l.b16 %v348
    %v2092 = vunpack.c.h.b16 %v348
    %v2093 = vunpack.c.l.b16 %v349
    %v2094 = vunpack.c.h.b16 %v349
    %v2095 = vunpack.c.l.b16 %v350
    %v2096 = vunpack.c.h.b16 %v350
    %v2097 = vunpack.c.l.b16 %v351
    %v2098 = vunpack.c.h.b16 %v351
    %v2099 = vunpack.c.l.b16 %v352
    %v2100 = vunpack.c.h.b16 %v352
    %v2101 = vunpack.c.l.b16 %v353
    %v2102 = vunpack.c.h.b16 %v353
    %v2103 = vunpack.c.l.b16 %v354
    %v2104 = vunpack.c.h.b16 %v354
    %v2105 = vunpack.c.l.b16 %v355
    %v2106 = vunpack.c.h.b16 %v355
    %v2107 = vunpack.c.l.b16 %v356
    %v2108 = vunpack.c.h.b16 %v356
    %v2109 = vunpack.c.l.b16 %v357
    %v2110 = vunpack.c.h.b16 %v357
    %v2111 = vunpack.c.l.b16 %v358
    %v2112 = vunpack.c.h.b16 %v358
    %v2113 = vunpack.c.l.b16 %v359
    %v2114 = vunpack.c.h.b16 %v359
    %v2115 = vunpack.c.l.b16 %v360
    %v2116 = vunpack.c.h.b16 %v360
    %v2117 = vunpack.c.l.b16 %v361
    %v2118 = vunpack.c.h.b16 %v361
    %v2119 = vunpack.c.l.b16 %v362
    %v2120 = vunpack.c.h.b16 %v362
    %v2121 = vunpack.c.l.b16 %v363
    %v2122 = vunpack.c.h.b16 %v363
    %v2123 = vunpack.c.l.b16 %v364
    %v2124 = vunpack.c.h.b16 %v364
    %v2125 = vunpack.c.l.b16 %v365
    %v2126 = vunpack.c.h.b16 %v365
    %v2127 = vunpack.c.l.b16 %v366
    %v2128 = vunpack.c.h.b16 %v366
    %v2129 = vunpack.c.l.b16 %v367
    %v2130 = vunpack.c.h.b16 %v367
    %v2131 = vunpack.c.l.b16 %v368
    %v2132 = vunpack.c.h.b16 %v368
    %v2133 = vunpack.c.l.b16 %v369
    %v2134 = vunpack.c.h.b16 %v369
    %v2135 = vunpack.c.l.b16 %v370
    %v2136 = vunpack.c.h.b16 %v370
    %v2137 = vunpack.c.l.b16 %v371
    %v2138 = vunpack.c.h.b16 %v371
    %v2139 = vunpack.c.l.b16 %v372
    %v2140 = vunpack.c.h.b16 %v372
    %v2141 = vunpack.c.l.b16 %v373
    %v2142 = vunpack.c.h.b16 %v373
    %v2143 = vunpack.c.l.b16 %v374
    %v2144 = vunpack.c.h.b16 %v374
    %v2145 = vunpack.c.l.b16 %v375
    %v2146 = vunpack.c.h.b16 %v375
    %v2147 = vunpack.c.l.b16 %v376
    %v2148 = vunpack.c.h.b16 %v376
    %v2149 = vunpack.c.l.b16 %v377
    %v2150 = vunpack.c.h.b16 %v377
    %v2151 = vunpack.c.l.b16 %v378
    %v2152 = vunpack.c.h.b16 %v378
    %v2153 = vunpack.c.l.b16 %v379
    %v2154 = vunpack.c.h.b16 %v379
    %v2155 = vunpack.c.l.b16 %v380
    %v2156 = vunpack.c.h.b16 %v380
    %v2157 = vunpack.c.l.b16 %v381
    %v2158 = vunpack.c.h.b16 %v381
    %v2159 = vunpack.c.l.b16 %v382
    %v2160 = vunpack.c.h.b16 %v382
    %v2161 = vunpack.c.l.b16 %v383
    %v2162 = vunpack.c.h.b16 %v383
    %v2163 = vunpack.c.l.b16 %v384
    %v2164 = vunpack.c.h.b16 %v384
    %v2165 = vunpack.c.l.b16 %v385
    %v2166 = vunpack.c.h.b16 %v385
    %v2167 = vunpack.c.l.b16 %v386
    %v2168 = vunpack.c.h.b16 %v386
    %v2169 = vunpack.c.l.b16 %v387
    %v2170 = vunpack.c.h.b16 %v387
    %v2171 = vunpack.c.l.b16 %v388
    %v2172 = vunpack.c.h.b16 %v388
    %v2173 = vunpack.c.l.b16 %v389
    %v2174 = vunpack.c.h.b16 %v389
    %v2175 = vunpack.c.l.b16 %v390
    %v2176 = vunpack.c.h.b16 %v390
    %v2177 = vunpack.c.l.b16 %v391
    %v2178 = vunpack.c.h.b16 %v391
    %v2179 = vunpack.c.l.b16 %v392
    %v2180 = vunpack.c.h.b16 %v392
    %v2181 = vunpack.c.l.b16 %v393
    %v2182 = vunpack.c.h.b16 %v393
    %v2183 = vunpack.c.l.b16 %v394
    %v2184 = vunpack.c.h.b16 %v394
    %v2185 = vunpack.c.l.b16 %v395
    %v2186 = vunpack.c.h.b16 %v395
    %v2187 = vunpack.c.l.b16 %v396
    %v2188 = vunpack.c.h.b16 %v396
    %v2189 = vunpack.c.l.b16 %v397
    %v2190 = vunpack.c.h.b16 %v397
    %v2191 = vunpack.c.l.b16 %v398
    %v2192 = vunpack.c.h.b16 %v398
    %v2193 = vunpack.c.l.b16 %v399
    %v2194 = vunpack.c.h.b16 %v399
    %v2195 = vunpack.c.l.b16 %v400
    %v2196 = vunpack.c.h.b16 %v400
    %v2197 = vunpack.c.l.b16 %v401
    %v2198 = vunpack.c.h.b16 %v401
    %v2199 = vunpack.c.l.b16 %v402
    %v2200 = vunpack.c.h.b16 %v402
    %v2201 = vunpack.c.l.b16 %v403
    %v2202 = vunpack.c.h.b16 %v403
    %v2203 = vunpack.c.l.b16 %v404
    %v2204 = vunpack.c.h.b16 %v404
    %v2205 = vunpack.c.l.b16 %v405
    %v2206 = vunpack.c.h.b16 %v405
    %v2207 = vunpack.c.l.b16 %v406
    %v2208 = vunpack.c.h.b16 %v406
    %v2209 = vunpack.c.l.b16 %v407
    %v2210 = vunpack.c.h.b16 %v407
    %v2211 = vunpack.c.l.b16 %v408
    %v2212 = vunpack.c.h.b16 %v408
    %v2213 = vunpack.c.l.b16 %v409
    %v2214 = vunpack.c.h.b16 %v409
    %v2215 = vunpack.c.l.b16 %v410
    %v2216 = vunpack.c.h.b16 %v410
    %v2217 = vunpack.c.l.b16 %v411
    %v2218 = vunpack.c.h.b16 %v411
    %v2219 = vunpack.c.l.b16 %v412
    %v2220 = vunpack.c.h.b16 %v412
    %v2221 = vunpack.c.l.b16 %v413
    %v2222 = vunpack.c.h.b16 %v413
    %v2223 = vunpack.c.l.b16 %v414
    %v2224 = vunpack.c.h.b16 %v414
    %v2225 = vunpack.c.l.b16 %v415
    %v2226 = vunpack.c.h.b16 %v415
    %v2227 = vunpack.c.l.b16 %v416
    %v2228 = vunpack.c.h.b16 %v416
    %v2229 = vunpack.c.l.b16 %v417
    %v2230 = vunpack.c.h.b16 %v417
    %v2231 = vunpack.c.l.b16 %v418
    %v2232 = vunpack.c.h.b16 %v418
    %v2233 = vunpack.c.l.b16 %v419
    %v2234 = vunpack.c.h.b16 %v419
    %v2235 = vunpack.c.l.b16 %v420
    %v2236 = vunpack.c.h.b16 %v420
    %v2237 = vunpack.c.l.b16 %v421
    %v2238 = vunpack.c.h.b16 %v421
    %v2239 = vunpack.c.l.b16 %v422
    %v2240 = vunpack.c.h.b16 %v422
    %v2241 = vunpack.c.l.b16 %v423
    %v2242 = vunpack.c.h.b16 %v423
    %v2243 = vunpack.c.l.b16 %v424
    %v2244 = vunpack.c.h.b16 %v424
    %v2245 = vunpack.c.l.b16 %v425
    %v2246 = vunpack.c.h.b16 %v425
    %v2247 = vunpack.c.l.b16 %v426
    %v2248 = vunpack.c.h.b16 %v426
    %v2249 = vunpack.c.l.b16 %v427
    %v2250 = vunpack.c.h.b16 %v427
    %v2251 = vunpack.c.l.b16 %v428
    %v2252 = vunpack.c.h.b16 %v428
    %v2253 = vunpack.c.l.b16 %v429
    %v2254 = vunpack.c.h.b16 %v429
    %v2255 = vunpack.c.l.b16 %v430
    %v2256 = vunpack.c.h.b16 %v430
    %v2257 = vunpack.c.l.b16 %v431
    %v2258 = vunpack.c.h.b16 %v431
    %v2259 = vunpack.c.l.b16 %v432
    %v2260 = vunpack.c.h.b16 %v432
    %v2261 = vunpack.c.l.b16 %v433
    %v2262 = vunpack.c.h.b16 %v433
    %v2263 = vunpack.c.l.b16 %v434
    %v2264 = vunpack.c.h.b16 %v434
    %v2265 = vunpack.c.l.b16 %v435
    %v2266 = vunpack.c.h.b16 %v435
    %v2267 = vunpack.c.l.b16 %v436
    %v2268 = vunpack.c.h.b16 %v436
    %v2269 = vunpack.c.l.b16 %v437
    %v2270 = vunpack.c.h.b16 %v437
    %v2271 = vunpack.c.l.b16 %v438
    %v2272 = vunpack.c.h.b16 %v438
    %v2273 = vunpack.c.l.b16 %v439
    %v2274 = vunpack.c.h.b16 %v439
    %v2275 = vunpack.c.l.b16 %v440
    %v2276 = vunpack.c.h.b16 %v440
    %v2277 = vunpack.c.l.b16 %v441
    %v2278 = vunpack.c.h.b16 %v441
    %v2279 = vunpack.c.l.b16 %v442
    %v2280 = vunpack.c.h.b16 %v442
    %v2281 = vunpack.c.l.b16 %v443
    %v2282 = vunpack.c.h.b16 %v443
    %v2283 = vunpack.c.l.b16 %v444
    %v2284 = vunpack.c.h.b16 %v444
    %v2285 = vunpack.c.l.b16 %v445
    %v2286 = vunpack.c.h.b16 %v445
    %v2287 = vunpack.c.l.b16 %v446
    %v2288 = vunpack.c.h.b16 %v446
    %v2289 = vunpack.c.l.b16 %v447
    %v2290 = vunpack.c.h.b16 %v447
    %v2291 = vunpack.c.l.b16 %v448
    %v2292 = vunpack.c.h.b16 %v448
    %v2293 = vunpack.c.l.b16 %v449
    %v2294 = vunpack.c.h.b16 %v449
    %v2295 = vunpack.c.l.b16 %v450
    %v2296 = vunpack.c.h.b16 %v450
    %v2297 = vunpack.c.l.b16 %v451
    %v2298 = vunpack.c.h.b16 %v451
    %v2299 = vunpack.c.l.b16 %v452
    %v2300 = vunpack.c.h.b16 %v452
    %v2301 = vunpack.c.l.b16 %v453
    %v2302 = vunpack.c.h.b16 %v453
    %v2303 = vunpack.c.l.b16 %v454
    %v2304 = vunpack.c.h.b16 %v454
    %v2305 = vunpack.c.l.b16 %v455
    %v2306 = vunpack.c.h.b16 %v455
    %v2307 = vunpack.c.l.b16 %v456
    %v2308 = vunpack.c.h.b16 %v456
    %v2309 = vunpack.c.l.b16 %v457
    %v2310 = vunpack.c.h.b16 %v457
    %v2311 = vunpack.c.l.b16 %v458
    %v2312 = vunpack.c.h.b16 %v458
    %v2313 = vunpack.c.l.b16 %v459
    %v2314 = vunpack.c.h.b16 %v459
    %v2315 = vunpack.c.l.b16 %v460
    %v2316 = vunpack.c.h.b16 %v460
    %v2317 = vunpack.c.l.b16 %v461
    %v2318 = vunpack.c.h.b16 %v461
    %v2319 = vunpack.c.l.b16 %v462
    %v2320 = vunpack.c.h.b16 %v462
    %v2321 = vunpack.c.l.b16 %v463
    %v2322 = vunpack.c.h.b16 %v463
    %v2323 = vunpack.c.l.b16 %v464
    %v2324 = vunpack.c.h.b16 %v464
    %v2325 = vunpack.c.l.b16 %v465
    %v2326 = vunpack.c.h.b16 %v465
    %v2327 = vunpack.c.l.b16 %v466
    %v2328 = vunpack.c.h.b16 %v466
    %v2329 = vunpack.c.l.b16 %v467
    %v2330 = vunpack.c.h.b16 %v467
    %v2331 = vunpack.c.l.b16 %v468
    %v2332 = vunpack.c.h.b16 %v468
    %v2333 = vunpack.c.l.b16 %v469
    %v2334 = vunpack.c.h.b16 %v469
    %v2335 = vunpack.c.l.b16 %v470
    %v2336 = vunpack.c.h.b16 %v470
    %v2337 = vunpack.c.l.b16 %v471
    %v2338 = vunpack.c.h.b16 %v471
    %v2339 = vunpack.c.l.b16 %v472
    %v2340 = vunpack.c.h.b16 %v472
    %v2341 = vunpack.c.l.b16 %v473
    %v2342 = vunpack.c.h.b16 %v473
    %v2343 = vunpack.c.l.b16 %v474
    %v2344 = vunpack.c.h.b16 %v474
    %v2345 = vunpack.c.l.b16 %v475
    %v2346 = vunpack.c.h.b16 %v475
    %v2347 = vunpack.c.l.b16 %v476
    %v2348 = vunpack.c.h.b16 %v476
    %v2349 = vunpack.c.l.b16 %v477
    %v2350 = vunpack.c.h.b16 %v477
    %v2351 = vunpack.c.l.b16 %v478
    %v2352 = vunpack.c.h.b16 %v478
    %v2353 = vunpack.c.l.b16 %v479
    %v2354 = vunpack.c.h.b16 %v479
    %v2355 = vunpack.c.l.b16 %v480
    %v2356 = vunpack.c.h.b16 %v480
    %v2357 = vunpack.c.l.b16 %v481
    %v2358 = vunpack.c.h.b16 %v481
    %v2359 = vunpack.c.l.b16 %v482
    %v2360 = vunpack.c.h.b16 %v482
    %v2361 = vunpack.c.l.b16 %v483
    %v2362 = vunpack.c.h.b16 %v483
    %v2363 = vunpack.c.l.b16 %v484
    %v2364 = vunpack.c.h.b16 %v484
    %v2365 = vunpack.c.l.b16 %v485
    %v2366 = vunpack.c.h.b16 %v485
    %v2367 = vunpack.c.l.b16 %v486
    %v2368 = vunpack.c.h.b16 %v486
    %v2369 = vunpack.c.l.b16 %v487
    %v2370 = vunpack.c.h.b16 %v487
    %v2371 = vunpack.c.l.b16 %v488
    %v2372 = vunpack.c.h.b16 %v488
    %v2373 = vunpack.c.l.b16 %v489
    %v2374 = vunpack.c.h.b16 %v489
    %v2375 = vunpack.c.l.b16 %v490
    %v2376 = vunpack.c.h.b16 %v490
    %v2377 = vunpack.c.l.b16 %v491
    %v2378 = vunpack.c.h.b16 %v491
    %v2379 = vunpack.c.l.b16 %v492
    %v2380 = vunpack.c.h.b16 %v492
    %v2381 = vunpack.c.l.b16 %v493
    %v2382 = vunpack.c.h.b16 %v493
    %v2383 = vunpack.c.l.b16 %v494
    %v2384 = vunpack.c.h.b16 %v494
    %v2385 = vunpack.c.l.b16 %v495
    %v2386 = vunpack.c.h.b16 %v495
    %v2387 = vunpack.c.l.b16 %v496
    %v2388 = vunpack.c.h.b16 %v496
    %v2389 = vunpack.c.l.b16 %v497
    %v2390 = vunpack.c.h.b16 %v497
    %v2391 = vunpack.c.l.b16 %v498
    %v2392 = vunpack.c.h.b16 %v498
    %v2393 = vunpack.c.l.b16 %v499
    %v2394 = vunpack.c.h.b16 %v499
    %v2395 = vunpack.c.l.b16 %v500
    %v2396 = vunpack.c.h.b16 %v500
    %v2397 = vunpack.c.l.b16 %v501
    %v2398 = vunpack.c.h.b16 %v501
    %v2399 = vunpack.c.l.b16 %v502
    %v2400 = vunpack.c.h.b16 %v502
    %v2401 = vunpack.c.l.b16 %v503
    %v2402 = vunpack.c.h.b16 %v503
    %v2403 = vunpack.c.l.b16 %v504
    %v2404 = vunpack.c.h.b16 %v504
    %v2405 = vunpack.c.l.b16 %v505
    %v2406 = vunpack.c.h.b16 %v505
    %v2407 = vunpack.c.l.b16 %v506
    %v2408 = vunpack.c.h.b16 %v506
    %v2409 = vunpack.c.l.b16 %v507
    %v2410 = vunpack.c.h.b16 %v507
    %v2411 = vunpack.c.l.b16 %v508
    %v2412 = vunpack.c.h.b16 %v508
    %v2413 = vunpack.c.l.b16 %v509
    %v2414 = vunpack.c.h.b16 %v509
    %v2415 = vunpack.c.l.b16 %v510
    %v2416 = vunpack.c.h.b16 %v510
    %v2417 = vunpack.c.l.b16 %v511
    %v2418 = vunpack.c.h.b16 %v511
    %v2419 = vunpack.c.l.b16 %v512
    %v2420 = vunpack.c.h.b16 %v512
    %v2421 = vunpack.c.l.b16 %v513
    %v2422 = vunpack.c.h.b16 %v513
    %v2423 = vunpack.c.l.b16 %v514
    %v2424 = vunpack.c.h.b16 %v514
    %v2425 = vunpack.c.l.b16 %v515
    %v2426 = vunpack.c.h.b16 %v515
    %v2427 = vunpack.c.l.b16 %v516
    %v2428 = vunpack.c.h.b16 %v516
    %v2429 = vunpack.c.l.b16 %v517
    %v2430 = vunpack.c.h.b16 %v517
    %v2431 = vunpack.c.l.b16 %v518
    %v2432 = vunpack.c.h.b16 %v518
    %v2433 = vunpack.c.l.b16 %v519
    %v2434 = vunpack.c.h.b16 %v519
    %v2435 = vunpack.c.l.b16 %v520
    %v2436 = vunpack.c.h.b16 %v520
    %v2437 = vunpack.c.l.b16 %v521
    %v2438 = vunpack.c.h.b16 %v521
    %v2439 = vunpack.c.l.b16 %v522
    %v2440 = vunpack.c.h.b16 %v522
    %v2441 = vunpack.c.l.b16 %v523
    %v2442 = vunpack.c.h.b16 %v523
    %v2443 = vunpack.c.l.b16 %v524
    %v2444 = vunpack.c.h.b16 %v524
    %v2445 = vunpack.c.l.b16 %v525
    %v2446 = vunpack.c.h.b16 %v525
    %v2447 = vunpack.c.l.b16 %v526
    %v2448 = vunpack.c.h.b16 %v526
    %v2449 = vunpack.c.l.b16 %v527
    %v2450 = vunpack.c.h.b16 %v527
    %v2451 = vunpack.c.l.b16 %v528
    %v2452 = vunpack.c.h.b16 %v528
    %v2453 = vunpack.c.l.b16 %v529
    %v2454 = vunpack.c.h.b16 %v529
    %v2455 = vunpack.c.l.b16 %v530
    %v2456 = vunpack.c.h.b16 %v530
    %v2457 = vunpack.c.l.b16 %v531
    %v2458 = vunpack.c.h.b16 %v531
    %v2459 = vunpack.c.l.b16 %v532
    %v2460 = vunpack.c.h.b16 %v532
    %v2461 = vunpack.c.l.b16 %v533
    %v2462 = vunpack.c.h.b16 %v533
    %v2463 = vunpack.c.l.b16 %v534
    %v2464 = vunpack.c.h.b16 %v534
    %v2465 = vunpack.c.l.b16 %v535
    %v2466 = vunpack.c.h.b16 %v535
    %v2467 = vunpack.c.l.b16 %v536
    %v2468 = vunpack.c.h.b16 %v536
    %v2469 = vunpack.c.l.b16 %v537
    %v2470 = vunpack.c.h.b16 %v537
    %v2471 = vunpack.c.l.b16 %v538
    %v2472 = vunpack.c.h.b16 %v538
    %v2473 = vunpack.c.l.b16 %v539
    %v2474 = vunpack.c.h.b16 %v539
    %v2475 = vunpack.c.l.b16 %v540
    %v2476 = vunpack.c.h.b16 %v540
    %v2477 = vunpack.c.l.b16 %v541
    %v2478 = vunpack.c.h.b16 %v541
    %v2479 = vunpack.c.l.b16 %v542
    %v2480 = vunpack.c.h.b16 %v542
    %v2481 = vunpack.c.l.b16 %v543
    %v2482 = vunpack.c.h.b16 %v543
    %v2483 = vunpack.c.l.b16 %v544
    %v2484 = vunpack.c.h.b16 %v544
    %v2485 = vunpack.c.l.b16 %v545
    %v2486 = vunpack.c.h.b16 %v545
    %v2487 = vunpack.c.l.b16 %v546
    %v2488 = vunpack.c.h.b16 %v546
    %v2489 = vunpack.c.l.b16 %v547
    %v2490 = vunpack.c.h.b16 %v547
    %v2491 = vunpack.c.l.b16 %v548
    %v2492 = vunpack.c.h.b16 %v548
    %v2493 = vunpack.c.l.b16 %v549
    %v2494 = vunpack.c.h.b16 %v549
    %v2495 = vunpack.c.l.b16 %v550
    %v2496 = vunpack.c.h.b16 %v550
    %v2497 = vunpack.c.l.b16 %v551
    %v2498 = vunpack.c.h.b16 %v551
    %v2499 = vunpack.c.l.b16 %v552
    %v2500 = vunpack.c.h.b16 %v552
    %v2501 = vunpack.c.l.b16 %v553
    %v2502 = vunpack.c.h.b16 %v553
    %v2503 = vunpack.c.l.b16 %v554
    %v2504 = vunpack.c.h.b16 %v554
    %v2505 = vunpack.c.l.b16 %v555
    %v2506 = vunpack.c.h.b16 %v555
    %v2507 = vunpack.c.l.b16 %v556
    %v2508 = vunpack.c.h.b16 %v556
    %v2509 = vunpack.c.l.b16 %v557
    %v2510 = vunpack.c.h.b16 %v557
    %v2511 = vunpack.c.l.b16 %v558
    %v2512 = vunpack.c.h.b16 %v558
    %v2513 = vunpack.c.l.b16 %v559
    %v2514 = vunpack.c.h.b16 %v559
    %v2515 = vunpack.c.l.b16 %v560
    %v2516 = vunpack.c.h.b16 %v560
    %v2517 = vunpack.c.l.b16 %v561
    %v2518 = vunpack.c.h.b16 %v561
    %v2519 = vunpack.c.l.b16 %v562
    %v2520 = vunpack.c.h.b16 %v562
    %v2521 = vunpack.c.l.b16 %v563
    %v2522 = vunpack.c.h.b16 %v563
    %v2523 = vunpack.c.l.b16 %v564
    %v2524 = vunpack.c.h.b16 %v564
    %v2525 = vunpack.c.l.b16 %v565
    %v2526 = vunpack.c.h.b16 %v565
    %v2527 = vunpack.c.l.b16 %v566
    %v2528 = vunpack.c.h.b16 %v566
    %v2529 = vunpack.c.l.b16 %v567
    %v2530 = vunpack.c.h.b16 %v567
    %v2531 = vunpack.c.l.b16 %v568
    %v2532 = vunpack.c.h.b16 %v568
    %v2533 = vunpack.c.l.b16 %v569
    %v2534 = vunpack.c.h.b16 %v569
    %v2535 = vunpack.c.l.b16 %v570
    %v2536 = vunpack.c.h.b16 %v570
    %v2537 = vunpack.c.l.b16 %v571
    %v2538 = vunpack.c.h.b16 %v571
    %v2539 = vunpack.c.l.b16 %v572
    %v2540 = vunpack.c.h.b16 %v572
    %v2541 = vunpack.c.l.b16 %v573
    %v2542 = vunpack.c.h.b16 %v573
    %v2543 = vunpack.c.l.b16 %v574
    %v2544 = vunpack.c.h.b16 %v574
    %v2545 = vunpack.c.l.b16 %v575
    %v2546 = vunpack.c.h.b16 %v575
    %v2547 = vunpack.c.l.b16 %v576
    %v2548 = vunpack.c.h.b16 %v576
    %v2549 = vunpack.c.l.b16 %v577
    %v2550 = vunpack.c.h.b16 %v577
    %v2551 = vunpack.c.l.b16 %v578
    %v2552 = vunpack.c.h.b16 %v578
    %v2553 = vunpack.c.l.b16 %v579
    %v2554 = vunpack.c.h.b16 %v579
    %v2555 = vunpack.c.l.b16 %v580
    %v2556 = vunpack.c.h.b16 %v580
    %v2557 = vunpack.c.l.b16 %v581
    %v2558 = vunpack.c.h.b16 %v581
    %v2559 = vunpack.c.l.b16 %v582
    %v2560 = vunpack.c.h.b16 %v582
    %v2561 = vunpack.c.l.b16 %v583
    %v2562 = vunpack.c.h.b16 %v583
    %v2563 = vunpack.c.l.b16 %v584
    %v2564 = vunpack.c.h.b16 %v584
    %v2565 = vunpack.c.l.b16 %v585
    %v2566 = vunpack.c.h.b16 %v585
    %v2567 = vunpack.c.l.b16 %v586
    %v2568 = vunpack.c.h.b16 %v586
    %v2569 = vunpack.c.l.b16 %v587
    %v2570 = vunpack.c.h.b16 %v587
    %v2571 = vunpack.c.l.b16 %v588
    %v2572 = vunpack.c.h.b16 %v588
    %v2573 = vunpack.c.l.b16 %v589
    %v2574 = vunpack.c.h.b16 %v589
    %v2575 = vunpack.c.l.b16 %v590
    %v2576 = vunpack.c.h.b16 %v590
    %v2577 = vunpack.c.l.b16 %v591
    %v2578 = vunpack.c.h.b16 %v591
    %v2579 = vunpack.c.l.b16 %v592
    %v2580 = vunpack.c.h.b16 %v592
    %v2581 = vunpack.c.l.b16 %v593
    %v2582 = vunpack.c.h.b16 %v593
    %v2583 = vunpack.c.l.b16 %v594
    %v2584 = vunpack.c.h.b16 %v594
    %v2585 = vunpack.c.l.b16 %v595
    %v2586 = vunpack.c.h.b16 %v595
    %v2587 = vunpack.c.l.b16 %v596
    %v2588 = vunpack.c.h.b16 %v596
    %v2589 = vunpack.c.l.b16 %v597
    %v2590 = vunpack.c.h.b16 %v597
    %v2591 = vunpack.c.l.b16 %v598
    %v2592 = vunpack.c.h.b16 %v598
    %v2593 = vunpack.c.l.b16 %v599
    %v2594 = vunpack.c.h.b16 %v599
    %v2595 = vunpack.c.l.b16 %v600
    %v2596 = vunpack.c.h.b16 %v600
    %v2597 = vunpack.c.l.b16 %v601
    %v2598 = vunpack.c.h.b16 %v601
    %v2599 = vunpack.c.l.b16 %v602
    %v2600 = vunpack.c.h.b16 %v602
    %v2601 = vunpack.c.l.b16 %v603
    %v2602 = vunpack.c.h.b16 %v603
    %v2603 = vunpack.c.l.b16 %v604
    %v2604 = vunpack.c.h.b16 %v604
    %v2605 = vunpack.c.l.b16 %v605
    %v2606 = vunpack.c.h.b16 %v605
    %v2607 = vunpack.c.l.b16 %v606
    %v2608 = vunpack.c.h.b16 %v606
    %v2609 = vunpack.c.l.b16 %v607
    %v2610 = vunpack.c.h.b16 %v607
    %v2611 = vunpack.c.l.b16 %v608
    %v2612 = vunpack.c.h.b16 %v608
    %v2613 = vunpack.c.l.b16 %v609
    %v2614 = vunpack.c.h.b16 %v609
    %v2615 = vunpack.c.l.b16 %v610
    %v2616 = vunpack.c.h.b16 %v610
    %v2617 = vunpack.c.l.b16 %v611
    %v2618 = vunpack.c.h.b16 %v611
    %v2619 = vunpack.c.l.b16 %v612
    %v2620 = vunpack.c.h.b16 %v612
    %v2621 = vunpack.c.l.b16 %v613
    %v2622 = vunpack.c.h.b16 %v613
    %v2623 = vunpack.c.l.b16 %v614
    %v2624 = vunpack.c.h.b16 %v614
    %v2625 = vunpack.c.l.b16 %v615
    %v2626 = vunpack.c.h.b16 %v615
    %v2627 = vunpack.c.l.b16 %v616
    %v2628 = vunpack.c.h.b16 %v616
    %v2629 = vunpack.c.l.b16 %v617
    %v2630 = vunpack.c.h.b16 %v617
    %v2631 = vunpack.c.l.b16 %v618
    %v2632 = vunpack.c.h.b16 %v618
    %v2633 = vunpack.c.l.b16 %v619
    %v2634 = vunpack.c.h.b16 %v619
    %v2635 = vunpack.c.l.b16 %v620
    %v2636 = vunpack.c.h.b16 %v620
    %v2637 = vunpack.c.l.b16 %v621
    %v2638 = vunpack.c.h.b16 %v621
    %v2639 = vunpack.c.l.b16 %v622
    %v2640 = vunpack.c.h.b16 %v622
    %v2641 = vunpack.c.l.b16 %v623
    %v2642 = vunpack.c.h.b16 %v623
    %v2643 = vunpack.c.l.b16 %v624
    %v2644 = vunpack.c.h.b16 %v624
    %v2645 = vunpack.c.l.b16 %v625
    %v2646 = vunpack.c.h.b16 %v625
    %v2647 = vunpack.c.l.b16 %v626
    %v2648 = vunpack.c.h.b16 %v626
    %v2649 = vunpack.c.l.b16 %v627
    %v2650 = vunpack.c.h.b16 %v627
    %v2651 = vunpack.c.l.b16 %v628
    %v2652 = vunpack.c.h.b16 %v628
    %v2653 = vunpack.c.l.b16 %v629
    %v2654 = vunpack.c.h.b16 %v629
    %v2655 = vunpack.c.l.b16 %v630
    %v2656 = vunpack.c.h.b16 %v630
    %v2657 = vunpack.c.l.b16 %v631
    %v2658 = vunpack.c.h.b16 %v631
    %v2659 = vunpack.c.l.b16 %v632
    %v2660 = vunpack.c.h.b16 %v632
    %v2661 = vunpack.c.l.b16 %v633
    %v2662 = vunpack.c.h.b16 %v633
    %v2663 = vunpack.c.l.b16 %v634
    %v2664 = vunpack.c.h.b16 %v634
    %v2665 = vunpack.c.l.b16 %v635
    %v2666 = vunpack.c.h.b16 %v635
    %v2667 = vunpack.c.l.b16 %v636
    %v2668 = vunpack.c.h.b16 %v636
    %v2669 = vunpack.c.l.b16 %v637
    %v2670 = vunpack.c.h.b16 %v637
    %v2671 = vunpack.c.l.b16 %v638
    %v2672 = vunpack.c.h.b16 %v638
    %v2673 = vunpack.c.l.b16 %v639
    %v2674 = vunpack.c.h.b16 %v639
    %v2675 = vunpack.c.l.b16 %v640
    %v2676 = vunpack.c.h.b16 %v640
    %v2677 = vunpack.c.l.b16 %v641
    %v2678 = vunpack.c.h.b16 %v641
    %v2679 = vunpack.c.l.b16 %v642
    %v2680 = vunpack.c.h.b16 %v642
    %v2681 = vunpack.c.l.b16 %v643
    %v2682 = vunpack.c.h.b16 %v643
    %v2683 = vunpack.c.l.b16 %v644
    %v2684 = vunpack.c.h.b16 %v644
    %v2685 = vunpack.c.l.b16 %v645
    %v2686 = vunpack.c.h.b16 %v645
    %v2687 = vunpack.c.l.b16 %v646
    %v2688 = vunpack.c.h.b16 %v646
    %v2689 = vunpack.c.l.b16 %v647
    %v2690 = vunpack.c.h.b16 %v647
    %v2691 = vunpack.c.l.b16 %v648
    %v2692 = vunpack.c.h.b16 %v648
    %v2693 = vunpack.c.l.b16 %v649
    %v2694 = vunpack.c.h.b16 %v649
    %v2695 = vunpack.c.l.b16 %v650
    %v2696 = vunpack.c.h.b16 %v650
    %v2697 = vunpack.c.l.b16 %v651
    %v2698 = vunpack.c.h.b16 %v651
    %v2699 = vunpack.c.l.b16 %v652
    %v2700 = vunpack.c.h.b16 %v652
    %v2701 = vunpack.c.l.b16 %v653
    %v2702 = vunpack.c.h.b16 %v653
    %v2703 = vunpack.c.l.b16 %v654
    %v2704 = vunpack.c.h.b16 %v654
    %v2705 = vunpack.c.l.b16 %v655
    %v2706 = vunpack.c.h.b16 %v655
    %v2707 = vunpack.c.l.b16 %v656
    %v2708 = vunpack.c.h.b16 %v656
    %v2709 = vunpack.c.l.b16 %v657
    %v2710 = vunpack.c.h.b16 %v657
    %v2711 = vunpack.c.l.b16 %v658
    %v2712 = vunpack.c.h.b16 %v658
    %v2713 = vunpack.c.l.b16 %v659
    %v2714 = vunpack.c.h.b16 %v659
    %v2715 = vunpack.c.l.b16 %v660
    %v2716 = vunpack.c.h.b16 %v660
    %v2717 = vunpack.c.l.b16 %v661
    %v2718 = vunpack.c.h.b16 %v661
    %v2719 = vunpack.c.l.b16 %v662
    %v2720 = vunpack.c.h.b16 %v662
    %v2721 = vunpack.c.l.b16 %v663
    %v2722 = vunpack.c.h.b16 %v663
    %v2723 = vunpack.c.l.b16 %v664
    %v2724 = vunpack.c.h.b16 %v664
    %v2725 = vunpack.c.l.b16 %v665
    %v2726 = vunpack.c.h.b16 %v665
    %v2727 = vunpack.c.l.b16 %v666
    %v2728 = vunpack.c.h.b16 %v666
    %v2729 = vunpack.c.l.b16 %v667
    %v2730 = vunpack.c.h.b16 %v667
    %v2731 = vunpack.c.l.b16 %v668
    %v2732 = vunpack.c.h.b16 %v668
    %v2733 = vunpack.c.l.b16 %v669
    %v2734 = vunpack.c.h.b16 %v669
    %v2735 = vunpack.c.l.b16 %v670
    %v2736 = vunpack.c.h.b16 %v670
    %v2737 = vunpack.c.l.b16 %v671
    %v2738 = vunpack.c.h.b16 %v671
    %v2739 = vunpack.c.l.b16 %v672
    %v2740 = vunpack.c.h.b16 %v672
    %v2741 = vunpack.c.l.b16 %v673
    %v2742 = vunpack.c.h.b16 %v673
    %v2743 = vunpack.c.l.b16 %v674
    %v2744 = vunpack.c.h.b16 %v674
    %v2745 = vunpack.c.l.b16 %v675
    %v2746 = vunpack.c.h.b16 %v675
    %v2747 = vunpack.c.l.b16 %v676
    %v2748 = vunpack.c.h.b16 %v676
    %v2749 = vunpack.c.l.b16 %v677
    %v2750 = vunpack.c.h.b16 %v677
    %v2751 = vunpack.c.l.b16 %v678
    %v2752 = vunpack.c.h.b16 %v678
    %v2753 = vunpack.c.l.b16 %v679
    %v2754 = vunpack.c.h.b16 %v679
    %v2755 = vunpack.c.l.b16 %v680
    %v2756 = vunpack.c.h.b16 %v680
    %v2757 = vunpack.c.l.b16 %v681
    %v2758 = vunpack.c.h.b16 %v681
    %v2759 = vunpack.c.l.b16 %v682
    %v2760 = vunpack.c.h.b16 %v682
    %v2761 = vunpack.c.l.b16 %v683
    %v2762 = vunpack.c.h.b16 %v683
    %v2763 = vunpack.c.l.b16 %v684
    %v2764 = vunpack.c.h.b16 %v684
    %v2765 = vunpack.c.l.b16 %v685
    %v2766 = vunpack.c.h.b16 %v685
    %v2767 = vunpack.c.l.b16 %v686
    %v2768 = vunpack.c.h.b16 %v686
    %v2769 = vunpack.c.l.b16 %v687
    %v2770 = vunpack.c.h.b16 %v687
    %v2771 = vunpack.c.l.b16 %v688
    %v2772 = vunpack.c.h.b16 %v688
    %v2773 = vunpack.c.l.b16 %v689
    %v2774 = vunpack.c.h.b16 %v689
    %v2775 = vunpack.c.l.b16 %v690
    %v2776 = vunpack.c.h.b16 %v690
    %v2777 = vunpack.c.l.b16 %v691
    %v2778 = vunpack.c.h.b16 %v691
    %v2779 = vunpack.c.l.b16 %v692
    %v2780 = vunpack.c.h.b16 %v692
    %v2781 = vunpack.c.l.b16 %v693
    %v2782 = vunpack.c.h.b16 %v693
    %v2783 = vunpack.c.l.b16 %v694
    %v2784 = vunpack.c.h.b16 %v694
    %v2785 = vunpack.c.l.b16 %v695
    %v2786 = vunpack.c.h.b16 %v695
    %v2787 = vunpack.c.l.b16 %v696
    %v2788 = vunpack.c.h.b16 %v696
    %v2789 = vunpack.c.l.b16 %v697
    %v2790 = vunpack.c.h.b16 %v697
    %v2791 = vunpack.c.l.b16 %v698
    %v2792 = vunpack.c.h.b16 %v698
    %v2793 = vunpack.c.l.b16 %v699
    %v2794 = vunpack.c.h.b16 %v699
    %v2795 = vunpack.c.l.b16 %v700
    %v2796 = vunpack.c.h.b16 %v700
    %v2797 = vunpack.c.l.b16 %v701
    %v2798 = vunpack.c.h.b16 %v701
    %v2799 = vunpack.c.l.b16 %v702
    %v2800 = vunpack.c.h.b16 %v702
    %v2801 = vunpack.c.l.b16 %v703
    %v2802 = vunpack.c.h.b16 %v703
    %v2803 = vunpack.c.l.b16 %v704
    %v2804 = vunpack.c.h.b16 %v704
    %v2805 = vunpack.c.l.b16 %v705
    %v2806 = vunpack.c.h.b16 %v705
    %v2807 = vunpack.c.l.b16 %v706
    %v2808 = vunpack.c.h.b16 %v706
    %v2809 = vunpack.c.l.b16 %v707
    %v2810 = vunpack.c.h.b16 %v707
    %v2811 = vunpack.c.l.b16 %v708
    %v2812 = vunpack.c.h.b16 %v708
    %v2813 = vunpack.c.l.b16 %v709
    %v2814 = vunpack.c.h.b16 %v709
    %v2815 = vunpack.c.l.b16 %v710
    %v2816 = vunpack.c.h.b16 %v710
    %v2817 = vunpack.c.l.b16 %v711
    %v2818 = vunpack.c.h.b16 %v711
    %v2819 = vunpack.c.l.b16 %v712
    %v2820 = vunpack.c.h.b16 %v712
    %v2821 = vunpack.c.l.b16 %v713
    %v2822 = vunpack.c.h.b16 %v713
    %v2823 = vunpack.c.l.b16 %v714
    %v2824 = vunpack.c.h.b16 %v714
    %v2825 = vunpack.c.l.b16 %v715
    %v2826 = vunpack.c.h.b16 %v715
    %v2827 = vunpack.c.l.b16 %v716
    %v2828 = vunpack.c.h.b16 %v716
    %v2829 = vunpack.c.l.b16 %v717
    %v2830 = vunpack.c.h.b16 %v717
    %v2831 = vunpack.c.l.b16 %v718
    %v2832 = vunpack.c.h.b16 %v718
    %v2833 = vunpack.c.l.b16 %v719
    %v2834 = vunpack.c.h.b16 %v719
    %v2835 = vunpack.c.l.b16 %v720
    %v2836 = vunpack.c.h.b16 %v720
    %v2837 = vunpack.c.l.b16 %v721
    %v2838 = vunpack.c.h.b16 %v721
    %v2839 = vunpack.c.l.b16 %v722
    %v2840 = vunpack.c.h.b16 %v722
    %v2841 = vunpack.c.l.b16 %v723
    %v2842 = vunpack.c.h.b16 %v723
    %v2843 = vunpack.c.l.b16 %v724
    %v2844 = vunpack.c.h.b16 %v724
    %v2845 = vunpack.c.l.b16 %v725
    %v2846 = vunpack.c.h.b16 %v725
    %v2847 = vunpack.c.l.b16 %v726
    %v2848 = vunpack.c.h.b16 %v726
    %v2849 = vunpack.c.l.b16 %v727
    %v2850 = vunpack.c.h.b16 %v727
    %v2851 = vunpack.c.l.b16 %v728
    %v2852 = vunpack.c.h.b16 %v728
    %v2853 = vunpack.c.l.b16 %v729
    %v2854 = vunpack.c.h.b16 %v729
    %v2855 = vunpack.c.l.b16 %v730
    %v2856 = vunpack.c.h.b16 %v730
    %v2857 = vunpack.c.l.b16 %v731
    %v2858 = vunpack.c.h.b16 %v731
    %v2859 = vunpack.c.l.b16 %v732
    %v2860 = vunpack.c.h.b16 %v732
    %v2861 = vunpack.c.l.b16 %v733
    %v2862 = vunpack.c.h.b16 %v733
    %v2863 = vunpack.c.l.b16 %v734
    %v2864 = vunpack.c.h.b16 %v734
    %v2865 = vunpack.c.l.b16 %v735
    %v2866 = vunpack.c.h.b16 %v735
    %v2867 = vunpack.c.l.b16 %v736
    %v2868 = vunpack.c.h.b16 %v736
    %v2869 = vunpack.c.l.b16 %v737
    %v2870 = vunpack.c.h.b16 %v737
    %v2871 = vunpack.c.l.b16 %v738
    %v2872 = vunpack.c.h.b16 %v738
    %v2873 = vunpack.c.l.b16 %v739
    %v2874 = vunpack.c.h.b16 %v739
    %v2875 = vunpack.c.l.b16 %v740
    %v2876 = vunpack.c.h.b16 %v740
    %v2877 = vunpack.c.l.b16 %v741
    %v2878 = vunpack.c.h.b16 %v741
    %v2879 = vunpack.c.l.b16 %v742
    %v2880 = vunpack.c.h.b16 %v742
    %v2881 = vunpack.c.l.b16 %v743
    %v2882 = vunpack.c.h.b16 %v743
    %v2883 = vunpack.c.l.b16 %v744
    %v2884 = vunpack.c.h.b16 %v744
    %v2885 = vunpack.c.l.b16 %v745
    %v2886 = vunpack.c.h.b16 %v745
    %v2887 = vunpack.c.l.b16 %v746
    %v2888 = vunpack.c.h.b16 %v746
    %v2889 = vunpack.c.l.b16 %v747
    %v2890 = vunpack.c.h.b16 %v747
    %v2891 = vunpack.c.l.b16 %v748
    %v2892 = vunpack.c.h.b16 %v748
    %v2893 = vunpack.c.l.b16 %v749
    %v2894 = vunpack.c.h.b16 %v749
    %v2895 = vunpack.c.l.b16 %v750
    %v2896 = vunpack.c.h.b16 %v750
    %v2897 = vunpack.c.l.b16 %v751
    %v2898 = vunpack.c.h.b16 %v751
    %v2899 = vunpack.c.l.b16 %v752
    %v2900 = vunpack.c.h.b16 %v752
    %v2901 = vunpack.c.l.b16 %v753
    %v2902 = vunpack.c.h.b16 %v753
    %v2903 = vunpack.c.l.b16 %v754
    %v2904 = vunpack.c.h.b16 %v754
    %v2905 = vunpack.c.l.b16 %v755
    %v2906 = vunpack.c.h.b16 %v755
    %v2907 = vunpack.c.l.b16 %v756
    %v2908 = vunpack.c.h.b16 %v756
    %v2909 = vunpack.c.l.b16 %v757
    %v2910 = vunpack.c.h.b16 %v757
    %v2911 = vunpack.c.l.b16 %v758
    %v2912 = vunpack.c.h.b16 %v758
    %v2913 = vunpack.c.l.b16 %v759
    %v2914 = vunpack.c.h.b16 %v759
    %v2915 = vunpack.c.l.b16 %v760
    %v2916 = vunpack.c.h.b16 %v760
    %v2917 = vunpack.c.l.b16 %v761
    %v2918 = vunpack.c.h.b16 %v761
    %v2919 = vunpack.c.l.b16 %v762
    %v2920 = vunpack.c.h.b16 %v762
    %v2921 = vunpack.c.l.b16 %v763
    %v2922 = vunpack.c.h.b16 %v763
    %v2923 = vunpack.c.l.b16 %v764
    %v2924 = vunpack.c.h.b16 %v764
    %v2925 = vunpack.c.l.b16 %v765
    %v2926 = vunpack.c.h.b16 %v765
    %v2927 = vunpack.c.l.b16 %v766
    %v2928 = vunpack.c.h.b16 %v766
    %v2929 = vunpack.c.l.b16 %v767
    %v2930 = vunpack.c.h.b16 %v767
    %v2931 = vunpack.c.l.b16 %v768
    %v2932 = vunpack.c.h.b16 %v768
    %v2933 = vunpack.c.l.b16 %v769
    %v2934 = vunpack.c.h.b16 %v769
    %v2935 = vunpack.c.l.b16 %v770
    %v2936 = vunpack.c.h.b16 %v770
    %v2937 = vunpack.c.l.b16 %v771
    %v2938 = vunpack.c.h.b16 %v771
    %v2939 = vunpack.c.l.b16 %v772
    %v2940 = vunpack.c.h.b16 %v772
    %v2941 = vunpack.c.l.b16 %v773
    %v2942 = vunpack.c.h.b16 %v773
    %v2943 = vunpack.c.l.b16 %v774
    %v2944 = vunpack.c.h.b16 %v774
    %v2945 = vunpack.c.l.b16 %v775
    %v2946 = vunpack.c.h.b16 %v775
    %v2947 = vunpack.c.l.b16 %v776
    %v2948 = vunpack.c.h.b16 %v776
    %v2949 = vunpack.c.l.b16 %v777
    %v2950 = vunpack.c.h.b16 %v777
    %v2951 = vunpack.c.l.b16 %v778
    %v2952 = vunpack.c.h.b16 %v778
    %v2953 = vunpack.c.l.b16 %v779
    %v2954 = vunpack.c.h.b16 %v779
    %v2955 = vunpack.c.l.b16 %v780
    %v2956 = vunpack.c.h.b16 %v780
    %v2957 = vunpack.c.l.b16 %v781
    %v2958 = vunpack.c.h.b16 %v781
    %v2959 = vunpack.c.l.b16 %v782
    %v2960 = vunpack.c.h.b16 %v782
    %v2961 = vunpack.c.l.b16 %v783
    %v2962 = vunpack.c.h.b16 %v783
    %v2963 = vunpack.c.l.b16 %v784
    %v2964 = vunpack.c.h.b16 %v784
    %v2965 = vunpack.c.l.b16 %v785
    %v2966 = vunpack.c.h.b16 %v785
    %v2967 = vunpack.c.l.b16 %v786
    %v2968 = vunpack.c.h.b16 %v786
    %v2969 = vunpack.c.l.b16 %v787
    %v2970 = vunpack.c.h.b16 %v787
    %v2971 = vunpack.c.l.b16 %v788
    %v2972 = vunpack.c.h.b16 %v788
    %v2973 = vunpack.c.l.b16 %v789
    %v2974 = vunpack.c.h.b16 %v789
    %v2975 = vunpack.c.l.b16 %v790
    %v2976 = vunpack.c.h.b16 %v790
    %v2977 = vunpack.c.l.b16 %v791
    %v2978 = vunpack.c.h.b16 %v791
    %v2979 = vunpack.c.l.b16 %v792
    %v2980 = vunpack.c.h.b16 %v792
    %v2981 = vunpack.c.l.b16 %v793
    %v2982 = vunpack.c.h.b16 %v793
    %v2983 = vunpack.c.l.b16 %v794
    %v2984 = vunpack.c.h.b16 %v794
    %v2985 = vunpack.c.l.b16 %v795
    %v2986 = vunpack.c.h.b16 %v795
    %v2987 = vunpack.c.l.b16 %v796
    %v2988 = vunpack.c.h.b16 %v796
    %v2989 = vunpack.c.l.b16 %v797
    %v2990 = vunpack.c.h.b16 %v797
    %v2991 = vunpack.c.l.b16 %v798
    %v2992 = vunpack.c.h.b16 %v798
    %v2993 = vunpack.c.l.b16 %v799
    %v2994 = vunpack.c.h.b16 %v799
    %v2995 = vunpack.c.l.b16 %v800
    %v2996 = vunpack.c.h.b16 %v800
    %v2997 = vunpack.c.l.b16 %v801
    %v2998 = vunpack.c.h.b16 %v801
    %v2999 = vunpack.c.l.b16 %v802
    %v3000 = vunpack.c.h.b16 %v802
    %v3001 = vunpack.c.l.b16 %v803
    %v3002 = vunpack.c.h.b16 %v803
    %v3003 = vunpack.c.l.b16 %v804
    %v3004 = vunpack.c.h.b16 %v804
    %v3005 = vunpack.c.l.b16 %v805
    %v3006 = vunpack.c.h.b16 %v805
    %v3007 = vunpack.c.l.b16 %v806
    %v3008 = vunpack.c.h.b16 %v806
    %v3009 = vunpack.c.l.b16 %v807
    %v3010 = vunpack.c.h.b16 %v807
    %v3011 = vunpack.c.l.b16 %v808
    %v3012 = vunpack.c.h.b16 %v808
    %v3013 = vunpack.c.l.b16 %v809
    %v3014 = vunpack.c.h.b16 %v809
    %v3015 = vunpack.c.l.b16 %v810
    %v3016 = vunpack.c.h.b16 %v810
    %v3017 = vunpack.c.l.b16 %v811
    %v3018 = vunpack.c.h.b16 %v811
    %v3019 = vunpack.c.l.b16 %v812
    %v3020 = vunpack.c.h.b16 %v812
    %v3021 = vunpack.c.l.b16 %v813
    %v3022 = vunpack.c.h.b16 %v813
    %v3023 = vunpack.c.l.b16 %v814
    %v3024 = vunpack.c.h.b16 %v814
    %v3025 = vunpack.c.l.b16 %v815
    %v3026 = vunpack.c.h.b16 %v815
    %v3027 = vunpack.c.l.b16 %v816
    %v3028 = vunpack.c.h.b16 %v816
    %v3029 = vunpack.c.l.b16 %v817
    %v3030 = vunpack.c.h.b16 %v817
    %v3031 = vunpack.c.l.b16 %v818
    %v3032 = vunpack.c.h.b16 %v818
    %v3033 = vunpack.c.l.b16 %v819
    %v3034 = vunpack.c.h.b16 %v819
    %v3035 = vunpack.c.l.b16 %v820
    %v3036 = vunpack.c.h.b16 %v820
    %v3037 = vunpack.c.l.b16 %v821
    %v3038 = vunpack.c.h.b16 %v821
    %v3039 = vunpack.c.l.b16 %v822
    %v3040 = vunpack.c.h.b16 %v822
    %v3041 = vunpack.c.l.b16 %v823
    %v3042 = vunpack.c.h.b16 %v823
    %v3043 = vunpack.c.l.b16 %v824
    %v3044 = vunpack.c.h.b16 %v824
    %v3045 = vunpack.c.l.b16 %v825
    %v3046 = vunpack.c.h.b16 %v825
    %v3047 = vunpack.c.l.b16 %v826
    %v3048 = vunpack.c.h.b16 %v826
    %v3049 = vunpack.c.l.b16 %v827
    %v3050 = vunpack.c.h.b16 %v827
    %v3051 = vunpack.c.l.b16 %v828
    %v3052 = vunpack.c.h.b16 %v828
    %v3053 = vunpack.c.l.b16 %v829
    %v3054 = vunpack.c.h.b16 %v829
    %v3055 = vunpack.c.l.b16 %v830
    %v3056 = vunpack.c.h.b16 %v830
    %v3057 = vunpack.c.l.b16 %v831
    %v3058 = vunpack.c.h.b16 %v831
    %v3059 = vunpack.c.l.b16 %v832
    %v3060 = vunpack.c.h.b16 %v832
    %v3061 = vunpack.c.l.b16 %v833
    %v3062 = vunpack.c.h.b16 %v833
    %v3063 = vunpack.c.l.b16 %v834
    %v3064 = vunpack.c.h.b16 %v834
    %v3065 = vunpack.c.l.b16 %v835
    %v3066 = vunpack.c.h.b16 %v835
    %v3067 = vunpack.c.l.b16 %v836
    %v3068 = vunpack.c.h.b16 %v836
    %v3069 = vunpack.c.l.b16 %v837
    %v3070 = vunpack.c.h.b16 %v837
    %v3071 = vunpack.c.l.b16 %v838
    %v3072 = vunpack.c.h.b16 %v838
    %v3073 = vunpack.c.l.b16 %v839
    %v3074 = vunpack.c.h.b16 %v839
    %v3075 = vunpack.c.l.b16 %v840
    %v3076 = vunpack.c.h.b16 %v840
    %v3077 = vunpack.c.l.b16 %v841
    %v3078 = vunpack.c.h.b16 %v841
    %v3079 = vunpack.c.l.b16 %v842
    %v3080 = vunpack.c.h.b16 %v842
    %v3081 = vunpack.c.l.b16 %v843
    %v3082 = vunpack.c.h.b16 %v843
    %v3083 = vunpack.c.l.b16 %v844
    %v3084 = vunpack.c.h.b16 %v844
    %v3085 = vunpack.c.l.b16 %v845
    %v3086 = vunpack.c.h.b16 %v845
    %v3087 = vunpack.c.l.b16 %v846
    %v3088 = vunpack.c.h.b16 %v846
    %v3089 = vunpack.c.l.b16 %v847
    %v3090 = vunpack.c.h.b16 %v847
    %v3091 = vunpack.c.l.b16 %v848
    %v3092 = vunpack.c.h.b16 %v848
    %v3093 = vunpack.c.l.b16 %v849
    %v3094 = vunpack.c.h.b16 %v849
    %v3095 = vunpack.c.l.b16 %v850
    %v3096 = vunpack.c.h.b16 %v850
    %v3097 = vunpack.c.l.b16 %v851
    %v3098 = vunpack.c.h.b16 %v851
    %v3099 = vunpack.c.l.b16 %v852
    %v3100 = vunpack.c.h.b16 %v852
    %v3101 = vunpack.c.l.b16 %v853
    %v3102 = vunpack.c.h.b16 %v853
    %v3103 = vunpack.c.l.b16 %v854
    %v3104 = vunpack.c.h.b16 %v854
    %v3105 = vunpack.c.l.b16 %v855
    %v3106 = vunpack.c.h.b16 %v855
    %v3107 = vunpack.c.l.b16 %v856
    %v3108 = vunpack.c.h.b16 %v856
    %v3109 = vunpack.c.l.b16 %v857
    %v3110 = vunpack.c.h.b16 %v857
    %v3111 = vunpack.c.l.b16 %v858
    %v3112 = vunpack.c.h.b16 %v858
    %v3113 = vunpack.c.l.b16 %v859
    %v3114 = vunpack.c.h.b16 %v859
    %v3115 = vunpack.c.l.b16 %v860
    %v3116 = vunpack.c.h.b16 %v860
    %v3117 = vunpack.c.l.b16 %v861
    %v3118 = vunpack.c.h.b16 %v861
    %v3119 = vunpack.c.l.b16 %v862
    %v3120 = vunpack.c.h.b16 %v862
    %v3121 = vunpack.c.l.b16 %v863
    %v3122 = vunpack.c.h.b16 %v863
    %v3123 = vunpack.c.l.b16 %v864
    %v3124 = vunpack.c.h.b16 %v864
    %v3125 = vunpack.c.l.b16 %v865
    %v3126 = vunpack.c.h.b16 %v865
    %v3127 = vunpack.c.l.b16 %v866
    %v3128 = vunpack.c.h.b16 %v866
    %v3129 = vunpack.c.l.b16 %v867
    %v3130 = vunpack.c.h.b16 %v867
    %v3131 = vunpack.c.l.b16 %v868
    %v3132 = vunpack.c.h.b16 %v868
    %v3133 = vunpack.c.l.b16 %v869
    %v3134 = vunpack.c.h.b16 %v869
    %v3135 = vunpack.c.l.b16 %v870
    %v3136 = vunpack.c.h.b16 %v870
    %v3137 = vunpack.c.l.b16 %v871
    %v3138 = vunpack.c.h.b16 %v871
    %v3139 = vunpack.c.l.b16 %v872
    %v3140 = vunpack.c.h.b16 %v872
    %v3141 = vunpack.c.l.b16 %v873
    %v3142 = vunpack.c.h.b16 %v873
    %v3143 = vunpack.c.l.b16 %v874
    %v3144 = vunpack.c.h.b16 %v874
    %v3145 = vunpack.c.l.b16 %v875
    %v3146 = vunpack.c.h.b16 %v875
    %v3147 = vunpack.c.l.b16 %v876
    %v3148 = vunpack.c.h.b16 %v876
    %v3149 = vunpack.c.l.b16 %v877
    %v3150 = vunpack.c.h.b16 %v877
    %v3151 = vunpack.c.l.b16 %v878
    %v3152 = vunpack.c.h.b16 %v878
    %v3153 = vunpack.c.l.b16 %v879
    %v3154 = vunpack.c.h.b16 %v879
    %v3155 = vunpack.c.l.b16 %v880
    %v3156 = vunpack.c.h.b16 %v880
    %v3157 = vunpack.c.l.b16 %v881
    %v3158 = vunpack.c.h.b16 %v881
    %v3159 = vunpack.c.l.b16 %v882
    %v3160 = vunpack.c.h.b16 %v882
    %v3161 = vunpack.c.l.b16 %v883
    %v3162 = vunpack.c.h.b16 %v883
    %v3163 = vunpack.c.l.b16 %v884
    %v3164 = vunpack.c.h.b16 %v884
    %v3165 = vunpack.c.l.b16 %v885
    %v3166 = vunpack.c.h.b16 %v885
    %v3167 = vunpack.c.l.b16 %v886
    %v3168 = vunpack.c.h.b16 %v886
    %v3169 = vunpack.c.l.b16 %v887
    %v3170 = vunpack.c.h.b16 %v887
    %v3171 = vunpack.c.l.b16 %v888
    %v3172 = vunpack.c.h.b16 %v888
    %v3173 = vunpack.c.l.b16 %v889
    %v3174 = vunpack.c.h.b16 %v889
    %v3175 = vunpack.c.l.b16 %v890
    %v3176 = vunpack.c.h.b16 %v890
    %v3177 = vunpack.c.l.b16 %v891
    %v3178 = vunpack.c.h.b16 %v891
    %v3179 = vunpack.c.l.b16 %v892
    %v3180 = vunpack.c.h.b16 %v892
    %v3181 = vunpack.c.l.b16 %v893
    %v3182 = vunpack.c.h.b16 %v893
    %v3183 = vunpack.c.l.b16 %v894
    %v3184 = vunpack.c.h.b16 %v894
    %v3185 = vunpack.c.l.b16 %v895
    %v3186 = vunpack.c.h.b16 %v895
    %v3187 = vunpack.c.l.b16 %v896
    %v3188 = vunpack.c.h.b16 %v896
    %v3189 = vunpack.c.l.b16 %v897
    %v3190 = vunpack.c.h.b16 %v897
    %v3191 = vunpack.c.l.b16 %v898
    %v3192 = vunpack.c.h.b16 %v898
    %v3193 = vunpack.c.l.b16 %v899
    %v3194 = vunpack.c.h.b16 %v899
    %v3195 = vunpack.c.l.b16 %v900
    %v3196 = vunpack.c.h.b16 %v900
    %v3197 = vunpack.c.l.b16 %v901
    %v3198 = vunpack.c.h.b16 %v901
    %v3199 = vunpack.c.l.b16 %v902
    %v3200 = vunpack.c.h.b16 %v902
    %v3201 = vunpack.c.l.b16 %v903
    %v3202 = vunpack.c.h.b16 %v903
    %v3203 = vunpack.c.l.b16 %v904
    %v3204 = vunpack.c.h.b16 %v904
    %v3205 = vunpack.c.l.b16 %v905
    %v3206 = vunpack.c.h.b16 %v905
    %v3207 = vunpack.c.l.b16 %v906
    %v3208 = vunpack.c.h.b16 %v906
    %v3209 = vunpack.c.l.b16 %v907
    %v3210 = vunpack.c.h.b16 %v907
    %v3211 = vunpack.c.l.b16 %v908
    %v3212 = vunpack.c.h.b16 %v908
    %v3213 = vunpack.c.l.b16 %v909
    %v3214 = vunpack.c.h.b16 %v909
    %v3215 = vunpack.c.l.b16 %v910
    %v3216 = vunpack.c.h.b16 %v910
    %v3217 = vunpack.c.l.b16 %v911
    %v3218 = vunpack.c.h.b16 %v911
    %v3219 = vunpack.c.l.b16 %v912
    %v3220 = vunpack.c.h.b16 %v912
    %v3221 = vunpack.c.l.b16 %v913
    %v3222 = vunpack.c.h.b16 %v913
    %v3223 = vunpack.c.l.b16 %v914
    %v3224 = vunpack.c.h.b16 %v914
    %v3225 = vunpack.c.l.b16 %v915
    %v3226 = vunpack.c.h.b16 %v915
    %v3227 = vunpack.c.l.b16 %v916
    %v3228 = vunpack.c.h.b16 %v916
    %v3229 = vunpack.c.l.b16 %v917
    %v3230 = vunpack.c.h.b16 %v917
    %v3231 = vunpack.c.l.b16 %v918
    %v3232 = vunpack.c.h.b16 %v918
    %v3233 = vunpack.c.l.b16 %v919
    %v3234 = vunpack.c.h.b16 %v919
    %v3235 = vunpack.c.l.b16 %v920
    %v3236 = vunpack.c.h.b16 %v920
    %v3237 = vunpack.c.l.b16 %v921
    %v3238 = vunpack.c.h.b16 %v921
    %v3239 = vunpack.c.l.b16 %v922
    %v3240 = vunpack.c.h.b16 %v922
    %v3241 = vunpack.c.l.b16 %v923
    %v3242 = vunpack.c.h.b16 %v923
    %v3243 = vunpack.c.l.b16 %v924
    %v3244 = vunpack.c.h.b16 %v924
    %v3245 = vunpack.c.l.b16 %v925
    %v3246 = vunpack.c.h.b16 %v925
    %v3247 = vunpack.c.l.b16 %v926
    %v3248 = vunpack.c.h.b16 %v926
    %v3249 = vunpack.c.l.b16 %v927
    %v3250 = vunpack.c.h.b16 %v927
    %v3251 = vunpack.c.l.b16 %v928
    %v3252 = vunpack.c.h.b16 %v928
    %v3253 = vunpack.c.l.b16 %v929
    %v3254 = vunpack.c.h.b16 %v929
    %v3255 = vunpack.c.l.b16 %v930
    %v3256 = vunpack.c.h.b16 %v930
    %v3257 = vunpack.c.l.b16 %v931
    %v3258 = vunpack.c.h.b16 %v931
    %v3259 = vunpack.c.l.b16 %v932
    %v3260 = vunpack.c.h.b16 %v932
    %v3261 = vunpack.c.l.b16 %v933
    %v3262 = vunpack.c.h.b16 %v933
    %v3263 = vunpack.c.l.b16 %v934
    %v3264 = vunpack.c.h.b16 %v934
    %v3265 = vunpack.c.l.b16 %v935
    %v3266 = vunpack.c.h.b16 %v935
    %v3267 = vunpack.c.l.b16 %v936
    %v3268 = vunpack.c.h.b16 %v936
    %v3269 = vunpack.c.l.b16 %v937
    %v3270 = vunpack.c.h.b16 %v937
    %v3271 = vunpack.c.l.b16 %v938
    %v3272 = vunpack.c.h.b16 %v938
    %v3273 = vunpack.c.l.b16 %v939
    %v3274 = vunpack.c.h.b16 %v939
    %v3275 = vunpack.c.l.b16 %v940
    %v3276 = vunpack.c.h.b16 %v940
    %v3277 = vunpack.c.l.b16 %v941
    %v3278 = vunpack.c.h.b16 %v941
    %v3279 = vunpack.c.l.b16 %v942
    %v3280 = vunpack.c.h.b16 %v942
    %v3281 = vunpack.c.l.b16 %v943
    %v3282 = vunpack.c.h.b16 %v943
    %v3283 = vunpack.c.l.b16 %v944
    %v3284 = vunpack.c.h.b16 %v944
    %v3285 = vunpack.c.l.b16 %v945
    %v3286 = vunpack.c.h.b16 %v945
    %v3287 = vunpack.c.l.b16 %v946
    %v3288 = vunpack.c.h.b16 %v946
    %v3289 = vunpack.c.l.b16 %v947
    %v3290 = vunpack.c.h.b16 %v947
    %v3291 = vunpack.c.l.b16 %v948
    %v3292 = vunpack.c.h.b16 %v948
    %v3293 = vunpack.c.l.b16 %v949
    %v3294 = vunpack.c.h.b16 %v949
    %v3295 = vunpack.c.l.b16 %v950
    %v3296 = vunpack.c.h.b16 %v950
    %v3297 = vunpack.c.l.b16 %v951
    %v3298 = vunpack.c.h.b16 %v951
    %v3299 = vunpack.c.l.b16 %v952
    %v3300 = vunpack.c.h.b16 %v952
    %v3301 = vunpack.c.l.b16 %v953
    %v3302 = vunpack.c.h.b16 %v953
    %v3303 = vunpack.c.l.b16 %v954
    %v3304 = vunpack.c.h.b16 %v954
    %v3305 = vunpack.c.l.b16 %v955
    %v3306 = vunpack.c.h.b16 %v955
    %v3307 = vunpack.c.l.b16 %v956
    %v3308 = vunpack.c.h.b16 %v956
    %v3309 = vunpack.c.l.b16 %v957
    %v3310 = vunpack.c.h.b16 %v957
    %v3311 = vunpack.c.l.b16 %v958
    %v3312 = vunpack.c.h.b16 %v958
    %v3313 = vunpack.c.l.b16 %v959
    %v3314 = vunpack.c.h.b16 %v959
    %v3315 = vunpack.c.l.b16 %v960
    %v3316 = vunpack.c.h.b16 %v960
    %v3317 = vunpack.c.l.b16 %v961
    %v3318 = vunpack.c.h.b16 %v961
    %v3319 = vunpack.c.l.b16 %v962
    %v3320 = vunpack.c.h.b16 %v962
    %v3321 = vunpack.c.l.b16 %v963
    %v3322 = vunpack.c.h.b16 %v963
    %v3323 = vunpack.c.l.b16 %v964
    %v3324 = vunpack.c.h.b16 %v964
    %v3325 = vunpack.c.l.b16 %v965
    %v3326 = vunpack.c.h.b16 %v965
    %v3327 = vunpack.c.l.b16 %v966
    %v3328 = vunpack.c.h.b16 %v966
    %v3329 = vunpack.c.l.b16 %v967
    %v3330 = vunpack.c.h.b16 %v967
    %v3331 = vunpack.c.l.b16 %v968
    %v3332 = vunpack.c.h.b16 %v968
    %v3333 = vunpack.c.l.b16 %v969
    %v3334 = vunpack.c.h.b16 %v969
    %v3335 = vunpack.c.l.b16 %v970
    %v3336 = vunpack.c.h.b16 %v970
    %v3337 = vunpack.c.l.b16 %v971
    %v3338 = vunpack.c.h.b16 %v971
    %v3339 = vunpack.c.l.b16 %v972
    %v3340 = vunpack.c.h.b16 %v972
    %v3341 = vunpack.c.l.b16 %v973
    %v3342 = vunpack.c.h.b16 %v973
    %v3343 = vunpack.c.l.b16 %v974
    %v3344 = vunpack.c.h.b16 %v974
    %v3345 = vunpack.c.l.b16 %v975
    %v3346 = vunpack.c.h.b16 %v975
    %v3347 = vunpack.c.l.b16 %v976
    %v3348 = vunpack.c.h.b16 %v976
    %v3349 = vunpack.c.l.b16 %v977
    %v3350 = vunpack.c.h.b16 %v977
    %v3351 = vunpack.c.l.b16 %v978
    %v3352 = vunpack.c.h.b16 %v978
    %v3353 = vpack.c.b16 %v1789, %v1785
    %v3354 = vpack.c.b16 %v1790, %v1786
    %v3355 = vpack.c.b16 %v1791, %v1787
    %v3356 = vpack.c.b16 %v1792, %v1788
    %v3357 = vpack.c.b16 %v1797, %v1793
    %v3358 = vpack.c.b16 %v1798, %v1794
    %v3359 = vpack.c.b16 %v1799, %v1795
    %v3360 = vpack.c.b16 %v1800, %v1796
    %v3361 = vpack.c.b16 %v1805, %v1801
    %v3362 = vpack.c.b16 %v1806, %v1802
    %v3363 = vpack.c.b16 %v1807, %v1803
    %v3364 = vpack.c.b16 %v1808, %v1804
    %v3365 = vpack.c.b16 %v1813, %v1809
    %v3366 = vpack.c.b16 %v1814, %v1810
    %v3367 = vpack.c.b16 %v1815, %v1811
    %v3368 = vpack.c.b16 %v1816, %v1812
    %v3369 = vpack.c.b16 %v1821, %v1817
    %v3370 = vpack.c.b16 %v1822, %v1818
    %v3371 = vpack.c.b16 %v1823, %v1819
    %v3372 = vpack.c.b16 %v1824, %v1820
    %v3373 = vpack.c.b16 %v1829, %v1825
    %v3374 = vpack.c.b16 %v1830, %v1826
    %v3375 = vpack.c.b16 %v1831, %v1827
    %v3376 = vpack.c.b16 %v1832, %v1828
    %v3377 = vpack.c.b16 %v1837, %v1833
    %v3378 = vpack.c.b16 %v1838, %v1834
    %v3379 = vpack.c.b16 %v1839, %v1835
    %v3380 = vpack.c.b16 %v1840, %v1836
    %v3381 = vpack.c.b16 %v1845, %v1841
    %v3382 = vpack.c.b16 %v1846, %v1842
    %v3383 = vpack.c.b16 %v1847, %v1843
    %v3384 = vpack.c.b16 %v1848, %v1844
    %v3385 = vpack.c.b16 %v1853, %v1849
    %v3386 = vpack.c.b16 %v1854, %v1850
    %v3387 = vpack.c.b16 %v1855, %v1851
    %v3388 = vpack.c.b16 %v1856, %v1852
    %v3389 = vpack.c.b16 %v1861, %v1857
    %v3390 = vpack.c.b16 %v1862, %v1858
    %v3391 = vpack.c.b16 %v1863, %v1859
    %v3392 = vpack.c.b16 %v1864, %v1860
    %v3393 = vpack.c.b16 %v1869, %v1865
    %v3394 = vpack.c.b16 %v1870, %v1866
    %v3395 = vpack.c.b16 %v1871, %v1867
    %v3396 = vpack.c.b16 %v1872, %v1868
    %v3397 = vpack.c.b16 %v1877, %v1873
    %v3398 = vpack.c.b16 %v1878, %v1874
    %v3399 = vpack.c.b16 %v1879, %v1875
    %v3400 = vpack.c.b16 %v1880, %v1876
    %v3401 = vpack.c.b16 %v1885, %v1881
    %v3402 = vpack.c.b16 %v1886, %v1882
    %v3403 = vpack.c.b16 %v1887, %v1883
    %v3404 = vpack.c.b16 %v1888, %v1884
    %v3405 = vpack.c.b16 %v1893, %v1889
    %v3406 = vpack.c.b16 %v1894, %v1890
    %v3407 = vpack.c.b16 %v1895, %v1891
    %v3408 = vpack.c.b16 %v1896, %v1892
    %v3409 = vpack.c.b16 %v1901, %v1897
    %v3410 = vpack.c.b16 %v1902, %v1898
    %v3411 = vpack.c.b16 %v1903, %v1899
    %v3412 = vpack.c.b16 %v1904, %v1900
    %v3413 = vpack.c.b16 %v1909, %v1905
    %v3414 = vpack.c.b16 %v1910, %v1906
    %v3415 = vpack.c.b16 %v1911, %v1907
    %v3416 = vpack.c.b16 %v1912, %v1908
    %v3417 = vpack.c.b16 %v1917, %v1913
    %v3418 = vpack.c.b16 %v1918, %v1914
    %v3419 = vpack.c.b16 %v1919, %v1915
    %v3420 = vpack.c.b16 %v1920, %v1916
    %v3421 = vpack.c.b16 %v1925, %v1921
    %v3422 = vpack.c.b16 %v1926, %v1922
    %v3423 = vpack.c.b16 %v1927, %v1923
    %v3424 = vpack.c.b16 %v1928, %v1924
    %v3425 = vpack.c.b16 %v1933, %v1929
    %v3426 = vpack.c.b16 %v1934, %v1930
    %v3427 = vpack.c.b16 %v1935, %v1931
    %v3428 = vpack.c.b16 %v1936, %v1932
    %v3429 = vpack.c.b16 %v1941, %v1937
    %v3430 = vpack.c.b16 %v1942, %v1938
    %v3431 = vpack.c.b16 %v1943, %v1939
    %v3432 = vpack.c.b16 %v1944, %v1940
    %v3433 = vpack.c.b16 %v1949, %v1945
    %v3434 = vpack.c.b16 %v1950, %v1946
    %v3435 = vpack.c.b16 %v1951, %v1947
    %v3436 = vpack.c.b16 %v1952, %v1948
    %v3437 = vpack.c.b16 %v1957, %v1953
    %v3438 = vpack.c.b16 %v1958, %v1954
    %v3439 = vpack.c.b16 %v1959, %v1955
    %v3440 = vpack.c.b16 %v1960, %v1956
    %v3441 = vpack.c.b16 %v1965, %v1961
    %v3442 = vpack.c.b16 %v1966, %v1962
    %v3443 = vpack.c.b16 %v1967, %v1963
    %v3444 = vpack.c.b16 %v1968, %v1964
    %v3445 = vpack.c.b16 %v1973, %v1969
    %v3446 = vpack.c.b16 %v1974, %v1970
    %v3447 = vpack.c.b16 %v1975, %v1971
    %v3448 = vpack.c.b16 %v1976, %v1972
    %v3449 = vpack.c.b16 %v1981, %v1977
    %v3450 = vpack.c.b16 %v1982, %v1978
    %v3451 = vpack.c.b16 %v1983, %v1979
    %v3452 = vpack.c.b16 %v1984, %v1980
    %v3453 = vpack.c.b16 %v1989, %v1985
    %v3454 = vpack.c.b16 %v1990, %v1986
    %v3455 = vpack.c.b16 %v1991, %v1987
    %v3456 = vpack.c.b16 %v1992, %v1988
    %v3457 = vpack.c.b16 %v1997, %v1993
    %v3458 = vpack.c.b16 %v1998, %v1994
    %v3459 = vpack.c.b16 %v1999, %v1995
    %v3460 = vpack.c.b16 %v2000, %v1996
    %v3461 = vpack.c.b16 %v2005, %v2001
    %v3462 = vpack.c.b16 %v2006, %v2002
    %v3463 = vpack.c.b16 %v2007, %v2003
    %v3464 = vpack.c.b16 %v2008, %v2004
    %v3465 = vpack.c.b16 %v2013, %v2009
    %v3466 = vpack.c.b16 %v2014, %v2010
    %v3467 = vpack.c.b16 %v2015, %v2011
    %v3468 = vpack.c.b16 %v2016, %v2012
    %v3469 = vpack.c.b16 %v2021, %v2017
    %v3470 = vpack.c.b16 %v2022, %v2018
    %v3471 = vpack.c.b16 %v2023, %v2019
    %v3472 = vpack.c.b16 %v2024, %v2020
    %v3473 = vpack.c.b16 %v2029, %v2025
    %v3474 = vpack.c.b16 %v2030, %v2026
    %v3475 = vpack.c.b16 %v2031, %v2027
    %v3476 = vpack.c.b16 %v2032, %v2028
    %v3477 = vpack.c.b16 %v2037, %v2033
    %v3478 = vpack.c.b16 %v2038, %v2034
    %v3479 = vpack.c.b16 %v2039, %v2035
    %v3480 = vpack.c.b16 %v2040, %v2036
    %v3481 = vpack.c.b16 %v2045, %v2041
    %v3482 = vpack.c.b16 %v2046, %v2042
    %v3483 = vpack.c.b16 %v2047, %v2043
    %v3484 = vpack.c.b16 %v2048, %v2044
    %v3485 = vpack.c.b16 %v2053, %v2049
    %v3486 = vpack.c.b16 %v2054, %v2050
    %v3487 = vpack.c.b16 %v2055, %v2051
    %v3488 = vpack.c.b16 %v2056, %v2052
    %v3489 = vpack.c.b16 %v2061, %v2057
    %v3490 = vpack.c.b16 %v2062, %v2058
    %v3491 = vpack.c.b16 %v2063, %v2059
    %v3492 = vpack.c.b16 %v2064, %v2060
    %v3493 = vpack.c.b16 %v2069, %v2065
    %v3494 = vpack.c.b16 %v2070, %v2066
    %v3495 = vpack.c.b16 %v2071, %v2067
    %v3496 = vpack.c.b16 %v2072, %v2068
    %v3497 = vpack.c.b16 %v2077, %v2073
    %v3498 = vpack.c.b16 %v2078, %v2074
    %v3499 = vpack.c.b16 %v2079, %v2075
    %v3500 = vpack.c.b16 %v2080, %v2076
    %v3501 = vpack.c.b16 %v2085, %v2081
    %v3502 = vpack.c.b16 %v2086, %v2082
    %v3503 = vpack.c.b16 %v2087, %v2083
    %v3504 = vpack.c.b16 %v2088, %v2084
    %v3505 = vpack.c.b16 %v2093, %v2089
    %v3506 = vpack.c.b16 %v2094, %v2090
    %v3507 = vpack.c.b16 %v2095, %v2091
    %v3508 = vpack.c.b16 %v2096, %v2092
    %v3509 = vpack.c.b16 %v2101, %v2097
    %v3510 = vpack.c.b16 %v2102, %v2098
    %v3511 = vpack.c.b16 %v2103, %v2099
    %v3512 = vpack.c.b16 %v2104, %v2100
    %v3513 = vpack.c.b16 %v2109, %v2105
    %v3514 = vpack.c.b16 %v2110, %v2106
    %v3515 = vpack.c.b16 %v2111, %v2107
    %v3516 = vpack.c.b16 %v2112, %v2108
    %v3517 = vpack.c.b16 %v2117, %v2113
    %v3518 = vpack.c.b16 %v2118, %v2114
    %v3519 = vpack.c.b16 %v2119, %v2115
    %v3520 = vpack.c.b16 %v2120, %v2116
    %v3521 = vpack.c.b16 %v2125, %v2121
    %v3522 = vpack.c.b16 %v2126, %v2122
    %v3523 = vpack.c.b16 %v2127, %v2123
    %v3524 = vpack.c.b16 %v2128, %v2124
    %v3525 = vpack.c.b16 %v2133, %v2129
    %v3526 = vpack.c.b16 %v2134, %v2130
    %v3527 = vpack.c.b16 %v2135, %v2131
    %v3528 = vpack.c.b16 %v2136, %v2132
    %v3529 = vpack.c.b16 %v2141, %v2137
    %v3530 = vpack.c.b16 %v2142, %v2138
    %v3531 = vpack.c.b16 %v2143, %v2139
    %v3532 = vpack.c.b16 %v2144, %v2140
    %v3533 = vpack.c.b16 %v2149, %v2145
    %v3534 = vpack.c.b16 %v2150, %v2146
    %v3535 = vpack.c.b16 %v2151, %v2147
    %v3536 = vpack.c.b16 %v2152, %v2148
    %v3537 = vpack.c.b16 %v2157, %v2153
    %v3538 = vpack.c.b16 %v2158, %v2154
    %v3539 = vpack.c.b16 %v2159, %v2155
    %v3540 = vpack.c.b16 %v2160, %v2156
    %v3541 = vpack.c.b16 %v2165, %v2161
    %v3542 = vpack.c.b16 %v2166, %v2162
    %v3543 = vpack.c.b16 %v2167, %v2163
    %v3544 = vpack.c.b16 %v2168, %v2164
    %v3545 = vpack.c.b16 %v2173, %v2169
    %v3546 = vpack.c.b16 %v2174, %v2170
    %v3547 = vpack.c.b16 %v2175, %v2171
    %v3548 = vpack.c.b16 %v2176, %v2172
    %v3549 = vpack.c.b16 %v2181, %v2177
    %v3550 = vpack.c.b16 %v2182, %v2178
    %v3551 = vpack.c.b16 %v2183, %v2179
    %v3552 = vpack.c.b16 %v2184, %v2180
    %v3553 = vpack.c.b16 %v2189, %v2185
    %v3554 = vpack.c.b16 %v2190, %v2186
    %v3555 = vpack.c.b16 %v2191, %v2187
    %v3556 = vpack.c.b16 %v2192, %v2188
    %v3557 = vpack.c.b16 %v2197, %v2193
    %v3558 = vpack.c.b16 %v2198, %v2194
    %v3559 = vpack.c.b16 %v2199, %v2195
    %v3560 = vpack.c.b16 %v2200, %v2196
    %v3561 = vpack.c.b16 %v2205, %v2201
    %v3562 = vpack.c.b16 %v2206, %v2202
    %v3563 = vpack.c.b16 %v2207, %v2203
    %v3564 = vpack.c.b16 %v2208, %v2204
    %v3565 = vpack.c.b16 %v2213, %v2209
    %v3566 = vpack.c.b16 %v2214, %v2210
    %v3567 = vpack.c.b16 %v2215, %v2211
    %v3568 = vpack.c.b16 %v2216, %v2212
    %v3569 = vpack.c.b16 %v2221, %v2217
    %v3570 = vpack.c.b16 %v2222, %v2218
    %v3571 = vpack.c.b16 %v2223, %v2219
    %v3572 = vpack.c.b16 %v2224, %v2220
    %v3573 = vpack.c.b16 %v2229, %v2225
    %v3574 = vpack.c.b16 %v2230, %v2226
    %v3575 = vpack.c.b16 %v2231, %v2227
    %v3576 = vpack.c.b16 %v2232, %v2228
    %v3577 = vpack.c.b16 %v2237, %v2233
    %v3578 = vpack.c.b16 %v2238, %v2234
    %v3579 = vpack.c.b16 %v2239, %v2235
    %v3580 = vpack.c.b16 %v2240, %v2236
    %v3581 = vpack.c.b16 %v2245, %v2241
    %v3582 = vpack.c.b16 %v2246, %v2242
    %v3583 = vpack.c.b16 %v2247, %v2243
    %v3584 = vpack.c.b16 %v2248, %v2244
    %v3585 = vpack.c.b16 %v2253, %v2249
    %v3586 = vpack.c.b16 %v2254, %v2250
    %v3587 = vpack.c.b16 %v2255, %v2251
    %v3588 = vpack.c.b16 %v2256, %v2252
    %v3589 = vpack.c.b16 %v2261, %v2257
    %v3590 = vpack.c.b16 %v2262, %v2258
    %v3591 = vpack.c.b16 %v2263, %v2259
    %v3592 = vpack.c.b16 %v2264, %v2260
    %v3593 = vpack.c.b16 %v2269, %v2265
    %v3594 = vpack.c.b16 %v2270, %v2266
    %v3595 = vpack.c.b16 %v2271, %v2267
    %v3596 = vpack.c.b16 %v2272, %v2268
    %v3597 = vpack.c.b16 %v2277, %v2273
    %v3598 = vpack.c.b16 %v2278, %v2274
    %v3599 = vpack.c.b16 %v2279, %v2275
    %v3600 = vpack.c.b16 %v2280, %v2276
    %v3601 = vpack.c.b16 %v2285, %v2281
    %v3602 = vpack.c.b16 %v2286, %v2282
    %v3603 = vpack.c.b16 %v2287, %v2283
    %v3604 = vpack.c.b16 %v2288, %v2284
    %v3605 = vpack.c.b16 %v2293, %v2289
    %v3606 = vpack.c.b16 %v2294, %v2290
    %v3607 = vpack.c.b16 %v2295, %v2291
    %v3608 = vpack.c.b16 %v2296, %v2292
    %v3609 = vpack.c.b16 %v2301, %v2297
    %v3610 = vpack.c.b16 %v2302, %v2298
    %v3611 = vpack.c.b16 %v2303, %v2299
    %v3612 = vpack.c.b16 %v2304, %v2300
    %v3613 = vpack.c.b16 %v2309, %v2305
    %v3614 = vpack.c.b16 %v2310, %v2306
    %v3615 = vpack.c.b16 %v2311, %v2307
    %v3616 = vpack.c.b16 %v2312, %v2308
    %v3617 = vpack.c.b16 %v2317, %v2313
    %v3618 = vpack.c.b16 %v2318, %v2314
    %v3619 = vpack.c.b16 %v2319, %v2315
    %v3620 = vpack.c.b16 %v2320, %v2316
    %v3621 = vpack.c.b16 %v2325, %v2321
    %v3622 = vpack.c.b16 %v2326, %v2322
    %v3623 = vpack.c.b16 %v2327, %v2323
    %v3624 = vpack.c.b16 %v2328, %v2324
    %v3625 = vpack.c.b16 %v2333, %v2329
    %v3626 = vpack.c.b16 %v2334, %v2330
    %v3627 = vpack.c.b16 %v2335, %v2331
    %v3628 = vpack.c.b16 %v2336, %v2332
    %v3629 = vpack.c.b16 %v2341, %v2337
    %v3630 = vpack.c.b16 %v2342, %v2338
    %v3631 = vpack.c.b16 %v2343, %v2339
    %v3632 = vpack.c.b16 %v2344, %v2340
    %v3633 = vpack.c.b16 %v2349, %v2345
    %v3634 = vpack.c.b16 %v2350, %v2346
    %v3635 = vpack.c.b16 %v2351, %v2347
    %v3636 = vpack.c.b16 %v2352, %v2348
    %v3637 = vpack.c.b16 %v2357, %v2353
    %v3638 = vpack.c.b16 %v2358, %v2354
    %v3639 = vpack.c.b16 %v2359, %v2355
    %v3640 = vpack.c.b16 %v2360, %v2356
    %v3641 = vpack.c.b16 %v2365, %v2361
    %v3642 = vpack.c.b16 %v2366, %v2362
    %v3643 = vpack.c.b16 %v2367, %v2363
    %v3644 = vpack.c.b16 %v2368, %v2364
    %v3645 = vpack.c.b16 %v2373, %v2369
    %v3646 = vpack.c.b16 %v2374, %v2370
    %v3647 = vpack.c.b16 %v2375, %v2371
    %v3648 = vpack.c.b16 %v2376, %v2372
    %v3649 = vpack.c.b16 %v2381, %v2377
    %v3650 = vpack.c.b16 %v2382, %v2378
    %v3651 = vpack.c.b16 %v2383, %v2379
    %v3652 = vpack.c.b16 %v2384, %v2380
    %v3653 = vpack.c.b16 %v2389, %v2385
    %v3654 = vpack.c.b16 %v2390, %v2386
    %v3655 = vpack.c.b16 %v2391, %v2387
    %v3656 = vpack.c.b16 %v2392, %v2388
    %v3657 = vpack.c.b16 %v2397, %v2393
    %v3658 = vpack.c.b16 %v2398, %v2394
    %v3659 = vpack.c.b16 %v2399, %v2395
    %v3660 = vpack.c.b16 %v2400, %v2396
    %v3661 = vpack.c.b16 %v2405, %v2401
    %v3662 = vpack.c.b16 %v2406, %v2402
    %v3663 = vpack.c.b16 %v2407, %v2403
    %v3664 = vpack.c.b16 %v2408, %v2404
    %v3665 = vpack.c.b16 %v2413, %v2409
    %v3666 = vpack.c.b16 %v2414, %v2410
    %v3667 = vpack.c.b16 %v2415, %v2411
    %v3668 = vpack.c.b16 %v2416, %v2412
    %v3669 = vpack.c.b16 %v2421, %v2417
    %v3670 = vpack.c.b16 %v2422, %v2418
    %v3671 = vpack.c.b16 %v2423, %v2419
    %v3672 = vpack.c.b16 %v2424, %v2420
    %v3673 = vpack.c.b16 %v2429, %v2425
    %v3674 = vpack.c.b16 %v2430, %v2426
    %v3675 = vpack.c.b16 %v2431, %v2427
    %v3676 = vpack.c.b16 %v2432, %v2428
    %v3677 = vpack.c.b16 %v2437, %v2433
    %v3678 = vpack.c.b16 %v2438, %v2434
    %v3679 = vpack.c.b16 %v2439, %v2435
    %v3680 = vpack.c.b16 %v2440, %v2436
    %v3681 = vpack.c.b16 %v2445, %v2441
    %v3682 = vpack.c.b16 %v2446, %v2442
    %v3683 = vpack.c.b16 %v2447, %v2443
    %v3684 = vpack.c.b16 %v2448, %v2444
    %v3685 = vpack.c.b16 %v2453, %v2449
    %v3686 = vpack.c.b16 %v2454, %v2450
    %v3687 = vpack.c.b16 %v2455, %v2451
    %v3688 = vpack.c.b16 %v2456, %v2452
    %v3689 = vpack.c.b16 %v2461, %v2457
    %v3690 = vpack.c.b16 %v2462, %v2458
    %v3691 = vpack.c.b16 %v2463, %v2459
    %v3692 = vpack.c.b16 %v2464, %v2460
    %v3693 = vpack.c.b16 %v2469, %v2465
    %v3694 = vpack.c.b16 %v2470, %v2466
    %v3695 = vpack.c.b16 %v2471, %v2467
    %v3696 = vpack.c.b16 %v2472, %v2468
    %v3697 = vpack.c.b16 %v2477, %v2473
    %v3698 = vpack.c.b16 %v2478, %v2474
    %v3699 = vpack.c.b16 %v2479, %v2475
    %v3700 = vpack.c.b16 %v2480, %v2476
    %v3701 = vpack.c.b16 %v2485, %v2481
    %v3702 = vpack.c.b16 %v2486, %v2482
    %v3703 = vpack.c.b16 %v2487, %v2483
    %v3704 = vpack.c.b16 %v2488, %v2484
    %v3705 = vpack.c.b16 %v2493, %v2489
    %v3706 = vpack.c.b16 %v2494, %v2490
    %v3707 = vpack.c.b16 %v2495, %v2491
    %v3708 = vpack.c.b16 %v2496, %v2492
    %v3709 = vpack.c.b16 %v2501, %v2497
    %v3710 = vpack.c.b16 %v2502, %v2498
    %v3711 = vpack.c.b16 %v2503, %v2499
    %v3712 = vpack.c.b16 %v2504, %v2500
    %v3713 = vpack.c.b16 %v2509, %v2505
    %v3714 = vpack.c.b16 %v2510, %v2506
    %v3715 = vpack.c.b16 %v2511, %v2507
    %v3716 = vpack.c.b16 %v2512, %v2508
    %v3717 = vpack.c.b16 %v2517, %v2513
    %v3718 = vpack.c.b16 %v2518, %v2514
    %v3719 = vpack.c.b16 %v2519, %v2515
    %v3720 = vpack.c.b16 %v2520, %v2516
    %v3721 = vpack.c.b16 %v2525, %v2521
    %v3722 = vpack.c.b16 %v2526, %v2522
    %v3723 = vpack.c.b16 %v2527, %v2523
    %v3724 = vpack.c.b16 %v2528, %v2524
    %v3725 = vpack.c.b16 %v2533, %v2529
    %v3726 = vpack.c.b16 %v2534, %v2530
    %v3727 = vpack.c.b16 %v2535, %v2531
    %v3728 = vpack.c.b16 %v2536, %v2532
    %v3729 = vpack.c.b16 %v2541, %v2537
    %v3730 = vpack.c.b16 %v2542, %v2538
    %v3731 = vpack.c.b16 %v2543, %v2539
    %v3732 = vpack.c.b16 %v2544, %v2540
    %v3733 = vpack.c.b16 %v2549, %v2545
    %v3734 = vpack.c.b16 %v2550, %v2546
    %v3735 = vpack.c.b16 %v2551, %v2547
    %v3736 = vpack.c.b16 %v2552, %v2548
    %v3737 = vpack.c.b16 %v2557, %v2553
    %v3738 = vpack.c.b16 %v2558, %v2554
    %v3739 = vpack.c.b16 %v2559, %v2555
    %v3740 = vpack.c.b16 %v2560, %v2556
    %v3741 = vpack.c.b16 %v2565, %v2561
    %v3742 = vpack.c.b16 %v2566, %v2562
    %v3743 = vpack.c.b16 %v2567, %v2563
    %v3744 = vpack.c.b16 %v2568, %v2564
    %v3745 = vpack.c.b16 %v2573, %v2569
    %v3746 = vpack.c.b16 %v2574, %v2570
    %v3747 = vpack.c.b16 %v2575, %v2571
    %v3748 = vpack.c.b16 %v2576, %v2572
    %v3749 = vpack.c.b16 %v2581, %v2577
    %v3750 = vpack.c.b16 %v2582, %v2578
    %v3751 = vpack.c.b16 %v2583, %v2579
    %v3752 = vpack.c.b16 %v2584, %v2580
    %v3753 = vpack.c.b16 %v2589, %v2585
    %v3754 = vpack.c.b16 %v2590, %v2586
    %v3755 = vpack.c.b16 %v2591, %v2587
    %v3756 = vpack.c.b16 %v2592, %v2588
    %v3757 = vpack.c.b16 %v2597, %v2593
    %v3758 = vpack.c.b16 %v2598, %v2594
    %v3759 = vpack.c.b16 %v2599, %v2595
    %v3760 = vpack.c.b16 %v2600, %v2596
    %v3761 = vpack.c.b16 %v2605, %v2601
    %v3762 = vpack.c.b16 %v2606, %v2602
    %v3763 = vpack.c.b16 %v2607, %v2603
    %v3764 = vpack.c.b16 %v2608, %v2604
    %v3765 = vpack.c.b16 %v2613, %v2609
    %v3766 = vpack.c.b16 %v2614, %v2610
    %v3767 = vpack.c.b16 %v2615, %v2611
    %v3768 = vpack.c.b16 %v2616, %v2612
    %v3769 = vpack.c.b16 %v2621, %v2617
    %v3770 = vpack.c.b16 %v2622, %v2618
    %v3771 = vpack.c.b16 %v2623, %v2619
    %v3772 = vpack.c.b16 %v2624, %v2620
    %v3773 = vpack.c.b16 %v2629, %v2625
    %v3774 = vpack.c.b16 %v2630, %v2626
    %v3775 = vpack.c.b16 %v2631, %v2627
    %v3776 = vpack.c.b16 %v2632, %v2628
    %v3777 = vpack.c.b16 %v2637, %v2633
    %v3778 = vpack.c.b16 %v2638, %v2634
    %v3779 = vpack.c.b16 %v2639, %v2635
    %v3780 = vpack.c.b16 %v2640, %v2636
    %v3781 = vpack.c.b16 %v2645, %v2641
    %v3782 = vpack.c.b16 %v2646, %v2642
    %v3783 = vpack.c.b16 %v2647, %v2643
    %v3784 = vpack.c.b16 %v2648, %v2644
    %v3785 = vpack.c.b16 %v2653, %v2649
    %v3786 = vpack.c.b16 %v2654, %v2650
    %v3787 = vpack.c.b16 %v2655, %v2651
    %v3788 = vpack.c.b16 %v2656, %v2652
    %v3789 = vpack.c.b16 %v2661, %v2657
    %v3790 = vpack.c.b16 %v2662, %v2658
    %v3791 = vpack.c.b16 %v2663, %v2659
    %v3792 = vpack.c.b16 %v2664, %v2660
    %v3793 = vpack.c.b16 %v2669, %v2665
    %v3794 = vpack.c.b16 %v2670, %v2666
    %v3795 = vpack.c.b16 %v2671, %v2667
    %v3796 = vpack.c.b16 %v2672, %v2668
    %v3797 = vpack.c.b16 %v2677, %v2673
    %v3798 = vpack.c.b16 %v2678, %v2674
    %v3799 = vpack.c.b16 %v2679, %v2675
    %v3800 = vpack.c.b16 %v2680, %v2676
    %v3801 = vpack.c.b16 %v2685, %v2681
    %v3802 = vpack.c.b16 %v2686, %v2682
    %v3803 = vpack.c.b16 %v2687, %v2683
    %v3804 = vpack.c.b16 %v2688, %v2684
    %v3805 = vpack.c.b16 %v2693, %v2689
    %v3806 = vpack.c.b16 %v2694, %v2690
    %v3807 = vpack.c.b16 %v2695, %v2691
    %v3808 = vpack.c.b16 %v2696, %v2692
    %v3809 = vpack.c.b16 %v2701, %v2697
    %v3810 = vpack.c.b16 %v2702, %v2698
    %v3811 = vpack.c.b16 %v2703, %v2699
    %v3812 = vpack.c.b16 %v2704, %v2700
    %v3813 = vpack.c.b16 %v2709, %v2705
    %v3814 = vpack.c.b16 %v2710, %v2706
    %v3815 = vpack.c.b16 %v2711, %v2707
    %v3816 = vpack.c.b16 %v2712, %v2708
    %v3817 = vpack.c.b16 %v2717, %v2713
    %v3818 = vpack.c.b16 %v2718, %v2714
    %v3819 = vpack.c.b16 %v2719, %v2715
    %v3820 = vpack.c.b16 %v2720, %v2716
    %v3821 = vpack.c.b16 %v2725, %v2721
    %v3822 = vpack.c.b16 %v2726, %v2722
    %v3823 = vpack.c.b16 %v2727, %v2723
    %v3824 = vpack.c.b16 %v2728, %v2724
    %v3825 = vpack.c.b16 %v2733, %v2729
    %v3826 = vpack.c.b16 %v2734, %v2730
    %v3827 = vpack.c.b16 %v2735, %v2731
    %v3828 = vpack.c.b16 %v2736, %v2732
    %v3829 = vpack.c.b16 %v2741, %v2737
    %v3830 = vpack.c.b16 %v2742, %v2738
    %v3831 = vpack.c.b16 %v2743, %v2739
    %v3832 = vpack.c.b16 %v2744, %v2740
    %v3833 = vpack.c.b16 %v2749, %v2745
    %v3834 = vpack.c.b16 %v2750, %v2746
    %v3835 = vpack.c.b16 %v2751, %v2747
    %v3836 = vpack.c.b16 %v2752, %v2748
    %v3837 = vpack.c.b16 %v2757, %v2753
    %v3838 = vpack.c.b16 %v2758, %v2754
    %v3839 = vpack.c.b16 %v2759, %v2755
    %v3840 = vpack.c.b16 %v2760, %v2756
    %v3841 = vpack.c.b16 %v2765, %v2761
    %v3842 = vpack.c.b16 %v2766, %v2762
    %v3843 = vpack.c.b16 %v2767, %v2763
    %v3844 = vpack.c.b16 %v2768, %v2764
    %v3845 = vpack.c.b16 %v2773, %v2769
    %v3846 = vpack.c.b16 %v2774, %v2770
    %v3847 = vpack.c.b16 %v2775, %v2771
    %v3848 = vpack.c.b16 %v2776, %v2772
    %v3849 = vpack.c.b16 %v2781, %v2777
    %v3850 = vpack.c.b16 %v2782, %v2778
    %v3851 = vpack.c.b16 %v2783, %v2779
    %v3852 = vpack.c.b16 %v2784, %v2780
    %v3853 = vpack.c.b16 %v2789, %v2785
    %v3854 = vpack.c.b16 %v2790, %v2786
    %v3855 = vpack.c.b16 %v2791, %v2787
    %v3856 = vpack.c.b16 %v2792, %v2788
    %v3857 = vpack.c.b16 %v2797, %v2793
    %v3858 = vpack.c.b16 %v2798, %v2794
    %v3859 = vpack.c.b16 %v2799, %v2795
    %v3860 = vpack.c.b16 %v2800, %v2796
    %v3861 = vpack.c.b16 %v2805, %v2801
    %v3862 = vpack.c.b16 %v2806, %v2802
    %v3863 = vpack.c.b16 %v2807, %v2803
    %v3864 = vpack.c.b16 %v2808, %v2804
    %v3865 = vpack.c.b16 %v2813, %v2809
    %v3866 = vpack.c.b16 %v2814, %v2810
    %v3867 = vpack.c.b16 %v2815, %v2811
    %v3868 = vpack.c.b16 %v2816, %v2812
    %v3869 = vpack.c.b16 %v2821, %v2817
    %v3870 = vpack.c.b16 %v2822, %v2818
    %v3871 = vpack.c.b16 %v2823, %v2819
    %v3872 = vpack.c.b16 %v2824, %v2820
    %v3873 = vpack.c.b16 %v2829, %v2825
    %v3874 = vpack.c.b16 %v2830, %v2826
    %v3875 = vpack.c.b16 %v2831, %v2827
    %v3876 = vpack.c.b16 %v2832, %v2828
    %v3877 = vpack.c.b16 %v2837, %v2833
    %v3878 = vpack.c.b16 %v2838, %v2834
    %v3879 = vpack.c.b16 %v2839, %v2835
    %v3880 = vpack.c.b16 %v2840, %v2836
    %v3881 = vpack.c.b16 %v2845, %v2841
    %v3882 = vpack.c.b16 %v2846, %v2842
    %v3883 = vpack.c.b16 %v2847, %v2843
    %v3884 = vpack.c.b16 %v2848, %v2844
    %v3885 = vpack.c.b16 %v2853, %v2849
    %v3886 = vpack.c.b16 %v2854, %v2850
    %v3887 = vpack.c.b16 %v2855, %v2851
    %v3888 = vpack.c.b16 %v2856, %v2852
    %v3889 = vpack.c.b16 %v2861, %v2857
    %v3890 = vpack.c.b16 %v2862, %v2858
    %v3891 = vpack.c.b16 %v2863, %v2859
    %v3892 = vpack.c.b16 %v2864, %v2860
    %v3893 = vpack.c.b16 %v2869, %v2865
    %v3894 = vpack.c.b16 %v2870, %v2866
    %v3895 = vpack.c.b16 %v2871, %v2867
    %v3896 = vpack.c.b16 %v2872, %v2868
    %v3897 = vpack.c.b16 %v2877, %v2873
    %v3898 = vpack.c.b16 %v2878, %v2874
    %v3899 = vpack.c.b16 %v2879, %v2875
    %v3900 = vpack.c.b16 %v2880, %v2876
    %v3901 = vpack.c.b16 %v2885, %v2881
    %v3902 = vpack.c.b16 %v2886, %v2882
    %v3903 = vpack.c.b16 %v2887, %v2883
    %v3904 = vpack.c.b16 %v2888, %v2884
    %v3905 = vpack.c.b16 %v2893, %v2889
    %v3906 = vpack.c.b16 %v2894, %v2890
    %v3907 = vpack.c.b16 %v2895, %v2891
    %v3908 = vpack.c.b16 %v2896, %v2892
    %v3909 = vpack.c.b16 %v2901, %v2897
    %v3910 = vpack.c.b16 %v2902, %v2898
    %v3911 = vpack.c.b16 %v2903, %v2899
    %v3912 = vpack.c.b16 %v2904, %v2900
    %v3913 = vpack.c.b16 %v2909, %v2905
    %v3914 = vpack.c.b16 %v2910, %v2906
    %v3915 = vpack.c.b16 %v2911, %v2907
    %v3916 = vpack.c.b16 %v2912, %v2908
    %v3917 = vpack.c.b16 %v2917, %v2913
    %v3918 = vpack.c.b16 %v2918, %v2914
    %v3919 = vpack.c.b16 %v2919, %v2915
    %v3920 = vpack.c.b16 %v2920, %v2916
    %v3921 = vpack.c.b16 %v2925, %v2921
    %v3922 = vpack.c.b16 %v2926, %v2922
    %v3923 = vpack.c.b16 %v2927, %v2923
    %v3924 = vpack.c.b16 %v2928, %v2924
    %v3925 = vpack.c.b16 %v2933, %v2929
    %v3926 = vpack.c.b16 %v2934, %v2930
    %v3927 = vpack.c.b16 %v2935, %v2931
    %v3928 = vpack.c.b16 %v2936, %v2932
    %v3929 = vpack.c.b16 %v2941, %v2937
    %v3930 = vpack.c.b16 %v2942, %v2938
    %v3931 = vpack.c.b16 %v2943, %v2939
    %v3932 = vpack.c.b16 %v2944, %v2940
    %v3933 = vpack.c.b16 %v2949, %v2945
    %v3934 = vpack.c.b16 %v2950, %v2946
    %v3935 = vpack.c.b16 %v2951, %v2947
    %v3936 = vpack.c.b16 %v2952, %v2948
    %v3937 = vpack.c.b16 %v2957, %v2953
    %v3938 = vpack.c.b16 %v2958, %v2954
    %v3939 = vpack.c.b16 %v2959, %v2955
    %v3940 = vpack.c.b16 %v2960, %v2956
    %v3941 = vpack.c.b16 %v2965, %v2961
    %v3942 = vpack.c.b16 %v2966, %v2962
    %v3943 = vpack.c.b16 %v2967, %v2963
    %v3944 = vpack.c.b16 %v2968, %v2964
    %v3945 = vpack.c.b16 %v2973, %v2969
    %v3946 = vpack.c.b16 %v2974, %v2970
    %v3947 = vpack.c.b16 %v2975, %v2971
    %v3948 = vpack.c.b16 %v2976, %v2972
    %v3949 = vpack.c.b16 %v2981, %v2977
    %v3950 = vpack.c.b16 %v2982, %v2978
    %v3951 = vpack.c.b16 %v2983, %v2979
    %v3952 = vpack.c.b16 %v2984, %v2980
    %v3953 = vpack.c.b16 %v2989, %v2985
    %v3954 = vpack.c.b16 %v2990, %v2986
    %v3955 = vpack.c.b16 %v2991, %v2987
    %v3956 = vpack.c.b16 %v2992, %v2988
    %v3957 = vpack.c.b16 %v2997, %v2993
    %v3958 = vpack.c.b16 %v2998, %v2994
    %v3959 = vpack.c.b16 %v2999, %v2995
    %v3960 = vpack.c.b16 %v3000, %v2996
    %v3961 = vpack.c.b16 %v3005, %v3001
    %v3962 = vpack.c.b16 %v3006, %v3002
    %v3963 = vpack.c.b16 %v3007, %v3003
    %v3964 = vpack.c.b16 %v3008, %v3004
    %v3965 = vpack.c.b16 %v3013, %v3009
    %v3966 = vpack.c.b16 %v3014, %v3010
    %v3967 = vpack.c.b16 %v3015, %v3011
    %v3968 = vpack.c.b16 %v3016, %v3012
    %v3969 = vpack.c.b16 %v3021, %v3017
    %v3970 = vpack.c.b16 %v3022, %v3018
    %v3971 = vpack.c.b16 %v3023, %v3019
    %v3972 = vpack.c.b16 %v3024, %v3020
    %v3973 = vpack.c.b16 %v3029, %v3025
    %v3974 = vpack.c.b16 %v3030, %v3026
    %v3975 = vpack.c.b16 %v3031, %v3027
    %v3976 = vpack.c.b16 %v3032, %v3028
    %v3977 = vpack.c.b16 %v3037, %v3033
    %v3978 = vpack.c.b16 %v3038, %v3034
    %v3979 = vpack.c.b16 %v3039, %v3035
    %v3980 = vpack.c.b16 %v3040, %v3036
    %v3981 = vpack.c.b16 %v3045, %v3041
    %v3982 = vpack.c.b16 %v3046, %v3042
    %v3983 = vpack.c.b16 %v3047, %v3043
    %v3984 = vpack.c.b16 %v3048, %v3044
    %v3985 = vpack.c.b16 %v3053, %v3049
    %v3986 = vpack.c.b16 %v3054, %v3050
    %v3987 = vpack.c.b16 %v3055, %v3051
    %v3988 = vpack.c.b16 %v3056, %v3052
    %v3989 = vpack.c.b16 %v3061, %v3057
    %v3990 = vpack.c.b16 %v3062, %v3058
    %v3991 = vpack.c.b16 %v3063, %v3059
    %v3992 = vpack.c.b16 %v3064, %v3060
    %v3993 = vpack.c.b16 %v3069, %v3065
    %v3994 = vpack.c.b16 %v3070, %v3066
    %v3995 = vpack.c.b16 %v3071, %v3067
    %v3996 = vpack.c.b16 %v3072, %v3068
    %v3997 = vpack.c.b16 %v3077, %v3073
    %v3998 = vpack.c.b16 %v3078, %v3074
    %v3999 = vpack.c.b16 %v3079, %v3075
    %v4000 = vpack.c.b16 %v3080, %v3076
    %v4001 = vpack.c.b16 %v3085, %v3081
    %v4002 = vpack.c.b16 %v3086, %v3082
    %v4003 = vpack.c.b16 %v3087, %v3083
    %v4004 = vpack.c.b16 %v3088, %v3084
    %v4005 = vpack.c.b16 %v3093, %v3089
    %v4006 = vpack.c.b16 %v3094, %v3090
    %v4007 = vpack.c.b16 %v3095, %v3091
    %v4008 = vpack.c.b16 %v3096, %v3092
    %v4009 = vpack.c.b16 %v3101, %v3097
    %v4010 = vpack.c.b16 %v3102, %v3098
    %v4011 = vpack.c.b16 %v3103, %v3099
    %v4012 = vpack.c.b16 %v3104, %v3100
    %v4013 = vpack.c.b16 %v3109, %v3105
    %v4014 = vpack.c.b16 %v3110, %v3106
    %v4015 = vpack.c.b16 %v3111, %v3107
    %v4016 = vpack.c.b16 %v3112, %v3108
    %v4017 = vpack.c.b16 %v3117, %v3113
    %v4018 = vpack.c.b16 %v3118, %v3114
    %v4019 = vpack.c.b16 %v3119, %v3115
    %v4020 = vpack.c.b16 %v3120, %v3116
    %v4021 = vpack.c.b16 %v3125, %v3121
    %v4022 = vpack.c.b16 %v3126, %v3122
    %v4023 = vpack.c.b16 %v3127, %v3123
    %v4024 = vpack.c.b16 %v3128, %v3124
    %v4025 = vpack.c.b16 %v3133, %v3129
    %v4026 = vpack.c.b16 %v3134, %v3130
    %v4027 = vpack.c.b16 %v3135, %v3131
    %v4028 = vpack.c.b16 %v3136, %v3132
    %v4029 = vpack.c.b16 %v3141, %v3137
    %v4030 = vpack.c.b16 %v3142, %v3138
    %v4031 = vpack.c.b16 %v3143, %v3139
    %v4032 = vpack.c.b16 %v3144, %v3140
    %v4033 = vpack.c.b16 %v3149, %v3145
    %v4034 = vpack.c.b16 %v3150, %v3146
    %v4035 = vpack.c.b16 %v3151, %v3147
    %v4036 = vpack.c.b16 %v3152, %v3148
    %v4037 = vpack.c.b16 %v3157, %v3153
    %v4038 = vpack.c.b16 %v3158, %v3154
    %v4039 = vpack.c.b16 %v3159, %v3155
    %v4040 = vpack.c.b16 %v3160, %v3156
    %v4041 = vpack.c.b16 %v3165, %v3161
    %v4042 = vpack.c.b16 %v3166, %v3162
    %v4043 = vpack.c.b16 %v3167, %v3163
    %v4044 = vpack.c.b16 %v3168, %v3164
    %v4045 = vpack.c.b16 %v3173, %v3169
    %v4046 = vpack.c.b16 %v3174, %v3170
    %v4047 = vpack.c.b16 %v3175, %v3171
    %v4048 = vpack.c.b16 %v3176, %v3172
    %v4049 = vpack.c.b16 %v3181, %v3177
    %v4050 = vpack.c.b16 %v3182, %v3178
    %v4051 = vpack.c.b16 %v3183, %v3179
    %v4052 = vpack.c.b16 %v3184, %v3180
    %v4053 = vpack.c.b16 %v3189, %v3185
    %v4054 = vpack.c.b16 %v3190, %v3186
    %v4055 = vpack.c.b16 %v3191, %v3187
    %v4056 = vpack.c.b16 %v3192, %v3188
    %v4057 = vpack.c.b16 %v3197, %v3193
    %v4058 = vpack.c.b16 %v3198, %v3194
    %v4059 = vpack.c.b16 %v3199, %v3195
    %v4060 = vpack.c.b16 %v3200, %v3196
    %v4061 = vpack.c.b16 %v3205, %v3201
    %v4062 = vpack.c.b16 %v3206, %v3202
    %v4063 = vpack.c.b16 %v3207, %v3203
    %v4064 = vpack.c.b16 %v3208, %v3204
    %v4065 = vpack.c.b16 %v3213, %v3209
    %v4066 = vpack.c.b16 %v3214, %v3210
    %v4067 = vpack.c.b16 %v3215, %v3211
    %v4068 = vpack.c.b16 %v3216, %v3212
    %v4069 = vpack.c.b16 %v3221, %v3217
    %v4070 = vpack.c.b16 %v3222, %v3218
    %v4071 = vpack.c.b16 %v3223, %v3219
    %v4072 = vpack.c.b16 %v3224, %v3220
    %v4073 = vpack.c.b16 %v3229, %v3225
    %v4074 = vpack.c.b16 %v3230, %v3226
    %v4075 = vpack.c.b16 %v3231, %v3227
    %v4076 = vpack.c.b16 %v3232, %v3228
    %v4077 = vpack.c.b16 %v3237, %v3233
    %v4078 = vpack.c.b16 %v3238, %v3234
    %v4079 = vpack.c.b16 %v3239, %v3235
    %v4080 = vpack.c.b16 %v3240, %v3236
    %v4081 = vpack.c.b16 %v3245, %v3241
    %v4082 = vpack.c.b16 %v3246, %v3242
    %v4083 = vpack.c.b16 %v3247, %v3243
    %v4084 = vpack.c.b16 %v3248, %v3244
    %v4085 = vpack.c.b16 %v3253, %v3249
    %v4086 = vpack.c.b16 %v3254, %v3250
    %v4087 = vpack.c.b16 %v3255, %v3251
    %v4088 = vpack.c.b16 %v3256, %v3252
    %v4089 = vpack.c.b16 %v3261, %v3257
    %v4090 = vpack.c.b16 %v3262, %v3258
    %v4091 = vpack.c.b16 %v3263, %v3259
    %v4092 = vpack.c.b16 %v3264, %v3260
    %v4093 = vpack.c.b16 %v3269, %v3265
    %v4094 = vpack.c.b16 %v3270, %v3266
    %v4095 = vpack.c.b16 %v3271, %v3267
    %v4096 = vpack.c.b16 %v3272, %v3268
    %v4097 = vpack.c.b16 %v3277, %v3273
    %v4098 = vpack.c.b16 %v3278, %v3274
    %v4099 = vpack.c.b16 %v3279, %v3275
    %v4100 = vpack.c.b16 %v3280, %v3276
    %v4101 = vpack.c.b16 %v3285, %v3281
    %v4102 = vpack.c.b16 %v3286, %v3282
    %v4103 = vpack.c.b16 %v3287, %v3283
    %v4104 = vpack.c.b16 %v3288, %v3284
    %v4105 = vpack.c.b16 %v3293, %v3289
    %v4106 = vpack.c.b16 %v3294, %v3290
    %v4107 = vpack.c.b16 %v3295, %v3291
    %v4108 = vpack.c.b16 %v3296, %v3292
    %v4109 = vpack.c.b16 %v3301, %v3297
    %v4110 = vpack.c.b16 %v3302, %v3298
    %v4111 = vpack.c.b16 %v3303, %v3299
    %v4112 = vpack.c.b16 %v3304, %v3300
    %v4113 = vpack.c.b16 %v3309, %v3305
    %v4114 = vpack.c.b16 %v3310, %v3306
    %v4115 = vpack.c.b16 %v3311, %v3307
    %v4116 = vpack.c.b16 %v3312, %v3308
    %v4117 = vpack.c.b16 %v3317, %v3313
    %v4118 = vpack.c.b16 %v3318, %v3314
    %v4119 = vpack.c.b16 %v3319, %v3315
    %v4120 = vpack.c.b16 %v3320, %v3316
    %v4121 = vpack.c.b16 %v3325, %v3321
    %v4122 = vpack.c.b16 %v3326, %v3322
    %v4123 = vpack.c.b16 %v3327, %v3323
    %v4124 = vpack.c.b16 %v3328, %v3324
    %v4125 = vpack.c.b16 %v3333, %v3329
    %v4126 = vpack.c.b16 %v3334, %v3330
    %v4127 = vpack.c.b16 %v3335, %v3331
    %v4128 = vpack.c.b16 %v3336, %v3332
    %v4129 = vpack.c.b16 %v3341, %v3337
    %v4130 = vpack.c.b16 %v3342, %v3338
    %v4131 = vpack.c.b16 %v3343, %v3339
    %v4132 = vpack.c.b16 %v3344, %v3340
    %v4133 = vpack.c.b16 %v3349, %v3345
    %v4134 = vpack.c.b16 %v3350, %v3346
    %v4135 = vpack.c.b16 %v3351, %v3347
    %v4136 = vpack.c.b16 %v3352, %v3348
    %vm4921 = vcmask 523264
    %v4923 = vsel %vm4921, %v194, 0
    %4925 = vmatprep.subr.bf16.mxu0 %v3382
    %4926 = vmatpush1.bf16.msra.mxu0 %v3381
    %4927 = vmatprep.subr.bf16.mxu0 %v3378
    %4928 = vmatpush1.bf16.msra.mxu0 %v3377
    %4929 = vmatprep.subr.bf16.mxu0 %v3374
    %4930 = vmatpush1.bf16.msra.mxu0 %v3373
    %4931 = vmatprep.subr.bf16.mxu0 %v3370
    %4932 = vmatpush1.bf16.msra.mxu0 %v3369
    %4933 = vmatprep.subr.bf16.mxu0 %v3366
    %4934 = vmatpush1.bf16.msra.mxu0 %v3365
    %4935 = vmatprep.subr.bf16.mxu0 %v3362
    %4936 = vmatpush1.bf16.msra.mxu0 %v3361
    %4937 = vmatprep.subr.bf16.mxu0 %v3358
    %4938 = vmatpush1.bf16.msra.mxu0 %v3357
    %4939 = vmatprep.subr.bf16.mxu0 %v3354
    %4940 = vmatpush1.bf16.msra.mxu0 %v3353
    %4941 = vmatprep.subr.bf16.mxu0 %v3414
    %4942 = vmatpush2.bf16.msra.mxu0 %v3413
    %4943 = vmatprep.subr.bf16.mxu0 %v3410
    %4944 = vmatpush2.bf16.msra.mxu0 %v3409
    %4945 = vmatprep.subr.bf16.mxu0 %v3406
    %4946 = vmatpush2.bf16.msra.mxu0 %v3405
    %4947 = vmatprep.subr.bf16.mxu0 %v3402
    %4948 = vmatpush2.bf16.msra.mxu0 %v3401
    %4949 = vmatprep.subr.bf16.mxu0 %v3398
    %4950 = vmatpush2.bf16.msra.mxu0 %v3397
    %4951 = vmatprep.subr.bf16.mxu0 %v3394
    %4952 = vmatpush2.bf16.msra.mxu0 %v3393
    %4953 = vmatprep.subr.bf16.mxu0 %v3390
    %4954 = vmatpush2.bf16.msra.mxu0 %v3389
    %4955 = vmatprep.subr.bf16.mxu0 %v3386
    %4956 = vmatpush2.bf16.msra.mxu0 %v3385
    %4957 = vmatprep.mubr.bf16.mxu0 %v171
    %4958 = vmatmul.mubr.bf16.gmra.mxu0 %v170
    %v4959 = vpop.f32.mrf.mxu0
    %v4960 = vadd.f32 %v984, %v4959
    %v4961 = vpop.f32.mrf.mxu0
    %v4962 = vadd.f32 %v988, %v4961
    %v4963 = vpop.f32.mrf.mxu0
    %v4964 = vpop.f32.mrf.mxu0
    %4965 = vdwg.mxu0
    %4966 = vmatprep.subr.bf16.mxu0 %v3446
    %4967 = vmatpush1.bf16.msra.mxu0 %v3445
    %4968 = vmatprep.subr.bf16.mxu0 %v3442
    %4969 = vmatpush1.bf16.msra.mxu0 %v3441
    %4970 = vmatprep.subr.bf16.mxu0 %v3438
    %4971 = vmatpush1.bf16.msra.mxu0 %v3437
    %4972 = vmatprep.subr.bf16.mxu0 %v3434
    %4973 = vmatpush1.bf16.msra.mxu0 %v3433
    %4974 = vmatprep.subr.bf16.mxu0 %v3430
    %4975 = vmatpush1.bf16.msra.mxu0 %v3429
    %4976 = vmatprep.subr.bf16.mxu0 %v3426
    %4977 = vmatpush1.bf16.msra.mxu0 %v3425
    %4978 = vmatprep.subr.bf16.mxu0 %v3422
    %4979 = vmatpush1.bf16.msra.mxu0 %v3421
    %4980 = vmatprep.subr.bf16.mxu0 %v3418
    %4981 = vmatpush1.bf16.msra.mxu0 %v3417
    %4982 = vmatprep.subr.bf16.mxu0 %v3478
    %4983 = vmatpush2.bf16.msra.mxu0 %v3477
    %4984 = vmatprep.subr.bf16.mxu0 %v3474
    %4985 = vmatpush2.bf16.msra.mxu0 %v3473
    %4986 = vmatprep.subr.bf16.mxu0 %v3470
    %4987 = vmatpush2.bf16.msra.mxu0 %v3469
    %4988 = vmatprep.subr.bf16.mxu0 %v3466
    %4989 = vmatpush2.bf16.msra.mxu0 %v3465
    %4990 = vmatprep.subr.bf16.mxu0 %v3462
    %4991 = vmatpush2.bf16.msra.mxu0 %v3461
    %4992 = vmatprep.subr.bf16.mxu0 %v3458
    %4993 = vmatpush2.bf16.msra.mxu0 %v3457
    %4994 = vmatprep.subr.bf16.mxu0 %v3454
    %4995 = vmatpush2.bf16.msra.mxu0 %v3453
    %4996 = vmatprep.subr.bf16.mxu0 %v3450
    %4997 = vmatpush2.bf16.msra.mxu0 %v3449
    %4998 = vmatprep.mubr.bf16.mxu0 %v173
    %4999 = vmatmul.mubr.bf16.gmra.mxu0 %v172
    %v5000 = vpop.f32.mrf.mxu0
    %v5001 = vadd.f32 %v4960, %v5000
    %v5002 = vpop.f32.mrf.mxu0
    %v5003 = vadd.f32 %v4962, %v5002
    %v5004 = vpop.f32.mrf.mxu0
    %v5005 = vpop.f32.mrf.mxu0
    %5006 = vdwg.mxu0
    %5007 = vmatprep.subr.bf16.mxu0 %v3510
    %5008 = vmatpush1.bf16.msra.mxu0 %v3509
    %5009 = vmatprep.subr.bf16.mxu0 %v3506
    %5010 = vmatpush1.bf16.msra.mxu0 %v3505
    %5011 = vmatprep.subr.bf16.mxu0 %v3502
    %5012 = vmatpush1.bf16.msra.mxu0 %v3501
    %5013 = vmatprep.subr.bf16.mxu0 %v3498
    %5014 = vmatpush1.bf16.msra.mxu0 %v3497
    %5015 = vmatprep.subr.bf16.mxu0 %v3494
    %5016 = vmatpush1.bf16.msra.mxu0 %v3493
    %5017 = vmatprep.subr.bf16.mxu0 %v3490
    %5018 = vmatpush1.bf16.msra.mxu0 %v3489
    %5019 = vmatprep.subr.bf16.mxu0 %v3486
    %5020 = vmatpush1.bf16.msra.mxu0 %v3485
    %5021 = vmatprep.subr.bf16.mxu0 %v3482
    %5022 = vmatpush1.bf16.msra.mxu0 %v3481
    %5023 = vmatprep.subr.bf16.mxu0 %v3542
    %5024 = vmatpush2.bf16.msra.mxu0 %v3541
    %5025 = vmatprep.subr.bf16.mxu0 %v3538
    %5026 = vmatpush2.bf16.msra.mxu0 %v3537
    %5027 = vmatprep.subr.bf16.mxu0 %v3534
    %5028 = vmatpush2.bf16.msra.mxu0 %v3533
    %5029 = vmatprep.subr.bf16.mxu0 %v3530
    %5030 = vmatpush2.bf16.msra.mxu0 %v3529
    %5031 = vmatprep.subr.bf16.mxu0 %v3526
    %5032 = vmatpush2.bf16.msra.mxu0 %v3525
    %5033 = vmatprep.subr.bf16.mxu0 %v3522
    %5034 = vmatpush2.bf16.msra.mxu0 %v3521
    %5035 = vmatprep.subr.bf16.mxu0 %v3518
    %5036 = vmatpush2.bf16.msra.mxu0 %v3517
    %5037 = vmatprep.subr.bf16.mxu0 %v3514
    %5038 = vmatpush2.bf16.msra.mxu0 %v3513
    %5039 = vmatprep.mubr.bf16.mxu0 %v175
    %5040 = vmatmul.mubr.bf16.gmra.mxu0 %v174
    %v5041 = vpop.f32.mrf.mxu0
    %v5042 = vadd.f32 %v5001, %v5041
    %v5043 = vpop.f32.mrf.mxu0
    %v5044 = vadd.f32 %v5003, %v5043
    %v5045 = vpop.f32.mrf.mxu0
    %v5046 = vpop.f32.mrf.mxu0
    %5047 = vdwg.mxu0
    %5048 = vmatprep.subr.bf16.mxu0 %v3574
    %5049 = vmatpush1.bf16.msra.mxu0 %v3573
    %5050 = vmatprep.subr.bf16.mxu0 %v3570
    %5051 = vmatpush1.bf16.msra.mxu0 %v3569
    %5052 = vmatprep.subr.bf16.mxu0 %v3566
    %5053 = vmatpush1.bf16.msra.mxu0 %v3565
    %5054 = vmatprep.subr.bf16.mxu0 %v3562
    %5055 = vmatpush1.bf16.msra.mxu0 %v3561
    %5056 = vmatprep.subr.bf16.mxu0 %v3558
    %5057 = vmatpush1.bf16.msra.mxu0 %v3557
    %5058 = vmatprep.subr.bf16.mxu0 %v3554
    %5059 = vmatpush1.bf16.msra.mxu0 %v3553
    %5060 = vmatprep.subr.bf16.mxu0 %v3550
    %5061 = vmatpush1.bf16.msra.mxu0 %v3549
    %5062 = vmatprep.subr.bf16.mxu0 %v3546
    %5063 = vmatpush1.bf16.msra.mxu0 %v3545
    %5064 = vmatprep.subr.bf16.mxu0 %v3606
    %5065 = vmatpush2.bf16.msra.mxu0 %v3605
    %5066 = vmatprep.subr.bf16.mxu0 %v3602
    %5067 = vmatpush2.bf16.msra.mxu0 %v3601
    %5068 = vmatprep.subr.bf16.mxu0 %v3598
    %5069 = vmatpush2.bf16.msra.mxu0 %v3597
    %5070 = vmatprep.subr.bf16.mxu0 %v3594
    %5071 = vmatpush2.bf16.msra.mxu0 %v3593
    %5072 = vmatprep.subr.bf16.mxu0 %v3590
    %5073 = vmatpush2.bf16.msra.mxu0 %v3589
    %5074 = vmatprep.subr.bf16.mxu0 %v3586
    %5075 = vmatpush2.bf16.msra.mxu0 %v3585
    %5076 = vmatprep.subr.bf16.mxu0 %v3582
    %5077 = vmatpush2.bf16.msra.mxu0 %v3581
    %5078 = vmatprep.subr.bf16.mxu0 %v3578
    %5079 = vmatpush2.bf16.msra.mxu0 %v3577
    %5080 = vmatprep.mubr.bf16.mxu0 %v177
    %5081 = vmatmul.mubr.bf16.gmra.mxu0 %v176
    %v5082 = vpop.f32.mrf.mxu0
    %v5083 = vadd.f32 %v5042, %v5082
    %v5084 = vpop.f32.mrf.mxu0
    %v5085 = vadd.f32 %v5044, %v5084
    %v5086 = vpop.f32.mrf.mxu0
    %v5087 = vpop.f32.mrf.mxu0
    %5088 = vdwg.mxu0
    %5089 = vmatprep.subr.bf16.mxu0 %v3638
    %5090 = vmatpush1.bf16.msra.mxu0 %v3637
    %5091 = vmatprep.subr.bf16.mxu0 %v3634
    %5092 = vmatpush1.bf16.msra.mxu0 %v3633
    %5093 = vmatprep.subr.bf16.mxu0 %v3630
    %5094 = vmatpush1.bf16.msra.mxu0 %v3629
    %5095 = vmatprep.subr.bf16.mxu0 %v3626
    %5096 = vmatpush1.bf16.msra.mxu0 %v3625
    %5097 = vmatprep.subr.bf16.mxu0 %v3622
    %5098 = vmatpush1.bf16.msra.mxu0 %v3621
    %5099 = vmatprep.subr.bf16.mxu0 %v3618
    %5100 = vmatpush1.bf16.msra.mxu0 %v3617
    %5101 = vmatprep.subr.bf16.mxu0 %v3614
    %5102 = vmatpush1.bf16.msra.mxu0 %v3613
    %5103 = vmatprep.subr.bf16.mxu0 %v3610
    %5104 = vmatpush1.bf16.msra.mxu0 %v3609
    %5105 = vmatprep.subr.bf16.mxu0 %v3670
    %5106 = vmatpush2.bf16.msra.mxu0 %v3669
    %5107 = vmatprep.subr.bf16.mxu0 %v3666
    %5108 = vmatpush2.bf16.msra.mxu0 %v3665
    %5109 = vmatprep.subr.bf16.mxu0 %v3662
    %5110 = vmatpush2.bf16.msra.mxu0 %v3661
    %5111 = vmatprep.subr.bf16.mxu0 %v3658
    %5112 = vmatpush2.bf16.msra.mxu0 %v3657
    %5113 = vmatprep.subr.bf16.mxu0 %v3654
    %5114 = vmatpush2.bf16.msra.mxu0 %v3653
    %5115 = vmatprep.subr.bf16.mxu0 %v3650
    %5116 = vmatpush2.bf16.msra.mxu0 %v3649
    %5117 = vmatprep.subr.bf16.mxu0 %v3646
    %5118 = vmatpush2.bf16.msra.mxu0 %v3645
    %5119 = vmatprep.subr.bf16.mxu0 %v3642
    %5120 = vmatpush2.bf16.msra.mxu0 %v3641
    %5121 = vmatprep.mubr.bf16.mxu0 %v179
    %5122 = vmatmul.mubr.bf16.gmra.mxu0 %v178
    %v5123 = vpop.f32.mrf.mxu0
    %v5124 = vadd.f32 %v5083, %v5123
    %v5125 = vpop.f32.mrf.mxu0
    %v5126 = vadd.f32 %v5085, %v5125
    %v5127 = vpop.f32.mrf.mxu0
    %v5128 = vpop.f32.mrf.mxu0
    %5129 = vdwg.mxu0
    %5130 = vmatprep.subr.bf16.mxu0 %v3702
    %5131 = vmatpush1.bf16.msra.mxu0 %v3701
    %5132 = vmatprep.subr.bf16.mxu0 %v3698
    %5133 = vmatpush1.bf16.msra.mxu0 %v3697
    %5134 = vmatprep.subr.bf16.mxu0 %v3694
    %5135 = vmatpush1.bf16.msra.mxu0 %v3693
    %5136 = vmatprep.subr.bf16.mxu0 %v3690
    %5137 = vmatpush1.bf16.msra.mxu0 %v3689
    %5138 = vmatprep.subr.bf16.mxu0 %v3686
    %5139 = vmatpush1.bf16.msra.mxu0 %v3685
    %5140 = vmatprep.subr.bf16.mxu0 %v3682
    %5141 = vmatpush1.bf16.msra.mxu0 %v3681
    %5142 = vmatprep.subr.bf16.mxu0 %v3678
    %5143 = vmatpush1.bf16.msra.mxu0 %v3677
    %5144 = vmatprep.subr.bf16.mxu0 %v3674
    %5145 = vmatpush1.bf16.msra.mxu0 %v3673
    %5146 = vmatprep.subr.bf16.mxu0 %v3734
    %5147 = vmatpush2.bf16.msra.mxu0 %v3733
    %5148 = vmatprep.subr.bf16.mxu0 %v3730
    %5149 = vmatpush2.bf16.msra.mxu0 %v3729
    %5150 = vmatprep.subr.bf16.mxu0 %v3726
    %5151 = vmatpush2.bf16.msra.mxu0 %v3725
    %5152 = vmatprep.subr.bf16.mxu0 %v3722
    %5153 = vmatpush2.bf16.msra.mxu0 %v3721
    %5154 = vmatprep.subr.bf16.mxu0 %v3718
    %5155 = vmatpush2.bf16.msra.mxu0 %v3717
    %5156 = vmatprep.subr.bf16.mxu0 %v3714
    %5157 = vmatpush2.bf16.msra.mxu0 %v3713
    %5158 = vmatprep.subr.bf16.mxu0 %v3710
    %5159 = vmatpush2.bf16.msra.mxu0 %v3709
    %5160 = vmatprep.subr.bf16.mxu0 %v3706
    %5161 = vmatpush2.bf16.msra.mxu0 %v3705
    %5162 = vmatprep.mubr.bf16.mxu0 %v181
    %5163 = vmatmul.mubr.bf16.gmra.mxu0 %v180
    %v5164 = vpop.f32.mrf.mxu0
    %v5165 = vadd.f32 %v5124, %v5164
    %v5166 = vpop.f32.mrf.mxu0
    %v5167 = vadd.f32 %v5126, %v5166
    %v5168 = vpop.f32.mrf.mxu0
    %v5169 = vpop.f32.mrf.mxu0
    %5170 = vdwg.mxu0
    %5171 = vmatprep.subr.bf16.mxu0 %v3766
    %5172 = vmatpush1.bf16.msra.mxu0 %v3765
    %5173 = vmatprep.subr.bf16.mxu0 %v3762
    %5174 = vmatpush1.bf16.msra.mxu0 %v3761
    %5175 = vmatprep.subr.bf16.mxu0 %v3758
    %5176 = vmatpush1.bf16.msra.mxu0 %v3757
    %5177 = vmatprep.subr.bf16.mxu0 %v3754
    %5178 = vmatpush1.bf16.msra.mxu0 %v3753
    %5179 = vmatprep.subr.bf16.mxu0 %v3750
    %5180 = vmatpush1.bf16.msra.mxu0 %v3749
    %5181 = vmatprep.subr.bf16.mxu0 %v3746
    %5182 = vmatpush1.bf16.msra.mxu0 %v3745
    %5183 = vmatprep.subr.bf16.mxu0 %v3742
    %5184 = vmatpush1.bf16.msra.mxu0 %v3741
    %5185 = vmatprep.subr.bf16.mxu0 %v3738
    %5186 = vmatpush1.bf16.msra.mxu0 %v3737
    %5187 = vmatprep.subr.bf16.mxu0 %v3798
    %5188 = vmatpush2.bf16.msra.mxu0 %v3797
    %5189 = vmatprep.subr.bf16.mxu0 %v3794
    %5190 = vmatpush2.bf16.msra.mxu0 %v3793
    %5191 = vmatprep.subr.bf16.mxu0 %v3790
    %5192 = vmatpush2.bf16.msra.mxu0 %v3789
    %5193 = vmatprep.subr.bf16.mxu0 %v3786
    %5194 = vmatpush2.bf16.msra.mxu0 %v3785
    %5195 = vmatprep.subr.bf16.mxu0 %v3782
    %5196 = vmatpush2.bf16.msra.mxu0 %v3781
    %5197 = vmatprep.subr.bf16.mxu0 %v3778
    %5198 = vmatpush2.bf16.msra.mxu0 %v3777
    %5199 = vmatprep.subr.bf16.mxu0 %v3774
    %5200 = vmatpush2.bf16.msra.mxu0 %v3773
    %5201 = vmatprep.subr.bf16.mxu0 %v3770
    %5202 = vmatpush2.bf16.msra.mxu0 %v3769
    %5203 = vmatprep.mubr.bf16.mxu0 %v183
    %5204 = vmatmul.mubr.bf16.gmra.mxu0 %v182
    %v5205 = vpop.f32.mrf.mxu0
    %v5206 = vadd.f32 %v5165, %v5205
    %v5207 = vpop.f32.mrf.mxu0
    %v5208 = vadd.f32 %v5167, %v5207
    %v5209 = vpop.f32.mrf.mxu0
    %v5210 = vpop.f32.mrf.mxu0
    %5211 = vdwg.mxu0
    %5212 = vmatprep.subr.bf16.mxu0 %v3830
    %5213 = vmatpush1.bf16.msra.mxu0 %v3829
    %5214 = vmatprep.subr.bf16.mxu0 %v3826
    %5215 = vmatpush1.bf16.msra.mxu0 %v3825
    %5216 = vmatprep.subr.bf16.mxu0 %v3822
    %5217 = vmatpush1.bf16.msra.mxu0 %v3821
    %5218 = vmatprep.subr.bf16.mxu0 %v3818
    %5219 = vmatpush1.bf16.msra.mxu0 %v3817
    %5220 = vmatprep.subr.bf16.mxu0 %v3814
    %5221 = vmatpush1.bf16.msra.mxu0 %v3813
    %5222 = vmatprep.subr.bf16.mxu0 %v3810
    %5223 = vmatpush1.bf16.msra.mxu0 %v3809
    %5224 = vmatprep.subr.bf16.mxu0 %v3806
    %5225 = vmatpush1.bf16.msra.mxu0 %v3805
    %5226 = vmatprep.subr.bf16.mxu0 %v3802
    %5227 = vmatpush1.bf16.msra.mxu0 %v3801
    %5228 = vmatprep.subr.bf16.mxu0 %v3862
    %5229 = vmatpush2.bf16.msra.mxu0 %v3861
    %5230 = vmatprep.subr.bf16.mxu0 %v3858
    %5231 = vmatpush2.bf16.msra.mxu0 %v3857
    %5232 = vmatprep.subr.bf16.mxu0 %v3854
    %5233 = vmatpush2.bf16.msra.mxu0 %v3853
    %5234 = vmatprep.subr.bf16.mxu0 %v3850
    %5235 = vmatpush2.bf16.msra.mxu0 %v3849
    %5236 = vmatprep.subr.bf16.mxu0 %v3846
    %5237 = vmatpush2.bf16.msra.mxu0 %v3845
    %5238 = vmatprep.subr.bf16.mxu0 %v3842
    %5239 = vmatpush2.bf16.msra.mxu0 %v3841
    %5240 = vmatprep.subr.bf16.mxu0 %v3838
    %5241 = vmatpush2.bf16.msra.mxu0 %v3837
    %5242 = vmatprep.subr.bf16.mxu0 %v3834
    %5243 = vmatpush2.bf16.msra.mxu0 %v3833
    %5244 = vmatprep.mubr.bf16.mxu0 %v185
    %5245 = vmatmul.mubr.bf16.gmra.mxu0 %v184
    %v5246 = vpop.f32.mrf.mxu0
    %v5247 = vadd.f32 %v5206, %v5246
    %v5248 = vpop.f32.mrf.mxu0
    %v5249 = vadd.f32 %v5208, %v5248
    %v5250 = vpop.f32.mrf.mxu0
    %v5251 = vpop.f32.mrf.mxu0
    %5252 = vdwg.mxu0
    %5253 = vmatprep.subr.bf16.mxu0 %v3894
    %5254 = vmatpush1.bf16.msra.mxu0 %v3893
    %5255 = vmatprep.subr.bf16.mxu0 %v3890
    %5256 = vmatpush1.bf16.msra.mxu0 %v3889
    %5257 = vmatprep.subr.bf16.mxu0 %v3886
    %5258 = vmatpush1.bf16.msra.mxu0 %v3885
    %5259 = vmatprep.subr.bf16.mxu0 %v3882
    %5260 = vmatpush1.bf16.msra.mxu0 %v3881
    %5261 = vmatprep.subr.bf16.mxu0 %v3878
    %5262 = vmatpush1.bf16.msra.mxu0 %v3877
    %5263 = vmatprep.subr.bf16.mxu0 %v3874
    %5264 = vmatpush1.bf16.msra.mxu0 %v3873
    %5265 = vmatprep.subr.bf16.mxu0 %v3870
    %5266 = vmatpush1.bf16.msra.mxu0 %v3869
    %5267 = vmatprep.subr.bf16.mxu0 %v3866
    %5268 = vmatpush1.bf16.msra.mxu0 %v3865
    %5269 = vmatprep.subr.bf16.mxu0 %v3926
    %5270 = vmatpush2.bf16.msra.mxu0 %v3925
    %5271 = vmatprep.subr.bf16.mxu0 %v3922
    %5272 = vmatpush2.bf16.msra.mxu0 %v3921
    %5273 = vmatprep.subr.bf16.mxu0 %v3918
    %5274 = vmatpush2.bf16.msra.mxu0 %v3917
    %5275 = vmatprep.subr.bf16.mxu0 %v3914
    %5276 = vmatpush2.bf16.msra.mxu0 %v3913
    %5277 = vmatprep.subr.bf16.mxu0 %v3910
    %5278 = vmatpush2.bf16.msra.mxu0 %v3909
    %5279 = vmatprep.subr.bf16.mxu0 %v3906
    %5280 = vmatpush2.bf16.msra.mxu0 %v3905
    %5281 = vmatprep.subr.bf16.mxu0 %v3902
    %5282 = vmatpush2.bf16.msra.mxu0 %v3901
    %5283 = vmatprep.subr.bf16.mxu0 %v3898
    %5284 = vmatpush2.bf16.msra.mxu0 %v3897
    %5285 = vmatprep.mubr.bf16.mxu0 %v187
    %5286 = vmatmul.mubr.bf16.gmra.mxu0 %v186
    %v5287 = vpop.f32.mrf.mxu0
    %v5288 = vadd.f32 %v5247, %v5287
    %v5289 = vpop.f32.mrf.mxu0
    %v5290 = vadd.f32 %v5249, %v5289
    %v5291 = vpop.f32.mrf.mxu0
    %v5292 = vpop.f32.mrf.mxu0
    %5293 = vdwg.mxu0
    %5294 = vmatprep.subr.bf16.mxu0 %v3958
    %5295 = vmatpush1.bf16.msra.mxu0 %v3957
    %5296 = vmatprep.subr.bf16.mxu0 %v3954
    %5297 = vmatpush1.bf16.msra.mxu0 %v3953
    %5298 = vmatprep.subr.bf16.mxu0 %v3950
    %5299 = vmatpush1.bf16.msra.mxu0 %v3949
    %5300 = vmatprep.subr.bf16.mxu0 %v3946
    %5301 = vmatpush1.bf16.msra.mxu0 %v3945
    %5302 = vmatprep.subr.bf16.mxu0 %v3942
    %5303 = vmatpush1.bf16.msra.mxu0 %v3941
    %5304 = vmatprep.subr.bf16.mxu0 %v3938
    %5305 = vmatpush1.bf16.msra.mxu0 %v3937
    %5306 = vmatprep.subr.bf16.mxu0 %v3934
    %5307 = vmatpush1.bf16.msra.mxu0 %v3933
    %5308 = vmatprep.subr.bf16.mxu0 %v3930
    %5309 = vmatpush1.bf16.msra.mxu0 %v3929
    %5310 = vmatprep.subr.bf16.mxu0 %v3990
    %5311 = vmatpush2.bf16.msra.mxu0 %v3989
    %5312 = vmatprep.subr.bf16.mxu0 %v3986
    %5313 = vmatpush2.bf16.msra.mxu0 %v3985
    %5314 = vmatprep.subr.bf16.mxu0 %v3982
    %5315 = vmatpush2.bf16.msra.mxu0 %v3981
    %5316 = vmatprep.subr.bf16.mxu0 %v3978
    %5317 = vmatpush2.bf16.msra.mxu0 %v3977
    %5318 = vmatprep.subr.bf16.mxu0 %v3974
    %5319 = vmatpush2.bf16.msra.mxu0 %v3973
    %5320 = vmatprep.subr.bf16.mxu0 %v3970
    %5321 = vmatpush2.bf16.msra.mxu0 %v3969
    %5322 = vmatprep.subr.bf16.mxu0 %v3966
    %5323 = vmatpush2.bf16.msra.mxu0 %v3965
    %5324 = vmatprep.subr.bf16.mxu0 %v3962
    %5325 = vmatpush2.bf16.msra.mxu0 %v3961
    %5326 = vmatprep.mubr.bf16.mxu0 %v189
    %5327 = vmatmul.mubr.bf16.gmra.mxu0 %v188
    %v5328 = vpop.f32.mrf.mxu0
    %v5329 = vadd.f32 %v5288, %v5328
    %v5330 = vpop.f32.mrf.mxu0
    %v5331 = vadd.f32 %v5290, %v5330
    %v5332 = vpop.f32.mrf.mxu0
    %v5333 = vpop.f32.mrf.mxu0
    %5334 = vdwg.mxu0
    %5335 = vmatprep.subr.bf16.mxu0 %v4022
    %5336 = vmatpush1.bf16.msra.mxu0 %v4021
    %5337 = vmatprep.subr.bf16.mxu0 %v4018
    %5338 = vmatpush1.bf16.msra.mxu0 %v4017
    %5339 = vmatprep.subr.bf16.mxu0 %v4014
    %5340 = vmatpush1.bf16.msra.mxu0 %v4013
    %5341 = vmatprep.subr.bf16.mxu0 %v4010
    %5342 = vmatpush1.bf16.msra.mxu0 %v4009
    %5343 = vmatprep.subr.bf16.mxu0 %v4006
    %5344 = vmatpush1.bf16.msra.mxu0 %v4005
    %5345 = vmatprep.subr.bf16.mxu0 %v4002
    %5346 = vmatpush1.bf16.msra.mxu0 %v4001
    %5347 = vmatprep.subr.bf16.mxu0 %v3998
    %5348 = vmatpush1.bf16.msra.mxu0 %v3997
    %5349 = vmatprep.subr.bf16.mxu0 %v3994
    %5350 = vmatpush1.bf16.msra.mxu0 %v3993
    %5351 = vmatprep.subr.bf16.mxu0 %v4054
    %5352 = vmatpush2.bf16.msra.mxu0 %v4053
    %5353 = vmatprep.subr.bf16.mxu0 %v4050
    %5354 = vmatpush2.bf16.msra.mxu0 %v4049
    %5355 = vmatprep.subr.bf16.mxu0 %v4046
    %5356 = vmatpush2.bf16.msra.mxu0 %v4045
    %5357 = vmatprep.subr.bf16.mxu0 %v4042
    %5358 = vmatpush2.bf16.msra.mxu0 %v4041
    %5359 = vmatprep.subr.bf16.mxu0 %v4038
    %5360 = vmatpush2.bf16.msra.mxu0 %v4037
    %5361 = vmatprep.subr.bf16.mxu0 %v4034
    %5362 = vmatpush2.bf16.msra.mxu0 %v4033
    %5363 = vmatprep.subr.bf16.mxu0 %v4030
    %5364 = vmatpush2.bf16.msra.mxu0 %v4029
    %5365 = vmatprep.subr.bf16.mxu0 %v4026
    %5366 = vmatpush2.bf16.msra.mxu0 %v4025
    %5367 = vmatprep.mubr.bf16.mxu0 %v191
    %5368 = vmatmul.mubr.bf16.gmra.mxu0 %v190
    %v5369 = vpop.f32.mrf.mxu0
    %v5370 = vadd.f32 %v5329, %v5369
    %v5371 = vpop.f32.mrf.mxu0
    %v5372 = vadd.f32 %v5331, %v5371
    %v5373 = vpop.f32.mrf.mxu0
    %v5374 = vpop.f32.mrf.mxu0
    %5375 = vdwg.mxu0
    %5376 = vmatprep.subr.bf16.mxu0 %v4086
    %5377 = vmatpush1.bf16.msra.mxu0 %v4085
    %5378 = vmatprep.subr.bf16.mxu0 %v4082
    %5379 = vmatpush1.bf16.msra.mxu0 %v4081
    %5380 = vmatprep.subr.bf16.mxu0 %v4078
    %5381 = vmatpush1.bf16.msra.mxu0 %v4077
    %5382 = vmatprep.subr.bf16.mxu0 %v4074
    %5383 = vmatpush1.bf16.msra.mxu0 %v4073
    %5384 = vmatprep.subr.bf16.mxu0 %v4070
    %5385 = vmatpush1.bf16.msra.mxu0 %v4069
    %5386 = vmatprep.subr.bf16.mxu0 %v4066
    %5387 = vmatpush1.bf16.msra.mxu0 %v4065
    %5388 = vmatprep.subr.bf16.mxu0 %v4062
    %5389 = vmatpush1.bf16.msra.mxu0 %v4061
    %5390 = vmatprep.subr.bf16.mxu0 %v4058
    %5391 = vmatpush1.bf16.msra.mxu0 %v4057
    %5392 = vmatprep.subr.bf16.mxu0 %v4118
    %5393 = vmatpush2.bf16.msra.mxu0 %v4117
    %5394 = vmatprep.subr.bf16.mxu0 %v4114
    %5395 = vmatpush2.bf16.msra.mxu0 %v4113
    %5396 = vmatprep.subr.bf16.mxu0 %v4110
    %5397 = vmatpush2.bf16.msra.mxu0 %v4109
    %5398 = vmatprep.subr.bf16.mxu0 %v4106
    %5399 = vmatpush2.bf16.msra.mxu0 %v4105
    %5400 = vmatprep.subr.bf16.mxu0 %v4102
    %5401 = vmatpush2.bf16.msra.mxu0 %v4101
    %5402 = vmatprep.subr.bf16.mxu0 %v4098
    %5403 = vmatpush2.bf16.msra.mxu0 %v4097
    %5404 = vmatprep.subr.bf16.mxu0 %v4094
    %5405 = vmatpush2.bf16.msra.mxu0 %v4093
    %5406 = vmatprep.subr.bf16.mxu0 %v4090
    %5407 = vmatpush2.bf16.msra.mxu0 %v4089
    %5408 = vmatprep.mubr.bf16.mxu0 %v193
    %5409 = vmatmul.mubr.bf16.gmra.mxu0 %v192
    %v5410 = vpop.f32.mrf.mxu0
    %v5411 = vadd.f32 %v5370, %v5410
    %v5412 = vpop.f32.mrf.mxu0
    %v5413 = vadd.f32 %v5372, %v5412
    %v5414 = vpop.f32.mrf.mxu0
    %v5415 = vpop.f32.mrf.mxu0
    %5416 = vdwg.mxu0
    %5417 = vmatprep.subr.bf16.mxu0 0
    %5418 = vmatpush1.bf16.msra.mxu0 0
    %5419 = vmatprep.subr.bf16.mxu0 0
    %5420 = vmatpush1.bf16.msra.mxu0 0
    %5421 = vmatprep.subr.bf16.mxu0 0
    %5422 = vmatpush1.bf16.msra.mxu0 0
    %5423 = vmatprep.subr.bf16.mxu0 0
    %5424 = vmatpush1.bf16.msra.mxu0 0
    %5425 = vmatprep.subr.bf16.mxu0 %v4134
    %5426 = vmatpush1.bf16.msra.mxu0 %v4133
    %5427 = vmatprep.subr.bf16.mxu0 %v4130
    %5428 = vmatpush1.bf16.msra.mxu0 %v4129
    %5429 = vmatprep.subr.bf16.mxu0 %v4126
    %5430 = vmatpush1.bf16.msra.mxu0 %v4125
    %5431 = vmatprep.subr.bf16.mxu0 %v4122
    %5432 = vmatpush1.bf16.msra.mxu0 %v4121
    %5433 = vmatprep.subr.bf16.mxu0 0
    %5434 = vmatpush2.bf16.msra.mxu0 0
    %5435 = vmatprep.subr.bf16.mxu0 0
    %5436 = vmatpush2.bf16.msra.mxu0 0
    %5437 = vmatprep.subr.bf16.mxu0 0
    %5438 = vmatpush2.bf16.msra.mxu0 0
    %5439 = vmatprep.subr.bf16.mxu0 0
    %5440 = vmatpush2.bf16.msra.mxu0 0
    %5441 = vmatprep.subr.bf16.mxu0 0
    %5442 = vmatpush2.bf16.msra.mxu0 0
    %5443 = vmatprep.subr.bf16.mxu0 0
    %5444 = vmatpush2.bf16.msra.mxu0 0
    %5445 = vmatprep.subr.bf16.mxu0 0
    %5446 = vmatpush2.bf16.msra.mxu0 0
    %5447 = vmatprep.subr.bf16.mxu0 0
    %5448 = vmatpush2.bf16.msra.mxu0 0
    %5449 = vmatprep.mubr.bf16.mxu0 0
    %5450 = vmatmul.mubr.bf16.gmra.mxu0 %v4923
    %v5451 = vpop.f32.mrf.mxu0
    %v5452 = vadd.f32 %v5411, %v5451
    %v5453 = vpop.f32.mrf.mxu0
    %v5454 = vadd.f32 %v5413, %v5453
    %v5455 = vpop.f32.mrf.mxu0
    %v5456 = vpop.f32.mrf.mxu0
    %5457 = vdwg.mxu0
    %5458 = vmatprep.subr.bf16.mxu0 %v3384
    %5459 = vmatpush1.bf16.msra.mxu0 %v3383
    %5460 = vmatprep.subr.bf16.mxu0 %v3380
    %5461 = vmatpush1.bf16.msra.mxu0 %v3379
    %5462 = vmatprep.subr.bf16.mxu0 %v3376
    %5463 = vmatpush1.bf16.msra.mxu0 %v3375
    %5464 = vmatprep.subr.bf16.mxu0 %v3372
    %5465 = vmatpush1.bf16.msra.mxu0 %v3371
    %5466 = vmatprep.subr.bf16.mxu0 %v3368
    %5467 = vmatpush1.bf16.msra.mxu0 %v3367
    %5468 = vmatprep.subr.bf16.mxu0 %v3364
    %5469 = vmatpush1.bf16.msra.mxu0 %v3363
    %5470 = vmatprep.subr.bf16.mxu0 %v3360
    %5471 = vmatpush1.bf16.msra.mxu0 %v3359
    %5472 = vmatprep.subr.bf16.mxu0 %v3356
    %5473 = vmatpush1.bf16.msra.mxu0 %v3355
    %5474 = vmatprep.subr.bf16.mxu0 %v3416
    %5475 = vmatpush2.bf16.msra.mxu0 %v3415
    %5476 = vmatprep.subr.bf16.mxu0 %v3412
    %5477 = vmatpush2.bf16.msra.mxu0 %v3411
    %5478 = vmatprep.subr.bf16.mxu0 %v3408
    %5479 = vmatpush2.bf16.msra.mxu0 %v3407
    %5480 = vmatprep.subr.bf16.mxu0 %v3404
    %5481 = vmatpush2.bf16.msra.mxu0 %v3403
    %5482 = vmatprep.subr.bf16.mxu0 %v3400
    %5483 = vmatpush2.bf16.msra.mxu0 %v3399
    %5484 = vmatprep.subr.bf16.mxu0 %v3396
    %5485 = vmatpush2.bf16.msra.mxu0 %v3395
    %5486 = vmatprep.subr.bf16.mxu0 %v3392
    %5487 = vmatpush2.bf16.msra.mxu0 %v3391
    %5488 = vmatprep.subr.bf16.mxu0 %v3388
    %5489 = vmatpush2.bf16.msra.mxu0 %v3387
    %5490 = vmatprep.mubr.bf16.mxu0 %v171
    %5491 = vmatmul.mubr.bf16.gmra.mxu0 %v170
    %v5492 = vpop.f32.mrf.mxu0
    %v5493 = vadd.f32 %v992, %v5492
    %v5494 = vpop.f32.mrf.mxu0
    %v5495 = vadd.f32 %v996, %v5494
    %v5496 = vpop.f32.mrf.mxu0
    %v5497 = vpop.f32.mrf.mxu0
    %5498 = vdwg.mxu0
    %5499 = vmatprep.subr.bf16.mxu0 %v3448
    %5500 = vmatpush1.bf16.msra.mxu0 %v3447
    %5501 = vmatprep.subr.bf16.mxu0 %v3444
    %5502 = vmatpush1.bf16.msra.mxu0 %v3443
    %5503 = vmatprep.subr.bf16.mxu0 %v3440
    %5504 = vmatpush1.bf16.msra.mxu0 %v3439
    %5505 = vmatprep.subr.bf16.mxu0 %v3436
    %5506 = vmatpush1.bf16.msra.mxu0 %v3435
    %5507 = vmatprep.subr.bf16.mxu0 %v3432
    %5508 = vmatpush1.bf16.msra.mxu0 %v3431
    %5509 = vmatprep.subr.bf16.mxu0 %v3428
    %5510 = vmatpush1.bf16.msra.mxu0 %v3427
    %5511 = vmatprep.subr.bf16.mxu0 %v3424
    %5512 = vmatpush1.bf16.msra.mxu0 %v3423
    %5513 = vmatprep.subr.bf16.mxu0 %v3420
    %5514 = vmatpush1.bf16.msra.mxu0 %v3419
    %5515 = vmatprep.subr.bf16.mxu0 %v3480
    %5516 = vmatpush2.bf16.msra.mxu0 %v3479
    %5517 = vmatprep.subr.bf16.mxu0 %v3476
    %5518 = vmatpush2.bf16.msra.mxu0 %v3475
    %5519 = vmatprep.subr.bf16.mxu0 %v3472
    %5520 = vmatpush2.bf16.msra.mxu0 %v3471
    %5521 = vmatprep.subr.bf16.mxu0 %v3468
    %5522 = vmatpush2.bf16.msra.mxu0 %v3467
    %5523 = vmatprep.subr.bf16.mxu0 %v3464
    %5524 = vmatpush2.bf16.msra.mxu0 %v3463
    %5525 = vmatprep.subr.bf16.mxu0 %v3460
    %5526 = vmatpush2.bf16.msra.mxu0 %v3459
    %5527 = vmatprep.subr.bf16.mxu0 %v3456
    %5528 = vmatpush2.bf16.msra.mxu0 %v3455
    %5529 = vmatprep.subr.bf16.mxu0 %v3452
    %5530 = vmatpush2.bf16.msra.mxu0 %v3451
    %5531 = vmatprep.mubr.bf16.mxu0 %v173
    %5532 = vmatmul.mubr.bf16.gmra.mxu0 %v172
    %v5533 = vpop.f32.mrf.mxu0
    %v5534 = vadd.f32 %v5493, %v5533
    %v5535 = vpop.f32.mrf.mxu0
    %v5536 = vadd.f32 %v5495, %v5535
    %v5537 = vpop.f32.mrf.mxu0
    %v5538 = vpop.f32.mrf.mxu0
    %5539 = vdwg.mxu0
    %5540 = vmatprep.subr.bf16.mxu0 %v3512
    %5541 = vmatpush1.bf16.msra.mxu0 %v3511
    %5542 = vmatprep.subr.bf16.mxu0 %v3508
    %5543 = vmatpush1.bf16.msra.mxu0 %v3507
    %5544 = vmatprep.subr.bf16.mxu0 %v3504
    %5545 = vmatpush1.bf16.msra.mxu0 %v3503
    %5546 = vmatprep.subr.bf16.mxu0 %v3500
    %5547 = vmatpush1.bf16.msra.mxu0 %v3499
    %5548 = vmatprep.subr.bf16.mxu0 %v3496
    %5549 = vmatpush1.bf16.msra.mxu0 %v3495
    %5550 = vmatprep.subr.bf16.mxu0 %v3492
    %5551 = vmatpush1.bf16.msra.mxu0 %v3491
    %5552 = vmatprep.subr.bf16.mxu0 %v3488
    %5553 = vmatpush1.bf16.msra.mxu0 %v3487
    %5554 = vmatprep.subr.bf16.mxu0 %v3484
    %5555 = vmatpush1.bf16.msra.mxu0 %v3483
    %5556 = vmatprep.subr.bf16.mxu0 %v3544
    %5557 = vmatpush2.bf16.msra.mxu0 %v3543
    %5558 = vmatprep.subr.bf16.mxu0 %v3540
    %5559 = vmatpush2.bf16.msra.mxu0 %v3539
    %5560 = vmatprep.subr.bf16.mxu0 %v3536
    %5561 = vmatpush2.bf16.msra.mxu0 %v3535
    %5562 = vmatprep.subr.bf16.mxu0 %v3532
    %5563 = vmatpush2.bf16.msra.mxu0 %v3531
    %5564 = vmatprep.subr.bf16.mxu0 %v3528
    %5565 = vmatpush2.bf16.msra.mxu0 %v3527
    %5566 = vmatprep.subr.bf16.mxu0 %v3524
    %5567 = vmatpush2.bf16.msra.mxu0 %v3523
    %5568 = vmatprep.subr.bf16.mxu0 %v3520
    %5569 = vmatpush2.bf16.msra.mxu0 %v3519
    %5570 = vmatprep.subr.bf16.mxu0 %v3516
    %5571 = vmatpush2.bf16.msra.mxu0 %v3515
    %5572 = vmatprep.mubr.bf16.mxu0 %v175
    %5573 = vmatmul.mubr.bf16.gmra.mxu0 %v174
    %v5574 = vpop.f32.mrf.mxu0
    %v5575 = vadd.f32 %v5534, %v5574
    %v5576 = vpop.f32.mrf.mxu0
    %v5577 = vadd.f32 %v5536, %v5576
    %v5578 = vpop.f32.mrf.mxu0
    %v5579 = vpop.f32.mrf.mxu0
    %5580 = vdwg.mxu0
    %5581 = vmatprep.subr.bf16.mxu0 %v3576
    %5582 = vmatpush1.bf16.msra.mxu0 %v3575
    %5583 = vmatprep.subr.bf16.mxu0 %v3572
    %5584 = vmatpush1.bf16.msra.mxu0 %v3571
    %5585 = vmatprep.subr.bf16.mxu0 %v3568
    %5586 = vmatpush1.bf16.msra.mxu0 %v3567
    %5587 = vmatprep.subr.bf16.mxu0 %v3564
    %5588 = vmatpush1.bf16.msra.mxu0 %v3563
    %5589 = vmatprep.subr.bf16.mxu0 %v3560
    %5590 = vmatpush1.bf16.msra.mxu0 %v3559
    %5591 = vmatprep.subr.bf16.mxu0 %v3556
    %5592 = vmatpush1.bf16.msra.mxu0 %v3555
    %5593 = vmatprep.subr.bf16.mxu0 %v3552
    %5594 = vmatpush1.bf16.msra.mxu0 %v3551
    %5595 = vmatprep.subr.bf16.mxu0 %v3548
    %5596 = vmatpush1.bf16.msra.mxu0 %v3547
    %5597 = vmatprep.subr.bf16.mxu0 %v3608
    %5598 = vmatpush2.bf16.msra.mxu0 %v3607
    %5599 = vmatprep.subr.bf16.mxu0 %v3604
    %5600 = vmatpush2.bf16.msra.mxu0 %v3603
    %5601 = vmatprep.subr.bf16.mxu0 %v3600
    %5602 = vmatpush2.bf16.msra.mxu0 %v3599
    %5603 = vmatprep.subr.bf16.mxu0 %v3596
    %5604 = vmatpush2.bf16.msra.mxu0 %v3595
    %5605 = vmatprep.subr.bf16.mxu0 %v3592
    %5606 = vmatpush2.bf16.msra.mxu0 %v3591
    %5607 = vmatprep.subr.bf16.mxu0 %v3588
    %5608 = vmatpush2.bf16.msra.mxu0 %v3587
    %5609 = vmatprep.subr.bf16.mxu0 %v3584
    %5610 = vmatpush2.bf16.msra.mxu0 %v3583
    %5611 = vmatprep.subr.bf16.mxu0 %v3580
    %5612 = vmatpush2.bf16.msra.mxu0 %v3579
    %5613 = vmatprep.mubr.bf16.mxu0 %v177
    %5614 = vmatmul.mubr.bf16.gmra.mxu0 %v176
    %v5615 = vpop.f32.mrf.mxu0
    %v5616 = vadd.f32 %v5575, %v5615
    %v5617 = vpop.f32.mrf.mxu0
    %v5618 = vadd.f32 %v5577, %v5617
    %v5619 = vpop.f32.mrf.mxu0
    %v5620 = vpop.f32.mrf.mxu0
    %5621 = vdwg.mxu0
    %5622 = vmatprep.subr.bf16.mxu0 %v3640
    %5623 = vmatpush1.bf16.msra.mxu0 %v3639
    %5624 = vmatprep.subr.bf16.mxu0 %v3636
    %5625 = vmatpush1.bf16.msra.mxu0 %v3635
    %5626 = vmatprep.subr.bf16.mxu0 %v3632
    %5627 = vmatpush1.bf16.msra.mxu0 %v3631
    %5628 = vmatprep.subr.bf16.mxu0 %v3628
    %5629 = vmatpush1.bf16.msra.mxu0 %v3627
    %5630 = vmatprep.subr.bf16.mxu0 %v3624
    %5631 = vmatpush1.bf16.msra.mxu0 %v3623
    %5632 = vmatprep.subr.bf16.mxu0 %v3620
    %5633 = vmatpush1.bf16.msra.mxu0 %v3619
    %5634 = vmatprep.subr.bf16.mxu0 %v3616
    %5635 = vmatpush1.bf16.msra.mxu0 %v3615
    %5636 = vmatprep.subr.bf16.mxu0 %v3612
    %5637 = vmatpush1.bf16.msra.mxu0 %v3611
    %5638 = vmatprep.subr.bf16.mxu0 %v3672
    %5639 = vmatpush2.bf16.msra.mxu0 %v3671
    %5640 = vmatprep.subr.bf16.mxu0 %v3668
    %5641 = vmatpush2.bf16.msra.mxu0 %v3667
    %5642 = vmatprep.subr.bf16.mxu0 %v3664
    %5643 = vmatpush2.bf16.msra.mxu0 %v3663
    %5644 = vmatprep.subr.bf16.mxu0 %v3660
    %5645 = vmatpush2.bf16.msra.mxu0 %v3659
    %5646 = vmatprep.subr.bf16.mxu0 %v3656
    %5647 = vmatpush2.bf16.msra.mxu0 %v3655
    %5648 = vmatprep.subr.bf16.mxu0 %v3652
    %5649 = vmatpush2.bf16.msra.mxu0 %v3651
    %5650 = vmatprep.subr.bf16.mxu0 %v3648
    %5651 = vmatpush2.bf16.msra.mxu0 %v3647
    %5652 = vmatprep.subr.bf16.mxu0 %v3644
    %5653 = vmatpush2.bf16.msra.mxu0 %v3643
    %5654 = vmatprep.mubr.bf16.mxu0 %v179
    %5655 = vmatmul.mubr.bf16.gmra.mxu0 %v178
    %v5656 = vpop.f32.mrf.mxu0
    %v5657 = vadd.f32 %v5616, %v5656
    %v5658 = vpop.f32.mrf.mxu0
    %v5659 = vadd.f32 %v5618, %v5658
    %v5660 = vpop.f32.mrf.mxu0
    %v5661 = vpop.f32.mrf.mxu0
    %5662 = vdwg.mxu0
    %5663 = vmatprep.subr.bf16.mxu0 %v3704
    %5664 = vmatpush1.bf16.msra.mxu0 %v3703
    %5665 = vmatprep.subr.bf16.mxu0 %v3700
    %5666 = vmatpush1.bf16.msra.mxu0 %v3699
    %5667 = vmatprep.subr.bf16.mxu0 %v3696
    %5668 = vmatpush1.bf16.msra.mxu0 %v3695
    %5669 = vmatprep.subr.bf16.mxu0 %v3692
    %5670 = vmatpush1.bf16.msra.mxu0 %v3691
    %5671 = vmatprep.subr.bf16.mxu0 %v3688
    %5672 = vmatpush1.bf16.msra.mxu0 %v3687
    %5673 = vmatprep.subr.bf16.mxu0 %v3684
    %5674 = vmatpush1.bf16.msra.mxu0 %v3683
    %5675 = vmatprep.subr.bf16.mxu0 %v3680
    %5676 = vmatpush1.bf16.msra.mxu0 %v3679
    %5677 = vmatprep.subr.bf16.mxu0 %v3676
    %5678 = vmatpush1.bf16.msra.mxu0 %v3675
    %5679 = vmatprep.subr.bf16.mxu0 %v3736
    %5680 = vmatpush2.bf16.msra.mxu0 %v3735
    %5681 = vmatprep.subr.bf16.mxu0 %v3732
    %5682 = vmatpush2.bf16.msra.mxu0 %v3731
    %5683 = vmatprep.subr.bf16.mxu0 %v3728
    %5684 = vmatpush2.bf16.msra.mxu0 %v3727
    %5685 = vmatprep.subr.bf16.mxu0 %v3724
    %5686 = vmatpush2.bf16.msra.mxu0 %v3723
    %5687 = vmatprep.subr.bf16.mxu0 %v3720
    %5688 = vmatpush2.bf16.msra.mxu0 %v3719
    %5689 = vmatprep.subr.bf16.mxu0 %v3716
    %5690 = vmatpush2.bf16.msra.mxu0 %v3715
    %5691 = vmatprep.subr.bf16.mxu0 %v3712
    %5692 = vmatpush2.bf16.msra.mxu0 %v3711
    %5693 = vmatprep.subr.bf16.mxu0 %v3708
    %5694 = vmatpush2.bf16.msra.mxu0 %v3707
    %5695 = vmatprep.mubr.bf16.mxu0 %v181
    %5696 = vmatmul.mubr.bf16.gmra.mxu0 %v180
    %v5697 = vpop.f32.mrf.mxu0
    %v5698 = vadd.f32 %v5657, %v5697
    %v5699 = vpop.f32.mrf.mxu0
    %v5700 = vadd.f32 %v5659, %v5699
    %v5701 = vpop.f32.mrf.mxu0
    %v5702 = vpop.f32.mrf.mxu0
    %5703 = vdwg.mxu0
    %5704 = vmatprep.subr.bf16.mxu0 %v3768
    %5705 = vmatpush1.bf16.msra.mxu0 %v3767
    %5706 = vmatprep.subr.bf16.mxu0 %v3764
    %5707 = vmatpush1.bf16.msra.mxu0 %v3763
    %5708 = vmatprep.subr.bf16.mxu0 %v3760
    %5709 = vmatpush1.bf16.msra.mxu0 %v3759
    %5710 = vmatprep.subr.bf16.mxu0 %v3756
    %5711 = vmatpush1.bf16.msra.mxu0 %v3755
    %5712 = vmatprep.subr.bf16.mxu0 %v3752
    %5713 = vmatpush1.bf16.msra.mxu0 %v3751
    %5714 = vmatprep.subr.bf16.mxu0 %v3748
    %5715 = vmatpush1.bf16.msra.mxu0 %v3747
    %5716 = vmatprep.subr.bf16.mxu0 %v3744
    %5717 = vmatpush1.bf16.msra.mxu0 %v3743
    %5718 = vmatprep.subr.bf16.mxu0 %v3740
    %5719 = vmatpush1.bf16.msra.mxu0 %v3739
    %5720 = vmatprep.subr.bf16.mxu0 %v3800
    %5721 = vmatpush2.bf16.msra.mxu0 %v3799
    %5722 = vmatprep.subr.bf16.mxu0 %v3796
    %5723 = vmatpush2.bf16.msra.mxu0 %v3795
    %5724 = vmatprep.subr.bf16.mxu0 %v3792
    %5725 = vmatpush2.bf16.msra.mxu0 %v3791
    %5726 = vmatprep.subr.bf16.mxu0 %v3788
    %5727 = vmatpush2.bf16.msra.mxu0 %v3787
    %5728 = vmatprep.subr.bf16.mxu0 %v3784
    %5729 = vmatpush2.bf16.msra.mxu0 %v3783
    %5730 = vmatprep.subr.bf16.mxu0 %v3780
    %5731 = vmatpush2.bf16.msra.mxu0 %v3779
    %5732 = vmatprep.subr.bf16.mxu0 %v3776
    %5733 = vmatpush2.bf16.msra.mxu0 %v3775
    %5734 = vmatprep.subr.bf16.mxu0 %v3772
    %5735 = vmatpush2.bf16.msra.mxu0 %v3771
    %5736 = vmatprep.mubr.bf16.mxu0 %v183
    %5737 = vmatmul.mubr.bf16.gmra.mxu0 %v182
    %v5738 = vpop.f32.mrf.mxu0
    %v5739 = vadd.f32 %v5698, %v5738
    %v5740 = vpop.f32.mrf.mxu0
    %v5741 = vadd.f32 %v5700, %v5740
    %v5742 = vpop.f32.mrf.mxu0
    %v5743 = vpop.f32.mrf.mxu0
    %5744 = vdwg.mxu0
    %5745 = vmatprep.subr.bf16.mxu0 %v3832
    %5746 = vmatpush1.bf16.msra.mxu0 %v3831
    %5747 = vmatprep.subr.bf16.mxu0 %v3828
    %5748 = vmatpush1.bf16.msra.mxu0 %v3827
    %5749 = vmatprep.subr.bf16.mxu0 %v3824
    %5750 = vmatpush1.bf16.msra.mxu0 %v3823
    %5751 = vmatprep.subr.bf16.mxu0 %v3820
    %5752 = vmatpush1.bf16.msra.mxu0 %v3819
    %5753 = vmatprep.subr.bf16.mxu0 %v3816
    %5754 = vmatpush1.bf16.msra.mxu0 %v3815
    %5755 = vmatprep.subr.bf16.mxu0 %v3812
    %5756 = vmatpush1.bf16.msra.mxu0 %v3811
    %5757 = vmatprep.subr.bf16.mxu0 %v3808
    %5758 = vmatpush1.bf16.msra.mxu0 %v3807
    %5759 = vmatprep.subr.bf16.mxu0 %v3804
    %5760 = vmatpush1.bf16.msra.mxu0 %v3803
    %5761 = vmatprep.subr.bf16.mxu0 %v3864
    %5762 = vmatpush2.bf16.msra.mxu0 %v3863
    %5763 = vmatprep.subr.bf16.mxu0 %v3860
    %5764 = vmatpush2.bf16.msra.mxu0 %v3859
    %5765 = vmatprep.subr.bf16.mxu0 %v3856
    %5766 = vmatpush2.bf16.msra.mxu0 %v3855
    %5767 = vmatprep.subr.bf16.mxu0 %v3852
    %5768 = vmatpush2.bf16.msra.mxu0 %v3851
    %5769 = vmatprep.subr.bf16.mxu0 %v3848
    %5770 = vmatpush2.bf16.msra.mxu0 %v3847
    %5771 = vmatprep.subr.bf16.mxu0 %v3844
    %5772 = vmatpush2.bf16.msra.mxu0 %v3843
    %5773 = vmatprep.subr.bf16.mxu0 %v3840
    %5774 = vmatpush2.bf16.msra.mxu0 %v3839
    %5775 = vmatprep.subr.bf16.mxu0 %v3836
    %5776 = vmatpush2.bf16.msra.mxu0 %v3835
    %5777 = vmatprep.mubr.bf16.mxu0 %v185
    %5778 = vmatmul.mubr.bf16.gmra.mxu0 %v184
    %v5779 = vpop.f32.mrf.mxu0
    %v5780 = vadd.f32 %v5739, %v5779
    %v5781 = vpop.f32.mrf.mxu0
    %v5782 = vadd.f32 %v5741, %v5781
    %v5783 = vpop.f32.mrf.mxu0
    %v5784 = vpop.f32.mrf.mxu0
    %5785 = vdwg.mxu0
    %5786 = vmatprep.subr.bf16.mxu0 %v3896
    %5787 = vmatpush1.bf16.msra.mxu0 %v3895
    %5788 = vmatprep.subr.bf16.mxu0 %v3892
    %5789 = vmatpush1.bf16.msra.mxu0 %v3891
    %5790 = vmatprep.subr.bf16.mxu0 %v3888
    %5791 = vmatpush1.bf16.msra.mxu0 %v3887
    %5792 = vmatprep.subr.bf16.mxu0 %v3884
    %5793 = vmatpush1.bf16.msra.mxu0 %v3883
    %5794 = vmatprep.subr.bf16.mxu0 %v3880
    %5795 = vmatpush1.bf16.msra.mxu0 %v3879
    %5796 = vmatprep.subr.bf16.mxu0 %v3876
    %5797 = vmatpush1.bf16.msra.mxu0 %v3875
    %5798 = vmatprep.subr.bf16.mxu0 %v3872
    %5799 = vmatpush1.bf16.msra.mxu0 %v3871
    %5800 = vmatprep.subr.bf16.mxu0 %v3868
    %5801 = vmatpush1.bf16.msra.mxu0 %v3867
    %5802 = vmatprep.subr.bf16.mxu0 %v3928
    %5803 = vmatpush2.bf16.msra.mxu0 %v3927
    %5804 = vmatprep.subr.bf16.mxu0 %v3924
    %5805 = vmatpush2.bf16.msra.mxu0 %v3923
    %5806 = vmatprep.subr.bf16.mxu0 %v3920
    %5807 = vmatpush2.bf16.msra.mxu0 %v3919
    %5808 = vmatprep.subr.bf16.mxu0 %v3916
    %5809 = vmatpush2.bf16.msra.mxu0 %v3915
    %5810 = vmatprep.subr.bf16.mxu0 %v3912
    %5811 = vmatpush2.bf16.msra.mxu0 %v3911
    %5812 = vmatprep.subr.bf16.mxu0 %v3908
    %5813 = vmatpush2.bf16.msra.mxu0 %v3907
    %5814 = vmatprep.subr.bf16.mxu0 %v3904
    %5815 = vmatpush2.bf16.msra.mxu0 %v3903
    %5816 = vmatprep.subr.bf16.mxu0 %v3900
    %5817 = vmatpush2.bf16.msra.mxu0 %v3899
    %5818 = vmatprep.mubr.bf16.mxu0 %v187
    %5819 = vmatmul.mubr.bf16.gmra.mxu0 %v186
    %v5820 = vpop.f32.mrf.mxu0
    %v5821 = vadd.f32 %v5780, %v5820
    %v5822 = vpop.f32.mrf.mxu0
    %v5823 = vadd.f32 %v5782, %v5822
    %v5824 = vpop.f32.mrf.mxu0
    %v5825 = vpop.f32.mrf.mxu0
    %5826 = vdwg.mxu0
    %5827 = vmatprep.subr.bf16.mxu0 %v3960
    %5828 = vmatpush1.bf16.msra.mxu0 %v3959
    %5829 = vmatprep.subr.bf16.mxu0 %v3956
    %5830 = vmatpush1.bf16.msra.mxu0 %v3955
    %5831 = vmatprep.subr.bf16.mxu0 %v3952
    %5832 = vmatpush1.bf16.msra.mxu0 %v3951
    %5833 = vmatprep.subr.bf16.mxu0 %v3948
    %5834 = vmatpush1.bf16.msra.mxu0 %v3947
    %5835 = vmatprep.subr.bf16.mxu0 %v3944
    %5836 = vmatpush1.bf16.msra.mxu0 %v3943
    %5837 = vmatprep.subr.bf16.mxu0 %v3940
    %5838 = vmatpush1.bf16.msra.mxu0 %v3939
    %5839 = vmatprep.subr.bf16.mxu0 %v3936
    %5840 = vmatpush1.bf16.msra.mxu0 %v3935
    %5841 = vmatprep.subr.bf16.mxu0 %v3932
    %5842 = vmatpush1.bf16.msra.mxu0 %v3931
    %5843 = vmatprep.subr.bf16.mxu0 %v3992
    %5844 = vmatpush2.bf16.msra.mxu0 %v3991
    %5845 = vmatprep.subr.bf16.mxu0 %v3988
    %5846 = vmatpush2.bf16.msra.mxu0 %v3987
    %5847 = vmatprep.subr.bf16.mxu0 %v3984
    %5848 = vmatpush2.bf16.msra.mxu0 %v3983
    %5849 = vmatprep.subr.bf16.mxu0 %v3980
    %5850 = vmatpush2.bf16.msra.mxu0 %v3979
    %5851 = vmatprep.subr.bf16.mxu0 %v3976
    %5852 = vmatpush2.bf16.msra.mxu0 %v3975
    %5853 = vmatprep.subr.bf16.mxu0 %v3972
    %5854 = vmatpush2.bf16.msra.mxu0 %v3971
    %5855 = vmatprep.subr.bf16.mxu0 %v3968
    %5856 = vmatpush2.bf16.msra.mxu0 %v3967
    %5857 = vmatprep.subr.bf16.mxu0 %v3964
    %5858 = vmatpush2.bf16.msra.mxu0 %v3963
    %5859 = vmatprep.mubr.bf16.mxu0 %v189
    %5860 = vmatmul.mubr.bf16.gmra.mxu0 %v188
    %v5861 = vpop.f32.mrf.mxu0
    %v5862 = vadd.f32 %v5821, %v5861
    %v5863 = vpop.f32.mrf.mxu0
    %v5864 = vadd.f32 %v5823, %v5863
    %v5865 = vpop.f32.mrf.mxu0
    %v5866 = vpop.f32.mrf.mxu0
    %5867 = vdwg.mxu0
    %5868 = vmatprep.subr.bf16.mxu0 %v4024
    %5869 = vmatpush1.bf16.msra.mxu0 %v4023
    %5870 = vmatprep.subr.bf16.mxu0 %v4020
    %5871 = vmatpush1.bf16.msra.mxu0 %v4019
    %5872 = vmatprep.subr.bf16.mxu0 %v4016
    %5873 = vmatpush1.bf16.msra.mxu0 %v4015
    %5874 = vmatprep.subr.bf16.mxu0 %v4012
    %5875 = vmatpush1.bf16.msra.mxu0 %v4011
    %5876 = vmatprep.subr.bf16.mxu0 %v4008
    %5877 = vmatpush1.bf16.msra.mxu0 %v4007
    %5878 = vmatprep.subr.bf16.mxu0 %v4004
    %5879 = vmatpush1.bf16.msra.mxu0 %v4003
    %5880 = vmatprep.subr.bf16.mxu0 %v4000
    %5881 = vmatpush1.bf16.msra.mxu0 %v3999
    %5882 = vmatprep.subr.bf16.mxu0 %v3996
    %5883 = vmatpush1.bf16.msra.mxu0 %v3995
    %5884 = vmatprep.subr.bf16.mxu0 %v4056
    %5885 = vmatpush2.bf16.msra.mxu0 %v4055
    %5886 = vmatprep.subr.bf16.mxu0 %v4052
    %5887 = vmatpush2.bf16.msra.mxu0 %v4051
    %5888 = vmatprep.subr.bf16.mxu0 %v4048
    %5889 = vmatpush2.bf16.msra.mxu0 %v4047
    %5890 = vmatprep.subr.bf16.mxu0 %v4044
    %5891 = vmatpush2.bf16.msra.mxu0 %v4043
    %5892 = vmatprep.subr.bf16.mxu0 %v4040
    %5893 = vmatpush2.bf16.msra.mxu0 %v4039
    %5894 = vmatprep.subr.bf16.mxu0 %v4036
    %5895 = vmatpush2.bf16.msra.mxu0 %v4035
    %5896 = vmatprep.subr.bf16.mxu0 %v4032
    %5897 = vmatpush2.bf16.msra.mxu0 %v4031
    %5898 = vmatprep.subr.bf16.mxu0 %v4028
    %5899 = vmatpush2.bf16.msra.mxu0 %v4027
    %5900 = vmatprep.mubr.bf16.mxu0 %v191
    %5901 = vmatmul.mubr.bf16.gmra.mxu0 %v190
    %v5902 = vpop.f32.mrf.mxu0
    %v5903 = vadd.f32 %v5862, %v5902
    %v5904 = vpop.f32.mrf.mxu0
    %v5905 = vadd.f32 %v5864, %v5904
    %v5906 = vpop.f32.mrf.mxu0
    %v5907 = vpop.f32.mrf.mxu0
    %5908 = vdwg.mxu0
    %5909 = vmatprep.subr.bf16.mxu0 %v4088
    %5910 = vmatpush1.bf16.msra.mxu0 %v4087
    %5911 = vmatprep.subr.bf16.mxu0 %v4084
    %5912 = vmatpush1.bf16.msra.mxu0 %v4083
    %5913 = vmatprep.subr.bf16.mxu0 %v4080
    %5914 = vmatpush1.bf16.msra.mxu0 %v4079
    %5915 = vmatprep.subr.bf16.mxu0 %v4076
    %5916 = vmatpush1.bf16.msra.mxu0 %v4075
    %5917 = vmatprep.subr.bf16.mxu0 %v4072
    %5918 = vmatpush1.bf16.msra.mxu0 %v4071
    %5919 = vmatprep.subr.bf16.mxu0 %v4068
    %5920 = vmatpush1.bf16.msra.mxu0 %v4067
    %5921 = vmatprep.subr.bf16.mxu0 %v4064
    %5922 = vmatpush1.bf16.msra.mxu0 %v4063
    %5923 = vmatprep.subr.bf16.mxu0 %v4060
    %5924 = vmatpush1.bf16.msra.mxu0 %v4059
    %5925 = vmatprep.subr.bf16.mxu0 %v4120
    %5926 = vmatpush2.bf16.msra.mxu0 %v4119
    %5927 = vmatprep.subr.bf16.mxu0 %v4116
    %5928 = vmatpush2.bf16.msra.mxu0 %v4115
    %5929 = vmatprep.subr.bf16.mxu0 %v4112
    %5930 = vmatpush2.bf16.msra.mxu0 %v4111
    %5931 = vmatprep.subr.bf16.mxu0 %v4108
    %5932 = vmatpush2.bf16.msra.mxu0 %v4107
    %5933 = vmatprep.subr.bf16.mxu0 %v4104
    %5934 = vmatpush2.bf16.msra.mxu0 %v4103
    %5935 = vmatprep.subr.bf16.mxu0 %v4100
    %5936 = vmatpush2.bf16.msra.mxu0 %v4099
    %5937 = vmatprep.subr.bf16.mxu0 %v4096
    %5938 = vmatpush2.bf16.msra.mxu0 %v4095
    %5939 = vmatprep.subr.bf16.mxu0 %v4092
    %5940 = vmatpush2.bf16.msra.mxu0 %v4091
    %5941 = vmatprep.mubr.bf16.mxu0 %v193
    %5942 = vmatmul.mubr.bf16.gmra.mxu0 %v192
    %v5943 = vpop.f32.mrf.mxu0
    %v5944 = vadd.f32 %v5903, %v5943
    %v5945 = vpop.f32.mrf.mxu0
    %v5946 = vadd.f32 %v5905, %v5945
    %v5947 = vpop.f32.mrf.mxu0
    %v5948 = vpop.f32.mrf.mxu0
    %5949 = vdwg.mxu0
    %5950 = vmatprep.subr.bf16.mxu0 0
    %5951 = vmatpush1.bf16.msra.mxu0 0
    %5952 = vmatprep.subr.bf16.mxu0 0
    %5953 = vmatpush1.bf16.msra.mxu0 0
    %5954 = vmatprep.subr.bf16.mxu0 0
    %5955 = vmatpush1.bf16.msra.mxu0 0
    %5956 = vmatprep.subr.bf16.mxu0 0
    %5957 = vmatpush1.bf16.msra.mxu0 0
    %5958 = vmatprep.subr.bf16.mxu0 %v4136
    %5959 = vmatpush1.bf16.msra.mxu0 %v4135
    %5960 = vmatprep.subr.bf16.mxu0 %v4132
    %5961 = vmatpush1.bf16.msra.mxu0 %v4131
    %5962 = vmatprep.subr.bf16.mxu0 %v4128
    %5963 = vmatpush1.bf16.msra.mxu0 %v4127
    %5964 = vmatprep.subr.bf16.mxu0 %v4124
    %5965 = vmatpush1.bf16.msra.mxu0 %v4123
    %5966 = vmatprep.subr.bf16.mxu0 0
    %5967 = vmatpush2.bf16.msra.mxu0 0
    %5968 = vmatprep.subr.bf16.mxu0 0
    %5969 = vmatpush2.bf16.msra.mxu0 0
    %5970 = vmatprep.subr.bf16.mxu0 0
    %5971 = vmatpush2.bf16.msra.mxu0 0
    %5972 = vmatprep.subr.bf16.mxu0 0
    %5973 = vmatpush2.bf16.msra.mxu0 0
    %5974 = vmatprep.subr.bf16.mxu0 0
    %5975 = vmatpush2.bf16.msra.mxu0 0
    %5976 = vmatprep.subr.bf16.mxu0 0
    %5977 = vmatpush2.bf16.msra.mxu0 0
    %5978 = vmatprep.subr.bf16.mxu0 0
    %5979 = vmatpush2.bf16.msra.mxu0 0
    %5980 = vmatprep.subr.bf16.mxu0 0
    %5981 = vmatpush2.bf16.msra.mxu0 0
    %5982 = vmatprep.mubr.bf16.mxu0 0
    %5983 = vmatmul.mubr.bf16.gmra.mxu0 %v4923
    %v5984 = vpop.f32.mrf.mxu0
    %v5985 = vadd.f32 %v5944, %v5984
    %v5986 = vpop.f32.mrf.mxu0
    %v5987 = vadd.f32 %v5946, %v5986
    %v5988 = vpop.f32.mrf.mxu0
    %v5989 = vpop.f32.mrf.mxu0
    %5990 = vdwg.mxu0
    %v5991 = vmax.f32 %v5452, 0.0
    %v5992 = vmax.f32 %v5454, 0.0
    %v5993 = vmax.f32 %v5985, 0.0
    %v5994 = vmax.f32 %v5987, 0.0
    %v5995 = vpack.c.bf16 %v5991, %v5991
    %v5996 = vpack.c.bf16 %v5992, %v5992
    %v5997 = vpack.c.bf16 %v5993, %v5993
    %v5998 = vpack.c.bf16 %v5994, %v5994
    %v5999 = vld [vmem:[%s3] sm:$0xf]
    %v6000 = vld [vmem:[%s3 + $0x4] sm:$0xf]
    %v6001 = vld [vmem:[%s3 + $0x8] sm:$0xf]
    %v6002 = vld [vmem:[%s3 + $0xc] sm:$0xf]
    %v6003 = vld [vmem:[%s3 + $0x10] sm:$0xf]
    %v6004 = vld [vmem:[%s3 + $0x14] sm:$0xf]
    %v6005 = vld [vmem:[%s3 + $0x18] sm:$0xf]
    %v6006 = vld [vmem:[%s3 + $0x1c] sm:$0xf]
    %v6007 = vld [vmem:[%s3 + $0x20] sm:$0xf]
    %v6008 = vld [vmem:[%s3 + $0x24] sm:$0xf]
    %v6009 = vld [vmem:[%s3 + $0x28] sm:$0xf]
    %v6010 = vld [vmem:[%s3 + $0x2c] sm:$0xf]
    %v6011 = vld [vmem:[%s3 + $0x30] sm:$0xf]
    %v6012 = vld [vmem:[%s3 + $0x34] sm:$0xf]
    %v6013 = vld [vmem:[%s3 + $0x38] sm:$0xf]
    %v6014 = vld [vmem:[%s3 + $0x3c] sm:$0xf]
    %v6015 = vld [vmem:[%s3 + $0x40] sm:$0xf]
    %v6016 = vld [vmem:[%s3 + $0x44] sm:$0xf]
    %v6017 = vld [vmem:[%s3 + $0x48] sm:$0xf]
    %v6018 = vld [vmem:[%s3 + $0x4c] sm:$0xf]
    %v6019 = vld [vmem:[%s3 + $0x50] sm:$0xf]
    %v6020 = vld [vmem:[%s3 + $0x54] sm:$0xf]
    %v6021 = vld [vmem:[%s3 + $0x58] sm:$0xf]
    %v6022 = vld [vmem:[%s3 + $0x5c] sm:$0xf]
    %v6023 = vld [vmem:[%s3 + $0x60] sm:$0xf]
    %v6024 = vld [vmem:[%s3 + $0x64] sm:$0xf]
    %v6025 = vld [vmem:[%s3 + $0x68] sm:$0xf]
    %v6026 = vld [vmem:[%s3 + $0x6c] sm:$0xf]
    %v6027 = vld [vmem:[%s3 + $0x70] sm:$0xf]
    %v6028 = vld [vmem:[%s3 + $0x74] sm:$0xf]
    %v6029 = vld [vmem:[%s3 + $0x78] sm:$0xf]
    %v6030 = vld [vmem:[%s3 + $0x7c] sm:$0xf]
    %v6031 = vld [vmem:[%s3 + $0x80] sm:$0xf]
    %v6032 = vld [vmem:[%s3 + $0x84] sm:$0xf]
    %v6033 = vld [vmem:[%s3 + $0x88] sm:$0xf]
    %v6034 = vld [vmem:[%s3 + $0x8c] sm:$0xf]
    %v6035 = vld [vmem:[%s3 + $0x90] sm:$0xf]
    %v6036 = vld [vmem:[%s3 + $0x94] sm:$0xf]
    %v6037 = vld [vmem:[%s3 + $0x98] sm:$0xf]
    %v6038 = vld [vmem:[%s3 + $0x9c] sm:$0xf]
    %v6039 = vld [vmem:[%s3 + $0xa0] sm:$0xf]
    %v6040 = vld [vmem:[%s3 + $0xa4] sm:$0xf]
    %v6041 = vld [vmem:[%s3 + $0xa8] sm:$0xf]
    %v6042 = vld [vmem:[%s3 + $0xac] sm:$0xf]
    %v6043 = vld [vmem:[%s3 + $0xb0] sm:$0xf]
    %v6044 = vld [vmem:[%s3 + $0xb4] sm:$0xf]
    %v6045 = vld [vmem:[%s3 + $0xb8] sm:$0xf]
    %v6046 = vld [vmem:[%s3 + $0xbc] sm:$0xf]
    %v6047 = vld [vmem:[%s3 + $0xc0] sm:$0xf]
    %v6048 = vld [vmem:[%s3 + $0xc4] sm:$0xf]
    %v6049 = vld [vmem:[%s3 + $0xc8] sm:$0xf]
    %v6050 = vld [vmem:[%s3 + $0xcc] sm:$0xf]
    %v6051 = vld [vmem:[%s3 + $0xd0] sm:$0xf]
    %v6052 = vld [vmem:[%s3 + $0xd4] sm:$0xf]
    %v6053 = vld [vmem:[%s3 + $0xd8] sm:$0xf]
    %v6054 = vld [vmem:[%s3 + $0xdc] sm:$0xf]
    %v6055 = vld [vmem:[%s3 + $0xe0] sm:$0xf]
    %v6056 = vld [vmem:[%s3 + $0xe4] sm:$0xf]
    %v6057 = vld [vmem:[%s3 + $0xe8] sm:$0xf]
    %v6058 = vld [vmem:[%s3 + $0xec] sm:$0xf]
    %v6059 = vld [vmem:[%s3 + $0xf0] sm:$0xf]
    %v6060 = vld [vmem:[%s3 + $0xf4] sm:$0xf]
    %v6061 = vld [vmem:[%s3 + $0xf8] sm:$0xf]
    %v6062 = vld [vmem:[%s3 + $0xfc] sm:$0xf]
    %v6063 = vld [vmem:[%s4] sm:$0x1]
    %v6065 = vlaneseq
    %v6066 = vshrl.u32 %v6065, 7
    %v6067 = vsub.s32 0, %v6066
    %v6068 = vrot.slane %v6063, %v6067
    %v6134 = vunpack.c.l.b16 %v5999
    %v6135 = vunpack.c.l.b16 %v6000
    %v6136 = vunpack.c.l.b16 %v6001
    %v6137 = vunpack.c.l.b16 %v6002
    %v6138 = vunpack.c.l.b16 %v6003
    %v6139 = vunpack.c.l.b16 %v6004
    %v6140 = vunpack.c.l.b16 %v6005
    %v6141 = vunpack.c.l.b16 %v6006
    %v6142 = vunpack.c.l.b16 %v6007
    %v6143 = vunpack.c.l.b16 %v6008
    %v6144 = vunpack.c.l.b16 %v6009
    %v6145 = vunpack.c.l.b16 %v6010
    %v6146 = vunpack.c.l.b16 %v6011
    %v6147 = vunpack.c.l.b16 %v6012
    %v6148 = vunpack.c.l.b16 %v6013
    %v6149 = vunpack.c.l.b16 %v6014
    %v6150 = vunpack.c.l.b16 %v6015
    %v6151 = vunpack.c.l.b16 %v6016
    %v6152 = vunpack.c.l.b16 %v6017
    %v6153 = vunpack.c.l.b16 %v6018
    %v6154 = vunpack.c.l.b16 %v6019
    %v6155 = vunpack.c.l.b16 %v6020
    %v6156 = vunpack.c.l.b16 %v6021
    %v6157 = vunpack.c.l.b16 %v6022
    %v6158 = vunpack.c.l.b16 %v6023
    %v6159 = vunpack.c.l.b16 %v6024
    %v6160 = vunpack.c.l.b16 %v6025
    %v6161 = vunpack.c.l.b16 %v6026
    %v6162 = vunpack.c.l.b16 %v6027
    %v6163 = vunpack.c.l.b16 %v6028
    %v6164 = vunpack.c.l.b16 %v6029
    %v6165 = vunpack.c.l.b16 %v6030
    %v6166 = vunpack.c.l.b16 %v6031
    %v6167 = vunpack.c.l.b16 %v6032
    %v6168 = vunpack.c.l.b16 %v6033
    %v6169 = vunpack.c.l.b16 %v6034
    %v6170 = vunpack.c.l.b16 %v6035
    %v6171 = vunpack.c.l.b16 %v6036
    %v6172 = vunpack.c.l.b16 %v6037
    %v6173 = vunpack.c.l.b16 %v6038
    %v6174 = vunpack.c.l.b16 %v6039
    %v6175 = vunpack.c.l.b16 %v6040
    %v6176 = vunpack.c.l.b16 %v6041
    %v6177 = vunpack.c.l.b16 %v6042
    %v6178 = vunpack.c.l.b16 %v6043
    %v6179 = vunpack.c.l.b16 %v6044
    %v6180 = vunpack.c.l.b16 %v6045
    %v6181 = vunpack.c.l.b16 %v6046
    %v6182 = vunpack.c.l.b16 %v6047
    %v6183 = vunpack.c.l.b16 %v6048
    %v6184 = vunpack.c.l.b16 %v6049
    %v6185 = vunpack.c.l.b16 %v6050
    %v6186 = vunpack.c.l.b16 %v6051
    %v6187 = vunpack.c.l.b16 %v6052
    %v6188 = vunpack.c.l.b16 %v6053
    %v6189 = vunpack.c.l.b16 %v6054
    %v6190 = vunpack.c.l.b16 %v6055
    %v6191 = vunpack.c.l.b16 %v6056
    %v6192 = vunpack.c.l.b16 %v6057
    %v6193 = vunpack.c.l.b16 %v6058
    %v6194 = vunpack.c.l.b16 %v6059
    %v6195 = vunpack.c.l.b16 %v6060
    %v6196 = vunpack.c.l.b16 %v6061
    %v6197 = vunpack.c.l.b16 %v6062
    %v6198 = vpack.c.b16 %v6135, %v6134
    %v6199 = vpack.c.b16 %v6137, %v6136
    %v6200 = vpack.c.b16 %v6139, %v6138
    %v6201 = vpack.c.b16 %v6141, %v6140
    %v6202 = vpack.c.b16 %v6143, %v6142
    %v6203 = vpack.c.b16 %v6145, %v6144
    %v6204 = vpack.c.b16 %v6147, %v6146
    %v6205 = vpack.c.b16 %v6149, %v6148
    %v6206 = vpack.c.b16 %v6151, %v6150
    %v6207 = vpack.c.b16 %v6153, %v6152
    %v6208 = vpack.c.b16 %v6155, %v6154
    %v6209 = vpack.c.b16 %v6157, %v6156
    %v6210 = vpack.c.b16 %v6159, %v6158
    %v6211 = vpack.c.b16 %v6161, %v6160
    %v6212 = vpack.c.b16 %v6163, %v6162
    %v6213 = vpack.c.b16 %v6165, %v6164
    %v6214 = vpack.c.b16 %v6167, %v6166
    %v6215 = vpack.c.b16 %v6169, %v6168
    %v6216 = vpack.c.b16 %v6171, %v6170
    %v6217 = vpack.c.b16 %v6173, %v6172
    %v6218 = vpack.c.b16 %v6175, %v6174
    %v6219 = vpack.c.b16 %v6177, %v6176
    %v6220 = vpack.c.b16 %v6179, %v6178
    %v6221 = vpack.c.b16 %v6181, %v6180
    %v6222 = vpack.c.b16 %v6183, %v6182
    %v6223 = vpack.c.b16 %v6185, %v6184
    %v6224 = vpack.c.b16 %v6187, %v6186
    %v6225 = vpack.c.b16 %v6189, %v6188
    %v6226 = vpack.c.b16 %v6191, %v6190
    %v6227 = vpack.c.b16 %v6193, %v6192
    %v6228 = vpack.c.b16 %v6195, %v6194
    %v6229 = vpack.c.b16 %v6197, %v6196
    %6262 = vmatprep.subr.bf16.mxu0 0
    %6263 = vmatpush1.bf16.msra.mxu0 %v6205
    %6264 = vmatprep.subr.bf16.mxu0 0
    %6265 = vmatpush1.bf16.msra.mxu0 %v6204
    %6266 = vmatprep.subr.bf16.mxu0 0
    %6267 = vmatpush1.bf16.msra.mxu0 %v6203
    %6268 = vmatprep.subr.bf16.mxu0 0
    %6269 = vmatpush1.bf16.msra.mxu0 %v6202
    %6270 = vmatprep.subr.bf16.mxu0 0
    %6271 = vmatpush1.bf16.msra.mxu0 %v6201
    %6272 = vmatprep.subr.bf16.mxu0 0
    %6273 = vmatpush1.bf16.msra.mxu0 %v6200
    %6274 = vmatprep.subr.bf16.mxu0 0
    %6275 = vmatpush1.bf16.msra.mxu0 %v6199
    %6276 = vmatprep.subr.bf16.mxu0 0
    %6277 = vmatpush1.bf16.msra.mxu0 %v6198
    %6278 = vmatprep.subr.bf16.mxu0 0
    %6279 = vmatpush2.bf16.msra.mxu0 %v6213
    %6280 = vmatprep.subr.bf16.mxu0 0
    %6281 = vmatpush2.bf16.msra.mxu0 %v6212
    %6282 = vmatprep.subr.bf16.mxu0 0
    %6283 = vmatpush2.bf16.msra.mxu0 %v6211
    %6284 = vmatprep.subr.bf16.mxu0 0
    %6285 = vmatpush2.bf16.msra.mxu0 %v6210
    %6286 = vmatprep.subr.bf16.mxu0 0
    %6287 = vmatpush2.bf16.msra.mxu0 %v6209
    %6288 = vmatprep.subr.bf16.mxu0 0
    %6289 = vmatpush2.bf16.msra.mxu0 %v6208
    %6290 = vmatprep.subr.bf16.mxu0 0
    %6291 = vmatpush2.bf16.msra.mxu0 %v6207
    %6292 = vmatprep.subr.bf16.mxu0 0
    %6293 = vmatpush2.bf16.msra.mxu0 %v6206
    %6294 = vmatprep.mubr.bf16.mxu0 %v5996
    %6295 = vmatmul.mubr.bf16.gmra.mxu0 %v5995
    %v6296 = vpop.f32.mrf.mxu0
    %v6297 = vadd.f32 %v6068, %v6296
    %v6298 = vpop.f32.mrf.mxu0
    %v6299 = vpop.f32.mrf.mxu0
    %v6300 = vpop.f32.mrf.mxu0
    %6301 = vdwg.mxu0
    %6302 = vmatprep.subr.bf16.mxu0 0
    %6303 = vmatpush1.bf16.msra.mxu0 %v6221
    %6304 = vmatprep.subr.bf16.mxu0 0
    %6305 = vmatpush1.bf16.msra.mxu0 %v6220
    %6306 = vmatprep.subr.bf16.mxu0 0
    %6307 = vmatpush1.bf16.msra.mxu0 %v6219
    %6308 = vmatprep.subr.bf16.mxu0 0
    %6309 = vmatpush1.bf16.msra.mxu0 %v6218
    %6310 = vmatprep.subr.bf16.mxu0 0
    %6311 = vmatpush1.bf16.msra.mxu0 %v6217
    %6312 = vmatprep.subr.bf16.mxu0 0
    %6313 = vmatpush1.bf16.msra.mxu0 %v6216
    %6314 = vmatprep.subr.bf16.mxu0 0
    %6315 = vmatpush1.bf16.msra.mxu0 %v6215
    %6316 = vmatprep.subr.bf16.mxu0 0
    %6317 = vmatpush1.bf16.msra.mxu0 %v6214
    %6318 = vmatprep.subr.bf16.mxu0 0
    %6319 = vmatpush2.bf16.msra.mxu0 %v6229
    %6320 = vmatprep.subr.bf16.mxu0 0
    %6321 = vmatpush2.bf16.msra.mxu0 %v6228
    %6322 = vmatprep.subr.bf16.mxu0 0
    %6323 = vmatpush2.bf16.msra.mxu0 %v6227
    %6324 = vmatprep.subr.bf16.mxu0 0
    %6325 = vmatpush2.bf16.msra.mxu0 %v6226
    %6326 = vmatprep.subr.bf16.mxu0 0
    %6327 = vmatpush2.bf16.msra.mxu0 %v6225
    %6328 = vmatprep.subr.bf16.mxu0 0
    %6329 = vmatpush2.bf16.msra.mxu0 %v6224
    %6330 = vmatprep.subr.bf16.mxu0 0
    %6331 = vmatpush2.bf16.msra.mxu0 %v6223
    %6332 = vmatprep.subr.bf16.mxu0 0
    %6333 = vmatpush2.bf16.msra.mxu0 %v6222
    %6334 = vmatprep.mubr.bf16.mxu0 %v5998
    %6335 = vmatmul.mubr.bf16.gmra.mxu0 %v5997
    %v6336 = vpop.f32.mrf.mxu0
    %v6337 = vadd.f32 %v6297, %v6336
    %v6338 = vpop.f32.mrf.mxu0
    %v6339 = vpop.f32.mrf.mxu0
    %v6340 = vpop.f32.mrf.mxu0
    %6341 = vdwg.mxu0
    %6342 = vst [vmem:[#allocation2] sm:$0x3] %v6337
    // Predicated region
    $region22: #{network_forward.5} parent=1 // pred_check
      _
    $region23: #{network_forward.5} parent=1 // pred_check_branch
      %6344 = sbr.rel (0) target = $region25
    $region24: #{network_forward.5} parent=1 // pred_region
      %s6346 = ssub.s32 32, 32
      %6347 = vsyncadd [#allocation3], %s6346
      %s6349 = sshll.u32 [#allocation2], 4
      %s6350 = int_to_ptr.vmem [resolvable:$true] %s6349
      %6352 = dma.vmem_to_hbm [thread:$0]  %s6350, 32, %s5, [#allocation3]
    $region25: #{network_forward.5} parent=1 // pred_fallthru
      _
    // Predicated region
    $region26: #{network_forward.5} parent=1 // pred_check
      _
    $region27: #{network_forward.5} parent=1 // pred_check_branch
      %6354 = sbr.rel (0) target = $region29
    $region28: #{network_forward.5} parent=1 // pred_region
      %6355 = dma.done [#allocation3], 32
    $region29: #{network_forward.5} parent=1 // pred_fallthru
      _
    %6356 = vsyncpa [#allocation3], 1

</llo_original>
